<compile_context>
chip_gen: v7x
topology: tpu7x:2x2x1
jax: 0.10.0
libtpu: 0.0.40
codegen_flags: <defaults>
</compile_context>

<pallas_src>
import functools
import math

import jax
import jax.numpy as jnp
from jax.experimental import pallas as pl
from jax.experimental.pallas import tpu as pltpu

N_EMBD = 384
N_HEAD = 6
HEAD_SIZE = N_EMBD // N_HEAD
HIDDEN = 4 * N_EMBD
DROPOUT_P = 0.2
LN_EPS = 1e-5

# bf16 matmul operands only when the real TPU backend (MXU) is available;
# plain f32 otherwise (e.g. CPU interpret mode, which rejects bf16xbf16=f32).
_ON_TPU = jax.default_backend() == "tpu"
MATMUL_DTYPE = jnp.bfloat16 if _ON_TPU else jnp.float32


# ----------------------------- kernel helpers -------------------------------

def _layernorm(x, gamma, beta):
    mu = jnp.mean(x, axis=-1, keepdims=True)
    xc = x - mu
    var = jnp.mean(xc * xc, axis=-1, keepdims=True)
    return xc * jax.lax.rsqrt(var + LN_EPS) * gamma + beta


def _keep_mask(shape, p):
    # Caller must have seeded the hardware PRNG (pltpu.prng_seed) already.
    bits = pltpu.bitcast(pltpu.prng_random_bits(shape), jnp.uint32)
    threshold = jnp.uint32(min(int(round(p * (1 << 32))), (1 << 32) - 1))
    return bits >= threshold  # kept with probability (1 - p)


def _const_block(shape):
    """Constant-index block: weights/biases DMA'd once, resident in VMEM."""
    return pl.BlockSpec(shape, lambda *_: (0,) * len(shape))


# ------------------------- fused Block kernel --------------------------------

def block_kernel(seed_ref, x_ref, g1_ref, b1_ref, wqkv_ref, wo_ref, bo_ref,
                 g2_ref, be2_ref, w1_ref, bf1_ref, w2_ref, bf2_ref, o_ref,
                 *, n_head, dropout_p, training):
    x3 = x_ref[...].astype(jnp.float32)               # (BB, T, C)
    BB, T, C = x3.shape
    hs = C // n_head
    scale = C ** -0.5                                  # module scales by n_embd**-0.5
    x2 = x3.reshape(BB * T, C)                         # token-wise view

    if training and dropout_p > 0.0:
        pltpu.prng_seed(seed_ref[0] + pl.program_id(0))

    # ---- LN1 + fused Q/K/V projection (one lane-dense (C, 3C) matmul) ----
    xn = _layernorm(x2, g1_ref[...], b1_ref[...]).astype(wqkv_ref.dtype)
    qkv = jnp.dot(xn, wqkv_ref[...], preferred_element_type=jnp.float32)  # (BB*T, 3C)
    q = qkv[:, :C].reshape(BB, T, C)
    k = qkv[:, C:2 * C].reshape(BB, T, C)
    v = qkv[:, 2 * C:].reshape(BB, T, C)

    row = jax.lax.broadcasted_iota(jnp.int32, (T, T), 0)
    col = jax.lax.broadcasted_iota(jnp.int32, (T, T), 1)
    causal = (row >= col)[None, :, :]                  # (1, T, T)

    outs = []
    for h in range(n_head):                            # static unroll, 6 heads
        qh = q[:, :, h * hs:(h + 1) * hs]
        kh = k[:, :, h * hs:(h + 1) * hs]
        vh = v[:, :, h * hs:(h + 1) * hs]
        # Score matmul without an explicit transpose (contract last dims).
        wei = jnp.einsum("bqd,bkd->bqk", qh, kh,
                         preferred_element_type=jnp.float32) * scale       # (BB,T,T)
        wei = jnp.where(causal, wei, -jnp.inf)
        wei = jnp.exp(wei - jnp.max(wei, axis=-1, keepdims=True))
        wei = wei * (1.0 / jnp.sum(wei, axis=-1, keepdims=True))           # cheap recip
        if training and dropout_p > 0.0:
            keep = _keep_mask(wei.shape, dropout_p)
            wei = jnp.where(keep, wei * (1.0 / (1.0 - dropout_p)), 0.0)
        outs.append(jnp.einsum("bqk,bkd->bqd", wei, vh,
                               preferred_element_type=jnp.float32))         # (BB,T,hs)

    # Concatenate head outputs once -> single full-width output projection.
    att = jnp.concatenate(outs, axis=-1).reshape(BB * T, C)
    y = jnp.dot(att.astype(wo_ref.dtype), wo_ref[...],
                preferred_element_type=jnp.float32) + bo_ref[...]
    if training and dropout_p > 0.0:
        keep = _keep_mask(y.shape, dropout_p)
        y = jnp.where(keep, y * (1.0 / (1.0 - dropout_p)), 0.0)
    x1 = x2 + y                                        # first residual

    # ---- LN2 + FFN (single full-width hidden pass) + residual ----
    xn2 = _layernorm(x1, g2_ref[...], be2_ref[...]).astype(w1_ref.dtype)
    hid = jnp.dot(xn2, w1_ref[...],
                  preferred_element_type=jnp.float32) + bf1_ref[...]        # (BB*T, H)
    hid = jnp.maximum(hid, 0.0)
    y2 = jnp.dot(hid.astype(w2_ref.dtype), w2_ref[...],
                 preferred_element_type=jnp.float32) + bf2_ref[...]
    if training and dropout_p > 0.0:
        keep = _keep_mask(y2.shape, dropout_p)
        y2 = jnp.where(keep, y2 * (1.0 / (1.0 - dropout_p)), 0.0)

    out = x1 + y2                                      # second residual
    o_ref[...] = out.reshape(BB, T, C).astype(o_ref.dtype)


def _pick_batch_tile(B, T, max_rows=256):
    """Largest divisor of B with block_b*T <= max_rows (amortizes small T)."""
    bb = 1
    for cand in range(1, B + 1):
        if B % cand == 0 and cand * T <= max_rows:
            bb = cand
    return bb


def block_forward(x, params, *, seed=0, dropout_p=DROPOUT_P, training=False,
                  block_b=None):
    """Matches Block.forward: x + sa(ln1(x)), then + ffwd(ln2(.)) — one kernel."""
    B, T, C = x.shape
    H = params["w1"].shape[1]
    if block_b is None:
        block_b = _pick_batch_tile(B, T)
    assert B % block_b == 0
    seed_arr = jnp.asarray([seed], dtype=jnp.int32)

    kernel = functools.partial(block_kernel, n_head=N_HEAD,
                               dropout_p=dropout_p, training=training)
    return pl.pallas_call(
        kernel,
        out_shape=jax.ShapeDtypeStruct((B, T, C), x.dtype),
        grid_spec=pltpu.PrefetchScalarGridSpec(
            num_scalar_prefetch=1,
            grid=(B // block_b,),
            in_specs=[
                pl.BlockSpec((block_b, T, C), lambda i, seed: (i, 0, 0)),  # x
                _const_block((1, C)),          # ln1 gamma
                _const_block((1, C)),          # ln1 beta
                _const_block((C, 3 * C)),      # Wqkv (fused, lane-dense, resident)
                _const_block((C, C)),          # Wproj
                _const_block((1, C)),          # bproj
                _const_block((1, C)),          # ln2 gamma
                _const_block((1, C)),          # ln2 beta
                _const_block((C, H)),          # W1
                _const_block((1, H)),          # b1
                _const_block((H, C)),          # W2
                _const_block((1, C)),          # b2
            ],
            out_specs=pl.BlockSpec((block_b, T, C), lambda i, seed: (i, 0, 0)),
        ),
        compiler_params=pltpu.CompilerParams(
            dimension_semantics=("parallel",),      # shard batch tiles across TCs
            vmem_limit_bytes=32 * 1024 * 1024,      # explicit budget (v5e default 16M)
        ),
    )(seed_arr, x, params["ln1_g"], params["ln1_b"], params["wqkv"],
      params["wo"], params["bo"], params["ln2_g"], params["ln2_b"],
      params["w1"], params["b1"], params["w2"], params["b2"])


# --------------------------- params & reference ------------------------------

def init_block_params(key, n_embd=N_EMBD, n_head=N_HEAD, dtype=MATMUL_DTYPE):
    """nn.Linear-style U(-1/sqrt(fan_in), 1/sqrt(fan_in)); LN gamma=1, beta=0.
    Per-head q/k/v weights are stacked column-wise into one lane-dense
    (C, 3C) matrix; all matmul weights are stored in MATMUL_DTYPE once."""
    hidden = 4 * n_embd
    ks = jax.random.split(key, 9)
    b_in = 1.0 / math.sqrt(n_embd)
    b_hid = 1.0 / math.sqrt(hidden)
    u = lambda k, shape, b: jax.random.uniform(k, shape, jnp.float32, -b, b)

    wq = u(ks[0], (n_embd, n_embd), b_in)   # head h = columns [h*hs:(h+1)*hs]
    wk = u(ks[1], (n_embd, n_embd), b_in)
    wv = u(ks[2], (n_embd, n_embd), b_in)
    wqkv = jnp.concatenate([wq, wk, wv], axis=1)          # (C, 3C)
    wo = u(ks[3], (n_embd, n_embd), b_in)
    bo = u(ks[4], (1, n_embd), b_in)
    w1 = u(ks[5], (n_embd, hidden), b_in)
    b1 = u(ks[6], (1, hidden), b_in)
    w2 = u(ks[7], (hidden, n_embd), b_hid)
    b2 = u(ks[8], (1, n_embd), b_hid)

    return dict(
        ln1_g=jnp.ones((1, n_embd), jnp.float32),
        ln1_b=jnp.zeros((1, n_embd), jnp.float32),
        ln2_g=jnp.ones((1, n_embd), jnp.float32),
        ln2_b=jnp.zeros((1, n_embd), jnp.float32),
        wqkv=wqkv.astype(dtype), wo=wo.astype(dtype), bo=bo,
        w1=w1.astype(dtype), b1=b1,
        w2=w2.astype(dtype), b2=b2,
    )


def block_reference(x, p, n_head=N_HEAD):
    """Pure-JAX reference with the same mixed-precision policy as the kernel
    (MATMUL_DTYPE matmul operands, f32 accumulation), eval mode."""
    B, T, C = x.shape
    hs = C // n_head
    scale = C ** -0.5

    def ln(z, g, b):
        mu = jnp.mean(z, -1, keepdims=True)
        zc = z - mu
        var = jnp.mean(zc * zc, -1, keepdims=True)
        return zc * jax.lax.rsqrt(var + LN_EPS) * g + b

    xn = ln(x, p["ln1_g"], p["ln1_b"]).astype(p["wqkv"].dtype)
    qkv = jnp.einsum("btc,cf->btf", xn, p["wqkv"],
                     preferred_element_type=jnp.float32)
    q, k, v = qkv[..., :C], qkv[..., C:2 * C], qkv[..., 2 * C:]
    causal = jnp.tril(jnp.ones((T, T), bool))[None]
    outs = []
    for h in range(n_head):
        qh = q[..., h * hs:(h + 1) * hs]
        kh = k[..., h * hs:(h + 1) * hs]
        vh = v[..., h * hs:(h + 1) * hs]
        wei = jnp.einsum("btd,bsd->bts", qh, kh) * scale
        wei = jnp.where(causal, wei, -jnp.inf)
        wei = jax.nn.softmax(wei, axis=-1)
        outs.append(jnp.einsum("bts,bsd->btd", wei, vh))
    att = jnp.concatenate(outs, axis=-1).astype(p["wo"].dtype)
    y = jnp.einsum("btc,cd->btd", att, p["wo"],
                   preferred_element_type=jnp.float32) + p["bo"]
    x1 = x + y

    xn2 = ln(x1, p["ln2_g"], p["ln2_b"]).astype(p["w1"].dtype)
    h1 = jnp.einsum("btc,ch->bth", xn2, p["w1"],
                    preferred_element_type=jnp.float32) + p["b1"]
    h1 = jnp.maximum(h1, 0.0)
    y2 = jnp.einsum("bth,hc->btc", h1.astype(p["w2"].dtype), p["w2"],
                    preferred_element_type=jnp.float32) + p["b2"]
    return x1 + y2


# ----------------------------------- demo ------------------------------------

if __name__ == "__main__":
    key = jax.random.PRNGKey(0)
    kx, kp = jax.random.split(key)

    B, T = 2, 8                      # small demo; n_embd=384, n_head=6 per spec
    x = jax.random.normal(kx, (B, T, N_EMBD), dtype=jnp.float32)
    params = init_block_params(kp)

    y = block_forward(x, params, training=False)   # eval mode (dropout = id)
    y = jax.block_until_ready(y)

    ref = block_reference(x, params)
    assert y.shape == (B, T, N_EMBD)
    err = float(jnp.max(jnp.abs(y - ref)))
    assert jnp.allclose(y, ref, atol=2e-3, rtol=2e-3), err

    print("KERNEL_OK")
</pallas_src>

<mosaic_0001>
module attributes {stable_mosaic.version = 11 : i64} {
  func.func @block_kernel(%arg0: i32, %arg1: memref<1xi32, #tpu.memory_space<smem>>, %arg2: memref<2x8x384xf32, #tpu.memory_space<vmem>>, %arg3: memref<1x384xf32, #tpu.memory_space<vmem>>, %arg4: memref<1x384xf32, #tpu.memory_space<vmem>>, %arg5: memref<384x1152xf32, #tpu.memory_space<vmem>>, %arg6: memref<384x384xf32, #tpu.memory_space<vmem>>, %arg7: memref<1x384xf32, #tpu.memory_space<vmem>>, %arg8: memref<1x384xf32, #tpu.memory_space<vmem>>, %arg9: memref<1x384xf32, #tpu.memory_space<vmem>>, %arg10: memref<384x1536xf32, #tpu.memory_space<vmem>>, %arg11: memref<1x1536xf32, #tpu.memory_space<vmem>>, %arg12: memref<1536x384xf32, #tpu.memory_space<vmem>>, %arg13: memref<1x384xf32, #tpu.memory_space<vmem>>, %arg14: memref<2x8x384xf32, #tpu.memory_space<vmem>>) attributes {dimension_semantics = [#tpu.dimension_semantics<parallel>], iteration_bounds = array<i64: 1>, scalar_prefetch = 1 : i64, scratch_operands = 0 : i64, tpu.core_type = #tpu.core_type<tc>, window_params = [{transform_indices = @transform_0, window_bounds = array<i64: 2, 8, 384>}, {pipeline_mode = #tpu.pipeline_mode<synchronous>, transform_indices = @transform_1, window_bounds = array<i64: 1, 384>}, {pipeline_mode = #tpu.pipeline_mode<synchronous>, transform_indices = @transform_2, window_bounds = array<i64: 1, 384>}, {pipeline_mode = #tpu.pipeline_mode<synchronous>, transform_indices = @transform_3, window_bounds = array<i64: 384, 1152>}, {pipeline_mode = #tpu.pipeline_mode<synchronous>, transform_indices = @transform_4, window_bounds = array<i64: 384, 384>}, {pipeline_mode = #tpu.pipeline_mode<synchronous>, transform_indices = @transform_5, window_bounds = array<i64: 1, 384>}, {pipeline_mode = #tpu.pipeline_mode<synchronous>, transform_indices = @transform_6, window_bounds = array<i64: 1, 384>}, {pipeline_mode = #tpu.pipeline_mode<synchronous>, transform_indices = @transform_7, window_bounds = array<i64: 1, 384>}, {pipeline_mode = #tpu.pipeline_mode<synchronous>, transform_indices = @transform_8, window_bounds = array<i64: 384, 1536>}, {pipeline_mode = #tpu.pipeline_mode<synchronous>, transform_indices = @transform_9, window_bounds = array<i64: 1, 1536>}, {pipeline_mode = #tpu.pipeline_mode<synchronous>, transform_indices = @transform_10, window_bounds = array<i64: 1536, 384>}, {pipeline_mode = #tpu.pipeline_mode<synchronous>, transform_indices = @transform_11, window_bounds = array<i64: 1, 384>}, {transform_indices = @transform_12, window_bounds = array<i64: 2, 8, 384>}]} {
    %c0 = arith.constant 0 : index
    %c0_0 = arith.constant 0 : index
    %c0_1 = arith.constant 0 : index
    %0 = vector.load %arg2[%c0, %c0_0, %c0_1] : memref<2x8x384xf32, #tpu.memory_space<vmem>>, vector<2x8x384xf32>
    %1 = vector.shape_cast %0 : vector<2x8x384xf32> to vector<16x384xf32>
    %c0_2 = arith.constant 0 : index
    %c0_3 = arith.constant 0 : index
    %2 = vector.load %arg3[%c0_2, %c0_3] : memref<1x384xf32, #tpu.memory_space<vmem>>, vector<1x384xf32>
    %c0_4 = arith.constant 0 : index
    %c0_5 = arith.constant 0 : index
    %3 = vector.load %arg4[%c0_4, %c0_5] : memref<1x384xf32, #tpu.memory_space<vmem>>, vector<1x384xf32>
    %cst = arith.constant dense<0.000000e+00> : vector<16xf32>
    %4 = vector.multi_reduction <add>, %1, %cst [1] : vector<16x384xf32> to vector<16xf32>
    %5 = vector.shape_cast %4 : vector<16xf32> to vector<16x1xf32>
    %cst_6 = arith.constant 3.840000e+02 : f32
    %6 = vector.broadcast %cst_6 : f32 to vector<16x1xf32>
    %7 = arith.divf %5, %6 : vector<16x1xf32>
    %8 = vector.broadcast %7 : vector<16x1xf32> to vector<16x384xf32>
    %9 = arith.subf %1, %8 : vector<16x384xf32>
    %10 = arith.mulf %9, %9 : vector<16x384xf32>
    %cst_7 = arith.constant dense<0.000000e+00> : vector<16xf32>
    %11 = vector.multi_reduction <add>, %10, %cst_7 [1] : vector<16x384xf32> to vector<16xf32>
    %12 = vector.shape_cast %11 : vector<16xf32> to vector<16x1xf32>
    %cst_8 = arith.constant 3.840000e+02 : f32
    %13 = vector.broadcast %cst_8 : f32 to vector<16x1xf32>
    %14 = arith.divf %12, %13 : vector<16x1xf32>
    %cst_9 = arith.constant 9.99999974E-6 : f32
    %15 = vector.broadcast %cst_9 : f32 to vector<16x1xf32>
    %16 = arith.addf %14, %15 : vector<16x1xf32>
    %17 = math.rsqrt %16 : vector<16x1xf32>
    %18 = vector.broadcast %17 : vector<16x1xf32> to vector<16x384xf32>
    %19 = arith.mulf %9, %18 : vector<16x384xf32>
    %20 = vector.broadcast %2 : vector<1x384xf32> to vector<16x384xf32>
    %21 = arith.mulf %19, %20 : vector<16x384xf32>
    %22 = vector.broadcast %3 : vector<1x384xf32> to vector<16x384xf32>
    %23 = arith.addf %21, %22 : vector<16x384xf32>
    %c0_10 = arith.constant 0 : index
    %c0_11 = arith.constant 0 : index
    %24 = vector.load %arg5[%c0_10, %c0_11] : memref<384x1152xf32, #tpu.memory_space<vmem>>, vector<384x1152xf32>
    %cst_12 = arith.constant dense<0.000000e+00> : vector<16x1152xf32>
    %25 = tpu.matmul %23, %24, %cst_12 {dimension_numbers = #tpu.dot_dimension_numbers<[1], [0], [0], [1], [0, 0, 1, 1], [], []>} : vector<16x384xf32>, vector<384x1152xf32>, vector<16x1152xf32> -> vector<16x1152xf32>
    %26 = vector.extract_strided_slice %25 {offsets = [0, 0], sizes = [16, 384], strides = [1, 1]} : vector<16x1152xf32> to vector<16x384xf32>
    %27 = vector.shape_cast %26 : vector<16x384xf32> to vector<2x8x384xf32>
    %28 = vector.extract_strided_slice %25 {offsets = [0, 384], sizes = [16, 384], strides = [1, 1]} : vector<16x1152xf32> to vector<16x384xf32>
    %29 = vector.shape_cast %28 : vector<16x384xf32> to vector<2x8x384xf32>
    %30 = vector.extract_strided_slice %25 {offsets = [0, 768], sizes = [16, 384], strides = [1, 1]} : vector<16x1152xf32> to vector<16x384xf32>
    %31 = vector.shape_cast %30 : vector<16x384xf32> to vector<2x8x384xf32>
    %32 = tpu.iota {dimensions = array<i32: 0>} : vector<8x8xi32>
    %33 = tpu.iota {dimensions = array<i32: 1>} : vector<8x8xi32>
    %34 = arith.cmpi sge, %32, %33 : vector<8x8xi32>
    %35 = vector.shape_cast %34 : vector<8x8xi1> to vector<1x8x8xi1>
    %36 = vector.extract_strided_slice %27 {offsets = [0, 0, 0], sizes = [2, 8, 64], strides = [1, 1, 1]} : vector<2x8x384xf32> to vector<2x8x64xf32>
    %37 = vector.extract_strided_slice %29 {offsets = [0, 0, 0], sizes = [2, 8, 64], strides = [1, 1, 1]} : vector<2x8x384xf32> to vector<2x8x64xf32>
    %38 = vector.extract_strided_slice %31 {offsets = [0, 0, 0], sizes = [2, 8, 64], strides = [1, 1, 1]} : vector<2x8x384xf32> to vector<2x8x64xf32>
    "tpu.trace_start"() <{level = 10 : i32, message = "bqd,bkd->bqk"}> : () -> ()
    %cst_13 = arith.constant dense<0.000000e+00> : vector<2x8x8xf32>
    %39 = tpu.matmul %36, %37, %cst_13 {dimension_numbers = #tpu.dot_dimension_numbers<[2], [2], [1], [1], [0, 0, 0, 1, 1, 1], [0], [0]>} : vector<2x8x64xf32>, vector<2x8x64xf32>, vector<2x8x8xf32> -> vector<2x8x8xf32>
    "tpu.trace_stop"() : () -> ()
    %cst_14 = arith.constant 0.0510310382 : f32
    %40 = vector.broadcast %cst_14 : f32 to vector<2x8x8xf32>
    %41 = arith.mulf %39, %40 : vector<2x8x8xf32>
    %cst_15 = arith.constant 0xFF800000 : f32
    %42 = vector.shape_cast %35 : vector<1x8x8xi1> to vector<1x8x8xi1>
    %43 = vector.broadcast %42 : vector<1x8x8xi1> to vector<2x8x8xi1>
    %44 = vector.broadcast %cst_15 : f32 to vector<2x8x8xf32>
    %45 = arith.select %43, %41, %44 : vector<2x8x8xi1>, vector<2x8x8xf32>
    %cst_16 = arith.constant dense<0xFF800000> : vector<2x8xf32>
    %46 = vector.multi_reduction <maximumf>, %45, %cst_16 [2] : vector<2x8x8xf32> to vector<2x8xf32>
    %47 = vector.shape_cast %46 : vector<2x8xf32> to vector<2x8x1xf32>
    %48 = vector.broadcast %47 : vector<2x8x1xf32> to vector<2x8x8xf32>
    %49 = arith.subf %45, %48 : vector<2x8x8xf32>
    %50 = math.exp %49 : vector<2x8x8xf32>
    %cst_17 = arith.constant dense<0.000000e+00> : vector<2x8xf32>
    %51 = vector.multi_reduction <add>, %50, %cst_17 [2] : vector<2x8x8xf32> to vector<2x8xf32>
    %52 = vector.shape_cast %51 : vector<2x8xf32> to vector<2x8x1xf32>
    %cst_18 = arith.constant 1.000000e+00 : f32
    %53 = vector.broadcast %cst_18 : f32 to vector<2x8x1xf32>
    %54 = arith.divf %53, %52 : vector<2x8x1xf32>
    %55 = vector.broadcast %54 : vector<2x8x1xf32> to vector<2x8x8xf32>
    %56 = arith.mulf %50, %55 : vector<2x8x8xf32>
    "tpu.trace_start"() <{level = 10 : i32, message = "bqk,bkd->bqd"}> : () -> ()
    %cst_19 = arith.constant dense<0.000000e+00> : vector<2x8x64xf32>
    %57 = tpu.matmul %56, %38, %cst_19 {dimension_numbers = #tpu.dot_dimension_numbers<[2], [1], [1], [2], [0, 0, 0, 1, 1, 2], [0], [0]>} : vector<2x8x8xf32>, vector<2x8x64xf32>, vector<2x8x64xf32> -> vector<2x8x64xf32>
    "tpu.trace_stop"() : () -> ()
    %58 = vector.extract_strided_slice %27 {offsets = [0, 0, 64], sizes = [2, 8, 64], strides = [1, 1, 1]} : vector<2x8x384xf32> to vector<2x8x64xf32>
    %59 = vector.extract_strided_slice %29 {offsets = [0, 0, 64], sizes = [2, 8, 64], strides = [1, 1, 1]} : vector<2x8x384xf32> to vector<2x8x64xf32>
    %60 = vector.extract_strided_slice %31 {offsets = [0, 0, 64], sizes = [2, 8, 64], strides = [1, 1, 1]} : vector<2x8x384xf32> to vector<2x8x64xf32>
    "tpu.trace_start"() <{level = 10 : i32, message = "bqd,bkd->bqk"}> : () -> ()
    %cst_20 = arith.constant dense<0.000000e+00> : vector<2x8x8xf32>
    %61 = tpu.matmul %58, %59, %cst_20 {dimension_numbers = #tpu.dot_dimension_numbers<[2], [2], [1], [1], [0, 0, 0, 1, 1, 1], [0], [0]>} : vector<2x8x64xf32>, vector<2x8x64xf32>, vector<2x8x8xf32> -> vector<2x8x8xf32>
    "tpu.trace_stop"() : () -> ()
    %cst_21 = arith.constant 0.0510310382 : f32
    %62 = vector.broadcast %cst_21 : f32 to vector<2x8x8xf32>
    %63 = arith.mulf %61, %62 : vector<2x8x8xf32>
    %cst_22 = arith.constant 0xFF800000 : f32
    %64 = vector.shape_cast %35 : vector<1x8x8xi1> to vector<1x8x8xi1>
    %65 = vector.broadcast %64 : vector<1x8x8xi1> to vector<2x8x8xi1>
    %66 = vector.broadcast %cst_22 : f32 to vector<2x8x8xf32>
    %67 = arith.select %65, %63, %66 : vector<2x8x8xi1>, vector<2x8x8xf32>
    %cst_23 = arith.constant dense<0xFF800000> : vector<2x8xf32>
    %68 = vector.multi_reduction <maximumf>, %67, %cst_23 [2] : vector<2x8x8xf32> to vector<2x8xf32>
    %69 = vector.shape_cast %68 : vector<2x8xf32> to vector<2x8x1xf32>
    %70 = vector.broadcast %69 : vector<2x8x1xf32> to vector<2x8x8xf32>
    %71 = arith.subf %67, %70 : vector<2x8x8xf32>
    %72 = math.exp %71 : vector<2x8x8xf32>
    %cst_24 = arith.constant dense<0.000000e+00> : vector<2x8xf32>
    %73 = vector.multi_reduction <add>, %72, %cst_24 [2] : vector<2x8x8xf32> to vector<2x8xf32>
    %74 = vector.shape_cast %73 : vector<2x8xf32> to vector<2x8x1xf32>
    %cst_25 = arith.constant 1.000000e+00 : f32
    %75 = vector.broadcast %cst_25 : f32 to vector<2x8x1xf32>
    %76 = arith.divf %75, %74 : vector<2x8x1xf32>
    %77 = vector.broadcast %76 : vector<2x8x1xf32> to vector<2x8x8xf32>
    %78 = arith.mulf %72, %77 : vector<2x8x8xf32>
    "tpu.trace_start"() <{level = 10 : i32, message = "bqk,bkd->bqd"}> : () -> ()
    %cst_26 = arith.constant dense<0.000000e+00> : vector<2x8x64xf32>
    %79 = tpu.matmul %78, %60, %cst_26 {dimension_numbers = #tpu.dot_dimension_numbers<[2], [1], [1], [2], [0, 0, 0, 1, 1, 2], [0], [0]>} : vector<2x8x8xf32>, vector<2x8x64xf32>, vector<2x8x64xf32> -> vector<2x8x64xf32>
    "tpu.trace_stop"() : () -> ()
    %80 = vector.extract_strided_slice %27 {offsets = [0, 0, 128], sizes = [2, 8, 64], strides = [1, 1, 1]} : vector<2x8x384xf32> to vector<2x8x64xf32>
    %81 = vector.extract_strided_slice %29 {offsets = [0, 0, 128], sizes = [2, 8, 64], strides = [1, 1, 1]} : vector<2x8x384xf32> to vector<2x8x64xf32>
    %82 = vector.extract_strided_slice %31 {offsets = [0, 0, 128], sizes = [2, 8, 64], strides = [1, 1, 1]} : vector<2x8x384xf32> to vector<2x8x64xf32>
    "tpu.trace_start"() <{level = 10 : i32, message = "bqd,bkd->bqk"}> : () -> ()
    %cst_27 = arith.constant dense<0.000000e+00> : vector<2x8x8xf32>
    %83 = tpu.matmul %80, %81, %cst_27 {dimension_numbers = #tpu.dot_dimension_numbers<[2], [2], [1], [1], [0, 0, 0, 1, 1, 1], [0], [0]>} : vector<2x8x64xf32>, vector<2x8x64xf32>, vector<2x8x8xf32> -> vector<2x8x8xf32>
    "tpu.trace_stop"() : () -> ()
    %cst_28 = arith.constant 0.0510310382 : f32
    %84 = vector.broadcast %cst_28 : f32 to vector<2x8x8xf32>
    %85 = arith.mulf %83, %84 : vector<2x8x8xf32>
    %cst_29 = arith.constant 0xFF800000 : f32
    %86 = vector.shape_cast %35 : vector<1x8x8xi1> to vector<1x8x8xi1>
    %87 = vector.broadcast %86 : vector<1x8x8xi1> to vector<2x8x8xi1>
    %88 = vector.broadcast %cst_29 : f32 to vector<2x8x8xf32>
    %89 = arith.select %87, %85, %88 : vector<2x8x8xi1>, vector<2x8x8xf32>
    %cst_30 = arith.constant dense<0xFF800000> : vector<2x8xf32>
    %90 = vector.multi_reduction <maximumf>, %89, %cst_30 [2] : vector<2x8x8xf32> to vector<2x8xf32>
    %91 = vector.shape_cast %90 : vector<2x8xf32> to vector<2x8x1xf32>
    %92 = vector.broadcast %91 : vector<2x8x1xf32> to vector<2x8x8xf32>
    %93 = arith.subf %89, %92 : vector<2x8x8xf32>
    %94 = math.exp %93 : vector<2x8x8xf32>
    %cst_31 = arith.constant dense<0.000000e+00> : vector<2x8xf32>
    %95 = vector.multi_reduction <add>, %94, %cst_31 [2] : vector<2x8x8xf32> to vector<2x8xf32>
    %96 = vector.shape_cast %95 : vector<2x8xf32> to vector<2x8x1xf32>
    %cst_32 = arith.constant 1.000000e+00 : f32
    %97 = vector.broadcast %cst_32 : f32 to vector<2x8x1xf32>
    %98 = arith.divf %97, %96 : vector<2x8x1xf32>
    %99 = vector.broadcast %98 : vector<2x8x1xf32> to vector<2x8x8xf32>
    %100 = arith.mulf %94, %99 : vector<2x8x8xf32>
    "tpu.trace_start"() <{level = 10 : i32, message = "bqk,bkd->bqd"}> : () -> ()
    %cst_33 = arith.constant dense<0.000000e+00> : vector<2x8x64xf32>
    %101 = tpu.matmul %100, %82, %cst_33 {dimension_numbers = #tpu.dot_dimension_numbers<[2], [1], [1], [2], [0, 0, 0, 1, 1, 2], [0], [0]>} : vector<2x8x8xf32>, vector<2x8x64xf32>, vector<2x8x64xf32> -> vector<2x8x64xf32>
    "tpu.trace_stop"() : () -> ()
    %102 = vector.extract_strided_slice %27 {offsets = [0, 0, 192], sizes = [2, 8, 64], strides = [1, 1, 1]} : vector<2x8x384xf32> to vector<2x8x64xf32>
    %103 = vector.extract_strided_slice %29 {offsets = [0, 0, 192], sizes = [2, 8, 64], strides = [1, 1, 1]} : vector<2x8x384xf32> to vector<2x8x64xf32>
    %104 = vector.extract_strided_slice %31 {offsets = [0, 0, 192], sizes = [2, 8, 64], strides = [1, 1, 1]} : vector<2x8x384xf32> to vector<2x8x64xf32>
    "tpu.trace_start"() <{level = 10 : i32, message = "bqd,bkd->bqk"}> : () -> ()
    %cst_34 = arith.constant dense<0.000000e+00> : vector<2x8x8xf32>
    %105 = tpu.matmul %102, %103, %cst_34 {dimension_numbers = #tpu.dot_dimension_numbers<[2], [2], [1], [1], [0, 0, 0, 1, 1, 1], [0], [0]>} : vector<2x8x64xf32>, vector<2x8x64xf32>, vector<2x8x8xf32> -> vector<2x8x8xf32>
    "tpu.trace_stop"() : () -> ()
    %cst_35 = arith.constant 0.0510310382 : f32
    %106 = vector.broadcast %cst_35 : f32 to vector<2x8x8xf32>
    %107 = arith.mulf %105, %106 : vector<2x8x8xf32>
    %cst_36 = arith.constant 0xFF800000 : f32
    %108 = vector.shape_cast %35 : vector<1x8x8xi1> to vector<1x8x8xi1>
    %109 = vector.broadcast %108 : vector<1x8x8xi1> to vector<2x8x8xi1>
    %110 = vector.broadcast %cst_36 : f32 to vector<2x8x8xf32>
    %111 = arith.select %109, %107, %110 : vector<2x8x8xi1>, vector<2x8x8xf32>
    %cst_37 = arith.constant dense<0xFF800000> : vector<2x8xf32>
    %112 = vector.multi_reduction <maximumf>, %111, %cst_37 [2] : vector<2x8x8xf32> to vector<2x8xf32>
    %113 = vector.shape_cast %112 : vector<2x8xf32> to vector<2x8x1xf32>
    %114 = vector.broadcast %113 : vector<2x8x1xf32> to vector<2x8x8xf32>
    %115 = arith.subf %111, %114 : vector<2x8x8xf32>
    %116 = math.exp %115 : vector<2x8x8xf32>
    %cst_38 = arith.constant dense<0.000000e+00> : vector<2x8xf32>
    %117 = vector.multi_reduction <add>, %116, %cst_38 [2] : vector<2x8x8xf32> to vector<2x8xf32>
    %118 = vector.shape_cast %117 : vector<2x8xf32> to vector<2x8x1xf32>
    %cst_39 = arith.constant 1.000000e+00 : f32
    %119 = vector.broadcast %cst_39 : f32 to vector<2x8x1xf32>
    %120 = arith.divf %119, %118 : vector<2x8x1xf32>
    %121 = vector.broadcast %120 : vector<2x8x1xf32> to vector<2x8x8xf32>
    %122 = arith.mulf %116, %121 : vector<2x8x8xf32>
    "tpu.trace_start"() <{level = 10 : i32, message = "bqk,bkd->bqd"}> : () -> ()
    %cst_40 = arith.constant dense<0.000000e+00> : vector<2x8x64xf32>
    %123 = tpu.matmul %122, %104, %cst_40 {dimension_numbers = #tpu.dot_dimension_numbers<[2], [1], [1], [2], [0, 0, 0, 1, 1, 2], [0], [0]>} : vector<2x8x8xf32>, vector<2x8x64xf32>, vector<2x8x64xf32> -> vector<2x8x64xf32>
    "tpu.trace_stop"() : () -> ()
    %124 = vector.extract_strided_slice %27 {offsets = [0, 0, 256], sizes = [2, 8, 64], strides = [1, 1, 1]} : vector<2x8x384xf32> to vector<2x8x64xf32>
    %125 = vector.extract_strided_slice %29 {offsets = [0, 0, 256], sizes = [2, 8, 64], strides = [1, 1, 1]} : vector<2x8x384xf32> to vector<2x8x64xf32>
    %126 = vector.extract_strided_slice %31 {offsets = [0, 0, 256], sizes = [2, 8, 64], strides = [1, 1, 1]} : vector<2x8x384xf32> to vector<2x8x64xf32>
    "tpu.trace_start"() <{level = 10 : i32, message = "bqd,bkd->bqk"}> : () -> ()
    %cst_41 = arith.constant dense<0.000000e+00> : vector<2x8x8xf32>
    %127 = tpu.matmul %124, %125, %cst_41 {dimension_numbers = #tpu.dot_dimension_numbers<[2], [2], [1], [1], [0, 0, 0, 1, 1, 1], [0], [0]>} : vector<2x8x64xf32>, vector<2x8x64xf32>, vector<2x8x8xf32> -> vector<2x8x8xf32>
    "tpu.trace_stop"() : () -> ()
    %cst_42 = arith.constant 0.0510310382 : f32
    %128 = vector.broadcast %cst_42 : f32 to vector<2x8x8xf32>
    %129 = arith.mulf %127, %128 : vector<2x8x8xf32>
    %cst_43 = arith.constant 0xFF800000 : f32
    %130 = vector.shape_cast %35 : vector<1x8x8xi1> to vector<1x8x8xi1>
    %131 = vector.broadcast %130 : vector<1x8x8xi1> to vector<2x8x8xi1>
    %132 = vector.broadcast %cst_43 : f32 to vector<2x8x8xf32>
    %133 = arith.select %131, %129, %132 : vector<2x8x8xi1>, vector<2x8x8xf32>
    %cst_44 = arith.constant dense<0xFF800000> : vector<2x8xf32>
    %134 = vector.multi_reduction <maximumf>, %133, %cst_44 [2] : vector<2x8x8xf32> to vector<2x8xf32>
    %135 = vector.shape_cast %134 : vector<2x8xf32> to vector<2x8x1xf32>
    %136 = vector.broadcast %135 : vector<2x8x1xf32> to vector<2x8x8xf32>
    %137 = arith.subf %133, %136 : vector<2x8x8xf32>
    %138 = math.exp %137 : vector<2x8x8xf32>
    %cst_45 = arith.constant dense<0.000000e+00> : vector<2x8xf32>
    %139 = vector.multi_reduction <add>, %138, %cst_45 [2] : vector<2x8x8xf32> to vector<2x8xf32>
    %140 = vector.shape_cast %139 : vector<2x8xf32> to vector<2x8x1xf32>
    %cst_46 = arith.constant 1.000000e+00 : f32
    %141 = vector.broadcast %cst_46 : f32 to vector<2x8x1xf32>
    %142 = arith.divf %141, %140 : vector<2x8x1xf32>
    %143 = vector.broadcast %142 : vector<2x8x1xf32> to vector<2x8x8xf32>
    %144 = arith.mulf %138, %143 : vector<2x8x8xf32>
    "tpu.trace_start"() <{level = 10 : i32, message = "bqk,bkd->bqd"}> : () -> ()
    %cst_47 = arith.constant dense<0.000000e+00> : vector<2x8x64xf32>
    %145 = tpu.matmul %144, %126, %cst_47 {dimension_numbers = #tpu.dot_dimension_numbers<[2], [1], [1], [2], [0, 0, 0, 1, 1, 2], [0], [0]>} : vector<2x8x8xf32>, vector<2x8x64xf32>, vector<2x8x64xf32> -> vector<2x8x64xf32>
    "tpu.trace_stop"() : () -> ()
    %146 = vector.extract_strided_slice %27 {offsets = [0, 0, 320], sizes = [2, 8, 64], strides = [1, 1, 1]} : vector<2x8x384xf32> to vector<2x8x64xf32>
    %147 = vector.extract_strided_slice %29 {offsets = [0, 0, 320], sizes = [2, 8, 64], strides = [1, 1, 1]} : vector<2x8x384xf32> to vector<2x8x64xf32>
    %148 = vector.extract_strided_slice %31 {offsets = [0, 0, 320], sizes = [2, 8, 64], strides = [1, 1, 1]} : vector<2x8x384xf32> to vector<2x8x64xf32>
    "tpu.trace_start"() <{level = 10 : i32, message = "bqd,bkd->bqk"}> : () -> ()
    %cst_48 = arith.constant dense<0.000000e+00> : vector<2x8x8xf32>
    %149 = tpu.matmul %146, %147, %cst_48 {dimension_numbers = #tpu.dot_dimension_numbers<[2], [2], [1], [1], [0, 0, 0, 1, 1, 1], [0], [0]>} : vector<2x8x64xf32>, vector<2x8x64xf32>, vector<2x8x8xf32> -> vector<2x8x8xf32>
    "tpu.trace_stop"() : () -> ()
    %cst_49 = arith.constant 0.0510310382 : f32
    %150 = vector.broadcast %cst_49 : f32 to vector<2x8x8xf32>
    %151 = arith.mulf %149, %150 : vector<2x8x8xf32>
    %cst_50 = arith.constant 0xFF800000 : f32
    %152 = vector.shape_cast %35 : vector<1x8x8xi1> to vector<1x8x8xi1>
    %153 = vector.broadcast %152 : vector<1x8x8xi1> to vector<2x8x8xi1>
    %154 = vector.broadcast %cst_50 : f32 to vector<2x8x8xf32>
    %155 = arith.select %153, %151, %154 : vector<2x8x8xi1>, vector<2x8x8xf32>
    %cst_51 = arith.constant dense<0xFF800000> : vector<2x8xf32>
    %156 = vector.multi_reduction <maximumf>, %155, %cst_51 [2] : vector<2x8x8xf32> to vector<2x8xf32>
    %157 = vector.shape_cast %156 : vector<2x8xf32> to vector<2x8x1xf32>
    %158 = vector.broadcast %157 : vector<2x8x1xf32> to vector<2x8x8xf32>
    %159 = arith.subf %155, %158 : vector<2x8x8xf32>
    %160 = math.exp %159 : vector<2x8x8xf32>
    %cst_52 = arith.constant dense<0.000000e+00> : vector<2x8xf32>
    %161 = vector.multi_reduction <add>, %160, %cst_52 [2] : vector<2x8x8xf32> to vector<2x8xf32>
    %162 = vector.shape_cast %161 : vector<2x8xf32> to vector<2x8x1xf32>
    %cst_53 = arith.constant 1.000000e+00 : f32
    %163 = vector.broadcast %cst_53 : f32 to vector<2x8x1xf32>
    %164 = arith.divf %163, %162 : vector<2x8x1xf32>
    %165 = vector.broadcast %164 : vector<2x8x1xf32> to vector<2x8x8xf32>
    %166 = arith.mulf %160, %165 : vector<2x8x8xf32>
    "tpu.trace_start"() <{level = 10 : i32, message = "bqk,bkd->bqd"}> : () -> ()
    %cst_54 = arith.constant dense<0.000000e+00> : vector<2x8x64xf32>
    %167 = tpu.matmul %166, %148, %cst_54 {dimension_numbers = #tpu.dot_dimension_numbers<[2], [1], [1], [2], [0, 0, 0, 1, 1, 2], [0], [0]>} : vector<2x8x8xf32>, vector<2x8x64xf32>, vector<2x8x64xf32> -> vector<2x8x64xf32>
    "tpu.trace_stop"() : () -> ()
    %168 = tpu.concatenate %57, %79, %101, %123, %145, %167 in 2 : vector<2x8x64xf32>, vector<2x8x64xf32>, vector<2x8x64xf32>, vector<2x8x64xf32>, vector<2x8x64xf32>, vector<2x8x64xf32> -> vector<2x8x384xf32>
    %169 = vector.shape_cast %168 : vector<2x8x384xf32> to vector<16x384xf32>
    %c0_55 = arith.constant 0 : index
    %c0_56 = arith.constant 0 : index
    %170 = vector.load %arg6[%c0_55, %c0_56] : memref<384x384xf32, #tpu.memory_space<vmem>>, vector<384x384xf32>
    %cst_57 = arith.constant dense<0.000000e+00> : vector<16x384xf32>
    %171 = tpu.matmul %169, %170, %cst_57 {dimension_numbers = #tpu.dot_dimension_numbers<[1], [0], [0], [1], [0, 0, 1, 1], [], []>} : vector<16x384xf32>, vector<384x384xf32>, vector<16x384xf32> -> vector<16x384xf32>
    %c0_58 = arith.constant 0 : index
    %c0_59 = arith.constant 0 : index
    %172 = vector.load %arg7[%c0_58, %c0_59] : memref<1x384xf32, #tpu.memory_space<vmem>>, vector<1x384xf32>
    %173 = vector.broadcast %172 : vector<1x384xf32> to vector<16x384xf32>
    %174 = arith.addf %171, %173 : vector<16x384xf32>
    %175 = arith.addf %1, %174 : vector<16x384xf32>
    %c0_60 = arith.constant 0 : index
    %c0_61 = arith.constant 0 : index
    %176 = vector.load %arg8[%c0_60, %c0_61] : memref<1x384xf32, #tpu.memory_space<vmem>>, vector<1x384xf32>
    %c0_62 = arith.constant 0 : index
    %c0_63 = arith.constant 0 : index
    %177 = vector.load %arg9[%c0_62, %c0_63] : memref<1x384xf32, #tpu.memory_space<vmem>>, vector<1x384xf32>
    %cst_64 = arith.constant dense<0.000000e+00> : vector<16xf32>
    %178 = vector.multi_reduction <add>, %175, %cst_64 [1] : vector<16x384xf32> to vector<16xf32>
    %179 = vector.shape_cast %178 : vector<16xf32> to vector<16x1xf32>
    %cst_65 = arith.constant 3.840000e+02 : f32
    %180 = vector.broadcast %cst_65 : f32 to vector<16x1xf32>
    %181 = arith.divf %179, %180 : vector<16x1xf32>
    %182 = vector.broadcast %181 : vector<16x1xf32> to vector<16x384xf32>
    %183 = arith.subf %175, %182 : vector<16x384xf32>
    %184 = arith.mulf %183, %183 : vector<16x384xf32>
    %cst_66 = arith.constant dense<0.000000e+00> : vector<16xf32>
    %185 = vector.multi_reduction <add>, %184, %cst_66 [1] : vector<16x384xf32> to vector<16xf32>
    %186 = vector.shape_cast %185 : vector<16xf32> to vector<16x1xf32>
    %cst_67 = arith.constant 3.840000e+02 : f32
    %187 = vector.broadcast %cst_67 : f32 to vector<16x1xf32>
    %188 = arith.divf %186, %187 : vector<16x1xf32>
    %cst_68 = arith.constant 9.99999974E-6 : f32
    %189 = vector.broadcast %cst_68 : f32 to vector<16x1xf32>
    %190 = arith.addf %188, %189 : vector<16x1xf32>
    %191 = math.rsqrt %190 : vector<16x1xf32>
    %192 = vector.broadcast %191 : vector<16x1xf32> to vector<16x384xf32>
    %193 = arith.mulf %183, %192 : vector<16x384xf32>
    %194 = vector.broadcast %176 : vector<1x384xf32> to vector<16x384xf32>
    %195 = arith.mulf %193, %194 : vector<16x384xf32>
    %196 = vector.broadcast %177 : vector<1x384xf32> to vector<16x384xf32>
    %197 = arith.addf %195, %196 : vector<16x384xf32>
    %c0_69 = arith.constant 0 : index
    %c0_70 = arith.constant 0 : index
    %198 = vector.load %arg10[%c0_69, %c0_70] : memref<384x1536xf32, #tpu.memory_space<vmem>>, vector<384x1536xf32>
    %cst_71 = arith.constant dense<0.000000e+00> : vector<16x1536xf32>
    %199 = tpu.matmul %197, %198, %cst_71 {dimension_numbers = #tpu.dot_dimension_numbers<[1], [0], [0], [1], [0, 0, 1, 1], [], []>} : vector<16x384xf32>, vector<384x1536xf32>, vector<16x1536xf32> -> vector<16x1536xf32>
    %c0_72 = arith.constant 0 : index
    %c0_73 = arith.constant 0 : index
    %200 = vector.load %arg11[%c0_72, %c0_73] : memref<1x1536xf32, #tpu.memory_space<vmem>>, vector<1x1536xf32>
    %201 = vector.broadcast %200 : vector<1x1536xf32> to vector<16x1536xf32>
    %202 = arith.addf %199, %201 : vector<16x1536xf32>
    %cst_74 = arith.constant 0.000000e+00 : f32
    %203 = vector.broadcast %cst_74 : f32 to vector<16x1536xf32>
    %204 = arith.maximumf %202, %203 : vector<16x1536xf32>
    %c0_75 = arith.constant 0 : index
    %c0_76 = arith.constant 0 : index
    %205 = vector.load %arg12[%c0_75, %c0_76] : memref<1536x384xf32, #tpu.memory_space<vmem>>, vector<1536x384xf32>
    %cst_77 = arith.constant dense<0.000000e+00> : vector<16x384xf32>
    %206 = tpu.matmul %204, %205, %cst_77 {dimension_numbers = #tpu.dot_dimension_numbers<[1], [0], [0], [1], [0, 0, 1, 1], [], []>} : vector<16x1536xf32>, vector<1536x384xf32>, vector<16x384xf32> -> vector<16x384xf32>
    %c0_78 = arith.constant 0 : index
    %c0_79 = arith.constant 0 : index
    %207 = vector.load %arg13[%c0_78, %c0_79] : memref<1x384xf32, #tpu.memory_space<vmem>>, vector<1x384xf32>
    %208 = vector.broadcast %207 : vector<1x384xf32> to vector<16x384xf32>
    %209 = arith.addf %206, %208 : vector<16x384xf32>
    %210 = arith.addf %175, %209 : vector<16x384xf32>
    %211 = vector.shape_cast %210 : vector<16x384xf32> to vector<2x8x384xf32>
    %c0_80 = arith.constant 0 : index
    %c0_81 = arith.constant 0 : index
    %c0_82 = arith.constant 0 : index
    %212 = vector.load %arg14[%c0_80, %c0_81, %c0_82] : memref<2x8x384xf32, #tpu.memory_space<vmem>>, vector<2x8x384xf32>
    tpu.vector_store %arg14[%c0_80, %c0_81, %c0_82], %211 {strides = array<i32>} : memref<2x8x384xf32, #tpu.memory_space<vmem>>, vector<2x8x384xf32>,
    return
  }
  func.func @transform_0(%arg0: i32, %arg1: memref<1xi32, #tpu.memory_space<smem>>) -> (i32, i32, i32) {
    %c0_i32 = arith.constant 0 : i32
    %c0_i32_0 = arith.constant 0 : i32
    %c0_i32_1 = arith.constant 0 : i32
    return %arg0, %c0_i32, %c0_i32_0 : i32, i32, i32
  }
  func.func @transform_1(%arg0: i32, %arg1: memref<1xi32, #tpu.memory_space<smem>>) -> (i32, i32) {
    %c0_i32 = arith.constant 0 : i32
    %c0_i32_0 = arith.constant 0 : i32
    %c0_i32_1 = arith.constant 0 : i32
    return %c0_i32, %c0_i32_0 : i32, i32
  }
  func.func @transform_2(%arg0: i32, %arg1: memref<1xi32, #tpu.memory_space<smem>>) -> (i32, i32) {
    %c0_i32 = arith.constant 0 : i32
    %c0_i32_0 = arith.constant 0 : i32
    %c0_i32_1 = arith.constant 0 : i32
    return %c0_i32, %c0_i32_0 : i32, i32
  }
  func.func @transform_3(%arg0: i32, %arg1: memref<1xi32, #tpu.memory_space<smem>>) -> (i32, i32) {
    %c0_i32 = arith.constant 0 : i32
    %c0_i32_0 = arith.constant 0 : i32
    %c0_i32_1 = arith.constant 0 : i32
    return %c0_i32, %c0_i32_0 : i32, i32
  }
  func.func @transform_4(%arg0: i32, %arg1: memref<1xi32, #tpu.memory_space<smem>>) -> (i32, i32) {
    %c0_i32 = arith.constant 0 : i32
    %c0_i32_0 = arith.constant 0 : i32
    %c0_i32_1 = arith.constant 0 : i32
    return %c0_i32, %c0_i32_0 : i32, i32
  }
  func.func @transform_5(%arg0: i32, %arg1: memref<1xi32, #tpu.memory_space<smem>>) -> (i32, i32) {
    %c0_i32 = arith.constant 0 : i32
    %c0_i32_0 = arith.constant 0 : i32
    %c0_i32_1 = arith.constant 0 : i32
    return %c0_i32, %c0_i32_0 : i32, i32
  }
  func.func @transform_6(%arg0: i32, %arg1: memref<1xi32, #tpu.memory_space<smem>>) -> (i32, i32) {
    %c0_i32 = arith.constant 0 : i32
    %c0_i32_0 = arith.constant 0 : i32
    %c0_i32_1 = arith.constant 0 : i32
    return %c0_i32, %c0_i32_0 : i32, i32
  }
  func.func @transform_7(%arg0: i32, %arg1: memref<1xi32, #tpu.memory_space<smem>>) -> (i32, i32) {
    %c0_i32 = arith.constant 0 : i32
    %c0_i32_0 = arith.constant 0 : i32
    %c0_i32_1 = arith.constant 0 : i32
    return %c0_i32, %c0_i32_0 : i32, i32
  }
  func.func @transform_8(%arg0: i32, %arg1: memref<1xi32, #tpu.memory_space<smem>>) -> (i32, i32) {
    %c0_i32 = arith.constant 0 : i32
    %c0_i32_0 = arith.constant 0 : i32
    %c0_i32_1 = arith.constant 0 : i32
    return %c0_i32, %c0_i32_0 : i32, i32
  }
  func.func @transform_9(%arg0: i32, %arg1: memref<1xi32, #tpu.memory_space<smem>>) -> (i32, i32) {
    %c0_i32 = arith.constant 0 : i32
    %c0_i32_0 = arith.constant 0 : i32
    %c0_i32_1 = arith.constant 0 : i32
    return %c0_i32, %c0_i32_0 : i32, i32
  }
  func.func @transform_10(%arg0: i32, %arg1: memref<1xi32, #tpu.memory_space<smem>>) -> (i32, i32) {
    %c0_i32 = arith.constant 0 : i32
    %c0_i32_0 = arith.constant 0 : i32
    %c0_i32_1 = arith.constant 0 : i32
    return %c0_i32, %c0_i32_0 : i32, i32
  }
  func.func @transform_11(%arg0: i32, %arg1: memref<1xi32, #tpu.memory_space<smem>>) -> (i32, i32) {
    %c0_i32 = arith.constant 0 : i32
    %c0_i32_0 = arith.constant 0 : i32
    %c0_i32_1 = arith.constant 0 : i32
    return %c0_i32, %c0_i32_0 : i32, i32
  }
  func.func @transform_12(%arg0: i32, %arg1: memref<1xi32, #tpu.memory_space<smem>>) -> (i32, i32, i32) {
    %c0_i32 = arith.constant 0 : i32
    %c0_i32_0 = arith.constant 0 : i32
    %c0_i32_1 = arith.constant 0 : i32
    return %arg0, %c0_i32, %c0_i32_0 : i32, i32, i32
  }
}

</mosaic_0001>

<llo_original>
// kernel: tpu_custom_call.1
$region0: #{tpu_custom_call.1}
  #allocation0 [shape = 'u32[]', space=smem, size = 0x4, offset = 0x4, fixed_abs, tag = 'smem constant byte address 0x4 - core index']
  #allocation1 [shape = 'u32[144,128]{1,0:T(1,128)}', space=vmem, size = 0x12000, scoped, tag = 'internal scratch']
  #allocation2 [shape = 's32[1]{0}', space=sflag, size = 0x4, scoped, tag = 'scoped memory for tpu_custom_call.1']
  #allocation3 [shape = 's32[1]{0:T(128)S(6)}', space=smem, size = 0x200, scoped, tag = 'prefetched SMEM operand 0']
  %s0 = inlined_call_operand.<no memory space> [shape: s32[1], index: 0, kind: input, shape index: {}]
  %s1 = inlined_call_operand.hbm [shape: f32[2,8,384], index: 1, kind: input, shape index: {}]
  %s2 = inlined_call_operand.hbm [shape: f32[1,384], index: 2, kind: input, shape index: {}]
  %s3 = inlined_call_operand.hbm [shape: f32[1,384], index: 3, kind: input, shape index: {}]
  %s4 = inlined_call_operand.hbm [shape: f32[384,1152], index: 4, kind: input, shape index: {}]
  %s5 = inlined_call_operand.hbm [shape: f32[384,384], index: 5, kind: input, shape index: {}]
  %s6 = inlined_call_operand.hbm [shape: f32[1,384], index: 6, kind: input, shape index: {}]
  %s7 = inlined_call_operand.hbm [shape: f32[1,384], index: 7, kind: input, shape index: {}]
  %s8 = inlined_call_operand.hbm [shape: f32[1,384], index: 8, kind: input, shape index: {}]
  %s9 = inlined_call_operand.hbm [shape: f32[384,1536], index: 9, kind: input, shape index: {}]
  %s10 = inlined_call_operand.hbm [shape: f32[1,1536], index: 10, kind: input, shape index: {}]
  %s11 = inlined_call_operand.hbm [shape: f32[1536,384], index: 11, kind: input, shape index: {}]
  %s12 = inlined_call_operand.hbm [shape: f32[1,384], index: 12, kind: input, shape index: {}]
  %s13 = inlined_call_operand.hbm [shape: f32[2,8,384], index: 13, kind: output, shape index: {}]
  %s14 = sld [smem:[#allocation0]]
  $region106: #{tpu_custom_call.1} parent=0
    _
  %s16 = ssub.s32 1, %s14
  %s17 = scalar_select 0, %s16, %s14
  %18 = sst [smem:[#allocation3]] %s0
  $region1: #{tpu_custom_call.1} parent=0
    #allocation4 [shape = 'u8[24576]{0}', space=vmem, size = 0x6000, scoped, tag = 'input window, operand 1, single buffered']
    #allocation5 [shape = 's32[1]{0}', space=sflag, size = 0x4, scoped, tag = 'scoped memory for tpu_custom_call.1']
    #allocation6 [shape = 's32[1]{0}', space=sflag, size = 0x4, scoped, tag = 'scoped memory for tpu_custom_call.1']
    #allocation7 [shape = 'u8[1536]{0}', space=vmem, size = 0x800, scoped, tag = 'input window, operand 2, single buffered']
    #allocation8 [shape = 's32[1]{0}', space=sflag, size = 0x4, scoped, tag = 'scoped memory for tpu_custom_call.1']
    #allocation9 [shape = 'u8[1536]{0}', space=vmem, size = 0x800, scoped, tag = 'input window, operand 3, single buffered']
    #allocation10 [shape = 'u8[1769472]{0}', space=vmem, size = 0x1b0000, scoped, tag = 'input window, operand 4, single buffered']
    #allocation11 [shape = 's32[1]{0}', space=sflag, size = 0x4, scoped, tag = 'scoped memory for tpu_custom_call.1']
    #allocation12 [shape = 'u8[589824]{0}', space=vmem, size = 0x90000, scoped, tag = 'input window, operand 5, single buffered']
    #allocation13 [shape = 'u8[1536]{0}', space=vmem, size = 0x800, scoped, tag = 'input window, operand 6, single buffered']
    #allocation14 [shape = 's32[1]{0}', space=sflag, size = 0x4, scoped, tag = 'scoped memory for tpu_custom_call.1']
    #allocation15 [shape = 'u8[1536]{0}', space=vmem, size = 0x800, scoped, tag = 'input window, operand 7, single buffered']
    #allocation16 [shape = 'u8[1536]{0}', space=vmem, size = 0x800, scoped, tag = 'input window, operand 8, single buffered']
    #allocation17 [shape = 's32[1]{0}', space=sflag, size = 0x4, scoped, tag = 'scoped memory for tpu_custom_call.1']
    #allocation18 [shape = 'u8[2359296]{0}', space=vmem, size = 0x240000, scoped, tag = 'input window, operand 9, single buffered']
    #allocation19 [shape = 'u8[6144]{0}', space=vmem, size = 0x1800, scoped, tag = 'input window, operand 10, single buffered']
    #allocation20 [shape = 's32[1]{0}', space=sflag, size = 0x4, scoped, tag = 'scoped memory for tpu_custom_call.1']
    #allocation21 [shape = 'u8[2359296]{0}', space=vmem, size = 0x240000, scoped, tag = 'input window, operand 11, single buffered']
    #allocation22 [shape = 'u8[1536]{0}', space=vmem, size = 0x800, scoped, tag = 'input window, operand 12, single buffered']
    #allocation23 [shape = 's32[1]{0}', space=sflag, size = 0x4, scoped, tag = 'scoped memory for tpu_custom_call.1']
    #allocation24 [shape = 'u8[24576]{0}', space=vmem, size = 0x6000, scoped, tag = 'output window, operand 0, single buffered']
    %19 = vsyncpa [#allocation5], 0
    %20 = vsyncpa [#allocation8], 0
    %21 = vsyncpa [#allocation11], 0
    %22 = vsyncpa [#allocation14], 0
    %23 = vsyncpa [#allocation17], 0
    %24 = vsyncpa [#allocation20], 0
    %25 = vsyncpa [#allocation23], 0
    %26 = vsyncpa [#allocation6], 0
    // Predicated region
    $region2: #{tpu_custom_call.1} parent=1 // pred_check
      _
    $region3: #{tpu_custom_call.1} parent=1 // pred_check_branch
      %28 = sbr.rel (0) target = $region5
    $region4: #{tpu_custom_call.1} parent=1 // pred_region
      %s30 = ssub.s32 768, 768
      %31 = vsyncadd [#allocation5], %s30
      %s32 = sshll.u32 [#allocation4], 4
      %s33 = int_to_ptr.vmem [resolvable:$true] %s32
      %38 = dma.hbm_to_vmem [thread:$0]  %s1, 768, %s33, [#allocation5], 384, 384, 24
    $region5: #{tpu_custom_call.1} parent=1 // pred_fallthru
      _
    // Predicated region
    $region6: #{tpu_custom_call.1} parent=1 // pred_check
      _
    $region7: #{tpu_custom_call.1} parent=1 // pred_check_branch
      %40 = sbr.rel (0) target = $region9
    $region8: #{tpu_custom_call.1} parent=1 // pred_region
      %s42 = ssub.s32 48, 48
      %43 = vsyncadd [#allocation8], %s42
      %s45 = sshll.u32 [#allocation7], 4
      %s46 = int_to_ptr.vmem [resolvable:$true] %s45
      %48 = dma.hbm_to_vmem [thread:$0]  %s2, 48, %s46, [#allocation8]
    $region9: #{tpu_custom_call.1} parent=1 // pred_fallthru
      _
    // Predicated region
    $region10: #{tpu_custom_call.1} parent=1 // pred_check
      _
    $region11: #{tpu_custom_call.1} parent=1 // pred_check_branch
      %50 = sbr.rel (0) target = $region13
    $region12: #{tpu_custom_call.1} parent=1 // pred_region
      %s52 = ssub.s32 48, 48
      %53 = vsyncadd [#allocation8], %s52
      %s55 = sshll.u32 [#allocation9], 4
      %s56 = int_to_ptr.vmem [resolvable:$true] %s55
      %58 = dma.hbm_to_vmem [thread:$0]  %s3, 48, %s56, [#allocation8]
    $region13: #{tpu_custom_call.1} parent=1 // pred_fallthru
      _
    // Predicated region
    $region14: #{tpu_custom_call.1} parent=1 // pred_check
      _
    $region15: #{tpu_custom_call.1} parent=1 // pred_check_branch
      %60 = sbr.rel (0) target = $region17
    $region16: #{tpu_custom_call.1} parent=1 // pred_region
      %s62 = ssub.s32 55296, 55296
      %63 = vsyncadd [#allocation11], %s62
      %s64 = sshll.u32 [#allocation10], 4
      %s65 = int_to_ptr.vmem [resolvable:$true] %s64
      %70 = dma.hbm_to_vmem [thread:$0]  %s4, 55296, %s65, [#allocation11], 1152, 1152, 72
    $region17: #{tpu_custom_call.1} parent=1 // pred_fallthru
      _
    // Predicated region
    $region18: #{tpu_custom_call.1} parent=1 // pred_check
      _
    $region19: #{tpu_custom_call.1} parent=1 // pred_check_branch
      %72 = sbr.rel (0) target = $region21
    $region20: #{tpu_custom_call.1} parent=1 // pred_region
      %s74 = ssub.s32 18432, 18432
      %75 = vsyncadd [#allocation11], %s74
      %s76 = sshll.u32 [#allocation12], 4
      %s77 = int_to_ptr.vmem [resolvable:$true] %s76
      %82 = dma.hbm_to_vmem [thread:$0]  %s5, 18432, %s77, [#allocation11], 384, 384, 24
    $region21: #{tpu_custom_call.1} parent=1 // pred_fallthru
      _
    // Predicated region
    $region22: #{tpu_custom_call.1} parent=1 // pred_check
      _
    $region23: #{tpu_custom_call.1} parent=1 // pred_check_branch
      %84 = sbr.rel (0) target = $region25
    $region24: #{tpu_custom_call.1} parent=1 // pred_region
      %s86 = ssub.s32 48, 48
      %87 = vsyncadd [#allocation14], %s86
      %s89 = sshll.u32 [#allocation13], 4
      %s90 = int_to_ptr.vmem [resolvable:$true] %s89
      %92 = dma.hbm_to_vmem [thread:$0]  %s6, 48, %s90, [#allocation14]
    $region25: #{tpu_custom_call.1} parent=1 // pred_fallthru
      _
    // Predicated region
    $region26: #{tpu_custom_call.1} parent=1 // pred_check
      _
    $region27: #{tpu_custom_call.1} parent=1 // pred_check_branch
      %94 = sbr.rel (0) target = $region29
    $region28: #{tpu_custom_call.1} parent=1 // pred_region
      %s96 = ssub.s32 48, 48
      %97 = vsyncadd [#allocation14], %s96
      %s99 = sshll.u32 [#allocation15], 4
      %s100 = int_to_ptr.vmem [resolvable:$true] %s99
      %102 = dma.hbm_to_vmem [thread:$0]  %s7, 48, %s100, [#allocation14]
    $region29: #{tpu_custom_call.1} parent=1 // pred_fallthru
      _
    // Predicated region
    $region30: #{tpu_custom_call.1} parent=1 // pred_check
      _
    $region31: #{tpu_custom_call.1} parent=1 // pred_check_branch
      %104 = sbr.rel (0) target = $region33
    $region32: #{tpu_custom_call.1} parent=1 // pred_region
      %s106 = ssub.s32 48, 48
      %107 = vsyncadd [#allocation17], %s106
      %s109 = sshll.u32 [#allocation16], 4
      %s110 = int_to_ptr.vmem [resolvable:$true] %s109
      %112 = dma.hbm_to_vmem [thread:$0]  %s8, 48, %s110, [#allocation17]
    $region33: #{tpu_custom_call.1} parent=1 // pred_fallthru
      _
    // Predicated region
    $region34: #{tpu_custom_call.1} parent=1 // pred_check
      _
    $region35: #{tpu_custom_call.1} parent=1 // pred_check_branch
      %114 = sbr.rel (0) target = $region37
    $region36: #{tpu_custom_call.1} parent=1 // pred_region
      %s116 = ssub.s32 73728, 73728
      %117 = vsyncadd [#allocation17], %s116
      %s118 = sshll.u32 [#allocation18], 4
      %s119 = int_to_ptr.vmem [resolvable:$true] %s118
      %124 = dma.hbm_to_vmem [thread:$0]  %s9, 73728, %s119, [#allocation17], 1536, 1536, 96
    $region37: #{tpu_custom_call.1} parent=1 // pred_fallthru
      _
    // Predicated region
    $region38: #{tpu_custom_call.1} parent=1 // pred_check
      _
    $region39: #{tpu_custom_call.1} parent=1 // pred_check_branch
      %126 = sbr.rel (0) target = $region41
    $region40: #{tpu_custom_call.1} parent=1 // pred_region
      %s128 = ssub.s32 192, 192
      %129 = vsyncadd [#allocation20], %s128
      %s131 = sshll.u32 [#allocation19], 4
      %s132 = int_to_ptr.vmem [resolvable:$true] %s131
      %134 = dma.hbm_to_vmem [thread:$0]  %s10, 192, %s132, [#allocation20]
    $region41: #{tpu_custom_call.1} parent=1 // pred_fallthru
      _
    // Predicated region
    $region42: #{tpu_custom_call.1} parent=1 // pred_check
      _
    $region43: #{tpu_custom_call.1} parent=1 // pred_check_branch
      %136 = sbr.rel (0) target = $region45
    $region44: #{tpu_custom_call.1} parent=1 // pred_region
      %s138 = ssub.s32 73728, 73728
      %139 = vsyncadd [#allocation20], %s138
      %s140 = sshll.u32 [#allocation21], 4
      %s141 = int_to_ptr.vmem [resolvable:$true] %s140
      %146 = dma.hbm_to_vmem [thread:$0]  %s11, 73728, %s141, [#allocation20], 384, 384, 24
    $region45: #{tpu_custom_call.1} parent=1 // pred_fallthru
      _
    // Predicated region
    $region46: #{tpu_custom_call.1} parent=1 // pred_check
      _
    $region47: #{tpu_custom_call.1} parent=1 // pred_check_branch
      %148 = sbr.rel (0) target = $region49
    $region48: #{tpu_custom_call.1} parent=1 // pred_region
      %s150 = ssub.s32 48, 48
      %151 = vsyncadd [#allocation23], %s150
      %s153 = sshll.u32 [#allocation22], 4
      %s154 = int_to_ptr.vmem [resolvable:$true] %s153
      %156 = dma.hbm_to_vmem [thread:$0]  %s12, 48, %s154, [#allocation23]
    $region49: #{tpu_custom_call.1} parent=1 // pred_fallthru
      _
    // Predicated region
    $region50: #{tpu_custom_call.1} parent=1 // pred_check
      _
    $region51: #{tpu_custom_call.1} parent=1 // pred_check_branch
      %158 = sbr.rel (0) target = $region53
    $region52: #{tpu_custom_call.1} parent=1 // pred_region
      %159 = dma.done [#allocation5], 768
    $region53: #{tpu_custom_call.1} parent=1 // pred_fallthru
      _
    // Predicated region
    $region54: #{tpu_custom_call.1} parent=1 // pred_check
      _
    $region55: #{tpu_custom_call.1} parent=1 // pred_check_branch
      %161 = sbr.rel (0) target = $region57
    $region56: #{tpu_custom_call.1} parent=1 // pred_region
      %162 = dma.done [#allocation8], 48
    $region57: #{tpu_custom_call.1} parent=1 // pred_fallthru
      _
    // Predicated region
    $region58: #{tpu_custom_call.1} parent=1 // pred_check
      _
    $region59: #{tpu_custom_call.1} parent=1 // pred_check_branch
      %164 = sbr.rel (0) target = $region61
    $region60: #{tpu_custom_call.1} parent=1 // pred_region
      %165 = dma.done [#allocation8], 48
    $region61: #{tpu_custom_call.1} parent=1 // pred_fallthru
      _
    // Predicated region
    $region62: #{tpu_custom_call.1} parent=1 // pred_check
      _
    $region63: #{tpu_custom_call.1} parent=1 // pred_check_branch
      %167 = sbr.rel (0) target = $region65
    $region64: #{tpu_custom_call.1} parent=1 // pred_region
      %168 = dma.done [#allocation11], 55296
    $region65: #{tpu_custom_call.1} parent=1 // pred_fallthru
      _
    // Predicated region
    $region66: #{tpu_custom_call.1} parent=1 // pred_check
      _
    $region67: #{tpu_custom_call.1} parent=1 // pred_check_branch
      %170 = sbr.rel (0) target = $region69
    $region68: #{tpu_custom_call.1} parent=1 // pred_region
      %171 = dma.done [#allocation11], 18432
    $region69: #{tpu_custom_call.1} parent=1 // pred_fallthru
      _
    // Predicated region
    $region70: #{tpu_custom_call.1} parent=1 // pred_check
      _
    $region71: #{tpu_custom_call.1} parent=1 // pred_check_branch
      %173 = sbr.rel (0) target = $region73
    $region72: #{tpu_custom_call.1} parent=1 // pred_region
      %174 = dma.done [#allocation14], 48
    $region73: #{tpu_custom_call.1} parent=1 // pred_fallthru
      _
    // Predicated region
    $region74: #{tpu_custom_call.1} parent=1 // pred_check
      _
    $region75: #{tpu_custom_call.1} parent=1 // pred_check_branch
      %176 = sbr.rel (0) target = $region77
    $region76: #{tpu_custom_call.1} parent=1 // pred_region
      %177 = dma.done [#allocation14], 48
    $region77: #{tpu_custom_call.1} parent=1 // pred_fallthru
      _
    // Predicated region
    $region78: #{tpu_custom_call.1} parent=1 // pred_check
      _
    $region79: #{tpu_custom_call.1} parent=1 // pred_check_branch
      %179 = sbr.rel (0) target = $region81
    $region80: #{tpu_custom_call.1} parent=1 // pred_region
      %180 = dma.done [#allocation17], 48
    $region81: #{tpu_custom_call.1} parent=1 // pred_fallthru
      _
    // Predicated region
    $region82: #{tpu_custom_call.1} parent=1 // pred_check
      _
    $region83: #{tpu_custom_call.1} parent=1 // pred_check_branch
      %182 = sbr.rel (0) target = $region85
    $region84: #{tpu_custom_call.1} parent=1 // pred_region
      %183 = dma.done [#allocation17], 73728
    $region85: #{tpu_custom_call.1} parent=1 // pred_fallthru
      _
    // Predicated region
    $region86: #{tpu_custom_call.1} parent=1 // pred_check
      _
    $region87: #{tpu_custom_call.1} parent=1 // pred_check_branch
      %185 = sbr.rel (0) target = $region89
    $region88: #{tpu_custom_call.1} parent=1 // pred_region
      %186 = dma.done [#allocation20], 192
    $region89: #{tpu_custom_call.1} parent=1 // pred_fallthru
      _
    // Predicated region
    $region90: #{tpu_custom_call.1} parent=1 // pred_check
      _
    $region91: #{tpu_custom_call.1} parent=1 // pred_check_branch
      %188 = sbr.rel (0) target = $region93
    $region92: #{tpu_custom_call.1} parent=1 // pred_region
      %189 = dma.done [#allocation20], 73728
    $region93: #{tpu_custom_call.1} parent=1 // pred_fallthru
      _
    // Predicated region
    $region94: #{tpu_custom_call.1} parent=1 // pred_check
      _
    $region95: #{tpu_custom_call.1} parent=1 // pred_check_branch
      %191 = sbr.rel (0) target = $region97
    $region96: #{tpu_custom_call.1} parent=1 // pred_region
      %192 = dma.done [#allocation23], 48
    $region97: #{tpu_custom_call.1} parent=1 // pred_fallthru
      _
    %v193 = vld [vmem:[#allocation4] sm:$0xff]
    %v194 = vld [vmem:[#allocation4 + $0x8] sm:$0xff]
    %v195 = vld [vmem:[#allocation4 + $0x10] sm:$0xff]
    %v196 = vld [vmem:[#allocation4 + $0x18] sm:$0xff]
    %v197 = vld [vmem:[#allocation4 + $0x20] sm:$0xff]
    %v198 = vld [vmem:[#allocation4 + $0x28] sm:$0xff]
    %v199 = vld [vmem:[#allocation7] sm:$0x7]
    %v200 = vld [vmem:[#allocation9] sm:$0x7]
    %v201 = vadd.f32 %v193, %v194
    %v202 = vadd.f32 %v201, %v195
    %203 = vadd.xlane.f32.xlu0 %v202
    %v204 = vpop.xlane.xlu0 %203
    %v205 = vadd.f32 %v196, %v197
    %v206 = vadd.f32 %v205, %v198
    %207 = vadd.xlane.f32.xlu0 %v206
    %v208 = vpop.xlane.xlu0 %207
    %v209 = vrcp.pop 384.0
    %v210 = vmul.f32 %v204, %v209
    %v211 = vmul.f32 %v208, %v209
    %v212 = vsub.f32 %v193, %v210
    %v213 = vsub.f32 %v194, %v210
    %v214 = vsub.f32 %v195, %v210
    %v215 = vsub.f32 %v196, %v211
    %v216 = vsub.f32 %v197, %v211
    %v217 = vsub.f32 %v198, %v211
    %v218 = vmul.f32 %v212, %v212
    %v219 = vmul.f32 %v213, %v213
    %v220 = vmul.f32 %v214, %v214
    %v221 = vmul.f32 %v215, %v215
    %v222 = vmul.f32 %v216, %v216
    %v223 = vmul.f32 %v217, %v217
    %v224 = vadd.f32 %v218, %v219
    %v225 = vadd.f32 %v224, %v220
    %226 = vadd.xlane.f32.xlu0 %v225
    %v227 = vpop.xlane.xlu0 %226
    %v228 = vadd.f32 %v221, %v222
    %v229 = vadd.f32 %v228, %v223
    %230 = vadd.xlane.f32.xlu0 %v229
    %v231 = vpop.xlane.xlu0 %230
    %v232 = vmul.f32 %v227, %v209
    %v233 = vmul.f32 %v231, %v209
    %v234 = vadd.f32 %v232, 1e-05
    %v235 = vadd.f32 %v233, 1e-05
    %v236 = vrsqrt.pop %v234
    %v237 = vrsqrt.pop %v235
    %v238 = vmul.f32 %v212, %v236
    %v239 = vmul.f32 %v213, %v236
    %v240 = vmul.f32 %v214, %v236
    %v241 = vmul.f32 %v215, %v237
    %v242 = vmul.f32 %v216, %v237
    %v243 = vmul.f32 %v217, %v237
    %v245 = vlaneseq
    %v246 = vshrl.u32 %v245, 7
    %v247 = vsub.s32 0, %v246
    %v248 = vrot.slane %v199, %v247
    %v249 = vlaneseq
    %v250 = vshrl.u32 %v249, 7
    %v251 = vsub.s32 1, %v250
    %v252 = vrot.slane %v199, %v251
    %v253 = vlaneseq
    %v254 = vshrl.u32 %v253, 7
    %v255 = vsub.s32 2, %v254
    %v256 = vrot.slane %v199, %v255
    %v260 = vmul.f32 %v238, %v248
    %v261 = vmul.f32 %v239, %v252
    %v262 = vmul.f32 %v240, %v256
    %v263 = vmul.f32 %v241, %v248
    %v264 = vmul.f32 %v242, %v252
    %v265 = vmul.f32 %v243, %v256
    %v267 = vlaneseq
    %v268 = vshrl.u32 %v267, 7
    %v269 = vsub.s32 0, %v268
    %v270 = vrot.slane %v200, %v269
    %v271 = vlaneseq
    %v272 = vshrl.u32 %v271, 7
    %v273 = vsub.s32 1, %v272
    %v274 = vrot.slane %v200, %v273
    %v275 = vlaneseq
    %v276 = vshrl.u32 %v275, 7
    %v277 = vsub.s32 2, %v276
    %v278 = vrot.slane %v200, %v277
    %v282 = vadd.f32 %v260, %v270
    %v283 = vadd.f32 %v261, %v274
    %v284 = vadd.f32 %v262, %v278
    %v285 = vadd.f32 %v263, %v270
    %v286 = vadd.f32 %v264, %v274
    %v287 = vadd.f32 %v265, %v278
    %v288 = vld [vmem:[#allocation10] sm:$0xff]
    %v289 = vld [vmem:[#allocation10 + $0x8] sm:$0xff]
    %v290 = vld [vmem:[#allocation10 + $0x10] sm:$0xff]
    %v291 = vld [vmem:[#allocation10 + $0x18] sm:$0xff]
    %v292 = vld [vmem:[#allocation10 + $0x20] sm:$0xff]
    %v293 = vld [vmem:[#allocation10 + $0x28] sm:$0xff]
    %v294 = vld [vmem:[#allocation10 + $0x30] sm:$0xff]
    %v295 = vld [vmem:[#allocation10 + $0x38] sm:$0xff]
    %v296 = vld [vmem:[#allocation10 + $0x40] sm:$0xff]
    %v297 = vld [vmem:[#allocation10 + $0x48] sm:$0xff]
    %v298 = vld [vmem:[#allocation10 + $0x50] sm:$0xff]
    %v299 = vld [vmem:[#allocation10 + $0x58] sm:$0xff]
    %v300 = vld [vmem:[#allocation10 + $0x60] sm:$0xff]
    %v301 = vld [vmem:[#allocation10 + $0x68] sm:$0xff]
    %v302 = vld [vmem:[#allocation10 + $0x70] sm:$0xff]
    %v303 = vld [vmem:[#allocation10 + $0x78] sm:$0xff]
    %v304 = vld [vmem:[#allocation10 + $0x80] sm:$0xff]
    %v305 = vld [vmem:[#allocation10 + $0x88] sm:$0xff]
    %v306 = vld [vmem:[#allocation10 + $0x90] sm:$0xff]
    %v307 = vld [vmem:[#allocation10 + $0x98] sm:$0xff]
    %v308 = vld [vmem:[#allocation10 + $0xa0] sm:$0xff]
    %v309 = vld [vmem:[#allocation10 + $0xa8] sm:$0xff]
    %v310 = vld [vmem:[#allocation10 + $0xb0] sm:$0xff]
    %v311 = vld [vmem:[#allocation10 + $0xb8] sm:$0xff]
    %v312 = vld [vmem:[#allocation10 + $0xc0] sm:$0xff]
    %v313 = vld [vmem:[#allocation10 + $0xc8] sm:$0xff]
    %v314 = vld [vmem:[#allocation10 + $0xd0] sm:$0xff]
    %v315 = vld [vmem:[#allocation10 + $0xd8] sm:$0xff]
    %v316 = vld [vmem:[#allocation10 + $0xe0] sm:$0xff]
    %v317 = vld [vmem:[#allocation10 + $0xe8] sm:$0xff]
    %v318 = vld [vmem:[#allocation10 + $0xf0] sm:$0xff]
    %v319 = vld [vmem:[#allocation10 + $0xf8] sm:$0xff]
    %v320 = vld [vmem:[#allocation10 + $0x100] sm:$0xff]
    %v321 = vld [vmem:[#allocation10 + $0x108] sm:$0xff]
    %v322 = vld [vmem:[#allocation10 + $0x110] sm:$0xff]
    %v323 = vld [vmem:[#allocation10 + $0x118] sm:$0xff]
    %v324 = vld [vmem:[#allocation10 + $0x120] sm:$0xff]
    %v325 = vld [vmem:[#allocation10 + $0x128] sm:$0xff]
    %v326 = vld [vmem:[#allocation10 + $0x130] sm:$0xff]
    %v327 = vld [vmem:[#allocation10 + $0x138] sm:$0xff]
    %v328 = vld [vmem:[#allocation10 + $0x140] sm:$0xff]
    %v329 = vld [vmem:[#allocation10 + $0x148] sm:$0xff]
    %v330 = vld [vmem:[#allocation10 + $0x150] sm:$0xff]
    %v331 = vld [vmem:[#allocation10 + $0x158] sm:$0xff]
    %v332 = vld [vmem:[#allocation10 + $0x160] sm:$0xff]
    %v333 = vld [vmem:[#allocation10 + $0x168] sm:$0xff]
    %v334 = vld [vmem:[#allocation10 + $0x170] sm:$0xff]
    %v335 = vld [vmem:[#allocation10 + $0x178] sm:$0xff]
    %v336 = vld [vmem:[#allocation10 + $0x180] sm:$0xff]
    %v337 = vld [vmem:[#allocation10 + $0x188] sm:$0xff]
    %v338 = vld [vmem:[#allocation10 + $0x190] sm:$0xff]
    %v339 = vld [vmem:[#allocation10 + $0x198] sm:$0xff]
    %v340 = vld [vmem:[#allocation10 + $0x1a0] sm:$0xff]
    %v341 = vld [vmem:[#allocation10 + $0x1a8] sm:$0xff]
    %v342 = vld [vmem:[#allocation10 + $0x1b0] sm:$0xff]
    %v343 = vld [vmem:[#allocation10 + $0x1b8] sm:$0xff]
    %v344 = vld [vmem:[#allocation10 + $0x1c0] sm:$0xff]
    %v345 = vld [vmem:[#allocation10 + $0x1c8] sm:$0xff]
    %v346 = vld [vmem:[#allocation10 + $0x1d0] sm:$0xff]
    %v347 = vld [vmem:[#allocation10 + $0x1d8] sm:$0xff]
    %v348 = vld [vmem:[#allocation10 + $0x1e0] sm:$0xff]
    %v349 = vld [vmem:[#allocation10 + $0x1e8] sm:$0xff]
    %v350 = vld [vmem:[#allocation10 + $0x1f0] sm:$0xff]
    %v351 = vld [vmem:[#allocation10 + $0x1f8] sm:$0xff]
    %v352 = vld [vmem:[#allocation10 + $0x200] sm:$0xff]
    %v353 = vld [vmem:[#allocation10 + $0x208] sm:$0xff]
    %v354 = vld [vmem:[#allocation10 + $0x210] sm:$0xff]
    %v355 = vld [vmem:[#allocation10 + $0x218] sm:$0xff]
    %v356 = vld [vmem:[#allocation10 + $0x220] sm:$0xff]
    %v357 = vld [vmem:[#allocation10 + $0x228] sm:$0xff]
    %v358 = vld [vmem:[#allocation10 + $0x230] sm:$0xff]
    %v359 = vld [vmem:[#allocation10 + $0x238] sm:$0xff]
    %v360 = vld [vmem:[#allocation10 + $0x240] sm:$0xff]
    %v361 = vld [vmem:[#allocation10 + $0x248] sm:$0xff]
    %v362 = vld [vmem:[#allocation10 + $0x250] sm:$0xff]
    %v363 = vld [vmem:[#allocation10 + $0x258] sm:$0xff]
    %v364 = vld [vmem:[#allocation10 + $0x260] sm:$0xff]
    %v365 = vld [vmem:[#allocation10 + $0x268] sm:$0xff]
    %v366 = vld [vmem:[#allocation10 + $0x270] sm:$0xff]
    %v367 = vld [vmem:[#allocation10 + $0x278] sm:$0xff]
    %v368 = vld [vmem:[#allocation10 + $0x280] sm:$0xff]
    %v369 = vld [vmem:[#allocation10 + $0x288] sm:$0xff]
    %v370 = vld [vmem:[#allocation10 + $0x290] sm:$0xff]
    %v371 = vld [vmem:[#allocation10 + $0x298] sm:$0xff]
    %v372 = vld [vmem:[#allocation10 + $0x2a0] sm:$0xff]
    %v373 = vld [vmem:[#allocation10 + $0x2a8] sm:$0xff]
    %v374 = vld [vmem:[#allocation10 + $0x2b0] sm:$0xff]
    %v375 = vld [vmem:[#allocation10 + $0x2b8] sm:$0xff]
    %v376 = vld [vmem:[#allocation10 + $0x2c0] sm:$0xff]
    %v377 = vld [vmem:[#allocation10 + $0x2c8] sm:$0xff]
    %v378 = vld [vmem:[#allocation10 + $0x2d0] sm:$0xff]
    %v379 = vld [vmem:[#allocation10 + $0x2d8] sm:$0xff]
    %v380 = vld [vmem:[#allocation10 + $0x2e0] sm:$0xff]
    %v381 = vld [vmem:[#allocation10 + $0x2e8] sm:$0xff]
    %v382 = vld [vmem:[#allocation10 + $0x2f0] sm:$0xff]
    %v383 = vld [vmem:[#allocation10 + $0x2f8] sm:$0xff]
    %v384 = vld [vmem:[#allocation10 + $0x300] sm:$0xff]
    %v385 = vld [vmem:[#allocation10 + $0x308] sm:$0xff]
    %v386 = vld [vmem:[#allocation10 + $0x310] sm:$0xff]
    %v387 = vld [vmem:[#allocation10 + $0x318] sm:$0xff]
    %v388 = vld [vmem:[#allocation10 + $0x320] sm:$0xff]
    %v389 = vld [vmem:[#allocation10 + $0x328] sm:$0xff]
    %v390 = vld [vmem:[#allocation10 + $0x330] sm:$0xff]
    %v391 = vld [vmem:[#allocation10 + $0x338] sm:$0xff]
    %v392 = vld [vmem:[#allocation10 + $0x340] sm:$0xff]
    %v393 = vld [vmem:[#allocation10 + $0x348] sm:$0xff]
    %v394 = vld [vmem:[#allocation10 + $0x350] sm:$0xff]
    %v395 = vld [vmem:[#allocation10 + $0x358] sm:$0xff]
    %v396 = vld [vmem:[#allocation10 + $0x360] sm:$0xff]
    %v397 = vld [vmem:[#allocation10 + $0x368] sm:$0xff]
    %v398 = vld [vmem:[#allocation10 + $0x370] sm:$0xff]
    %v399 = vld [vmem:[#allocation10 + $0x378] sm:$0xff]
    %v400 = vld [vmem:[#allocation10 + $0x380] sm:$0xff]
    %v401 = vld [vmem:[#allocation10 + $0x388] sm:$0xff]
    %v402 = vld [vmem:[#allocation10 + $0x390] sm:$0xff]
    %v403 = vld [vmem:[#allocation10 + $0x398] sm:$0xff]
    %v404 = vld [vmem:[#allocation10 + $0x3a0] sm:$0xff]
    %v405 = vld [vmem:[#allocation10 + $0x3a8] sm:$0xff]
    %v406 = vld [vmem:[#allocation10 + $0x3b0] sm:$0xff]
    %v407 = vld [vmem:[#allocation10 + $0x3b8] sm:$0xff]
    %v408 = vld [vmem:[#allocation10 + $0x3c0] sm:$0xff]
    %v409 = vld [vmem:[#allocation10 + $0x3c8] sm:$0xff]
    %v410 = vld [vmem:[#allocation10 + $0x3d0] sm:$0xff]
    %v411 = vld [vmem:[#allocation10 + $0x3d8] sm:$0xff]
    %v412 = vld [vmem:[#allocation10 + $0x3e0] sm:$0xff]
    %v413 = vld [vmem:[#allocation10 + $0x3e8] sm:$0xff]
    %v414 = vld [vmem:[#allocation10 + $0x3f0] sm:$0xff]
    %v415 = vld [vmem:[#allocation10 + $0x3f8] sm:$0xff]
    %v416 = vld [vmem:[#allocation10 + $0x400] sm:$0xff]
    %v417 = vld [vmem:[#allocation10 + $0x408] sm:$0xff]
    %v418 = vld [vmem:[#allocation10 + $0x410] sm:$0xff]
    %v419 = vld [vmem:[#allocation10 + $0x418] sm:$0xff]
    %v420 = vld [vmem:[#allocation10 + $0x420] sm:$0xff]
    %v421 = vld [vmem:[#allocation10 + $0x428] sm:$0xff]
    %v422 = vld [vmem:[#allocation10 + $0x430] sm:$0xff]
    %v423 = vld [vmem:[#allocation10 + $0x438] sm:$0xff]
    %v424 = vld [vmem:[#allocation10 + $0x440] sm:$0xff]
    %v425 = vld [vmem:[#allocation10 + $0x448] sm:$0xff]
    %v426 = vld [vmem:[#allocation10 + $0x450] sm:$0xff]
    %v427 = vld [vmem:[#allocation10 + $0x458] sm:$0xff]
    %v428 = vld [vmem:[#allocation10 + $0x460] sm:$0xff]
    %v429 = vld [vmem:[#allocation10 + $0x468] sm:$0xff]
    %v430 = vld [vmem:[#allocation10 + $0x470] sm:$0xff]
    %v431 = vld [vmem:[#allocation10 + $0x478] sm:$0xff]
    %v432 = vld [vmem:[#allocation10 + $0x480] sm:$0xff]
    %v433 = vld [vmem:[#allocation10 + $0x488] sm:$0xff]
    %v434 = vld [vmem:[#allocation10 + $0x490] sm:$0xff]
    %v435 = vld [vmem:[#allocation10 + $0x498] sm:$0xff]
    %v436 = vld [vmem:[#allocation10 + $0x4a0] sm:$0xff]
    %v437 = vld [vmem:[#allocation10 + $0x4a8] sm:$0xff]
    %v438 = vld [vmem:[#allocation10 + $0x4b0] sm:$0xff]
    %v439 = vld [vmem:[#allocation10 + $0x4b8] sm:$0xff]
    %v440 = vld [vmem:[#allocation10 + $0x4c0] sm:$0xff]
    %v441 = vld [vmem:[#allocation10 + $0x4c8] sm:$0xff]
    %v442 = vld [vmem:[#allocation10 + $0x4d0] sm:$0xff]
    %v443 = vld [vmem:[#allocation10 + $0x4d8] sm:$0xff]
    %v444 = vld [vmem:[#allocation10 + $0x4e0] sm:$0xff]
    %v445 = vld [vmem:[#allocation10 + $0x4e8] sm:$0xff]
    %v446 = vld [vmem:[#allocation10 + $0x4f0] sm:$0xff]
    %v447 = vld [vmem:[#allocation10 + $0x4f8] sm:$0xff]
    %v448 = vld [vmem:[#allocation10 + $0x500] sm:$0xff]
    %v449 = vld [vmem:[#allocation10 + $0x508] sm:$0xff]
    %v450 = vld [vmem:[#allocation10 + $0x510] sm:$0xff]
    %v451 = vld [vmem:[#allocation10 + $0x518] sm:$0xff]
    %v452 = vld [vmem:[#allocation10 + $0x520] sm:$0xff]
    %v453 = vld [vmem:[#allocation10 + $0x528] sm:$0xff]
    %v454 = vld [vmem:[#allocation10 + $0x530] sm:$0xff]
    %v455 = vld [vmem:[#allocation10 + $0x538] sm:$0xff]
    %v456 = vld [vmem:[#allocation10 + $0x540] sm:$0xff]
    %v457 = vld [vmem:[#allocation10 + $0x548] sm:$0xff]
    %v458 = vld [vmem:[#allocation10 + $0x550] sm:$0xff]
    %v459 = vld [vmem:[#allocation10 + $0x558] sm:$0xff]
    %v460 = vld [vmem:[#allocation10 + $0x560] sm:$0xff]
    %v461 = vld [vmem:[#allocation10 + $0x568] sm:$0xff]
    %v462 = vld [vmem:[#allocation10 + $0x570] sm:$0xff]
    %v463 = vld [vmem:[#allocation10 + $0x578] sm:$0xff]
    %v464 = vld [vmem:[#allocation10 + $0x580] sm:$0xff]
    %v465 = vld [vmem:[#allocation10 + $0x588] sm:$0xff]
    %v466 = vld [vmem:[#allocation10 + $0x590] sm:$0xff]
    %v467 = vld [vmem:[#allocation10 + $0x598] sm:$0xff]
    %v468 = vld [vmem:[#allocation10 + $0x5a0] sm:$0xff]
    %v469 = vld [vmem:[#allocation10 + $0x5a8] sm:$0xff]
    %v470 = vld [vmem:[#allocation10 + $0x5b0] sm:$0xff]
    %v471 = vld [vmem:[#allocation10 + $0x5b8] sm:$0xff]
    %v472 = vld [vmem:[#allocation10 + $0x5c0] sm:$0xff]
    %v473 = vld [vmem:[#allocation10 + $0x5c8] sm:$0xff]
    %v474 = vld [vmem:[#allocation10 + $0x5d0] sm:$0xff]
    %v475 = vld [vmem:[#allocation10 + $0x5d8] sm:$0xff]
    %v476 = vld [vmem:[#allocation10 + $0x5e0] sm:$0xff]
    %v477 = vld [vmem:[#allocation10 + $0x5e8] sm:$0xff]
    %v478 = vld [vmem:[#allocation10 + $0x5f0] sm:$0xff]
    %v479 = vld [vmem:[#allocation10 + $0x5f8] sm:$0xff]
    %v480 = vld [vmem:[#allocation10 + $0x600] sm:$0xff]
    %v481 = vld [vmem:[#allocation10 + $0x608] sm:$0xff]
    %v482 = vld [vmem:[#allocation10 + $0x610] sm:$0xff]
    %v483 = vld [vmem:[#allocation10 + $0x618] sm:$0xff]
    %v484 = vld [vmem:[#allocation10 + $0x620] sm:$0xff]
    %v485 = vld [vmem:[#allocation10 + $0x628] sm:$0xff]
    %v486 = vld [vmem:[#allocation10 + $0x630] sm:$0xff]
    %v487 = vld [vmem:[#allocation10 + $0x638] sm:$0xff]
    %v488 = vld [vmem:[#allocation10 + $0x640] sm:$0xff]
    %v489 = vld [vmem:[#allocation10 + $0x648] sm:$0xff]
    %v490 = vld [vmem:[#allocation10 + $0x650] sm:$0xff]
    %v491 = vld [vmem:[#allocation10 + $0x658] sm:$0xff]
    %v492 = vld [vmem:[#allocation10 + $0x660] sm:$0xff]
    %v493 = vld [vmem:[#allocation10 + $0x668] sm:$0xff]
    %v494 = vld [vmem:[#allocation10 + $0x670] sm:$0xff]
    %v495 = vld [vmem:[#allocation10 + $0x678] sm:$0xff]
    %v496 = vld [vmem:[#allocation10 + $0x680] sm:$0xff]
    %v497 = vld [vmem:[#allocation10 + $0x688] sm:$0xff]
    %v498 = vld [vmem:[#allocation10 + $0x690] sm:$0xff]
    %v499 = vld [vmem:[#allocation10 + $0x698] sm:$0xff]
    %v500 = vld [vmem:[#allocation10 + $0x6a0] sm:$0xff]
    %v501 = vld [vmem:[#allocation10 + $0x6a8] sm:$0xff]
    %v502 = vld [vmem:[#allocation10 + $0x6b0] sm:$0xff]
    %v503 = vld [vmem:[#allocation10 + $0x6b8] sm:$0xff]
    %v504 = vld [vmem:[#allocation10 + $0x6c0] sm:$0xff]
    %v505 = vld [vmem:[#allocation10 + $0x6c8] sm:$0xff]
    %v506 = vld [vmem:[#allocation10 + $0x6d0] sm:$0xff]
    %v507 = vld [vmem:[#allocation10 + $0x6d8] sm:$0xff]
    %v508 = vld [vmem:[#allocation10 + $0x6e0] sm:$0xff]
    %v509 = vld [vmem:[#allocation10 + $0x6e8] sm:$0xff]
    %v510 = vld [vmem:[#allocation10 + $0x6f0] sm:$0xff]
    %v511 = vld [vmem:[#allocation10 + $0x6f8] sm:$0xff]
    %v512 = vld [vmem:[#allocation10 + $0x700] sm:$0xff]
    %v513 = vld [vmem:[#allocation10 + $0x708] sm:$0xff]
    %v514 = vld [vmem:[#allocation10 + $0x710] sm:$0xff]
    %v515 = vld [vmem:[#allocation10 + $0x718] sm:$0xff]
    %v516 = vld [vmem:[#allocation10 + $0x720] sm:$0xff]
    %v517 = vld [vmem:[#allocation10 + $0x728] sm:$0xff]
    %v518 = vld [vmem:[#allocation10 + $0x730] sm:$0xff]
    %v519 = vld [vmem:[#allocation10 + $0x738] sm:$0xff]
    %v520 = vld [vmem:[#allocation10 + $0x740] sm:$0xff]
    %v521 = vld [vmem:[#allocation10 + $0x748] sm:$0xff]
    %v522 = vld [vmem:[#allocation10 + $0x750] sm:$0xff]
    %v523 = vld [vmem:[#allocation10 + $0x758] sm:$0xff]
    %v524 = vld [vmem:[#allocation10 + $0x760] sm:$0xff]
    %v525 = vld [vmem:[#allocation10 + $0x768] sm:$0xff]
    %v526 = vld [vmem:[#allocation10 + $0x770] sm:$0xff]
    %v527 = vld [vmem:[#allocation10 + $0x778] sm:$0xff]
    %v528 = vld [vmem:[#allocation10 + $0x780] sm:$0xff]
    %v529 = vld [vmem:[#allocation10 + $0x788] sm:$0xff]
    %v530 = vld [vmem:[#allocation10 + $0x790] sm:$0xff]
    %v531 = vld [vmem:[#allocation10 + $0x798] sm:$0xff]
    %v532 = vld [vmem:[#allocation10 + $0x7a0] sm:$0xff]
    %v533 = vld [vmem:[#allocation10 + $0x7a8] sm:$0xff]
    %v534 = vld [vmem:[#allocation10 + $0x7b0] sm:$0xff]
    %v535 = vld [vmem:[#allocation10 + $0x7b8] sm:$0xff]
    %v536 = vld [vmem:[#allocation10 + $0x7c0] sm:$0xff]
    %v537 = vld [vmem:[#allocation10 + $0x7c8] sm:$0xff]
    %v538 = vld [vmem:[#allocation10 + $0x7d0] sm:$0xff]
    %v539 = vld [vmem:[#allocation10 + $0x7d8] sm:$0xff]
    %v540 = vld [vmem:[#allocation10 + $0x7e0] sm:$0xff]
    %v541 = vld [vmem:[#allocation10 + $0x7e8] sm:$0xff]
    %v542 = vld [vmem:[#allocation10 + $0x7f0] sm:$0xff]
    %v543 = vld [vmem:[#allocation10 + $0x7f8] sm:$0xff]
    %v544 = vld [vmem:[#allocation10 + $0x800] sm:$0xff]
    %v545 = vld [vmem:[#allocation10 + $0x808] sm:$0xff]
    %v546 = vld [vmem:[#allocation10 + $0x810] sm:$0xff]
    %v547 = vld [vmem:[#allocation10 + $0x818] sm:$0xff]
    %v548 = vld [vmem:[#allocation10 + $0x820] sm:$0xff]
    %v549 = vld [vmem:[#allocation10 + $0x828] sm:$0xff]
    %v550 = vld [vmem:[#allocation10 + $0x830] sm:$0xff]
    %v551 = vld [vmem:[#allocation10 + $0x838] sm:$0xff]
    %v552 = vld [vmem:[#allocation10 + $0x840] sm:$0xff]
    %v553 = vld [vmem:[#allocation10 + $0x848] sm:$0xff]
    %v554 = vld [vmem:[#allocation10 + $0x850] sm:$0xff]
    %v555 = vld [vmem:[#allocation10 + $0x858] sm:$0xff]
    %v556 = vld [vmem:[#allocation10 + $0x860] sm:$0xff]
    %v557 = vld [vmem:[#allocation10 + $0x868] sm:$0xff]
    %v558 = vld [vmem:[#allocation10 + $0x870] sm:$0xff]
    %v559 = vld [vmem:[#allocation10 + $0x878] sm:$0xff]
    %v560 = vld [vmem:[#allocation10 + $0x880] sm:$0xff]
    %v561 = vld [vmem:[#allocation10 + $0x888] sm:$0xff]
    %v562 = vld [vmem:[#allocation10 + $0x890] sm:$0xff]
    %v563 = vld [vmem:[#allocation10 + $0x898] sm:$0xff]
    %v564 = vld [vmem:[#allocation10 + $0x8a0] sm:$0xff]
    %v565 = vld [vmem:[#allocation10 + $0x8a8] sm:$0xff]
    %v566 = vld [vmem:[#allocation10 + $0x8b0] sm:$0xff]
    %v567 = vld [vmem:[#allocation10 + $0x8b8] sm:$0xff]
    %v568 = vld [vmem:[#allocation10 + $0x8c0] sm:$0xff]
    %v569 = vld [vmem:[#allocation10 + $0x8c8] sm:$0xff]
    %v570 = vld [vmem:[#allocation10 + $0x8d0] sm:$0xff]
    %v571 = vld [vmem:[#allocation10 + $0x8d8] sm:$0xff]
    %v572 = vld [vmem:[#allocation10 + $0x8e0] sm:$0xff]
    %v573 = vld [vmem:[#allocation10 + $0x8e8] sm:$0xff]
    %v574 = vld [vmem:[#allocation10 + $0x8f0] sm:$0xff]
    %v575 = vld [vmem:[#allocation10 + $0x8f8] sm:$0xff]
    %v576 = vld [vmem:[#allocation10 + $0x900] sm:$0xff]
    %v577 = vld [vmem:[#allocation10 + $0x908] sm:$0xff]
    %v578 = vld [vmem:[#allocation10 + $0x910] sm:$0xff]
    %v579 = vld [vmem:[#allocation10 + $0x918] sm:$0xff]
    %v580 = vld [vmem:[#allocation10 + $0x920] sm:$0xff]
    %v581 = vld [vmem:[#allocation10 + $0x928] sm:$0xff]
    %v582 = vld [vmem:[#allocation10 + $0x930] sm:$0xff]
    %v583 = vld [vmem:[#allocation10 + $0x938] sm:$0xff]
    %v584 = vld [vmem:[#allocation10 + $0x940] sm:$0xff]
    %v585 = vld [vmem:[#allocation10 + $0x948] sm:$0xff]
    %v586 = vld [vmem:[#allocation10 + $0x950] sm:$0xff]
    %v587 = vld [vmem:[#allocation10 + $0x958] sm:$0xff]
    %v588 = vld [vmem:[#allocation10 + $0x960] sm:$0xff]
    %v589 = vld [vmem:[#allocation10 + $0x968] sm:$0xff]
    %v590 = vld [vmem:[#allocation10 + $0x970] sm:$0xff]
    %v591 = vld [vmem:[#allocation10 + $0x978] sm:$0xff]
    %v592 = vld [vmem:[#allocation10 + $0x980] sm:$0xff]
    %v593 = vld [vmem:[#allocation10 + $0x988] sm:$0xff]
    %v594 = vld [vmem:[#allocation10 + $0x990] sm:$0xff]
    %v595 = vld [vmem:[#allocation10 + $0x998] sm:$0xff]
    %v596 = vld [vmem:[#allocation10 + $0x9a0] sm:$0xff]
    %v597 = vld [vmem:[#allocation10 + $0x9a8] sm:$0xff]
    %v598 = vld [vmem:[#allocation10 + $0x9b0] sm:$0xff]
    %v599 = vld [vmem:[#allocation10 + $0x9b8] sm:$0xff]
    %v600 = vld [vmem:[#allocation10 + $0x9c0] sm:$0xff]
    %v601 = vld [vmem:[#allocation10 + $0x9c8] sm:$0xff]
    %v602 = vld [vmem:[#allocation10 + $0x9d0] sm:$0xff]
    %v603 = vld [vmem:[#allocation10 + $0x9d8] sm:$0xff]
    %v604 = vld [vmem:[#allocation10 + $0x9e0] sm:$0xff]
    %v605 = vld [vmem:[#allocation10 + $0x9e8] sm:$0xff]
    %v606 = vld [vmem:[#allocation10 + $0x9f0] sm:$0xff]
    %v607 = vld [vmem:[#allocation10 + $0x9f8] sm:$0xff]
    %v608 = vld [vmem:[#allocation10 + $0xa00] sm:$0xff]
    %v609 = vld [vmem:[#allocation10 + $0xa08] sm:$0xff]
    %v610 = vld [vmem:[#allocation10 + $0xa10] sm:$0xff]
    %v611 = vld [vmem:[#allocation10 + $0xa18] sm:$0xff]
    %v612 = vld [vmem:[#allocation10 + $0xa20] sm:$0xff]
    %v613 = vld [vmem:[#allocation10 + $0xa28] sm:$0xff]
    %v614 = vld [vmem:[#allocation10 + $0xa30] sm:$0xff]
    %v615 = vld [vmem:[#allocation10 + $0xa38] sm:$0xff]
    %v616 = vld [vmem:[#allocation10 + $0xa40] sm:$0xff]
    %v617 = vld [vmem:[#allocation10 + $0xa48] sm:$0xff]
    %v618 = vld [vmem:[#allocation10 + $0xa50] sm:$0xff]
    %v619 = vld [vmem:[#allocation10 + $0xa58] sm:$0xff]
    %v620 = vld [vmem:[#allocation10 + $0xa60] sm:$0xff]
    %v621 = vld [vmem:[#allocation10 + $0xa68] sm:$0xff]
    %v622 = vld [vmem:[#allocation10 + $0xa70] sm:$0xff]
    %v623 = vld [vmem:[#allocation10 + $0xa78] sm:$0xff]
    %v624 = vld [vmem:[#allocation10 + $0xa80] sm:$0xff]
    %v625 = vld [vmem:[#allocation10 + $0xa88] sm:$0xff]
    %v626 = vld [vmem:[#allocation10 + $0xa90] sm:$0xff]
    %v627 = vld [vmem:[#allocation10 + $0xa98] sm:$0xff]
    %v628 = vld [vmem:[#allocation10 + $0xaa0] sm:$0xff]
    %v629 = vld [vmem:[#allocation10 + $0xaa8] sm:$0xff]
    %v630 = vld [vmem:[#allocation10 + $0xab0] sm:$0xff]
    %v631 = vld [vmem:[#allocation10 + $0xab8] sm:$0xff]
    %v632 = vld [vmem:[#allocation10 + $0xac0] sm:$0xff]
    %v633 = vld [vmem:[#allocation10 + $0xac8] sm:$0xff]
    %v634 = vld [vmem:[#allocation10 + $0xad0] sm:$0xff]
    %v635 = vld [vmem:[#allocation10 + $0xad8] sm:$0xff]
    %v636 = vld [vmem:[#allocation10 + $0xae0] sm:$0xff]
    %v637 = vld [vmem:[#allocation10 + $0xae8] sm:$0xff]
    %v638 = vld [vmem:[#allocation10 + $0xaf0] sm:$0xff]
    %v639 = vld [vmem:[#allocation10 + $0xaf8] sm:$0xff]
    %v640 = vld [vmem:[#allocation10 + $0xb00] sm:$0xff]
    %v641 = vld [vmem:[#allocation10 + $0xb08] sm:$0xff]
    %v642 = vld [vmem:[#allocation10 + $0xb10] sm:$0xff]
    %v643 = vld [vmem:[#allocation10 + $0xb18] sm:$0xff]
    %v644 = vld [vmem:[#allocation10 + $0xb20] sm:$0xff]
    %v645 = vld [vmem:[#allocation10 + $0xb28] sm:$0xff]
    %v646 = vld [vmem:[#allocation10 + $0xb30] sm:$0xff]
    %v647 = vld [vmem:[#allocation10 + $0xb38] sm:$0xff]
    %v648 = vld [vmem:[#allocation10 + $0xb40] sm:$0xff]
    %v649 = vld [vmem:[#allocation10 + $0xb48] sm:$0xff]
    %v650 = vld [vmem:[#allocation10 + $0xb50] sm:$0xff]
    %v651 = vld [vmem:[#allocation10 + $0xb58] sm:$0xff]
    %v652 = vld [vmem:[#allocation10 + $0xb60] sm:$0xff]
    %v653 = vld [vmem:[#allocation10 + $0xb68] sm:$0xff]
    %v654 = vld [vmem:[#allocation10 + $0xb70] sm:$0xff]
    %v655 = vld [vmem:[#allocation10 + $0xb78] sm:$0xff]
    %v656 = vld [vmem:[#allocation10 + $0xb80] sm:$0xff]
    %v657 = vld [vmem:[#allocation10 + $0xb88] sm:$0xff]
    %v658 = vld [vmem:[#allocation10 + $0xb90] sm:$0xff]
    %v659 = vld [vmem:[#allocation10 + $0xb98] sm:$0xff]
    %v660 = vld [vmem:[#allocation10 + $0xba0] sm:$0xff]
    %v661 = vld [vmem:[#allocation10 + $0xba8] sm:$0xff]
    %v662 = vld [vmem:[#allocation10 + $0xbb0] sm:$0xff]
    %v663 = vld [vmem:[#allocation10 + $0xbb8] sm:$0xff]
    %v664 = vld [vmem:[#allocation10 + $0xbc0] sm:$0xff]
    %v665 = vld [vmem:[#allocation10 + $0xbc8] sm:$0xff]
    %v666 = vld [vmem:[#allocation10 + $0xbd0] sm:$0xff]
    %v667 = vld [vmem:[#allocation10 + $0xbd8] sm:$0xff]
    %v668 = vld [vmem:[#allocation10 + $0xbe0] sm:$0xff]
    %v669 = vld [vmem:[#allocation10 + $0xbe8] sm:$0xff]
    %v670 = vld [vmem:[#allocation10 + $0xbf0] sm:$0xff]
    %v671 = vld [vmem:[#allocation10 + $0xbf8] sm:$0xff]
    %v672 = vld [vmem:[#allocation10 + $0xc00] sm:$0xff]
    %v673 = vld [vmem:[#allocation10 + $0xc08] sm:$0xff]
    %v674 = vld [vmem:[#allocation10 + $0xc10] sm:$0xff]
    %v675 = vld [vmem:[#allocation10 + $0xc18] sm:$0xff]
    %v676 = vld [vmem:[#allocation10 + $0xc20] sm:$0xff]
    %v677 = vld [vmem:[#allocation10 + $0xc28] sm:$0xff]
    %v678 = vld [vmem:[#allocation10 + $0xc30] sm:$0xff]
    %v679 = vld [vmem:[#allocation10 + $0xc38] sm:$0xff]
    %v680 = vld [vmem:[#allocation10 + $0xc40] sm:$0xff]
    %v681 = vld [vmem:[#allocation10 + $0xc48] sm:$0xff]
    %v682 = vld [vmem:[#allocation10 + $0xc50] sm:$0xff]
    %v683 = vld [vmem:[#allocation10 + $0xc58] sm:$0xff]
    %v684 = vld [vmem:[#allocation10 + $0xc60] sm:$0xff]
    %v685 = vld [vmem:[#allocation10 + $0xc68] sm:$0xff]
    %v686 = vld [vmem:[#allocation10 + $0xc70] sm:$0xff]
    %v687 = vld [vmem:[#allocation10 + $0xc78] sm:$0xff]
    %v688 = vld [vmem:[#allocation10 + $0xc80] sm:$0xff]
    %v689 = vld [vmem:[#allocation10 + $0xc88] sm:$0xff]
    %v690 = vld [vmem:[#allocation10 + $0xc90] sm:$0xff]
    %v691 = vld [vmem:[#allocation10 + $0xc98] sm:$0xff]
    %v692 = vld [vmem:[#allocation10 + $0xca0] sm:$0xff]
    %v693 = vld [vmem:[#allocation10 + $0xca8] sm:$0xff]
    %v694 = vld [vmem:[#allocation10 + $0xcb0] sm:$0xff]
    %v695 = vld [vmem:[#allocation10 + $0xcb8] sm:$0xff]
    %v696 = vld [vmem:[#allocation10 + $0xcc0] sm:$0xff]
    %v697 = vld [vmem:[#allocation10 + $0xcc8] sm:$0xff]
    %v698 = vld [vmem:[#allocation10 + $0xcd0] sm:$0xff]
    %v699 = vld [vmem:[#allocation10 + $0xcd8] sm:$0xff]
    %v700 = vld [vmem:[#allocation10 + $0xce0] sm:$0xff]
    %v701 = vld [vmem:[#allocation10 + $0xce8] sm:$0xff]
    %v702 = vld [vmem:[#allocation10 + $0xcf0] sm:$0xff]
    %v703 = vld [vmem:[#allocation10 + $0xcf8] sm:$0xff]
    %v704 = vld [vmem:[#allocation10 + $0xd00] sm:$0xff]
    %v705 = vld [vmem:[#allocation10 + $0xd08] sm:$0xff]
    %v706 = vld [vmem:[#allocation10 + $0xd10] sm:$0xff]
    %v707 = vld [vmem:[#allocation10 + $0xd18] sm:$0xff]
    %v708 = vld [vmem:[#allocation10 + $0xd20] sm:$0xff]
    %v709 = vld [vmem:[#allocation10 + $0xd28] sm:$0xff]
    %v710 = vld [vmem:[#allocation10 + $0xd30] sm:$0xff]
    %v711 = vld [vmem:[#allocation10 + $0xd38] sm:$0xff]
    %v712 = vld [vmem:[#allocation10 + $0xd40] sm:$0xff]
    %v713 = vld [vmem:[#allocation10 + $0xd48] sm:$0xff]
    %v714 = vld [vmem:[#allocation10 + $0xd50] sm:$0xff]
    %v715 = vld [vmem:[#allocation10 + $0xd58] sm:$0xff]
    %v716 = vld [vmem:[#allocation10 + $0xd60] sm:$0xff]
    %v717 = vld [vmem:[#allocation10 + $0xd68] sm:$0xff]
    %v718 = vld [vmem:[#allocation10 + $0xd70] sm:$0xff]
    %v719 = vld [vmem:[#allocation10 + $0xd78] sm:$0xff]
    %720 = vmatprep.subr.mxu0 %v289
    %721 = vmatpush1.msra.mxu0 %v288
    %722 = vmatprep.subr.mxu0 %v298
    %723 = vmatpush1.msra.mxu0 %v297
    %724 = vmatprep.subr.mxu0 %v307
    %725 = vmatpush1.msra.mxu0 %v306
    %726 = vmatprep.subr.mxu0 %v316
    %727 = vmatpush1.msra.mxu0 %v315
    %728 = vmatprep.subr.mxu0 %v325
    %729 = vmatpush1.msra.mxu0 %v324
    %730 = vmatprep.subr.mxu0 %v334
    %731 = vmatpush1.msra.mxu0 %v333
    %732 = vmatprep.subr.mxu0 %v343
    %733 = vmatpush1.msra.mxu0 %v342
    %734 = vmatprep.subr.mxu0 %v352
    %735 = vmatpush1.msra.mxu0 %v351
    %736 = vmatprep.subr.mxu0 %v361
    %737 = vmatpush1.msra.mxu0 %v360
    %738 = vmatprep.subr.mxu0 %v370
    %739 = vmatpush1.msra.mxu0 %v369
    %740 = vmatprep.subr.mxu0 %v379
    %741 = vmatpush1.msra.mxu0 %v378
    %742 = vmatprep.subr.mxu0 %v388
    %743 = vmatpush1.msra.mxu0 %v387
    %744 = vmatprep.subr.mxu0 %v397
    %745 = vmatpush1.msra.mxu0 %v396
    %746 = vmatprep.subr.mxu0 %v406
    %747 = vmatpush1.msra.mxu0 %v405
    %748 = vmatprep.subr.mxu0 %v415
    %749 = vmatpush1.msra.mxu0 %v414
    %750 = vmatprep.subr.mxu0 %v424
    %751 = vmatpush1.msra.mxu0 %v423
    %752 = vmatprep.subr.mxu0 %v433
    %753 = vmatpush1.msra.mxu0 %v432
    %754 = vmatprep.subr.mxu0 %v442
    %755 = vmatpush1.msra.mxu0 %v441
    %756 = vmatprep.subr.mxu0 %v451
    %757 = vmatpush1.msra.mxu0 %v450
    %758 = vmatprep.subr.mxu0 %v460
    %759 = vmatpush1.msra.mxu0 %v459
    %760 = vmatprep.subr.mxu0 %v469
    %761 = vmatpush1.msra.mxu0 %v468
    %762 = vmatprep.subr.mxu0 %v478
    %763 = vmatpush1.msra.mxu0 %v477
    %764 = vmatprep.subr.mxu0 %v487
    %765 = vmatpush1.msra.mxu0 %v486
    %766 = vmatprep.subr.mxu0 %v496
    %767 = vmatpush1.msra.mxu0 %v495
    %768 = vmatprep.subr.mxu0 %v505
    %769 = vmatpush1.msra.mxu0 %v504
    %770 = vmatprep.subr.mxu0 %v514
    %771 = vmatpush1.msra.mxu0 %v513
    %772 = vmatprep.subr.mxu0 %v523
    %773 = vmatpush1.msra.mxu0 %v522
    %774 = vmatprep.subr.mxu0 %v532
    %775 = vmatpush1.msra.mxu0 %v531
    %776 = vmatprep.subr.mxu0 %v541
    %777 = vmatpush1.msra.mxu0 %v540
    %778 = vmatprep.subr.mxu0 %v550
    %779 = vmatpush1.msra.mxu0 %v549
    %780 = vmatprep.subr.mxu0 %v559
    %781 = vmatpush1.msra.mxu0 %v558
    %782 = vmatprep.subr.mxu0 %v568
    %783 = vmatpush1.msra.mxu0 %v567
    %784 = vmatprep.mubr.f32.mxu0 %v283
    %785 = vmatmul.mubr.f32.gmra.mrb[0].mxu0 %v282
    %v786 = vpop.f32.mrb[0].mxu0
    %v787 = vadd.f32 0.0, %v786
    %v788 = vpop.f32.mrb[0].mxu0
    %v789 = vadd.f32 0.0, %v788
    %790 = vmatprep.mubr.f32.mxu0 %v286
    %791 = vmatmul.mubr.f32.gmra.mrb[0].mxu0 %v285
    %v792 = vpop.f32.mrb[0].mxu0
    %v793 = vadd.f32 0.0, %v792
    %v794 = vpop.f32.mrb[0].mxu0
    %v795 = vadd.f32 0.0, %v794
    %796 = vdwg.mxu0
    %797 = vmatprep.subr.mxu0 %v577
    %798 = vmatpush1.msra.mxu0 %v576
    %799 = vmatprep.subr.mxu0 %v586
    %800 = vmatpush1.msra.mxu0 %v585
    %801 = vmatprep.subr.mxu0 %v595
    %802 = vmatpush1.msra.mxu0 %v594
    %803 = vmatprep.subr.mxu0 %v604
    %804 = vmatpush1.msra.mxu0 %v603
    %805 = vmatprep.subr.mxu0 %v613
    %806 = vmatpush1.msra.mxu0 %v612
    %807 = vmatprep.subr.mxu0 %v622
    %808 = vmatpush1.msra.mxu0 %v621
    %809 = vmatprep.subr.mxu0 %v631
    %810 = vmatpush1.msra.mxu0 %v630
    %811 = vmatprep.subr.mxu0 %v640
    %812 = vmatpush1.msra.mxu0 %v639
    %813 = vmatprep.subr.mxu0 %v649
    %814 = vmatpush1.msra.mxu0 %v648
    %815 = vmatprep.subr.mxu0 %v658
    %816 = vmatpush1.msra.mxu0 %v657
    %817 = vmatprep.subr.mxu0 %v667
    %818 = vmatpush1.msra.mxu0 %v666
    %819 = vmatprep.subr.mxu0 %v676
    %820 = vmatpush1.msra.mxu0 %v675
    %821 = vmatprep.subr.mxu0 %v685
    %822 = vmatpush1.msra.mxu0 %v684
    %823 = vmatprep.subr.mxu0 %v694
    %824 = vmatpush1.msra.mxu0 %v693
    %825 = vmatprep.subr.mxu0 %v703
    %826 = vmatpush1.msra.mxu0 %v702
    %827 = vmatprep.subr.mxu0 %v712
    %828 = vmatpush1.msra.mxu0 %v711
    %829 = vmatprep.subr.mxu0 0.0
    %830 = vmatpush1.msra.mxu0 0.0
    %831 = vmatprep.subr.mxu0 0.0
    %832 = vmatpush1.msra.mxu0 0.0
    %833 = vmatprep.subr.mxu0 0.0
    %834 = vmatpush1.msra.mxu0 0.0
    %835 = vmatprep.subr.mxu0 0.0
    %836 = vmatpush1.msra.mxu0 0.0
    %837 = vmatprep.subr.mxu0 0.0
    %838 = vmatpush1.msra.mxu0 0.0
    %839 = vmatprep.subr.mxu0 0.0
    %840 = vmatpush1.msra.mxu0 0.0
    %841 = vmatprep.subr.mxu0 0.0
    %842 = vmatpush1.msra.mxu0 0.0
    %843 = vmatprep.subr.mxu0 0.0
    %844 = vmatpush1.msra.mxu0 0.0
    %845 = vmatprep.subr.mxu0 0.0
    %846 = vmatpush1.msra.mxu0 0.0
    %847 = vmatprep.subr.mxu0 0.0
    %848 = vmatpush1.msra.mxu0 0.0
    %849 = vmatprep.subr.mxu0 0.0
    %850 = vmatpush1.msra.mxu0 0.0
    %851 = vmatprep.subr.mxu0 0.0
    %852 = vmatpush1.msra.mxu0 0.0
    %853 = vmatprep.subr.mxu0 0.0
    %854 = vmatpush1.msra.mxu0 0.0
    %855 = vmatprep.subr.mxu0 0.0
    %856 = vmatpush1.msra.mxu0 0.0
    %857 = vmatprep.subr.mxu0 0.0
    %858 = vmatpush1.msra.mxu0 0.0
    %859 = vmatprep.subr.mxu0 0.0
    %860 = vmatpush1.msra.mxu0 0.0
    %861 = vmatprep.mubr.f32.mxu0 0.0
    %862 = vmatmul.mubr.f32.gmra.mrb[0].mxu0 %v284
    %v863 = vpop.f32.mrb[0].mxu0
    %v864 = vadd.f32 %v787, %v863
    %v865 = vpop.f32.mrb[0].mxu0
    %v866 = vadd.f32 %v789, %v865
    %867 = vmatprep.mubr.f32.mxu0 0.0
    %868 = vmatmul.mubr.f32.gmra.mrb[0].mxu0 %v287
    %v869 = vpop.f32.mrb[0].mxu0
    %v870 = vadd.f32 %v793, %v869
    %v871 = vpop.f32.mrb[0].mxu0
    %v872 = vadd.f32 %v795, %v871
    %873 = vdwg.mxu0
    %874 = vmatprep.subr.mxu0 %v291
    %875 = vmatpush1.msra.mxu0 %v290
    %876 = vmatprep.subr.mxu0 %v300
    %877 = vmatpush1.msra.mxu0 %v299
    %878 = vmatprep.subr.mxu0 %v309
    %879 = vmatpush1.msra.mxu0 %v308
    %880 = vmatprep.subr.mxu0 %v318
    %881 = vmatpush1.msra.mxu0 %v317
    %882 = vmatprep.subr.mxu0 %v327
    %883 = vmatpush1.msra.mxu0 %v326
    %884 = vmatprep.subr.mxu0 %v336
    %885 = vmatpush1.msra.mxu0 %v335
    %886 = vmatprep.subr.mxu0 %v345
    %887 = vmatpush1.msra.mxu0 %v344
    %888 = vmatprep.subr.mxu0 %v354
    %889 = vmatpush1.msra.mxu0 %v353
    %890 = vmatprep.subr.mxu0 %v363
    %891 = vmatpush1.msra.mxu0 %v362
    %892 = vmatprep.subr.mxu0 %v372
    %893 = vmatpush1.msra.mxu0 %v371
    %894 = vmatprep.subr.mxu0 %v381
    %895 = vmatpush1.msra.mxu0 %v380
    %896 = vmatprep.subr.mxu0 %v390
    %897 = vmatpush1.msra.mxu0 %v389
    %898 = vmatprep.subr.mxu0 %v399
    %899 = vmatpush1.msra.mxu0 %v398
    %900 = vmatprep.subr.mxu0 %v408
    %901 = vmatpush1.msra.mxu0 %v407
    %902 = vmatprep.subr.mxu0 %v417
    %903 = vmatpush1.msra.mxu0 %v416
    %904 = vmatprep.subr.mxu0 %v426
    %905 = vmatpush1.msra.mxu0 %v425
    %906 = vmatprep.subr.mxu0 %v435
    %907 = vmatpush1.msra.mxu0 %v434
    %908 = vmatprep.subr.mxu0 %v444
    %909 = vmatpush1.msra.mxu0 %v443
    %910 = vmatprep.subr.mxu0 %v453
    %911 = vmatpush1.msra.mxu0 %v452
    %912 = vmatprep.subr.mxu0 %v462
    %913 = vmatpush1.msra.mxu0 %v461
    %914 = vmatprep.subr.mxu0 %v471
    %915 = vmatpush1.msra.mxu0 %v470
    %916 = vmatprep.subr.mxu0 %v480
    %917 = vmatpush1.msra.mxu0 %v479
    %918 = vmatprep.subr.mxu0 %v489
    %919 = vmatpush1.msra.mxu0 %v488
    %920 = vmatprep.subr.mxu0 %v498
    %921 = vmatpush1.msra.mxu0 %v497
    %922 = vmatprep.subr.mxu0 %v507
    %923 = vmatpush1.msra.mxu0 %v506
    %924 = vmatprep.subr.mxu0 %v516
    %925 = vmatpush1.msra.mxu0 %v515
    %926 = vmatprep.subr.mxu0 %v525
    %927 = vmatpush1.msra.mxu0 %v524
    %928 = vmatprep.subr.mxu0 %v534
    %929 = vmatpush1.msra.mxu0 %v533
    %930 = vmatprep.subr.mxu0 %v543
    %931 = vmatpush1.msra.mxu0 %v542
    %932 = vmatprep.subr.mxu0 %v552
    %933 = vmatpush1.msra.mxu0 %v551
    %934 = vmatprep.subr.mxu0 %v561
    %935 = vmatpush1.msra.mxu0 %v560
    %936 = vmatprep.subr.mxu0 %v570
    %937 = vmatpush1.msra.mxu0 %v569
    %938 = vmatprep.mubr.f32.mxu0 %v283
    %939 = vmatmul.mubr.f32.gmra.mrb[0].mxu0 %v282
    %v940 = vpop.f32.mrb[0].mxu0
    %v941 = vadd.f32 0.0, %v940
    %v942 = vpop.f32.mrb[0].mxu0
    %v943 = vadd.f32 0.0, %v942
    %944 = vmatprep.mubr.f32.mxu0 %v286
    %945 = vmatmul.mubr.f32.gmra.mrb[0].mxu0 %v285
    %v946 = vpop.f32.mrb[0].mxu0
    %v947 = vadd.f32 0.0, %v946
    %v948 = vpop.f32.mrb[0].mxu0
    %v949 = vadd.f32 0.0, %v948
    %950 = vdwg.mxu0
    %951 = vmatprep.subr.mxu0 %v579
    %952 = vmatpush1.msra.mxu0 %v578
    %953 = vmatprep.subr.mxu0 %v588
    %954 = vmatpush1.msra.mxu0 %v587
    %955 = vmatprep.subr.mxu0 %v597
    %956 = vmatpush1.msra.mxu0 %v596
    %957 = vmatprep.subr.mxu0 %v606
    %958 = vmatpush1.msra.mxu0 %v605
    %959 = vmatprep.subr.mxu0 %v615
    %960 = vmatpush1.msra.mxu0 %v614
    %961 = vmatprep.subr.mxu0 %v624
    %962 = vmatpush1.msra.mxu0 %v623
    %963 = vmatprep.subr.mxu0 %v633
    %964 = vmatpush1.msra.mxu0 %v632
    %965 = vmatprep.subr.mxu0 %v642
    %966 = vmatpush1.msra.mxu0 %v641
    %967 = vmatprep.subr.mxu0 %v651
    %968 = vmatpush1.msra.mxu0 %v650
    %969 = vmatprep.subr.mxu0 %v660
    %970 = vmatpush1.msra.mxu0 %v659
    %971 = vmatprep.subr.mxu0 %v669
    %972 = vmatpush1.msra.mxu0 %v668
    %973 = vmatprep.subr.mxu0 %v678
    %974 = vmatpush1.msra.mxu0 %v677
    %975 = vmatprep.subr.mxu0 %v687
    %976 = vmatpush1.msra.mxu0 %v686
    %977 = vmatprep.subr.mxu0 %v696
    %978 = vmatpush1.msra.mxu0 %v695
    %979 = vmatprep.subr.mxu0 %v705
    %980 = vmatpush1.msra.mxu0 %v704
    %981 = vmatprep.subr.mxu0 %v714
    %982 = vmatpush1.msra.mxu0 %v713
    %983 = vmatprep.subr.mxu0 0.0
    %984 = vmatpush1.msra.mxu0 0.0
    %985 = vmatprep.subr.mxu0 0.0
    %986 = vmatpush1.msra.mxu0 0.0
    %987 = vmatprep.subr.mxu0 0.0
    %988 = vmatpush1.msra.mxu0 0.0
    %989 = vmatprep.subr.mxu0 0.0
    %990 = vmatpush1.msra.mxu0 0.0
    %991 = vmatprep.subr.mxu0 0.0
    %992 = vmatpush1.msra.mxu0 0.0
    %993 = vmatprep.subr.mxu0 0.0
    %994 = vmatpush1.msra.mxu0 0.0
    %995 = vmatprep.subr.mxu0 0.0
    %996 = vmatpush1.msra.mxu0 0.0
    %997 = vmatprep.subr.mxu0 0.0
    %998 = vmatpush1.msra.mxu0 0.0
    %999 = vmatprep.subr.mxu0 0.0
    %1000 = vmatpush1.msra.mxu0 0.0
    %1001 = vmatprep.subr.mxu0 0.0
    %1002 = vmatpush1.msra.mxu0 0.0
    %1003 = vmatprep.subr.mxu0 0.0
    %1004 = vmatpush1.msra.mxu0 0.0
    %1005 = vmatprep.subr.mxu0 0.0
    %1006 = vmatpush1.msra.mxu0 0.0
    %1007 = vmatprep.subr.mxu0 0.0
    %1008 = vmatpush1.msra.mxu0 0.0
    %1009 = vmatprep.subr.mxu0 0.0
    %1010 = vmatpush1.msra.mxu0 0.0
    %1011 = vmatprep.subr.mxu0 0.0
    %1012 = vmatpush1.msra.mxu0 0.0
    %1013 = vmatprep.subr.mxu0 0.0
    %1014 = vmatpush1.msra.mxu0 0.0
    %1015 = vmatprep.mubr.f32.mxu0 0.0
    %1016 = vmatmul.mubr.f32.gmra.mrb[0].mxu0 %v284
    %v1017 = vpop.f32.mrb[0].mxu0
    %v1018 = vadd.f32 %v941, %v1017
    %v1019 = vpop.f32.mrb[0].mxu0
    %v1020 = vadd.f32 %v943, %v1019
    %1021 = vmatprep.mubr.f32.mxu0 0.0
    %1022 = vmatmul.mubr.f32.gmra.mrb[0].mxu0 %v287
    %v1023 = vpop.f32.mrb[0].mxu0
    %v1024 = vadd.f32 %v947, %v1023
    %v1025 = vpop.f32.mrb[0].mxu0
    %v1026 = vadd.f32 %v949, %v1025
    %1027 = vdwg.mxu0
    %1028 = vmatprep.subr.mxu0 %v293
    %1029 = vmatpush1.msra.mxu0 %v292
    %1030 = vmatprep.subr.mxu0 %v302
    %1031 = vmatpush1.msra.mxu0 %v301
    %1032 = vmatprep.subr.mxu0 %v311
    %1033 = vmatpush1.msra.mxu0 %v310
    %1034 = vmatprep.subr.mxu0 %v320
    %1035 = vmatpush1.msra.mxu0 %v319
    %1036 = vmatprep.subr.mxu0 %v329
    %1037 = vmatpush1.msra.mxu0 %v328
    %1038 = vmatprep.subr.mxu0 %v338
    %1039 = vmatpush1.msra.mxu0 %v337
    %1040 = vmatprep.subr.mxu0 %v347
    %1041 = vmatpush1.msra.mxu0 %v346
    %1042 = vmatprep.subr.mxu0 %v356
    %1043 = vmatpush1.msra.mxu0 %v355
    %1044 = vmatprep.subr.mxu0 %v365
    %1045 = vmatpush1.msra.mxu0 %v364
    %1046 = vmatprep.subr.mxu0 %v374
    %1047 = vmatpush1.msra.mxu0 %v373
    %1048 = vmatprep.subr.mxu0 %v383
    %1049 = vmatpush1.msra.mxu0 %v382
    %1050 = vmatprep.subr.mxu0 %v392
    %1051 = vmatpush1.msra.mxu0 %v391
    %1052 = vmatprep.subr.mxu0 %v401
    %1053 = vmatpush1.msra.mxu0 %v400
    %1054 = vmatprep.subr.mxu0 %v410
    %1055 = vmatpush1.msra.mxu0 %v409
    %1056 = vmatprep.subr.mxu0 %v419
    %1057 = vmatpush1.msra.mxu0 %v418
    %1058 = vmatprep.subr.mxu0 %v428
    %1059 = vmatpush1.msra.mxu0 %v427
    %1060 = vmatprep.subr.mxu0 %v437
    %1061 = vmatpush1.msra.mxu0 %v436
    %1062 = vmatprep.subr.mxu0 %v446
    %1063 = vmatpush1.msra.mxu0 %v445
    %1064 = vmatprep.subr.mxu0 %v455
    %1065 = vmatpush1.msra.mxu0 %v454
    %1066 = vmatprep.subr.mxu0 %v464
    %1067 = vmatpush1.msra.mxu0 %v463
    %1068 = vmatprep.subr.mxu0 %v473
    %1069 = vmatpush1.msra.mxu0 %v472
    %1070 = vmatprep.subr.mxu0 %v482
    %1071 = vmatpush1.msra.mxu0 %v481
    %1072 = vmatprep.subr.mxu0 %v491
    %1073 = vmatpush1.msra.mxu0 %v490
    %1074 = vmatprep.subr.mxu0 %v500
    %1075 = vmatpush1.msra.mxu0 %v499
    %1076 = vmatprep.subr.mxu0 %v509
    %1077 = vmatpush1.msra.mxu0 %v508
    %1078 = vmatprep.subr.mxu0 %v518
    %1079 = vmatpush1.msra.mxu0 %v517
    %1080 = vmatprep.subr.mxu0 %v527
    %1081 = vmatpush1.msra.mxu0 %v526
    %1082 = vmatprep.subr.mxu0 %v536
    %1083 = vmatpush1.msra.mxu0 %v535
    %1084 = vmatprep.subr.mxu0 %v545
    %1085 = vmatpush1.msra.mxu0 %v544
    %1086 = vmatprep.subr.mxu0 %v554
    %1087 = vmatpush1.msra.mxu0 %v553
    %1088 = vmatprep.subr.mxu0 %v563
    %1089 = vmatpush1.msra.mxu0 %v562
    %1090 = vmatprep.subr.mxu0 %v572
    %1091 = vmatpush1.msra.mxu0 %v571
    %1092 = vmatprep.mubr.f32.mxu0 %v283
    %1093 = vmatmul.mubr.f32.gmra.mrb[0].mxu0 %v282
    %v1094 = vpop.f32.mrb[0].mxu0
    %v1095 = vadd.f32 0.0, %v1094
    %v1096 = vpop.f32.mrb[0].mxu0
    %v1097 = vadd.f32 0.0, %v1096
    %1098 = vmatprep.mubr.f32.mxu0 %v286
    %1099 = vmatmul.mubr.f32.gmra.mrb[0].mxu0 %v285
    %v1100 = vpop.f32.mrb[0].mxu0
    %v1101 = vadd.f32 0.0, %v1100
    %v1102 = vpop.f32.mrb[0].mxu0
    %v1103 = vadd.f32 0.0, %v1102
    %1104 = vdwg.mxu0
    %1105 = vmatprep.subr.mxu0 %v581
    %1106 = vmatpush1.msra.mxu0 %v580
    %1107 = vmatprep.subr.mxu0 %v590
    %1108 = vmatpush1.msra.mxu0 %v589
    %1109 = vmatprep.subr.mxu0 %v599
    %1110 = vmatpush1.msra.mxu0 %v598
    %1111 = vmatprep.subr.mxu0 %v608
    %1112 = vmatpush1.msra.mxu0 %v607
    %1113 = vmatprep.subr.mxu0 %v617
    %1114 = vmatpush1.msra.mxu0 %v616
    %1115 = vmatprep.subr.mxu0 %v626
    %1116 = vmatpush1.msra.mxu0 %v625
    %1117 = vmatprep.subr.mxu0 %v635
    %1118 = vmatpush1.msra.mxu0 %v634
    %1119 = vmatprep.subr.mxu0 %v644
    %1120 = vmatpush1.msra.mxu0 %v643
    %1121 = vmatprep.subr.mxu0 %v653
    %1122 = vmatpush1.msra.mxu0 %v652
    %1123 = vmatprep.subr.mxu0 %v662
    %1124 = vmatpush1.msra.mxu0 %v661
    %1125 = vmatprep.subr.mxu0 %v671
    %1126 = vmatpush1.msra.mxu0 %v670
    %1127 = vmatprep.subr.mxu0 %v680
    %1128 = vmatpush1.msra.mxu0 %v679
    %1129 = vmatprep.subr.mxu0 %v689
    %1130 = vmatpush1.msra.mxu0 %v688
    %1131 = vmatprep.subr.mxu0 %v698
    %1132 = vmatpush1.msra.mxu0 %v697
    %1133 = vmatprep.subr.mxu0 %v707
    %1134 = vmatpush1.msra.mxu0 %v706
    %1135 = vmatprep.subr.mxu0 %v716
    %1136 = vmatpush1.msra.mxu0 %v715
    %1137 = vmatprep.subr.mxu0 0.0
    %1138 = vmatpush1.msra.mxu0 0.0
    %1139 = vmatprep.subr.mxu0 0.0
    %1140 = vmatpush1.msra.mxu0 0.0
    %1141 = vmatprep.subr.mxu0 0.0
    %1142 = vmatpush1.msra.mxu0 0.0
    %1143 = vmatprep.subr.mxu0 0.0
    %1144 = vmatpush1.msra.mxu0 0.0
    %1145 = vmatprep.subr.mxu0 0.0
    %1146 = vmatpush1.msra.mxu0 0.0
    %1147 = vmatprep.subr.mxu0 0.0
    %1148 = vmatpush1.msra.mxu0 0.0
    %1149 = vmatprep.subr.mxu0 0.0
    %1150 = vmatpush1.msra.mxu0 0.0
    %1151 = vmatprep.subr.mxu0 0.0
    %1152 = vmatpush1.msra.mxu0 0.0
    %1153 = vmatprep.subr.mxu0 0.0
    %1154 = vmatpush1.msra.mxu0 0.0
    %1155 = vmatprep.subr.mxu0 0.0
    %1156 = vmatpush1.msra.mxu0 0.0
    %1157 = vmatprep.subr.mxu0 0.0
    %1158 = vmatpush1.msra.mxu0 0.0
    %1159 = vmatprep.subr.mxu0 0.0
    %1160 = vmatpush1.msra.mxu0 0.0
    %1161 = vmatprep.subr.mxu0 0.0
    %1162 = vmatpush1.msra.mxu0 0.0
    %1163 = vmatprep.subr.mxu0 0.0
    %1164 = vmatpush1.msra.mxu0 0.0
    %1165 = vmatprep.subr.mxu0 0.0
    %1166 = vmatpush1.msra.mxu0 0.0
    %1167 = vmatprep.subr.mxu0 0.0
    %1168 = vmatpush1.msra.mxu0 0.0
    %1169 = vmatprep.mubr.f32.mxu0 0.0
    %1170 = vmatmul.mubr.f32.gmra.mrb[0].mxu0 %v284
    %v1171 = vpop.f32.mrb[0].mxu0
    %v1172 = vadd.f32 %v1095, %v1171
    %v1173 = vpop.f32.mrb[0].mxu0
    %v1174 = vadd.f32 %v1097, %v1173
    %1175 = vmatprep.mubr.f32.mxu0 0.0
    %1176 = vmatmul.mubr.f32.gmra.mrb[0].mxu0 %v287
    %v1177 = vpop.f32.mrb[0].mxu0
    %v1178 = vadd.f32 %v1101, %v1177
    %v1179 = vpop.f32.mrb[0].mxu0
    %v1180 = vadd.f32 %v1103, %v1179
    %1181 = vdwg.mxu0
    %1182 = vmatprep.subr.mxu0 %v295
    %1183 = vmatpush1.msra.mxu0 %v294
    %1184 = vmatprep.subr.mxu0 %v304
    %1185 = vmatpush1.msra.mxu0 %v303
    %1186 = vmatprep.subr.mxu0 %v313
    %1187 = vmatpush1.msra.mxu0 %v312
    %1188 = vmatprep.subr.mxu0 %v322
    %1189 = vmatpush1.msra.mxu0 %v321
    %1190 = vmatprep.subr.mxu0 %v331
    %1191 = vmatpush1.msra.mxu0 %v330
    %1192 = vmatprep.subr.mxu0 %v340
    %1193 = vmatpush1.msra.mxu0 %v339
    %1194 = vmatprep.subr.mxu0 %v349
    %1195 = vmatpush1.msra.mxu0 %v348
    %1196 = vmatprep.subr.mxu0 %v358
    %1197 = vmatpush1.msra.mxu0 %v357
    %1198 = vmatprep.subr.mxu0 %v367
    %1199 = vmatpush1.msra.mxu0 %v366
    %1200 = vmatprep.subr.mxu0 %v376
    %1201 = vmatpush1.msra.mxu0 %v375
    %1202 = vmatprep.subr.mxu0 %v385
    %1203 = vmatpush1.msra.mxu0 %v384
    %1204 = vmatprep.subr.mxu0 %v394
    %1205 = vmatpush1.msra.mxu0 %v393
    %1206 = vmatprep.subr.mxu0 %v403
    %1207 = vmatpush1.msra.mxu0 %v402
    %1208 = vmatprep.subr.mxu0 %v412
    %1209 = vmatpush1.msra.mxu0 %v411
    %1210 = vmatprep.subr.mxu0 %v421
    %1211 = vmatpush1.msra.mxu0 %v420
    %1212 = vmatprep.subr.mxu0 %v430
    %1213 = vmatpush1.msra.mxu0 %v429
    %1214 = vmatprep.subr.mxu0 %v439
    %1215 = vmatpush1.msra.mxu0 %v438
    %1216 = vmatprep.subr.mxu0 %v448
    %1217 = vmatpush1.msra.mxu0 %v447
    %1218 = vmatprep.subr.mxu0 %v457
    %1219 = vmatpush1.msra.mxu0 %v456
    %1220 = vmatprep.subr.mxu0 %v466
    %1221 = vmatpush1.msra.mxu0 %v465
    %1222 = vmatprep.subr.mxu0 %v475
    %1223 = vmatpush1.msra.mxu0 %v474
    %1224 = vmatprep.subr.mxu0 %v484
    %1225 = vmatpush1.msra.mxu0 %v483
    %1226 = vmatprep.subr.mxu0 %v493
    %1227 = vmatpush1.msra.mxu0 %v492
    %1228 = vmatprep.subr.mxu0 %v502
    %1229 = vmatpush1.msra.mxu0 %v501
    %1230 = vmatprep.subr.mxu0 %v511
    %1231 = vmatpush1.msra.mxu0 %v510
    %1232 = vmatprep.subr.mxu0 %v520
    %1233 = vmatpush1.msra.mxu0 %v519
    %1234 = vmatprep.subr.mxu0 %v529
    %1235 = vmatpush1.msra.mxu0 %v528
    %1236 = vmatprep.subr.mxu0 %v538
    %1237 = vmatpush1.msra.mxu0 %v537
    %1238 = vmatprep.subr.mxu0 %v547
    %1239 = vmatpush1.msra.mxu0 %v546
    %1240 = vmatprep.subr.mxu0 %v556
    %1241 = vmatpush1.msra.mxu0 %v555
    %1242 = vmatprep.subr.mxu0 %v565
    %1243 = vmatpush1.msra.mxu0 %v564
    %1244 = vmatprep.subr.mxu0 %v574
    %1245 = vmatpush1.msra.mxu0 %v573
    %1246 = vmatprep.mubr.f32.mxu0 %v283
    %1247 = vmatmul.mubr.f32.gmra.mrb[0].mxu0 %v282
    %v1248 = vpop.f32.mrb[0].mxu0
    %v1249 = vadd.f32 0.0, %v1248
    %v1250 = vpop.f32.mrb[0].mxu0
    %v1251 = vadd.f32 0.0, %v1250
    %1252 = vmatprep.mubr.f32.mxu0 %v286
    %1253 = vmatmul.mubr.f32.gmra.mrb[0].mxu0 %v285
    %v1254 = vpop.f32.mrb[0].mxu0
    %v1255 = vadd.f32 0.0, %v1254
    %v1256 = vpop.f32.mrb[0].mxu0
    %v1257 = vadd.f32 0.0, %v1256
    %1258 = vdwg.mxu0
    %1259 = vmatprep.subr.mxu0 %v583
    %1260 = vmatpush1.msra.mxu0 %v582
    %1261 = vmatprep.subr.mxu0 %v592
    %1262 = vmatpush1.msra.mxu0 %v591
    %1263 = vmatprep.subr.mxu0 %v601
    %1264 = vmatpush1.msra.mxu0 %v600
    %1265 = vmatprep.subr.mxu0 %v610
    %1266 = vmatpush1.msra.mxu0 %v609
    %1267 = vmatprep.subr.mxu0 %v619
    %1268 = vmatpush1.msra.mxu0 %v618
    %1269 = vmatprep.subr.mxu0 %v628
    %1270 = vmatpush1.msra.mxu0 %v627
    %1271 = vmatprep.subr.mxu0 %v637
    %1272 = vmatpush1.msra.mxu0 %v636
    %1273 = vmatprep.subr.mxu0 %v646
    %1274 = vmatpush1.msra.mxu0 %v645
    %1275 = vmatprep.subr.mxu0 %v655
    %1276 = vmatpush1.msra.mxu0 %v654
    %1277 = vmatprep.subr.mxu0 %v664
    %1278 = vmatpush1.msra.mxu0 %v663
    %1279 = vmatprep.subr.mxu0 %v673
    %1280 = vmatpush1.msra.mxu0 %v672
    %1281 = vmatprep.subr.mxu0 %v682
    %1282 = vmatpush1.msra.mxu0 %v681
    %1283 = vmatprep.subr.mxu0 %v691
    %1284 = vmatpush1.msra.mxu0 %v690
    %1285 = vmatprep.subr.mxu0 %v700
    %1286 = vmatpush1.msra.mxu0 %v699
    %1287 = vmatprep.subr.mxu0 %v709
    %1288 = vmatpush1.msra.mxu0 %v708
    %1289 = vmatprep.subr.mxu0 %v718
    %1290 = vmatpush1.msra.mxu0 %v717
    %1291 = vmatprep.subr.mxu0 0.0
    %1292 = vmatpush1.msra.mxu0 0.0
    %1293 = vmatprep.subr.mxu0 0.0
    %1294 = vmatpush1.msra.mxu0 0.0
    %1295 = vmatprep.subr.mxu0 0.0
    %1296 = vmatpush1.msra.mxu0 0.0
    %1297 = vmatprep.subr.mxu0 0.0
    %1298 = vmatpush1.msra.mxu0 0.0
    %1299 = vmatprep.subr.mxu0 0.0
    %1300 = vmatpush1.msra.mxu0 0.0
    %1301 = vmatprep.subr.mxu0 0.0
    %1302 = vmatpush1.msra.mxu0 0.0
    %1303 = vmatprep.subr.mxu0 0.0
    %1304 = vmatpush1.msra.mxu0 0.0
    %1305 = vmatprep.subr.mxu0 0.0
    %1306 = vmatpush1.msra.mxu0 0.0
    %1307 = vmatprep.subr.mxu0 0.0
    %1308 = vmatpush1.msra.mxu0 0.0
    %1309 = vmatprep.subr.mxu0 0.0
    %1310 = vmatpush1.msra.mxu0 0.0
    %1311 = vmatprep.subr.mxu0 0.0
    %1312 = vmatpush1.msra.mxu0 0.0
    %1313 = vmatprep.subr.mxu0 0.0
    %1314 = vmatpush1.msra.mxu0 0.0
    %1315 = vmatprep.subr.mxu0 0.0
    %1316 = vmatpush1.msra.mxu0 0.0
    %1317 = vmatprep.subr.mxu0 0.0
    %1318 = vmatpush1.msra.mxu0 0.0
    %1319 = vmatprep.subr.mxu0 0.0
    %1320 = vmatpush1.msra.mxu0 0.0
    %1321 = vmatprep.subr.mxu0 0.0
    %1322 = vmatpush1.msra.mxu0 0.0
    %1323 = vmatprep.mubr.f32.mxu0 0.0
    %1324 = vmatmul.mubr.f32.gmra.mrb[0].mxu0 %v284
    %v1325 = vpop.f32.mrb[0].mxu0
    %v1326 = vadd.f32 %v1249, %v1325
    %v1327 = vpop.f32.mrb[0].mxu0
    %v1328 = vadd.f32 %v1251, %v1327
    %1329 = vmatprep.mubr.f32.mxu0 0.0
    %1330 = vmatmul.mubr.f32.gmra.mrb[0].mxu0 %v287
    %v1331 = vpop.f32.mrb[0].mxu0
    %v1332 = vadd.f32 %v1255, %v1331
    %v1333 = vpop.f32.mrb[0].mxu0
    %v1334 = vadd.f32 %v1257, %v1333
    %1335 = vdwg.mxu0
    %1336 = vmatprep.subr.mxu0 0.0
    %1337 = vmatpush1.msra.mxu0 %v296
    %1338 = vmatprep.subr.mxu0 0.0
    %1339 = vmatpush1.msra.mxu0 %v305
    %1340 = vmatprep.subr.mxu0 0.0
    %1341 = vmatpush1.msra.mxu0 %v314
    %1342 = vmatprep.subr.mxu0 0.0
    %1343 = vmatpush1.msra.mxu0 %v323
    %1344 = vmatprep.subr.mxu0 0.0
    %1345 = vmatpush1.msra.mxu0 %v332
    %1346 = vmatprep.subr.mxu0 0.0
    %1347 = vmatpush1.msra.mxu0 %v341
    %1348 = vmatprep.subr.mxu0 0.0
    %1349 = vmatpush1.msra.mxu0 %v350
    %1350 = vmatprep.subr.mxu0 0.0
    %1351 = vmatpush1.msra.mxu0 %v359
    %1352 = vmatprep.subr.mxu0 0.0
    %1353 = vmatpush1.msra.mxu0 %v368
    %1354 = vmatprep.subr.mxu0 0.0
    %1355 = vmatpush1.msra.mxu0 %v377
    %1356 = vmatprep.subr.mxu0 0.0
    %1357 = vmatpush1.msra.mxu0 %v386
    %1358 = vmatprep.subr.mxu0 0.0
    %1359 = vmatpush1.msra.mxu0 %v395
    %1360 = vmatprep.subr.mxu0 0.0
    %1361 = vmatpush1.msra.mxu0 %v404
    %1362 = vmatprep.subr.mxu0 0.0
    %1363 = vmatpush1.msra.mxu0 %v413
    %1364 = vmatprep.subr.mxu0 0.0
    %1365 = vmatpush1.msra.mxu0 %v422
    %1366 = vmatprep.subr.mxu0 0.0
    %1367 = vmatpush1.msra.mxu0 %v431
    %1368 = vmatprep.subr.mxu0 0.0
    %1369 = vmatpush1.msra.mxu0 %v440
    %1370 = vmatprep.subr.mxu0 0.0
    %1371 = vmatpush1.msra.mxu0 %v449
    %1372 = vmatprep.subr.mxu0 0.0
    %1373 = vmatpush1.msra.mxu0 %v458
    %1374 = vmatprep.subr.mxu0 0.0
    %1375 = vmatpush1.msra.mxu0 %v467
    %1376 = vmatprep.subr.mxu0 0.0
    %1377 = vmatpush1.msra.mxu0 %v476
    %1378 = vmatprep.subr.mxu0 0.0
    %1379 = vmatpush1.msra.mxu0 %v485
    %1380 = vmatprep.subr.mxu0 0.0
    %1381 = vmatpush1.msra.mxu0 %v494
    %1382 = vmatprep.subr.mxu0 0.0
    %1383 = vmatpush1.msra.mxu0 %v503
    %1384 = vmatprep.subr.mxu0 0.0
    %1385 = vmatpush1.msra.mxu0 %v512
    %1386 = vmatprep.subr.mxu0 0.0
    %1387 = vmatpush1.msra.mxu0 %v521
    %1388 = vmatprep.subr.mxu0 0.0
    %1389 = vmatpush1.msra.mxu0 %v530
    %1390 = vmatprep.subr.mxu0 0.0
    %1391 = vmatpush1.msra.mxu0 %v539
    %1392 = vmatprep.subr.mxu0 0.0
    %1393 = vmatpush1.msra.mxu0 %v548
    %1394 = vmatprep.subr.mxu0 0.0
    %1395 = vmatpush1.msra.mxu0 %v557
    %1396 = vmatprep.subr.mxu0 0.0
    %1397 = vmatpush1.msra.mxu0 %v566
    %1398 = vmatprep.subr.mxu0 0.0
    %1399 = vmatpush1.msra.mxu0 %v575
    %1400 = vmatprep.mubr.f32.mxu0 %v283
    %1401 = vmatmul.mubr.f32.gmra.mrb[0].mxu0 %v282
    %v1402 = vpop.f32.mrb[0].mxu0
    %v1403 = vadd.f32 0.0, %v1402
    %v1404 = vpop.f32.mrb[0].mxu0
    %1405 = vmatprep.mubr.f32.mxu0 %v286
    %1406 = vmatmul.mubr.f32.gmra.mrb[0].mxu0 %v285
    %v1407 = vpop.f32.mrb[0].mxu0
    %v1408 = vadd.f32 0.0, %v1407
    %v1409 = vpop.f32.mrb[0].mxu0
    %1410 = vdwg.mxu0
    %1411 = vmatprep.subr.mxu0 0.0
    %1412 = vmatpush1.msra.mxu0 %v584
    %1413 = vmatprep.subr.mxu0 0.0
    %1414 = vmatpush1.msra.mxu0 %v593
    %1415 = vmatprep.subr.mxu0 0.0
    %1416 = vmatpush1.msra.mxu0 %v602
    %1417 = vmatprep.subr.mxu0 0.0
    %1418 = vmatpush1.msra.mxu0 %v611
    %1419 = vmatprep.subr.mxu0 0.0
    %1420 = vmatpush1.msra.mxu0 %v620
    %1421 = vmatprep.subr.mxu0 0.0
    %1422 = vmatpush1.msra.mxu0 %v629
    %1423 = vmatprep.subr.mxu0 0.0
    %1424 = vmatpush1.msra.mxu0 %v638
    %1425 = vmatprep.subr.mxu0 0.0
    %1426 = vmatpush1.msra.mxu0 %v647
    %1427 = vmatprep.subr.mxu0 0.0
    %1428 = vmatpush1.msra.mxu0 %v656
    %1429 = vmatprep.subr.mxu0 0.0
    %1430 = vmatpush1.msra.mxu0 %v665
    %1431 = vmatprep.subr.mxu0 0.0
    %1432 = vmatpush1.msra.mxu0 %v674
    %1433 = vmatprep.subr.mxu0 0.0
    %1434 = vmatpush1.msra.mxu0 %v683
    %1435 = vmatprep.subr.mxu0 0.0
    %1436 = vmatpush1.msra.mxu0 %v692
    %1437 = vmatprep.subr.mxu0 0.0
    %1438 = vmatpush1.msra.mxu0 %v701
    %1439 = vmatprep.subr.mxu0 0.0
    %1440 = vmatpush1.msra.mxu0 %v710
    %1441 = vmatprep.subr.mxu0 0.0
    %1442 = vmatpush1.msra.mxu0 %v719
    %1443 = vmatprep.subr.mxu0 0.0
    %1444 = vmatpush1.msra.mxu0 0.0
    %1445 = vmatprep.subr.mxu0 0.0
    %1446 = vmatpush1.msra.mxu0 0.0
    %1447 = vmatprep.subr.mxu0 0.0
    %1448 = vmatpush1.msra.mxu0 0.0
    %1449 = vmatprep.subr.mxu0 0.0
    %1450 = vmatpush1.msra.mxu0 0.0
    %1451 = vmatprep.subr.mxu0 0.0
    %1452 = vmatpush1.msra.mxu0 0.0
    %1453 = vmatprep.subr.mxu0 0.0
    %1454 = vmatpush1.msra.mxu0 0.0
    %1455 = vmatprep.subr.mxu0 0.0
    %1456 = vmatpush1.msra.mxu0 0.0
    %1457 = vmatprep.subr.mxu0 0.0
    %1458 = vmatpush1.msra.mxu0 0.0
    %1459 = vmatprep.subr.mxu0 0.0
    %1460 = vmatpush1.msra.mxu0 0.0
    %1461 = vmatprep.subr.mxu0 0.0
    %1462 = vmatpush1.msra.mxu0 0.0
    %1463 = vmatprep.subr.mxu0 0.0
    %1464 = vmatpush1.msra.mxu0 0.0
    %1465 = vmatprep.subr.mxu0 0.0
    %1466 = vmatpush1.msra.mxu0 0.0
    %1467 = vmatprep.subr.mxu0 0.0
    %1468 = vmatpush1.msra.mxu0 0.0
    %1469 = vmatprep.subr.mxu0 0.0
    %1470 = vmatpush1.msra.mxu0 0.0
    %1471 = vmatprep.subr.mxu0 0.0
    %1472 = vmatpush1.msra.mxu0 0.0
    %1473 = vmatprep.subr.mxu0 0.0
    %1474 = vmatpush1.msra.mxu0 0.0
    %1475 = vmatprep.mubr.f32.mxu0 0.0
    %1476 = vmatmul.mubr.f32.gmra.mrb[0].mxu0 %v284
    %v1477 = vpop.f32.mrb[0].mxu0
    %v1478 = vadd.f32 %v1403, %v1477
    %v1479 = vpop.f32.mrb[0].mxu0
    %1480 = vmatprep.mubr.f32.mxu0 0.0
    %1481 = vmatmul.mubr.f32.gmra.mrb[0].mxu0 %v287
    %v1482 = vpop.f32.mrb[0].mxu0
    %v1483 = vadd.f32 %v1408, %v1482
    %v1484 = vpop.f32.mrb[0].mxu0
    %1485 = vdwg.mxu0
    %v1486 = vlaneseq
    %v1487 = vshrl.u32 %v1486, 7
    %v1488 = vlaneseq
    %v1489 = vand.u32 %v1488, 127
    %vm1490 = vcmp.ge.s32.totalorder %v1487, %v1489
    %vm1491 = vcmask 523264
    %v1493 = vsel %vm1491, %v864, 0
    %v1496 = vsel %vm1491, %v1020, 0
    %1498 = vmatprep.subr.mxu0 0.0
    %1499 = vmatpush1.xpose.msra.mxu0 %v1496
    %1500 = vmatprep.subr.mxu0 0.0
    %1501 = vmatpush1.xpose.msra.mxu0 0.0
    %1502 = vmatprep.subr.mxu0 0.0
    %1503 = vmatpush1.xpose.msra.mxu0 0.0
    %1504 = vmatprep.subr.mxu0 0.0
    %1505 = vmatpush1.xpose.msra.mxu0 0.0
    %1506 = vmatprep.subr.mxu0 0.0
    %1507 = vmatpush1.xpose.msra.mxu0 0.0
    %1508 = vmatprep.subr.mxu0 0.0
    %1509 = vmatpush1.xpose.msra.mxu0 0.0
    %1510 = vmatprep.subr.mxu0 0.0
    %1511 = vmatpush1.xpose.msra.mxu0 0.0
    %1512 = vmatprep.subr.mxu0 0.0
    %1513 = vmatpush1.xpose.msra.mxu0 0.0
    %1514 = vmatprep.subr.mxu0 0.0
    %1515 = vmatpush1.xpose.msra.mxu0 0.0
    %1516 = vmatprep.subr.mxu0 0.0
    %1517 = vmatpush1.xpose.msra.mxu0 0.0
    %1518 = vmatprep.subr.mxu0 0.0
    %1519 = vmatpush1.xpose.msra.mxu0 0.0
    %1520 = vmatprep.subr.mxu0 0.0
    %1521 = vmatpush1.xpose.msra.mxu0 0.0
    %1522 = vmatprep.subr.mxu0 0.0
    %1523 = vmatpush1.xpose.msra.mxu0 0.0
    %1524 = vmatprep.subr.mxu0 0.0
    %1525 = vmatpush1.xpose.msra.mxu0 0.0
    %1526 = vmatprep.subr.mxu0 0.0
    %1527 = vmatpush1.xpose.msra.mxu0 0.0
    %1528 = vmatprep.subr.mxu0 0.0
    %1529 = vmatpush1.xpose.msra.mxu0 0.0
    %1530 = vmatprep.subr.mxu0 0.0
    %1531 = vmatpush1.xpose.msra.mxu0 0.0
    %1532 = vmatprep.subr.mxu0 0.0
    %1533 = vmatpush1.xpose.msra.mxu0 0.0
    %1534 = vmatprep.subr.mxu0 0.0
    %1535 = vmatpush1.xpose.msra.mxu0 0.0
    %1536 = vmatprep.subr.mxu0 0.0
    %1537 = vmatpush1.xpose.msra.mxu0 0.0
    %1538 = vmatprep.subr.mxu0 0.0
    %1539 = vmatpush1.xpose.msra.mxu0 0.0
    %1540 = vmatprep.subr.mxu0 0.0
    %1541 = vmatpush1.xpose.msra.mxu0 0.0
    %1542 = vmatprep.subr.mxu0 0.0
    %1543 = vmatpush1.xpose.msra.mxu0 0.0
    %1544 = vmatprep.subr.mxu0 0.0
    %1545 = vmatpush1.xpose.msra.mxu0 0.0
    %1546 = vmatprep.subr.mxu0 0.0
    %1547 = vmatpush1.xpose.msra.mxu0 0.0
    %1548 = vmatprep.subr.mxu0 0.0
    %1549 = vmatpush1.xpose.msra.mxu0 0.0
    %1550 = vmatprep.subr.mxu0 0.0
    %1551 = vmatpush1.xpose.msra.mxu0 0.0
    %1552 = vmatprep.subr.mxu0 0.0
    %1553 = vmatpush1.xpose.msra.mxu0 0.0
    %1554 = vmatprep.subr.mxu0 0.0
    %1555 = vmatpush1.xpose.msra.mxu0 0.0
    %1556 = vmatprep.subr.mxu0 0.0
    %1557 = vmatpush1.xpose.msra.mxu0 0.0
    %1558 = vmatprep.subr.mxu0 0.0
    %1559 = vmatpush1.xpose.msra.mxu0 0.0
    %1560 = vmatprep.subr.mxu0 0.0
    %1561 = vmatpush1.xpose.msra.mxu0 0.0
    %1562 = vmatprep.mubr.f32.mxu0 0.0
    %1563 = vmatmul.mubr.f32.gmra.mrb[0].mxu0 %v1493
    %v1564 = vpop.f32.mrb[0].mxu0
    %v1565 = vadd.f32 0.0, %v1564
    %v1566 = vpop.f32.mrb[0].mxu0
    %1567 = vdwg.mxu0
    %v1569 = vsel %vm1491, %v870, 0
    %v1572 = vsel %vm1491, %v1026, 0
    %1574 = vmatprep.subr.mxu0 0.0
    %1575 = vmatpush1.xpose.msra.mxu0 %v1572
    %1576 = vmatprep.subr.mxu0 0.0
    %1577 = vmatpush1.xpose.msra.mxu0 0.0
    %1578 = vmatprep.subr.mxu0 0.0
    %1579 = vmatpush1.xpose.msra.mxu0 0.0
    %1580 = vmatprep.subr.mxu0 0.0
    %1581 = vmatpush1.xpose.msra.mxu0 0.0
    %1582 = vmatprep.subr.mxu0 0.0
    %1583 = vmatpush1.xpose.msra.mxu0 0.0
    %1584 = vmatprep.subr.mxu0 0.0
    %1585 = vmatpush1.xpose.msra.mxu0 0.0
    %1586 = vmatprep.subr.mxu0 0.0
    %1587 = vmatpush1.xpose.msra.mxu0 0.0
    %1588 = vmatprep.subr.mxu0 0.0
    %1589 = vmatpush1.xpose.msra.mxu0 0.0
    %1590 = vmatprep.subr.mxu0 0.0
    %1591 = vmatpush1.xpose.msra.mxu0 0.0
    %1592 = vmatprep.subr.mxu0 0.0
    %1593 = vmatpush1.xpose.msra.mxu0 0.0
    %1594 = vmatprep.subr.mxu0 0.0
    %1595 = vmatpush1.xpose.msra.mxu0 0.0
    %1596 = vmatprep.subr.mxu0 0.0
    %1597 = vmatpush1.xpose.msra.mxu0 0.0
    %1598 = vmatprep.subr.mxu0 0.0
    %1599 = vmatpush1.xpose.msra.mxu0 0.0
    %1600 = vmatprep.subr.mxu0 0.0
    %1601 = vmatpush1.xpose.msra.mxu0 0.0
    %1602 = vmatprep.subr.mxu0 0.0
    %1603 = vmatpush1.xpose.msra.mxu0 0.0
    %1604 = vmatprep.subr.mxu0 0.0
    %1605 = vmatpush1.xpose.msra.mxu0 0.0
    %1606 = vmatprep.subr.mxu0 0.0
    %1607 = vmatpush1.xpose.msra.mxu0 0.0
    %1608 = vmatprep.subr.mxu0 0.0
    %1609 = vmatpush1.xpose.msra.mxu0 0.0
    %1610 = vmatprep.subr.mxu0 0.0
    %1611 = vmatpush1.xpose.msra.mxu0 0.0
    %1612 = vmatprep.subr.mxu0 0.0
    %1613 = vmatpush1.xpose.msra.mxu0 0.0
    %1614 = vmatprep.subr.mxu0 0.0
    %1615 = vmatpush1.xpose.msra.mxu0 0.0
    %1616 = vmatprep.subr.mxu0 0.0
    %1617 = vmatpush1.xpose.msra.mxu0 0.0
    %1618 = vmatprep.subr.mxu0 0.0
    %1619 = vmatpush1.xpose.msra.mxu0 0.0
    %1620 = vmatprep.subr.mxu0 0.0
    %1621 = vmatpush1.xpose.msra.mxu0 0.0
    %1622 = vmatprep.subr.mxu0 0.0
    %1623 = vmatpush1.xpose.msra.mxu0 0.0
    %1624 = vmatprep.subr.mxu0 0.0
    %1625 = vmatpush1.xpose.msra.mxu0 0.0
    %1626 = vmatprep.subr.mxu0 0.0
    %1627 = vmatpush1.xpose.msra.mxu0 0.0
    %1628 = vmatprep.subr.mxu0 0.0
    %1629 = vmatpush1.xpose.msra.mxu0 0.0
    %1630 = vmatprep.subr.mxu0 0.0
    %1631 = vmatpush1.xpose.msra.mxu0 0.0
    %1632 = vmatprep.subr.mxu0 0.0
    %1633 = vmatpush1.xpose.msra.mxu0 0.0
    %1634 = vmatprep.subr.mxu0 0.0
    %1635 = vmatpush1.xpose.msra.mxu0 0.0
    %1636 = vmatprep.subr.mxu0 0.0
    %1637 = vmatpush1.xpose.msra.mxu0 0.0
    %1638 = vmatprep.mubr.f32.mxu0 0.0
    %1639 = vmatmul.mubr.f32.gmra.mrb[0].mxu0 %v1569
    %v1640 = vpop.f32.mrb[0].mxu0
    %v1641 = vadd.f32 0.0, %v1640
    %v1642 = vpop.f32.mrb[0].mxu0
    %1643 = vdwg.mxu0
    %v1644 = vmul.f32 %v1565, 0.05103104
    %v1645 = vmul.f32 %v1641, 0.05103104
    %v1646 = vsel %vm1490, 1, 0
    %vm1647 = vcmp.eq.s32.totalorder %v1646, 1
    %v1648 = vsel %vm1647, %v1644, -inf
    %v1649 = vsel %vm1647, %v1645, -inf
    %vm1650 = vcmask 64512
    %v1651 = vsel %vm1650, %v1648, -inf
    %1652 = vmax.xlane.f32.xlu0 %v1651
    %v1653 = vpop.xlane.xlu0 %1652
    %v1654 = vsel %vm1650, %v1649, -inf
    %1655 = vmax.xlane.f32.xlu0 %v1654
    %v1656 = vpop.xlane.xlu0 %1655
    %v1657 = vsub.f32 %v1648, %v1653
    %v1658 = vsub.f32 %v1649, %v1656
    %v1659 = vmul.f32 %v1657, 1.442695
    %v1660 = vpow.pop %v1659
    %v1661 = vmul.f32 %v1658, 1.442695
    %v1662 = vpow.pop %v1661
    %v1663 = vsel %vm1650, %v1660, 0.0
    %1664 = vadd.xlane.f32.xlu0 %v1663
    %v1665 = vpop.xlane.xlu0 %1664
    %v1666 = vsel %vm1650, %v1662, 0.0
    %1667 = vadd.xlane.f32.xlu0 %v1666
    %v1668 = vpop.xlane.xlu0 %1667
    %v1669 = vrcp.pop %v1665
    %v1670 = vmul.f32 1.0, %v1669
    %v1671 = vrcp.pop %v1668
    %v1672 = vmul.f32 1.0, %v1671
    %v1673 = vmul.f32 %v1660, %v1670
    %v1674 = vmul.f32 %v1662, %v1672
    %v1676 = vsel %vm1650, %v1673, 0
    %1678 = vmatprep.subr.mxu0 0.0
    %1679 = vmatpush1.msra.mxu0 %v1326
    %1680 = vmatprep.subr.mxu0 0.0
    %1681 = vmatpush1.msra.mxu0 0.0
    %1682 = vmatprep.subr.mxu0 0.0
    %1683 = vmatpush1.msra.mxu0 0.0
    %1684 = vmatprep.subr.mxu0 0.0
    %1685 = vmatpush1.msra.mxu0 0.0
    %1686 = vmatprep.subr.mxu0 0.0
    %1687 = vmatpush1.msra.mxu0 0.0
    %1688 = vmatprep.subr.mxu0 0.0
    %1689 = vmatpush1.msra.mxu0 0.0
    %1690 = vmatprep.subr.mxu0 0.0
    %1691 = vmatpush1.msra.mxu0 0.0
    %1692 = vmatprep.subr.mxu0 0.0
    %1693 = vmatpush1.msra.mxu0 0.0
    %1694 = vmatprep.subr.mxu0 0.0
    %1695 = vmatpush1.msra.mxu0 0.0
    %1696 = vmatprep.subr.mxu0 0.0
    %1697 = vmatpush1.msra.mxu0 0.0
    %1698 = vmatprep.subr.mxu0 0.0
    %1699 = vmatpush1.msra.mxu0 0.0
    %1700 = vmatprep.subr.mxu0 0.0
    %1701 = vmatpush1.msra.mxu0 0.0
    %1702 = vmatprep.subr.mxu0 0.0
    %1703 = vmatpush1.msra.mxu0 0.0
    %1704 = vmatprep.subr.mxu0 0.0
    %1705 = vmatpush1.msra.mxu0 0.0
    %1706 = vmatprep.subr.mxu0 0.0
    %1707 = vmatpush1.msra.mxu0 0.0
    %1708 = vmatprep.subr.mxu0 0.0
    %1709 = vmatpush1.msra.mxu0 0.0
    %1710 = vmatprep.subr.mxu0 0.0
    %1711 = vmatpush1.msra.mxu0 0.0
    %1712 = vmatprep.subr.mxu0 0.0
    %1713 = vmatpush1.msra.mxu0 0.0
    %1714 = vmatprep.subr.mxu0 0.0
    %1715 = vmatpush1.msra.mxu0 0.0
    %1716 = vmatprep.subr.mxu0 0.0
    %1717 = vmatpush1.msra.mxu0 0.0
    %1718 = vmatprep.subr.mxu0 0.0
    %1719 = vmatpush1.msra.mxu0 0.0
    %1720 = vmatprep.subr.mxu0 0.0
    %1721 = vmatpush1.msra.mxu0 0.0
    %1722 = vmatprep.subr.mxu0 0.0
    %1723 = vmatpush1.msra.mxu0 0.0
    %1724 = vmatprep.subr.mxu0 0.0
    %1725 = vmatpush1.msra.mxu0 0.0
    %1726 = vmatprep.subr.mxu0 0.0
    %1727 = vmatpush1.msra.mxu0 0.0
    %1728 = vmatprep.subr.mxu0 0.0
    %1729 = vmatpush1.msra.mxu0 0.0
    %1730 = vmatprep.subr.mxu0 0.0
    %1731 = vmatpush1.msra.mxu0 0.0
    %1732 = vmatprep.subr.mxu0 0.0
    %1733 = vmatpush1.msra.mxu0 0.0
    %1734 = vmatprep.subr.mxu0 0.0
    %1735 = vmatpush1.msra.mxu0 0.0
    %1736 = vmatprep.subr.mxu0 0.0
    %1737 = vmatpush1.msra.mxu0 0.0
    %1738 = vmatprep.subr.mxu0 0.0
    %1739 = vmatpush1.msra.mxu0 0.0
    %1740 = vmatprep.subr.mxu0 0.0
    %1741 = vmatpush1.msra.mxu0 0.0
    %1742 = vmatprep.mubr.f32.mxu0 0.0
    %1743 = vmatmul.mubr.f32.gmra.mrb[0].mxu0 %v1676
    %v1744 = vpop.f32.mrb[0].mxu0
    %v1745 = vadd.f32 0.0, %v1744
    %v1746 = vpop.f32.mrb[0].mxu0
    %1747 = vdwg.mxu0
    %v1749 = vsel %vm1650, %v1674, 0
    %1751 = vmatprep.subr.mxu0 0.0
    %1752 = vmatpush1.msra.mxu0 %v1332
    %1753 = vmatprep.subr.mxu0 0.0
    %1754 = vmatpush1.msra.mxu0 0.0
    %1755 = vmatprep.subr.mxu0 0.0
    %1756 = vmatpush1.msra.mxu0 0.0
    %1757 = vmatprep.subr.mxu0 0.0
    %1758 = vmatpush1.msra.mxu0 0.0
    %1759 = vmatprep.subr.mxu0 0.0
    %1760 = vmatpush1.msra.mxu0 0.0
    %1761 = vmatprep.subr.mxu0 0.0
    %1762 = vmatpush1.msra.mxu0 0.0
    %1763 = vmatprep.subr.mxu0 0.0
    %1764 = vmatpush1.msra.mxu0 0.0
    %1765 = vmatprep.subr.mxu0 0.0
    %1766 = vmatpush1.msra.mxu0 0.0
    %1767 = vmatprep.subr.mxu0 0.0
    %1768 = vmatpush1.msra.mxu0 0.0
    %1769 = vmatprep.subr.mxu0 0.0
    %1770 = vmatpush1.msra.mxu0 0.0
    %1771 = vmatprep.subr.mxu0 0.0
    %1772 = vmatpush1.msra.mxu0 0.0
    %1773 = vmatprep.subr.mxu0 0.0
    %1774 = vmatpush1.msra.mxu0 0.0
    %1775 = vmatprep.subr.mxu0 0.0
    %1776 = vmatpush1.msra.mxu0 0.0
    %1777 = vmatprep.subr.mxu0 0.0
    %1778 = vmatpush1.msra.mxu0 0.0
    %1779 = vmatprep.subr.mxu0 0.0
    %1780 = vmatpush1.msra.mxu0 0.0
    %1781 = vmatprep.subr.mxu0 0.0
    %1782 = vmatpush1.msra.mxu0 0.0
    %1783 = vmatprep.subr.mxu0 0.0
    %1784 = vmatpush1.msra.mxu0 0.0
    %1785 = vmatprep.subr.mxu0 0.0
    %1786 = vmatpush1.msra.mxu0 0.0
    %1787 = vmatprep.subr.mxu0 0.0
    %1788 = vmatpush1.msra.mxu0 0.0
    %1789 = vmatprep.subr.mxu0 0.0
    %1790 = vmatpush1.msra.mxu0 0.0
    %1791 = vmatprep.subr.mxu0 0.0
    %1792 = vmatpush1.msra.mxu0 0.0
    %1793 = vmatprep.subr.mxu0 0.0
    %1794 = vmatpush1.msra.mxu0 0.0
    %1795 = vmatprep.subr.mxu0 0.0
    %1796 = vmatpush1.msra.mxu0 0.0
    %1797 = vmatprep.subr.mxu0 0.0
    %1798 = vmatpush1.msra.mxu0 0.0
    %1799 = vmatprep.subr.mxu0 0.0
    %1800 = vmatpush1.msra.mxu0 0.0
    %1801 = vmatprep.subr.mxu0 0.0
    %1802 = vmatpush1.msra.mxu0 0.0
    %1803 = vmatprep.subr.mxu0 0.0
    %1804 = vmatpush1.msra.mxu0 0.0
    %1805 = vmatprep.subr.mxu0 0.0
    %1806 = vmatpush1.msra.mxu0 0.0
    %1807 = vmatprep.subr.mxu0 0.0
    %1808 = vmatpush1.msra.mxu0 0.0
    %1809 = vmatprep.subr.mxu0 0.0
    %1810 = vmatpush1.msra.mxu0 0.0
    %1811 = vmatprep.subr.mxu0 0.0
    %1812 = vmatpush1.msra.mxu0 0.0
    %1813 = vmatprep.subr.mxu0 0.0
    %1814 = vmatpush1.msra.mxu0 0.0
    %1815 = vmatprep.mubr.f32.mxu0 0.0
    %1816 = vmatmul.mubr.f32.gmra.mrb[0].mxu0 %v1749
    %v1817 = vpop.f32.mrb[0].mxu0
    %v1818 = vadd.f32 0.0, %v1817
    %v1819 = vpop.f32.mrb[0].mxu0
    %1820 = vdwg.mxu0
    %1821 = vrot.lane.b32.xlu0 %v864, 64
    %v1822 = vpop.permute.xlu0 %1821
    %1823 = vrot.lane.b32.xlu0 %v1020, 64
    %v1824 = vpop.permute.xlu0 %1823
    %v1825 = vsel %vm1491, %v1822, 0
    %v1827 = vsel %vm1491, %v1824, 0
    %1829 = vmatprep.subr.mxu0 0.0
    %1830 = vmatpush1.xpose.msra.mxu0 %v1827
    %1831 = vmatprep.subr.mxu0 0.0
    %1832 = vmatpush1.xpose.msra.mxu0 0.0
    %1833 = vmatprep.subr.mxu0 0.0
    %1834 = vmatpush1.xpose.msra.mxu0 0.0
    %1835 = vmatprep.subr.mxu0 0.0
    %1836 = vmatpush1.xpose.msra.mxu0 0.0
    %1837 = vmatprep.subr.mxu0 0.0
    %1838 = vmatpush1.xpose.msra.mxu0 0.0
    %1839 = vmatprep.subr.mxu0 0.0
    %1840 = vmatpush1.xpose.msra.mxu0 0.0
    %1841 = vmatprep.subr.mxu0 0.0
    %1842 = vmatpush1.xpose.msra.mxu0 0.0
    %1843 = vmatprep.subr.mxu0 0.0
    %1844 = vmatpush1.xpose.msra.mxu0 0.0
    %1845 = vmatprep.subr.mxu0 0.0
    %1846 = vmatpush1.xpose.msra.mxu0 0.0
    %1847 = vmatprep.subr.mxu0 0.0
    %1848 = vmatpush1.xpose.msra.mxu0 0.0
    %1849 = vmatprep.subr.mxu0 0.0
    %1850 = vmatpush1.xpose.msra.mxu0 0.0
    %1851 = vmatprep.subr.mxu0 0.0
    %1852 = vmatpush1.xpose.msra.mxu0 0.0
    %1853 = vmatprep.subr.mxu0 0.0
    %1854 = vmatpush1.xpose.msra.mxu0 0.0
    %1855 = vmatprep.subr.mxu0 0.0
    %1856 = vmatpush1.xpose.msra.mxu0 0.0
    %1857 = vmatprep.subr.mxu0 0.0
    %1858 = vmatpush1.xpose.msra.mxu0 0.0
    %1859 = vmatprep.subr.mxu0 0.0
    %1860 = vmatpush1.xpose.msra.mxu0 0.0
    %1861 = vmatprep.subr.mxu0 0.0
    %1862 = vmatpush1.xpose.msra.mxu0 0.0
    %1863 = vmatprep.subr.mxu0 0.0
    %1864 = vmatpush1.xpose.msra.mxu0 0.0
    %1865 = vmatprep.subr.mxu0 0.0
    %1866 = vmatpush1.xpose.msra.mxu0 0.0
    %1867 = vmatprep.subr.mxu0 0.0
    %1868 = vmatpush1.xpose.msra.mxu0 0.0
    %1869 = vmatprep.subr.mxu0 0.0
    %1870 = vmatpush1.xpose.msra.mxu0 0.0
    %1871 = vmatprep.subr.mxu0 0.0
    %1872 = vmatpush1.xpose.msra.mxu0 0.0
    %1873 = vmatprep.subr.mxu0 0.0
    %1874 = vmatpush1.xpose.msra.mxu0 0.0
    %1875 = vmatprep.subr.mxu0 0.0
    %1876 = vmatpush1.xpose.msra.mxu0 0.0
    %1877 = vmatprep.subr.mxu0 0.0
    %1878 = vmatpush1.xpose.msra.mxu0 0.0
    %1879 = vmatprep.subr.mxu0 0.0
    %1880 = vmatpush1.xpose.msra.mxu0 0.0
    %1881 = vmatprep.subr.mxu0 0.0
    %1882 = vmatpush1.xpose.msra.mxu0 0.0
    %1883 = vmatprep.subr.mxu0 0.0
    %1884 = vmatpush1.xpose.msra.mxu0 0.0
    %1885 = vmatprep.subr.mxu0 0.0
    %1886 = vmatpush1.xpose.msra.mxu0 0.0
    %1887 = vmatprep.subr.mxu0 0.0
    %1888 = vmatpush1.xpose.msra.mxu0 0.0
    %1889 = vmatprep.subr.mxu0 0.0
    %1890 = vmatpush1.xpose.msra.mxu0 0.0
    %1891 = vmatprep.subr.mxu0 0.0
    %1892 = vmatpush1.xpose.msra.mxu0 0.0
    %1893 = vmatprep.mubr.f32.mxu0 0.0
    %1894 = vmatmul.mubr.f32.gmra.mrb[0].mxu0 %v1825
    %v1895 = vpop.f32.mrb[0].mxu0
    %v1896 = vadd.f32 0.0, %v1895
    %v1897 = vpop.f32.mrb[0].mxu0
    %1898 = vdwg.mxu0
    %1899 = vrot.lane.b32.xlu0 %v870, 64
    %v1900 = vpop.permute.xlu0 %1899
    %1901 = vrot.lane.b32.xlu0 %v1026, 64
    %v1902 = vpop.permute.xlu0 %1901
    %v1903 = vsel %vm1491, %v1900, 0
    %v1905 = vsel %vm1491, %v1902, 0
    %1907 = vmatprep.subr.mxu0 0.0
    %1908 = vmatpush1.xpose.msra.mxu0 %v1905
    %1909 = vmatprep.subr.mxu0 0.0
    %1910 = vmatpush1.xpose.msra.mxu0 0.0
    %1911 = vmatprep.subr.mxu0 0.0
    %1912 = vmatpush1.xpose.msra.mxu0 0.0
    %1913 = vmatprep.subr.mxu0 0.0
    %1914 = vmatpush1.xpose.msra.mxu0 0.0
    %1915 = vmatprep.subr.mxu0 0.0
    %1916 = vmatpush1.xpose.msra.mxu0 0.0
    %1917 = vmatprep.subr.mxu0 0.0
    %1918 = vmatpush1.xpose.msra.mxu0 0.0
    %1919 = vmatprep.subr.mxu0 0.0
    %1920 = vmatpush1.xpose.msra.mxu0 0.0
    %1921 = vmatprep.subr.mxu0 0.0
    %1922 = vmatpush1.xpose.msra.mxu0 0.0
    %1923 = vmatprep.subr.mxu0 0.0
    %1924 = vmatpush1.xpose.msra.mxu0 0.0
    %1925 = vmatprep.subr.mxu0 0.0
    %1926 = vmatpush1.xpose.msra.mxu0 0.0
    %1927 = vmatprep.subr.mxu0 0.0
    %1928 = vmatpush1.xpose.msra.mxu0 0.0
    %1929 = vmatprep.subr.mxu0 0.0
    %1930 = vmatpush1.xpose.msra.mxu0 0.0
    %1931 = vmatprep.subr.mxu0 0.0
    %1932 = vmatpush1.xpose.msra.mxu0 0.0
    %1933 = vmatprep.subr.mxu0 0.0
    %1934 = vmatpush1.xpose.msra.mxu0 0.0
    %1935 = vmatprep.subr.mxu0 0.0
    %1936 = vmatpush1.xpose.msra.mxu0 0.0
    %1937 = vmatprep.subr.mxu0 0.0
    %1938 = vmatpush1.xpose.msra.mxu0 0.0
    %1939 = vmatprep.subr.mxu0 0.0
    %1940 = vmatpush1.xpose.msra.mxu0 0.0
    %1941 = vmatprep.subr.mxu0 0.0
    %1942 = vmatpush1.xpose.msra.mxu0 0.0
    %1943 = vmatprep.subr.mxu0 0.0
    %1944 = vmatpush1.xpose.msra.mxu0 0.0
    %1945 = vmatprep.subr.mxu0 0.0
    %1946 = vmatpush1.xpose.msra.mxu0 0.0
    %1947 = vmatprep.subr.mxu0 0.0
    %1948 = vmatpush1.xpose.msra.mxu0 0.0
    %1949 = vmatprep.subr.mxu0 0.0
    %1950 = vmatpush1.xpose.msra.mxu0 0.0
    %1951 = vmatprep.subr.mxu0 0.0
    %1952 = vmatpush1.xpose.msra.mxu0 0.0
    %1953 = vmatprep.subr.mxu0 0.0
    %1954 = vmatpush1.xpose.msra.mxu0 0.0
    %1955 = vmatprep.subr.mxu0 0.0
    %1956 = vmatpush1.xpose.msra.mxu0 0.0
    %1957 = vmatprep.subr.mxu0 0.0
    %1958 = vmatpush1.xpose.msra.mxu0 0.0
    %1959 = vmatprep.subr.mxu0 0.0
    %1960 = vmatpush1.xpose.msra.mxu0 0.0
    %1961 = vmatprep.subr.mxu0 0.0
    %1962 = vmatpush1.xpose.msra.mxu0 0.0
    %1963 = vmatprep.subr.mxu0 0.0
    %1964 = vmatpush1.xpose.msra.mxu0 0.0
    %1965 = vmatprep.subr.mxu0 0.0
    %1966 = vmatpush1.xpose.msra.mxu0 0.0
    %1967 = vmatprep.subr.mxu0 0.0
    %1968 = vmatpush1.xpose.msra.mxu0 0.0
    %1969 = vmatprep.subr.mxu0 0.0
    %1970 = vmatpush1.xpose.msra.mxu0 0.0
    %1971 = vmatprep.mubr.f32.mxu0 0.0
    %1972 = vmatmul.mubr.f32.gmra.mrb[0].mxu0 %v1903
    %v1973 = vpop.f32.mrb[0].mxu0
    %v1974 = vadd.f32 0.0, %v1973
    %v1975 = vpop.f32.mrb[0].mxu0
    %1976 = vdwg.mxu0
    %v1977 = vmul.f32 %v1896, 0.05103104
    %v1978 = vmul.f32 %v1974, 0.05103104
    %v1979 = vsel %vm1647, %v1977, -inf
    %v1980 = vsel %vm1647, %v1978, -inf
    %v1981 = vsel %vm1650, %v1979, -inf
    %1982 = vmax.xlane.f32.xlu0 %v1981
    %v1983 = vpop.xlane.xlu0 %1982
    %v1984 = vsel %vm1650, %v1980, -inf
    %1985 = vmax.xlane.f32.xlu0 %v1984
    %v1986 = vpop.xlane.xlu0 %1985
    %v1987 = vsub.f32 %v1979, %v1983
    %v1988 = vsub.f32 %v1980, %v1986
    %v1989 = vmul.f32 %v1987, 1.442695
    %v1990 = vpow.pop %v1989
    %v1991 = vmul.f32 %v1988, 1.442695
    %v1992 = vpow.pop %v1991
    %v1993 = vsel %vm1650, %v1990, 0.0
    %1994 = vadd.xlane.f32.xlu0 %v1993
    %v1995 = vpop.xlane.xlu0 %1994
    %v1996 = vsel %vm1650, %v1992, 0.0
    %1997 = vadd.xlane.f32.xlu0 %v1996
    %v1998 = vpop.xlane.xlu0 %1997
    %v1999 = vrcp.pop %v1995
    %v2000 = vmul.f32 1.0, %v1999
    %v2001 = vrcp.pop %v1998
    %v2002 = vmul.f32 1.0, %v2001
    %v2003 = vmul.f32 %v1990, %v2000
    %v2004 = vmul.f32 %v1992, %v2002
    %2006 = vrot.lane.b32.xlu0 %v1326, 64
    %v2007 = vpop.permute.xlu0 %2006
    %v2010 = vsel %vm1650, %v2003, 0
    %2012 = vmatprep.subr.mxu0 0.0
    %2013 = vmatpush1.msra.mxu0 %v2007
    %2014 = vmatprep.subr.mxu0 0.0
    %2015 = vmatpush1.msra.mxu0 0.0
    %2016 = vmatprep.subr.mxu0 0.0
    %2017 = vmatpush1.msra.mxu0 0.0
    %2018 = vmatprep.subr.mxu0 0.0
    %2019 = vmatpush1.msra.mxu0 0.0
    %2020 = vmatprep.subr.mxu0 0.0
    %2021 = vmatpush1.msra.mxu0 0.0
    %2022 = vmatprep.subr.mxu0 0.0
    %2023 = vmatpush1.msra.mxu0 0.0
    %2024 = vmatprep.subr.mxu0 0.0
    %2025 = vmatpush1.msra.mxu0 0.0
    %2026 = vmatprep.subr.mxu0 0.0
    %2027 = vmatpush1.msra.mxu0 0.0
    %2028 = vmatprep.subr.mxu0 0.0
    %2029 = vmatpush1.msra.mxu0 0.0
    %2030 = vmatprep.subr.mxu0 0.0
    %2031 = vmatpush1.msra.mxu0 0.0
    %2032 = vmatprep.subr.mxu0 0.0
    %2033 = vmatpush1.msra.mxu0 0.0
    %2034 = vmatprep.subr.mxu0 0.0
    %2035 = vmatpush1.msra.mxu0 0.0
    %2036 = vmatprep.subr.mxu0 0.0
    %2037 = vmatpush1.msra.mxu0 0.0
    %2038 = vmatprep.subr.mxu0 0.0
    %2039 = vmatpush1.msra.mxu0 0.0
    %2040 = vmatprep.subr.mxu0 0.0
    %2041 = vmatpush1.msra.mxu0 0.0
    %2042 = vmatprep.subr.mxu0 0.0
    %2043 = vmatpush1.msra.mxu0 0.0
    %2044 = vmatprep.subr.mxu0 0.0
    %2045 = vmatpush1.msra.mxu0 0.0
    %2046 = vmatprep.subr.mxu0 0.0
    %2047 = vmatpush1.msra.mxu0 0.0
    %2048 = vmatprep.subr.mxu0 0.0
    %2049 = vmatpush1.msra.mxu0 0.0
    %2050 = vmatprep.subr.mxu0 0.0
    %2051 = vmatpush1.msra.mxu0 0.0
    %2052 = vmatprep.subr.mxu0 0.0
    %2053 = vmatpush1.msra.mxu0 0.0
    %2054 = vmatprep.subr.mxu0 0.0
    %2055 = vmatpush1.msra.mxu0 0.0
    %2056 = vmatprep.subr.mxu0 0.0
    %2057 = vmatpush1.msra.mxu0 0.0
    %2058 = vmatprep.subr.mxu0 0.0
    %2059 = vmatpush1.msra.mxu0 0.0
    %2060 = vmatprep.subr.mxu0 0.0
    %2061 = vmatpush1.msra.mxu0 0.0
    %2062 = vmatprep.subr.mxu0 0.0
    %2063 = vmatpush1.msra.mxu0 0.0
    %2064 = vmatprep.subr.mxu0 0.0
    %2065 = vmatpush1.msra.mxu0 0.0
    %2066 = vmatprep.subr.mxu0 0.0
    %2067 = vmatpush1.msra.mxu0 0.0
    %2068 = vmatprep.subr.mxu0 0.0
    %2069 = vmatpush1.msra.mxu0 0.0
    %2070 = vmatprep.subr.mxu0 0.0
    %2071 = vmatpush1.msra.mxu0 0.0
    %2072 = vmatprep.subr.mxu0 0.0
    %2073 = vmatpush1.msra.mxu0 0.0
    %2074 = vmatprep.subr.mxu0 0.0
    %2075 = vmatpush1.msra.mxu0 0.0
    %2076 = vmatprep.mubr.f32.mxu0 0.0
    %2077 = vmatmul.mubr.f32.gmra.mrb[0].mxu0 %v2010
    %v2078 = vpop.f32.mrb[0].mxu0
    %v2079 = vadd.f32 0.0, %v2078
    %v2080 = vpop.f32.mrb[0].mxu0
    %2081 = vdwg.mxu0
    %2083 = vrot.lane.b32.xlu0 %v1332, 64
    %v2084 = vpop.permute.xlu0 %2083
    %v2087 = vsel %vm1650, %v2004, 0
    %2089 = vmatprep.subr.mxu0 0.0
    %2090 = vmatpush1.msra.mxu0 %v2084
    %2091 = vmatprep.subr.mxu0 0.0
    %2092 = vmatpush1.msra.mxu0 0.0
    %2093 = vmatprep.subr.mxu0 0.0
    %2094 = vmatpush1.msra.mxu0 0.0
    %2095 = vmatprep.subr.mxu0 0.0
    %2096 = vmatpush1.msra.mxu0 0.0
    %2097 = vmatprep.subr.mxu0 0.0
    %2098 = vmatpush1.msra.mxu0 0.0
    %2099 = vmatprep.subr.mxu0 0.0
    %2100 = vmatpush1.msra.mxu0 0.0
    %2101 = vmatprep.subr.mxu0 0.0
    %2102 = vmatpush1.msra.mxu0 0.0
    %2103 = vmatprep.subr.mxu0 0.0
    %2104 = vmatpush1.msra.mxu0 0.0
    %2105 = vmatprep.subr.mxu0 0.0
    %2106 = vmatpush1.msra.mxu0 0.0
    %2107 = vmatprep.subr.mxu0 0.0
    %2108 = vmatpush1.msra.mxu0 0.0
    %2109 = vmatprep.subr.mxu0 0.0
    %2110 = vmatpush1.msra.mxu0 0.0
    %2111 = vmatprep.subr.mxu0 0.0
    %2112 = vmatpush1.msra.mxu0 0.0
    %2113 = vmatprep.subr.mxu0 0.0
    %2114 = vmatpush1.msra.mxu0 0.0
    %2115 = vmatprep.subr.mxu0 0.0
    %2116 = vmatpush1.msra.mxu0 0.0
    %2117 = vmatprep.subr.mxu0 0.0
    %2118 = vmatpush1.msra.mxu0 0.0
    %2119 = vmatprep.subr.mxu0 0.0
    %2120 = vmatpush1.msra.mxu0 0.0
    %2121 = vmatprep.subr.mxu0 0.0
    %2122 = vmatpush1.msra.mxu0 0.0
    %2123 = vmatprep.subr.mxu0 0.0
    %2124 = vmatpush1.msra.mxu0 0.0
    %2125 = vmatprep.subr.mxu0 0.0
    %2126 = vmatpush1.msra.mxu0 0.0
    %2127 = vmatprep.subr.mxu0 0.0
    %2128 = vmatpush1.msra.mxu0 0.0
    %2129 = vmatprep.subr.mxu0 0.0
    %2130 = vmatpush1.msra.mxu0 0.0
    %2131 = vmatprep.subr.mxu0 0.0
    %2132 = vmatpush1.msra.mxu0 0.0
    %2133 = vmatprep.subr.mxu0 0.0
    %2134 = vmatpush1.msra.mxu0 0.0
    %2135 = vmatprep.subr.mxu0 0.0
    %2136 = vmatpush1.msra.mxu0 0.0
    %2137 = vmatprep.subr.mxu0 0.0
    %2138 = vmatpush1.msra.mxu0 0.0
    %2139 = vmatprep.subr.mxu0 0.0
    %2140 = vmatpush1.msra.mxu0 0.0
    %2141 = vmatprep.subr.mxu0 0.0
    %2142 = vmatpush1.msra.mxu0 0.0
    %2143 = vmatprep.subr.mxu0 0.0
    %2144 = vmatpush1.msra.mxu0 0.0
    %2145 = vmatprep.subr.mxu0 0.0
    %2146 = vmatpush1.msra.mxu0 0.0
    %2147 = vmatprep.subr.mxu0 0.0
    %2148 = vmatpush1.msra.mxu0 0.0
    %2149 = vmatprep.subr.mxu0 0.0
    %2150 = vmatpush1.msra.mxu0 0.0
    %2151 = vmatprep.subr.mxu0 0.0
    %2152 = vmatpush1.msra.mxu0 0.0
    %2153 = vmatprep.mubr.f32.mxu0 0.0
    %2154 = vmatmul.mubr.f32.gmra.mrb[0].mxu0 %v2087
    %v2155 = vpop.f32.mrb[0].mxu0
    %v2156 = vadd.f32 0.0, %v2155
    %v2157 = vpop.f32.mrb[0].mxu0
    %2158 = vdwg.mxu0
    %v2160 = vsel %vm1491, %v866, 0
    %v2163 = vsel %vm1491, %v1172, 0
    %2165 = vmatprep.subr.mxu0 0.0
    %2166 = vmatpush1.xpose.msra.mxu0 %v2163
    %2167 = vmatprep.subr.mxu0 0.0
    %2168 = vmatpush1.xpose.msra.mxu0 0.0
    %2169 = vmatprep.subr.mxu0 0.0
    %2170 = vmatpush1.xpose.msra.mxu0 0.0
    %2171 = vmatprep.subr.mxu0 0.0
    %2172 = vmatpush1.xpose.msra.mxu0 0.0
    %2173 = vmatprep.subr.mxu0 0.0
    %2174 = vmatpush1.xpose.msra.mxu0 0.0
    %2175 = vmatprep.subr.mxu0 0.0
    %2176 = vmatpush1.xpose.msra.mxu0 0.0
    %2177 = vmatprep.subr.mxu0 0.0
    %2178 = vmatpush1.xpose.msra.mxu0 0.0
    %2179 = vmatprep.subr.mxu0 0.0
    %2180 = vmatpush1.xpose.msra.mxu0 0.0
    %2181 = vmatprep.subr.mxu0 0.0
    %2182 = vmatpush1.xpose.msra.mxu0 0.0
    %2183 = vmatprep.subr.mxu0 0.0
    %2184 = vmatpush1.xpose.msra.mxu0 0.0
    %2185 = vmatprep.subr.mxu0 0.0
    %2186 = vmatpush1.xpose.msra.mxu0 0.0
    %2187 = vmatprep.subr.mxu0 0.0
    %2188 = vmatpush1.xpose.msra.mxu0 0.0
    %2189 = vmatprep.subr.mxu0 0.0
    %2190 = vmatpush1.xpose.msra.mxu0 0.0
    %2191 = vmatprep.subr.mxu0 0.0
    %2192 = vmatpush1.xpose.msra.mxu0 0.0
    %2193 = vmatprep.subr.mxu0 0.0
    %2194 = vmatpush1.xpose.msra.mxu0 0.0
    %2195 = vmatprep.subr.mxu0 0.0
    %2196 = vmatpush1.xpose.msra.mxu0 0.0
    %2197 = vmatprep.subr.mxu0 0.0
    %2198 = vmatpush1.xpose.msra.mxu0 0.0
    %2199 = vmatprep.subr.mxu0 0.0
    %2200 = vmatpush1.xpose.msra.mxu0 0.0
    %2201 = vmatprep.subr.mxu0 0.0
    %2202 = vmatpush1.xpose.msra.mxu0 0.0
    %2203 = vmatprep.subr.mxu0 0.0
    %2204 = vmatpush1.xpose.msra.mxu0 0.0
    %2205 = vmatprep.subr.mxu0 0.0
    %2206 = vmatpush1.xpose.msra.mxu0 0.0
    %2207 = vmatprep.subr.mxu0 0.0
    %2208 = vmatpush1.xpose.msra.mxu0 0.0
    %2209 = vmatprep.subr.mxu0 0.0
    %2210 = vmatpush1.xpose.msra.mxu0 0.0
    %2211 = vmatprep.subr.mxu0 0.0
    %2212 = vmatpush1.xpose.msra.mxu0 0.0
    %2213 = vmatprep.subr.mxu0 0.0
    %2214 = vmatpush1.xpose.msra.mxu0 0.0
    %2215 = vmatprep.subr.mxu0 0.0
    %2216 = vmatpush1.xpose.msra.mxu0 0.0
    %2217 = vmatprep.subr.mxu0 0.0
    %2218 = vmatpush1.xpose.msra.mxu0 0.0
    %2219 = vmatprep.subr.mxu0 0.0
    %2220 = vmatpush1.xpose.msra.mxu0 0.0
    %2221 = vmatprep.subr.mxu0 0.0
    %2222 = vmatpush1.xpose.msra.mxu0 0.0
    %2223 = vmatprep.subr.mxu0 0.0
    %2224 = vmatpush1.xpose.msra.mxu0 0.0
    %2225 = vmatprep.subr.mxu0 0.0
    %2226 = vmatpush1.xpose.msra.mxu0 0.0
    %2227 = vmatprep.subr.mxu0 0.0
    %2228 = vmatpush1.xpose.msra.mxu0 0.0
    %2229 = vmatprep.mubr.f32.mxu0 0.0
    %2230 = vmatmul.mubr.f32.gmra.mrb[0].mxu0 %v2160
    %v2231 = vpop.f32.mrb[0].mxu0
    %v2232 = vadd.f32 0.0, %v2231
    %v2233 = vpop.f32.mrb[0].mxu0
    %2234 = vdwg.mxu0
    %v2236 = vsel %vm1491, %v872, 0
    %v2239 = vsel %vm1491, %v1178, 0
    %2241 = vmatprep.subr.mxu0 0.0
    %2242 = vmatpush1.xpose.msra.mxu0 %v2239
    %2243 = vmatprep.subr.mxu0 0.0
    %2244 = vmatpush1.xpose.msra.mxu0 0.0
    %2245 = vmatprep.subr.mxu0 0.0
    %2246 = vmatpush1.xpose.msra.mxu0 0.0
    %2247 = vmatprep.subr.mxu0 0.0
    %2248 = vmatpush1.xpose.msra.mxu0 0.0
    %2249 = vmatprep.subr.mxu0 0.0
    %2250 = vmatpush1.xpose.msra.mxu0 0.0
    %2251 = vmatprep.subr.mxu0 0.0
    %2252 = vmatpush1.xpose.msra.mxu0 0.0
    %2253 = vmatprep.subr.mxu0 0.0
    %2254 = vmatpush1.xpose.msra.mxu0 0.0
    %2255 = vmatprep.subr.mxu0 0.0
    %2256 = vmatpush1.xpose.msra.mxu0 0.0
    %2257 = vmatprep.subr.mxu0 0.0
    %2258 = vmatpush1.xpose.msra.mxu0 0.0
    %2259 = vmatprep.subr.mxu0 0.0
    %2260 = vmatpush1.xpose.msra.mxu0 0.0
    %2261 = vmatprep.subr.mxu0 0.0
    %2262 = vmatpush1.xpose.msra.mxu0 0.0
    %2263 = vmatprep.subr.mxu0 0.0
    %2264 = vmatpush1.xpose.msra.mxu0 0.0
    %2265 = vmatprep.subr.mxu0 0.0
    %2266 = vmatpush1.xpose.msra.mxu0 0.0
    %2267 = vmatprep.subr.mxu0 0.0
    %2268 = vmatpush1.xpose.msra.mxu0 0.0
    %2269 = vmatprep.subr.mxu0 0.0
    %2270 = vmatpush1.xpose.msra.mxu0 0.0
    %2271 = vmatprep.subr.mxu0 0.0
    %2272 = vmatpush1.xpose.msra.mxu0 0.0
    %2273 = vmatprep.subr.mxu0 0.0
    %2274 = vmatpush1.xpose.msra.mxu0 0.0
    %2275 = vmatprep.subr.mxu0 0.0
    %2276 = vmatpush1.xpose.msra.mxu0 0.0
    %2277 = vmatprep.subr.mxu0 0.0
    %2278 = vmatpush1.xpose.msra.mxu0 0.0
    %2279 = vmatprep.subr.mxu0 0.0
    %2280 = vmatpush1.xpose.msra.mxu0 0.0
    %2281 = vmatprep.subr.mxu0 0.0
    %2282 = vmatpush1.xpose.msra.mxu0 0.0
    %2283 = vmatprep.subr.mxu0 0.0
    %2284 = vmatpush1.xpose.msra.mxu0 0.0
    %2285 = vmatprep.subr.mxu0 0.0
    %2286 = vmatpush1.xpose.msra.mxu0 0.0
    %2287 = vmatprep.subr.mxu0 0.0
    %2288 = vmatpush1.xpose.msra.mxu0 0.0
    %2289 = vmatprep.subr.mxu0 0.0
    %2290 = vmatpush1.xpose.msra.mxu0 0.0
    %2291 = vmatprep.subr.mxu0 0.0
    %2292 = vmatpush1.xpose.msra.mxu0 0.0
    %2293 = vmatprep.subr.mxu0 0.0
    %2294 = vmatpush1.xpose.msra.mxu0 0.0
    %2295 = vmatprep.subr.mxu0 0.0
    %2296 = vmatpush1.xpose.msra.mxu0 0.0
    %2297 = vmatprep.subr.mxu0 0.0
    %2298 = vmatpush1.xpose.msra.mxu0 0.0
    %2299 = vmatprep.subr.mxu0 0.0
    %2300 = vmatpush1.xpose.msra.mxu0 0.0
    %2301 = vmatprep.subr.mxu0 0.0
    %2302 = vmatpush1.xpose.msra.mxu0 0.0
    %2303 = vmatprep.subr.mxu0 0.0
    %2304 = vmatpush1.xpose.msra.mxu0 0.0
    %2305 = vmatprep.mubr.f32.mxu0 0.0
    %2306 = vmatmul.mubr.f32.gmra.mrb[0].mxu0 %v2236
    %v2307 = vpop.f32.mrb[0].mxu0
    %v2308 = vadd.f32 0.0, %v2307
    %v2309 = vpop.f32.mrb[0].mxu0
    %2310 = vdwg.mxu0
    %v2311 = vmul.f32 %v2232, 0.05103104
    %v2312 = vmul.f32 %v2308, 0.05103104
    %v2313 = vsel %vm1647, %v2311, -inf
    %v2314 = vsel %vm1647, %v2312, -inf
    %v2315 = vsel %vm1650, %v2313, -inf
    %2316 = vmax.xlane.f32.xlu0 %v2315
    %v2317 = vpop.xlane.xlu0 %2316
    %v2318 = vsel %vm1650, %v2314, -inf
    %2319 = vmax.xlane.f32.xlu0 %v2318
    %v2320 = vpop.xlane.xlu0 %2319
    %v2321 = vsub.f32 %v2313, %v2317
    %v2322 = vsub.f32 %v2314, %v2320
    %v2323 = vmul.f32 %v2321, 1.442695
    %v2324 = vpow.pop %v2323
    %v2325 = vmul.f32 %v2322, 1.442695
    %v2326 = vpow.pop %v2325
    %v2327 = vsel %vm1650, %v2324, 0.0
    %2328 = vadd.xlane.f32.xlu0 %v2327
    %v2329 = vpop.xlane.xlu0 %2328
    %v2330 = vsel %vm1650, %v2326, 0.0
    %2331 = vadd.xlane.f32.xlu0 %v2330
    %v2332 = vpop.xlane.xlu0 %2331
    %v2333 = vrcp.pop %v2329
    %v2334 = vmul.f32 1.0, %v2333
    %v2335 = vrcp.pop %v2332
    %v2336 = vmul.f32 1.0, %v2335
    %v2337 = vmul.f32 %v2324, %v2334
    %v2338 = vmul.f32 %v2326, %v2336
    %v2340 = vsel %vm1650, %v2337, 0
    %2342 = vmatprep.subr.mxu0 0.0
    %2343 = vmatpush1.msra.mxu0 %v1328
    %2344 = vmatprep.subr.mxu0 0.0
    %2345 = vmatpush1.msra.mxu0 0.0
    %2346 = vmatprep.subr.mxu0 0.0
    %2347 = vmatpush1.msra.mxu0 0.0
    %2348 = vmatprep.subr.mxu0 0.0
    %2349 = vmatpush1.msra.mxu0 0.0
    %2350 = vmatprep.subr.mxu0 0.0
    %2351 = vmatpush1.msra.mxu0 0.0
    %2352 = vmatprep.subr.mxu0 0.0
    %2353 = vmatpush1.msra.mxu0 0.0
    %2354 = vmatprep.subr.mxu0 0.0
    %2355 = vmatpush1.msra.mxu0 0.0
    %2356 = vmatprep.subr.mxu0 0.0
    %2357 = vmatpush1.msra.mxu0 0.0
    %2358 = vmatprep.subr.mxu0 0.0
    %2359 = vmatpush1.msra.mxu0 0.0
    %2360 = vmatprep.subr.mxu0 0.0
    %2361 = vmatpush1.msra.mxu0 0.0
    %2362 = vmatprep.subr.mxu0 0.0
    %2363 = vmatpush1.msra.mxu0 0.0
    %2364 = vmatprep.subr.mxu0 0.0
    %2365 = vmatpush1.msra.mxu0 0.0
    %2366 = vmatprep.subr.mxu0 0.0
    %2367 = vmatpush1.msra.mxu0 0.0
    %2368 = vmatprep.subr.mxu0 0.0
    %2369 = vmatpush1.msra.mxu0 0.0
    %2370 = vmatprep.subr.mxu0 0.0
    %2371 = vmatpush1.msra.mxu0 0.0
    %2372 = vmatprep.subr.mxu0 0.0
    %2373 = vmatpush1.msra.mxu0 0.0
    %2374 = vmatprep.subr.mxu0 0.0
    %2375 = vmatpush1.msra.mxu0 0.0
    %2376 = vmatprep.subr.mxu0 0.0
    %2377 = vmatpush1.msra.mxu0 0.0
    %2378 = vmatprep.subr.mxu0 0.0
    %2379 = vmatpush1.msra.mxu0 0.0
    %2380 = vmatprep.subr.mxu0 0.0
    %2381 = vmatpush1.msra.mxu0 0.0
    %2382 = vmatprep.subr.mxu0 0.0
    %2383 = vmatpush1.msra.mxu0 0.0
    %2384 = vmatprep.subr.mxu0 0.0
    %2385 = vmatpush1.msra.mxu0 0.0
    %2386 = vmatprep.subr.mxu0 0.0
    %2387 = vmatpush1.msra.mxu0 0.0
    %2388 = vmatprep.subr.mxu0 0.0
    %2389 = vmatpush1.msra.mxu0 0.0
    %2390 = vmatprep.subr.mxu0 0.0
    %2391 = vmatpush1.msra.mxu0 0.0
    %2392 = vmatprep.subr.mxu0 0.0
    %2393 = vmatpush1.msra.mxu0 0.0
    %2394 = vmatprep.subr.mxu0 0.0
    %2395 = vmatpush1.msra.mxu0 0.0
    %2396 = vmatprep.subr.mxu0 0.0
    %2397 = vmatpush1.msra.mxu0 0.0
    %2398 = vmatprep.subr.mxu0 0.0
    %2399 = vmatpush1.msra.mxu0 0.0
    %2400 = vmatprep.subr.mxu0 0.0
    %2401 = vmatpush1.msra.mxu0 0.0
    %2402 = vmatprep.subr.mxu0 0.0
    %2403 = vmatpush1.msra.mxu0 0.0
    %2404 = vmatprep.subr.mxu0 0.0
    %2405 = vmatpush1.msra.mxu0 0.0
    %2406 = vmatprep.mubr.f32.mxu0 0.0
    %2407 = vmatmul.mubr.f32.gmra.mrb[0].mxu0 %v2340
    %v2408 = vpop.f32.mrb[0].mxu0
    %v2409 = vadd.f32 0.0, %v2408
    %v2410 = vpop.f32.mrb[0].mxu0
    %2411 = vdwg.mxu0
    %v2413 = vsel %vm1650, %v2338, 0
    %2415 = vmatprep.subr.mxu0 0.0
    %2416 = vmatpush1.msra.mxu0 %v1334
    %2417 = vmatprep.subr.mxu0 0.0
    %2418 = vmatpush1.msra.mxu0 0.0
    %2419 = vmatprep.subr.mxu0 0.0
    %2420 = vmatpush1.msra.mxu0 0.0
    %2421 = vmatprep.subr.mxu0 0.0
    %2422 = vmatpush1.msra.mxu0 0.0
    %2423 = vmatprep.subr.mxu0 0.0
    %2424 = vmatpush1.msra.mxu0 0.0
    %2425 = vmatprep.subr.mxu0 0.0
    %2426 = vmatpush1.msra.mxu0 0.0
    %2427 = vmatprep.subr.mxu0 0.0
    %2428 = vmatpush1.msra.mxu0 0.0
    %2429 = vmatprep.subr.mxu0 0.0
    %2430 = vmatpush1.msra.mxu0 0.0
    %2431 = vmatprep.subr.mxu0 0.0
    %2432 = vmatpush1.msra.mxu0 0.0
    %2433 = vmatprep.subr.mxu0 0.0
    %2434 = vmatpush1.msra.mxu0 0.0
    %2435 = vmatprep.subr.mxu0 0.0
    %2436 = vmatpush1.msra.mxu0 0.0
    %2437 = vmatprep.subr.mxu0 0.0
    %2438 = vmatpush1.msra.mxu0 0.0
    %2439 = vmatprep.subr.mxu0 0.0
    %2440 = vmatpush1.msra.mxu0 0.0
    %2441 = vmatprep.subr.mxu0 0.0
    %2442 = vmatpush1.msra.mxu0 0.0
    %2443 = vmatprep.subr.mxu0 0.0
    %2444 = vmatpush1.msra.mxu0 0.0
    %2445 = vmatprep.subr.mxu0 0.0
    %2446 = vmatpush1.msra.mxu0 0.0
    %2447 = vmatprep.subr.mxu0 0.0
    %2448 = vmatpush1.msra.mxu0 0.0
    %2449 = vmatprep.subr.mxu0 0.0
    %2450 = vmatpush1.msra.mxu0 0.0
    %2451 = vmatprep.subr.mxu0 0.0
    %2452 = vmatpush1.msra.mxu0 0.0
    %2453 = vmatprep.subr.mxu0 0.0
    %2454 = vmatpush1.msra.mxu0 0.0
    %2455 = vmatprep.subr.mxu0 0.0
    %2456 = vmatpush1.msra.mxu0 0.0
    %2457 = vmatprep.subr.mxu0 0.0
    %2458 = vmatpush1.msra.mxu0 0.0
    %2459 = vmatprep.subr.mxu0 0.0
    %2460 = vmatpush1.msra.mxu0 0.0
    %2461 = vmatprep.subr.mxu0 0.0
    %2462 = vmatpush1.msra.mxu0 0.0
    %2463 = vmatprep.subr.mxu0 0.0
    %2464 = vmatpush1.msra.mxu0 0.0
    %2465 = vmatprep.subr.mxu0 0.0
    %2466 = vmatpush1.msra.mxu0 0.0
    %2467 = vmatprep.subr.mxu0 0.0
    %2468 = vmatpush1.msra.mxu0 0.0
    %2469 = vmatprep.subr.mxu0 0.0
    %2470 = vmatpush1.msra.mxu0 0.0
    %2471 = vmatprep.subr.mxu0 0.0
    %2472 = vmatpush1.msra.mxu0 0.0
    %2473 = vmatprep.subr.mxu0 0.0
    %2474 = vmatpush1.msra.mxu0 0.0
    %2475 = vmatprep.subr.mxu0 0.0
    %2476 = vmatpush1.msra.mxu0 0.0
    %2477 = vmatprep.subr.mxu0 0.0
    %2478 = vmatpush1.msra.mxu0 0.0
    %2479 = vmatprep.mubr.f32.mxu0 0.0
    %2480 = vmatmul.mubr.f32.gmra.mrb[0].mxu0 %v2413
    %v2481 = vpop.f32.mrb[0].mxu0
    %v2482 = vadd.f32 0.0, %v2481
    %v2483 = vpop.f32.mrb[0].mxu0
    %2484 = vdwg.mxu0
    %2485 = vrot.lane.b32.xlu0 %v866, 64
    %v2486 = vpop.permute.xlu0 %2485
    %2487 = vrot.lane.b32.xlu0 %v1172, 64
    %v2488 = vpop.permute.xlu0 %2487
    %v2489 = vsel %vm1491, %v2486, 0
    %v2491 = vsel %vm1491, %v2488, 0
    %2493 = vmatprep.subr.mxu0 0.0
    %2494 = vmatpush1.xpose.msra.mxu0 %v2491
    %2495 = vmatprep.subr.mxu0 0.0
    %2496 = vmatpush1.xpose.msra.mxu0 0.0
    %2497 = vmatprep.subr.mxu0 0.0
    %2498 = vmatpush1.xpose.msra.mxu0 0.0
    %2499 = vmatprep.subr.mxu0 0.0
    %2500 = vmatpush1.xpose.msra.mxu0 0.0
    %2501 = vmatprep.subr.mxu0 0.0
    %2502 = vmatpush1.xpose.msra.mxu0 0.0
    %2503 = vmatprep.subr.mxu0 0.0
    %2504 = vmatpush1.xpose.msra.mxu0 0.0
    %2505 = vmatprep.subr.mxu0 0.0
    %2506 = vmatpush1.xpose.msra.mxu0 0.0
    %2507 = vmatprep.subr.mxu0 0.0
    %2508 = vmatpush1.xpose.msra.mxu0 0.0
    %2509 = vmatprep.subr.mxu0 0.0
    %2510 = vmatpush1.xpose.msra.mxu0 0.0
    %2511 = vmatprep.subr.mxu0 0.0
    %2512 = vmatpush1.xpose.msra.mxu0 0.0
    %2513 = vmatprep.subr.mxu0 0.0
    %2514 = vmatpush1.xpose.msra.mxu0 0.0
    %2515 = vmatprep.subr.mxu0 0.0
    %2516 = vmatpush1.xpose.msra.mxu0 0.0
    %2517 = vmatprep.subr.mxu0 0.0
    %2518 = vmatpush1.xpose.msra.mxu0 0.0
    %2519 = vmatprep.subr.mxu0 0.0
    %2520 = vmatpush1.xpose.msra.mxu0 0.0
    %2521 = vmatprep.subr.mxu0 0.0
    %2522 = vmatpush1.xpose.msra.mxu0 0.0
    %2523 = vmatprep.subr.mxu0 0.0
    %2524 = vmatpush1.xpose.msra.mxu0 0.0
    %2525 = vmatprep.subr.mxu0 0.0
    %2526 = vmatpush1.xpose.msra.mxu0 0.0
    %2527 = vmatprep.subr.mxu0 0.0
    %2528 = vmatpush1.xpose.msra.mxu0 0.0
    %2529 = vmatprep.subr.mxu0 0.0
    %2530 = vmatpush1.xpose.msra.mxu0 0.0
    %2531 = vmatprep.subr.mxu0 0.0
    %2532 = vmatpush1.xpose.msra.mxu0 0.0
    %2533 = vmatprep.subr.mxu0 0.0
    %2534 = vmatpush1.xpose.msra.mxu0 0.0
    %2535 = vmatprep.subr.mxu0 0.0
    %2536 = vmatpush1.xpose.msra.mxu0 0.0
    %2537 = vmatprep.subr.mxu0 0.0
    %2538 = vmatpush1.xpose.msra.mxu0 0.0
    %2539 = vmatprep.subr.mxu0 0.0
    %2540 = vmatpush1.xpose.msra.mxu0 0.0
    %2541 = vmatprep.subr.mxu0 0.0
    %2542 = vmatpush1.xpose.msra.mxu0 0.0
    %2543 = vmatprep.subr.mxu0 0.0
    %2544 = vmatpush1.xpose.msra.mxu0 0.0
    %2545 = vmatprep.subr.mxu0 0.0
    %2546 = vmatpush1.xpose.msra.mxu0 0.0
    %2547 = vmatprep.subr.mxu0 0.0
    %2548 = vmatpush1.xpose.msra.mxu0 0.0
    %2549 = vmatprep.subr.mxu0 0.0
    %2550 = vmatpush1.xpose.msra.mxu0 0.0
    %2551 = vmatprep.subr.mxu0 0.0
    %2552 = vmatpush1.xpose.msra.mxu0 0.0
    %2553 = vmatprep.subr.mxu0 0.0
    %2554 = vmatpush1.xpose.msra.mxu0 0.0
    %2555 = vmatprep.subr.mxu0 0.0
    %2556 = vmatpush1.xpose.msra.mxu0 0.0
    %2557 = vmatprep.mubr.f32.mxu0 0.0
    %2558 = vmatmul.mubr.f32.gmra.mrb[0].mxu0 %v2489
    %v2559 = vpop.f32.mrb[0].mxu0
    %v2560 = vadd.f32 0.0, %v2559
    %v2561 = vpop.f32.mrb[0].mxu0
    %2562 = vdwg.mxu0
    %2563 = vrot.lane.b32.xlu0 %v872, 64
    %v2564 = vpop.permute.xlu0 %2563
    %2565 = vrot.lane.b32.xlu0 %v1178, 64
    %v2566 = vpop.permute.xlu0 %2565
    %v2567 = vsel %vm1491, %v2564, 0
    %v2569 = vsel %vm1491, %v2566, 0
    %2571 = vmatprep.subr.mxu0 0.0
    %2572 = vmatpush1.xpose.msra.mxu0 %v2569
    %2573 = vmatprep.subr.mxu0 0.0
    %2574 = vmatpush1.xpose.msra.mxu0 0.0
    %2575 = vmatprep.subr.mxu0 0.0
    %2576 = vmatpush1.xpose.msra.mxu0 0.0
    %2577 = vmatprep.subr.mxu0 0.0
    %2578 = vmatpush1.xpose.msra.mxu0 0.0
    %2579 = vmatprep.subr.mxu0 0.0
    %2580 = vmatpush1.xpose.msra.mxu0 0.0
    %2581 = vmatprep.subr.mxu0 0.0
    %2582 = vmatpush1.xpose.msra.mxu0 0.0
    %2583 = vmatprep.subr.mxu0 0.0
    %2584 = vmatpush1.xpose.msra.mxu0 0.0
    %2585 = vmatprep.subr.mxu0 0.0
    %2586 = vmatpush1.xpose.msra.mxu0 0.0
    %2587 = vmatprep.subr.mxu0 0.0
    %2588 = vmatpush1.xpose.msra.mxu0 0.0
    %2589 = vmatprep.subr.mxu0 0.0
    %2590 = vmatpush1.xpose.msra.mxu0 0.0
    %2591 = vmatprep.subr.mxu0 0.0
    %2592 = vmatpush1.xpose.msra.mxu0 0.0
    %2593 = vmatprep.subr.mxu0 0.0
    %2594 = vmatpush1.xpose.msra.mxu0 0.0
    %2595 = vmatprep.subr.mxu0 0.0
    %2596 = vmatpush1.xpose.msra.mxu0 0.0
    %2597 = vmatprep.subr.mxu0 0.0
    %2598 = vmatpush1.xpose.msra.mxu0 0.0
    %2599 = vmatprep.subr.mxu0 0.0
    %2600 = vmatpush1.xpose.msra.mxu0 0.0
    %2601 = vmatprep.subr.mxu0 0.0
    %2602 = vmatpush1.xpose.msra.mxu0 0.0
    %2603 = vmatprep.subr.mxu0 0.0
    %2604 = vmatpush1.xpose.msra.mxu0 0.0
    %2605 = vmatprep.subr.mxu0 0.0
    %2606 = vmatpush1.xpose.msra.mxu0 0.0
    %2607 = vmatprep.subr.mxu0 0.0
    %2608 = vmatpush1.xpose.msra.mxu0 0.0
    %2609 = vmatprep.subr.mxu0 0.0
    %2610 = vmatpush1.xpose.msra.mxu0 0.0
    %2611 = vmatprep.subr.mxu0 0.0
    %2612 = vmatpush1.xpose.msra.mxu0 0.0
    %2613 = vmatprep.subr.mxu0 0.0
    %2614 = vmatpush1.xpose.msra.mxu0 0.0
    %2615 = vmatprep.subr.mxu0 0.0
    %2616 = vmatpush1.xpose.msra.mxu0 0.0
    %2617 = vmatprep.subr.mxu0 0.0
    %2618 = vmatpush1.xpose.msra.mxu0 0.0
    %2619 = vmatprep.subr.mxu0 0.0
    %2620 = vmatpush1.xpose.msra.mxu0 0.0
    %2621 = vmatprep.subr.mxu0 0.0
    %2622 = vmatpush1.xpose.msra.mxu0 0.0
    %2623 = vmatprep.subr.mxu0 0.0
    %2624 = vmatpush1.xpose.msra.mxu0 0.0
    %2625 = vmatprep.subr.mxu0 0.0
    %2626 = vmatpush1.xpose.msra.mxu0 0.0
    %2627 = vmatprep.subr.mxu0 0.0
    %2628 = vmatpush1.xpose.msra.mxu0 0.0
    %2629 = vmatprep.subr.mxu0 0.0
    %2630 = vmatpush1.xpose.msra.mxu0 0.0
    %2631 = vmatprep.subr.mxu0 0.0
    %2632 = vmatpush1.xpose.msra.mxu0 0.0
    %2633 = vmatprep.subr.mxu0 0.0
    %2634 = vmatpush1.xpose.msra.mxu0 0.0
    %2635 = vmatprep.mubr.f32.mxu0 0.0
    %2636 = vmatmul.mubr.f32.gmra.mrb[0].mxu0 %v2567
    %v2637 = vpop.f32.mrb[0].mxu0
    %v2638 = vadd.f32 0.0, %v2637
    %v2639 = vpop.f32.mrb[0].mxu0
    %2640 = vdwg.mxu0
    %v2641 = vmul.f32 %v2560, 0.05103104
    %v2642 = vmul.f32 %v2638, 0.05103104
    %v2643 = vsel %vm1647, %v2641, -inf
    %v2644 = vsel %vm1647, %v2642, -inf
    %v2645 = vsel %vm1650, %v2643, -inf
    %2646 = vmax.xlane.f32.xlu0 %v2645
    %v2647 = vpop.xlane.xlu0 %2646
    %v2648 = vsel %vm1650, %v2644, -inf
    %2649 = vmax.xlane.f32.xlu0 %v2648
    %v2650 = vpop.xlane.xlu0 %2649
    %v2651 = vsub.f32 %v2643, %v2647
    %v2652 = vsub.f32 %v2644, %v2650
    %v2653 = vmul.f32 %v2651, 1.442695
    %v2654 = vpow.pop %v2653
    %v2655 = vmul.f32 %v2652, 1.442695
    %v2656 = vpow.pop %v2655
    %v2657 = vsel %vm1650, %v2654, 0.0
    %2658 = vadd.xlane.f32.xlu0 %v2657
    %v2659 = vpop.xlane.xlu0 %2658
    %v2660 = vsel %vm1650, %v2656, 0.0
    %2661 = vadd.xlane.f32.xlu0 %v2660
    %v2662 = vpop.xlane.xlu0 %2661
    %v2663 = vrcp.pop %v2659
    %v2664 = vmul.f32 1.0, %v2663
    %v2665 = vrcp.pop %v2662
    %v2666 = vmul.f32 1.0, %v2665
    %v2667 = vmul.f32 %v2654, %v2664
    %v2668 = vmul.f32 %v2656, %v2666
    %2670 = vrot.lane.b32.xlu0 %v1328, 64
    %v2671 = vpop.permute.xlu0 %2670
    %v2674 = vsel %vm1650, %v2667, 0
    %2676 = vmatprep.subr.mxu0 0.0
    %2677 = vmatpush1.msra.mxu0 %v2671
    %2678 = vmatprep.subr.mxu0 0.0
    %2679 = vmatpush1.msra.mxu0 0.0
    %2680 = vmatprep.subr.mxu0 0.0
    %2681 = vmatpush1.msra.mxu0 0.0
    %2682 = vmatprep.subr.mxu0 0.0
    %2683 = vmatpush1.msra.mxu0 0.0
    %2684 = vmatprep.subr.mxu0 0.0
    %2685 = vmatpush1.msra.mxu0 0.0
    %2686 = vmatprep.subr.mxu0 0.0
    %2687 = vmatpush1.msra.mxu0 0.0
    %2688 = vmatprep.subr.mxu0 0.0
    %2689 = vmatpush1.msra.mxu0 0.0
    %2690 = vmatprep.subr.mxu0 0.0
    %2691 = vmatpush1.msra.mxu0 0.0
    %2692 = vmatprep.subr.mxu0 0.0
    %2693 = vmatpush1.msra.mxu0 0.0
    %2694 = vmatprep.subr.mxu0 0.0
    %2695 = vmatpush1.msra.mxu0 0.0
    %2696 = vmatprep.subr.mxu0 0.0
    %2697 = vmatpush1.msra.mxu0 0.0
    %2698 = vmatprep.subr.mxu0 0.0
    %2699 = vmatpush1.msra.mxu0 0.0
    %2700 = vmatprep.subr.mxu0 0.0
    %2701 = vmatpush1.msra.mxu0 0.0
    %2702 = vmatprep.subr.mxu0 0.0
    %2703 = vmatpush1.msra.mxu0 0.0
    %2704 = vmatprep.subr.mxu0 0.0
    %2705 = vmatpush1.msra.mxu0 0.0
    %2706 = vmatprep.subr.mxu0 0.0
    %2707 = vmatpush1.msra.mxu0 0.0
    %2708 = vmatprep.subr.mxu0 0.0
    %2709 = vmatpush1.msra.mxu0 0.0
    %2710 = vmatprep.subr.mxu0 0.0
    %2711 = vmatpush1.msra.mxu0 0.0
    %2712 = vmatprep.subr.mxu0 0.0
    %2713 = vmatpush1.msra.mxu0 0.0
    %2714 = vmatprep.subr.mxu0 0.0
    %2715 = vmatpush1.msra.mxu0 0.0
    %2716 = vmatprep.subr.mxu0 0.0
    %2717 = vmatpush1.msra.mxu0 0.0
    %2718 = vmatprep.subr.mxu0 0.0
    %2719 = vmatpush1.msra.mxu0 0.0
    %2720 = vmatprep.subr.mxu0 0.0
    %2721 = vmatpush1.msra.mxu0 0.0
    %2722 = vmatprep.subr.mxu0 0.0
    %2723 = vmatpush1.msra.mxu0 0.0
    %2724 = vmatprep.subr.mxu0 0.0
    %2725 = vmatpush1.msra.mxu0 0.0
    %2726 = vmatprep.subr.mxu0 0.0
    %2727 = vmatpush1.msra.mxu0 0.0
    %2728 = vmatprep.subr.mxu0 0.0
    %2729 = vmatpush1.msra.mxu0 0.0
    %2730 = vmatprep.subr.mxu0 0.0
    %2731 = vmatpush1.msra.mxu0 0.0
    %2732 = vmatprep.subr.mxu0 0.0
    %2733 = vmatpush1.msra.mxu0 0.0
    %2734 = vmatprep.subr.mxu0 0.0
    %2735 = vmatpush1.msra.mxu0 0.0
    %2736 = vmatprep.subr.mxu0 0.0
    %2737 = vmatpush1.msra.mxu0 0.0
    %2738 = vmatprep.subr.mxu0 0.0
    %2739 = vmatpush1.msra.mxu0 0.0
    %2740 = vmatprep.mubr.f32.mxu0 0.0
    %2741 = vmatmul.mubr.f32.gmra.mrb[0].mxu0 %v2674
    %v2742 = vpop.f32.mrb[0].mxu0
    %v2743 = vadd.f32 0.0, %v2742
    %v2744 = vpop.f32.mrb[0].mxu0
    %2745 = vdwg.mxu0
    %2747 = vrot.lane.b32.xlu0 %v1334, 64
    %v2748 = vpop.permute.xlu0 %2747
    %v2751 = vsel %vm1650, %v2668, 0
    %2753 = vmatprep.subr.mxu0 0.0
    %2754 = vmatpush1.msra.mxu0 %v2748
    %2755 = vmatprep.subr.mxu0 0.0
    %2756 = vmatpush1.msra.mxu0 0.0
    %2757 = vmatprep.subr.mxu0 0.0
    %2758 = vmatpush1.msra.mxu0 0.0
    %2759 = vmatprep.subr.mxu0 0.0
    %2760 = vmatpush1.msra.mxu0 0.0
    %2761 = vmatprep.subr.mxu0 0.0
    %2762 = vmatpush1.msra.mxu0 0.0
    %2763 = vmatprep.subr.mxu0 0.0
    %2764 = vmatpush1.msra.mxu0 0.0
    %2765 = vmatprep.subr.mxu0 0.0
    %2766 = vmatpush1.msra.mxu0 0.0
    %2767 = vmatprep.subr.mxu0 0.0
    %2768 = vmatpush1.msra.mxu0 0.0
    %2769 = vmatprep.subr.mxu0 0.0
    %2770 = vmatpush1.msra.mxu0 0.0
    %2771 = vmatprep.subr.mxu0 0.0
    %2772 = vmatpush1.msra.mxu0 0.0
    %2773 = vmatprep.subr.mxu0 0.0
    %2774 = vmatpush1.msra.mxu0 0.0
    %2775 = vmatprep.subr.mxu0 0.0
    %2776 = vmatpush1.msra.mxu0 0.0
    %2777 = vmatprep.subr.mxu0 0.0
    %2778 = vmatpush1.msra.mxu0 0.0
    %2779 = vmatprep.subr.mxu0 0.0
    %2780 = vmatpush1.msra.mxu0 0.0
    %2781 = vmatprep.subr.mxu0 0.0
    %2782 = vmatpush1.msra.mxu0 0.0
    %2783 = vmatprep.subr.mxu0 0.0
    %2784 = vmatpush1.msra.mxu0 0.0
    %2785 = vmatprep.subr.mxu0 0.0
    %2786 = vmatpush1.msra.mxu0 0.0
    %2787 = vmatprep.subr.mxu0 0.0
    %2788 = vmatpush1.msra.mxu0 0.0
    %2789 = vmatprep.subr.mxu0 0.0
    %2790 = vmatpush1.msra.mxu0 0.0
    %2791 = vmatprep.subr.mxu0 0.0
    %2792 = vmatpush1.msra.mxu0 0.0
    %2793 = vmatprep.subr.mxu0 0.0
    %2794 = vmatpush1.msra.mxu0 0.0
    %2795 = vmatprep.subr.mxu0 0.0
    %2796 = vmatpush1.msra.mxu0 0.0
    %2797 = vmatprep.subr.mxu0 0.0
    %2798 = vmatpush1.msra.mxu0 0.0
    %2799 = vmatprep.subr.mxu0 0.0
    %2800 = vmatpush1.msra.mxu0 0.0
    %2801 = vmatprep.subr.mxu0 0.0
    %2802 = vmatpush1.msra.mxu0 0.0
    %2803 = vmatprep.subr.mxu0 0.0
    %2804 = vmatpush1.msra.mxu0 0.0
    %2805 = vmatprep.subr.mxu0 0.0
    %2806 = vmatpush1.msra.mxu0 0.0
    %2807 = vmatprep.subr.mxu0 0.0
    %2808 = vmatpush1.msra.mxu0 0.0
    %2809 = vmatprep.subr.mxu0 0.0
    %2810 = vmatpush1.msra.mxu0 0.0
    %2811 = vmatprep.subr.mxu0 0.0
    %2812 = vmatpush1.msra.mxu0 0.0
    %2813 = vmatprep.subr.mxu0 0.0
    %2814 = vmatpush1.msra.mxu0 0.0
    %2815 = vmatprep.subr.mxu0 0.0
    %2816 = vmatpush1.msra.mxu0 0.0
    %2817 = vmatprep.mubr.f32.mxu0 0.0
    %2818 = vmatmul.mubr.f32.gmra.mrb[0].mxu0 %v2751
    %v2819 = vpop.f32.mrb[0].mxu0
    %v2820 = vadd.f32 0.0, %v2819
    %v2821 = vpop.f32.mrb[0].mxu0
    %2822 = vdwg.mxu0
    %v2824 = vsel %vm1491, %v1018, 0
    %v2827 = vsel %vm1491, %v1174, 0
    %2829 = vmatprep.subr.mxu0 0.0
    %2830 = vmatpush1.xpose.msra.mxu0 %v2827
    %2831 = vmatprep.subr.mxu0 0.0
    %2832 = vmatpush1.xpose.msra.mxu0 0.0
    %2833 = vmatprep.subr.mxu0 0.0
    %2834 = vmatpush1.xpose.msra.mxu0 0.0
    %2835 = vmatprep.subr.mxu0 0.0
    %2836 = vmatpush1.xpose.msra.mxu0 0.0
    %2837 = vmatprep.subr.mxu0 0.0
    %2838 = vmatpush1.xpose.msra.mxu0 0.0
    %2839 = vmatprep.subr.mxu0 0.0
    %2840 = vmatpush1.xpose.msra.mxu0 0.0
    %2841 = vmatprep.subr.mxu0 0.0
    %2842 = vmatpush1.xpose.msra.mxu0 0.0
    %2843 = vmatprep.subr.mxu0 0.0
    %2844 = vmatpush1.xpose.msra.mxu0 0.0
    %2845 = vmatprep.subr.mxu0 0.0
    %2846 = vmatpush1.xpose.msra.mxu0 0.0
    %2847 = vmatprep.subr.mxu0 0.0
    %2848 = vmatpush1.xpose.msra.mxu0 0.0
    %2849 = vmatprep.subr.mxu0 0.0
    %2850 = vmatpush1.xpose.msra.mxu0 0.0
    %2851 = vmatprep.subr.mxu0 0.0
    %2852 = vmatpush1.xpose.msra.mxu0 0.0
    %2853 = vmatprep.subr.mxu0 0.0
    %2854 = vmatpush1.xpose.msra.mxu0 0.0
    %2855 = vmatprep.subr.mxu0 0.0
    %2856 = vmatpush1.xpose.msra.mxu0 0.0
    %2857 = vmatprep.subr.mxu0 0.0
    %2858 = vmatpush1.xpose.msra.mxu0 0.0
    %2859 = vmatprep.subr.mxu0 0.0
    %2860 = vmatpush1.xpose.msra.mxu0 0.0
    %2861 = vmatprep.subr.mxu0 0.0
    %2862 = vmatpush1.xpose.msra.mxu0 0.0
    %2863 = vmatprep.subr.mxu0 0.0
    %2864 = vmatpush1.xpose.msra.mxu0 0.0
    %2865 = vmatprep.subr.mxu0 0.0
    %2866 = vmatpush1.xpose.msra.mxu0 0.0
    %2867 = vmatprep.subr.mxu0 0.0
    %2868 = vmatpush1.xpose.msra.mxu0 0.0
    %2869 = vmatprep.subr.mxu0 0.0
    %2870 = vmatpush1.xpose.msra.mxu0 0.0
    %2871 = vmatprep.subr.mxu0 0.0
    %2872 = vmatpush1.xpose.msra.mxu0 0.0
    %2873 = vmatprep.subr.mxu0 0.0
    %2874 = vmatpush1.xpose.msra.mxu0 0.0
    %2875 = vmatprep.subr.mxu0 0.0
    %2876 = vmatpush1.xpose.msra.mxu0 0.0
    %2877 = vmatprep.subr.mxu0 0.0
    %2878 = vmatpush1.xpose.msra.mxu0 0.0
    %2879 = vmatprep.subr.mxu0 0.0
    %2880 = vmatpush1.xpose.msra.mxu0 0.0
    %2881 = vmatprep.subr.mxu0 0.0
    %2882 = vmatpush1.xpose.msra.mxu0 0.0
    %2883 = vmatprep.subr.mxu0 0.0
    %2884 = vmatpush1.xpose.msra.mxu0 0.0
    %2885 = vmatprep.subr.mxu0 0.0
    %2886 = vmatpush1.xpose.msra.mxu0 0.0
    %2887 = vmatprep.subr.mxu0 0.0
    %2888 = vmatpush1.xpose.msra.mxu0 0.0
    %2889 = vmatprep.subr.mxu0 0.0
    %2890 = vmatpush1.xpose.msra.mxu0 0.0
    %2891 = vmatprep.subr.mxu0 0.0
    %2892 = vmatpush1.xpose.msra.mxu0 0.0
    %2893 = vmatprep.mubr.f32.mxu0 0.0
    %2894 = vmatmul.mubr.f32.gmra.mrb[0].mxu0 %v2824
    %v2895 = vpop.f32.mrb[0].mxu0
    %v2896 = vadd.f32 0.0, %v2895
    %v2897 = vpop.f32.mrb[0].mxu0
    %2898 = vdwg.mxu0
    %v2900 = vsel %vm1491, %v1024, 0
    %v2903 = vsel %vm1491, %v1180, 0
    %2905 = vmatprep.subr.mxu0 0.0
    %2906 = vmatpush1.xpose.msra.mxu0 %v2903
    %2907 = vmatprep.subr.mxu0 0.0
    %2908 = vmatpush1.xpose.msra.mxu0 0.0
    %2909 = vmatprep.subr.mxu0 0.0
    %2910 = vmatpush1.xpose.msra.mxu0 0.0
    %2911 = vmatprep.subr.mxu0 0.0
    %2912 = vmatpush1.xpose.msra.mxu0 0.0
    %2913 = vmatprep.subr.mxu0 0.0
    %2914 = vmatpush1.xpose.msra.mxu0 0.0
    %2915 = vmatprep.subr.mxu0 0.0
    %2916 = vmatpush1.xpose.msra.mxu0 0.0
    %2917 = vmatprep.subr.mxu0 0.0
    %2918 = vmatpush1.xpose.msra.mxu0 0.0
    %2919 = vmatprep.subr.mxu0 0.0
    %2920 = vmatpush1.xpose.msra.mxu0 0.0
    %2921 = vmatprep.subr.mxu0 0.0
    %2922 = vmatpush1.xpose.msra.mxu0 0.0
    %2923 = vmatprep.subr.mxu0 0.0
    %2924 = vmatpush1.xpose.msra.mxu0 0.0
    %2925 = vmatprep.subr.mxu0 0.0
    %2926 = vmatpush1.xpose.msra.mxu0 0.0
    %2927 = vmatprep.subr.mxu0 0.0
    %2928 = vmatpush1.xpose.msra.mxu0 0.0
    %2929 = vmatprep.subr.mxu0 0.0
    %2930 = vmatpush1.xpose.msra.mxu0 0.0
    %2931 = vmatprep.subr.mxu0 0.0
    %2932 = vmatpush1.xpose.msra.mxu0 0.0
    %2933 = vmatprep.subr.mxu0 0.0
    %2934 = vmatpush1.xpose.msra.mxu0 0.0
    %2935 = vmatprep.subr.mxu0 0.0
    %2936 = vmatpush1.xpose.msra.mxu0 0.0
    %2937 = vmatprep.subr.mxu0 0.0
    %2938 = vmatpush1.xpose.msra.mxu0 0.0
    %2939 = vmatprep.subr.mxu0 0.0
    %2940 = vmatpush1.xpose.msra.mxu0 0.0
    %2941 = vmatprep.subr.mxu0 0.0
    %2942 = vmatpush1.xpose.msra.mxu0 0.0
    %2943 = vmatprep.subr.mxu0 0.0
    %2944 = vmatpush1.xpose.msra.mxu0 0.0
    %2945 = vmatprep.subr.mxu0 0.0
    %2946 = vmatpush1.xpose.msra.mxu0 0.0
    %2947 = vmatprep.subr.mxu0 0.0
    %2948 = vmatpush1.xpose.msra.mxu0 0.0
    %2949 = vmatprep.subr.mxu0 0.0
    %2950 = vmatpush1.xpose.msra.mxu0 0.0
    %2951 = vmatprep.subr.mxu0 0.0
    %2952 = vmatpush1.xpose.msra.mxu0 0.0
    %2953 = vmatprep.subr.mxu0 0.0
    %2954 = vmatpush1.xpose.msra.mxu0 0.0
    %2955 = vmatprep.subr.mxu0 0.0
    %2956 = vmatpush1.xpose.msra.mxu0 0.0
    %2957 = vmatprep.subr.mxu0 0.0
    %2958 = vmatpush1.xpose.msra.mxu0 0.0
    %2959 = vmatprep.subr.mxu0 0.0
    %2960 = vmatpush1.xpose.msra.mxu0 0.0
    %2961 = vmatprep.subr.mxu0 0.0
    %2962 = vmatpush1.xpose.msra.mxu0 0.0
    %2963 = vmatprep.subr.mxu0 0.0
    %2964 = vmatpush1.xpose.msra.mxu0 0.0
    %2965 = vmatprep.subr.mxu0 0.0
    %2966 = vmatpush1.xpose.msra.mxu0 0.0
    %2967 = vmatprep.subr.mxu0 0.0
    %2968 = vmatpush1.xpose.msra.mxu0 0.0
    %2969 = vmatprep.mubr.f32.mxu0 0.0
    %2970 = vmatmul.mubr.f32.gmra.mrb[0].mxu0 %v2900
    %v2971 = vpop.f32.mrb[0].mxu0
    %v2972 = vadd.f32 0.0, %v2971
    %v2973 = vpop.f32.mrb[0].mxu0
    %2974 = vdwg.mxu0
    %v2975 = vmul.f32 %v2896, 0.05103104
    %v2976 = vmul.f32 %v2972, 0.05103104
    %v2977 = vsel %vm1647, %v2975, -inf
    %v2978 = vsel %vm1647, %v2976, -inf
    %v2979 = vsel %vm1650, %v2977, -inf
    %2980 = vmax.xlane.f32.xlu0 %v2979
    %v2981 = vpop.xlane.xlu0 %2980
    %v2982 = vsel %vm1650, %v2978, -inf
    %2983 = vmax.xlane.f32.xlu0 %v2982
    %v2984 = vpop.xlane.xlu0 %2983
    %v2985 = vsub.f32 %v2977, %v2981
    %v2986 = vsub.f32 %v2978, %v2984
    %v2987 = vmul.f32 %v2985, 1.442695
    %v2988 = vpow.pop %v2987
    %v2989 = vmul.f32 %v2986, 1.442695
    %v2990 = vpow.pop %v2989
    %v2991 = vsel %vm1650, %v2988, 0.0
    %2992 = vadd.xlane.f32.xlu0 %v2991
    %v2993 = vpop.xlane.xlu0 %2992
    %v2994 = vsel %vm1650, %v2990, 0.0
    %2995 = vadd.xlane.f32.xlu0 %v2994
    %v2996 = vpop.xlane.xlu0 %2995
    %v2997 = vrcp.pop %v2993
    %v2998 = vmul.f32 1.0, %v2997
    %v2999 = vrcp.pop %v2996
    %v3000 = vmul.f32 1.0, %v2999
    %v3001 = vmul.f32 %v2988, %v2998
    %v3002 = vmul.f32 %v2990, %v3000
    %v3004 = vsel %vm1650, %v3001, 0
    %3006 = vmatprep.subr.mxu0 0.0
    %3007 = vmatpush1.msra.mxu0 %v1478
    %3008 = vmatprep.subr.mxu0 0.0
    %3009 = vmatpush1.msra.mxu0 0.0
    %3010 = vmatprep.subr.mxu0 0.0
    %3011 = vmatpush1.msra.mxu0 0.0
    %3012 = vmatprep.subr.mxu0 0.0
    %3013 = vmatpush1.msra.mxu0 0.0
    %3014 = vmatprep.subr.mxu0 0.0
    %3015 = vmatpush1.msra.mxu0 0.0
    %3016 = vmatprep.subr.mxu0 0.0
    %3017 = vmatpush1.msra.mxu0 0.0
    %3018 = vmatprep.subr.mxu0 0.0
    %3019 = vmatpush1.msra.mxu0 0.0
    %3020 = vmatprep.subr.mxu0 0.0
    %3021 = vmatpush1.msra.mxu0 0.0
    %3022 = vmatprep.subr.mxu0 0.0
    %3023 = vmatpush1.msra.mxu0 0.0
    %3024 = vmatprep.subr.mxu0 0.0
    %3025 = vmatpush1.msra.mxu0 0.0
    %3026 = vmatprep.subr.mxu0 0.0
    %3027 = vmatpush1.msra.mxu0 0.0
    %3028 = vmatprep.subr.mxu0 0.0
    %3029 = vmatpush1.msra.mxu0 0.0
    %3030 = vmatprep.subr.mxu0 0.0
    %3031 = vmatpush1.msra.mxu0 0.0
    %3032 = vmatprep.subr.mxu0 0.0
    %3033 = vmatpush1.msra.mxu0 0.0
    %3034 = vmatprep.subr.mxu0 0.0
    %3035 = vmatpush1.msra.mxu0 0.0
    %3036 = vmatprep.subr.mxu0 0.0
    %3037 = vmatpush1.msra.mxu0 0.0
    %3038 = vmatprep.subr.mxu0 0.0
    %3039 = vmatpush1.msra.mxu0 0.0
    %3040 = vmatprep.subr.mxu0 0.0
    %3041 = vmatpush1.msra.mxu0 0.0
    %3042 = vmatprep.subr.mxu0 0.0
    %3043 = vmatpush1.msra.mxu0 0.0
    %3044 = vmatprep.subr.mxu0 0.0
    %3045 = vmatpush1.msra.mxu0 0.0
    %3046 = vmatprep.subr.mxu0 0.0
    %3047 = vmatpush1.msra.mxu0 0.0
    %3048 = vmatprep.subr.mxu0 0.0
    %3049 = vmatpush1.msra.mxu0 0.0
    %3050 = vmatprep.subr.mxu0 0.0
    %3051 = vmatpush1.msra.mxu0 0.0
    %3052 = vmatprep.subr.mxu0 0.0
    %3053 = vmatpush1.msra.mxu0 0.0
    %3054 = vmatprep.subr.mxu0 0.0
    %3055 = vmatpush1.msra.mxu0 0.0
    %3056 = vmatprep.subr.mxu0 0.0
    %3057 = vmatpush1.msra.mxu0 0.0
    %3058 = vmatprep.subr.mxu0 0.0
    %3059 = vmatpush1.msra.mxu0 0.0
    %3060 = vmatprep.subr.mxu0 0.0
    %3061 = vmatpush1.msra.mxu0 0.0
    %3062 = vmatprep.subr.mxu0 0.0
    %3063 = vmatpush1.msra.mxu0 0.0
    %3064 = vmatprep.subr.mxu0 0.0
    %3065 = vmatpush1.msra.mxu0 0.0
    %3066 = vmatprep.subr.mxu0 0.0
    %3067 = vmatpush1.msra.mxu0 0.0
    %3068 = vmatprep.subr.mxu0 0.0
    %3069 = vmatpush1.msra.mxu0 0.0
    %3070 = vmatprep.mubr.f32.mxu0 0.0
    %3071 = vmatmul.mubr.f32.gmra.mrb[0].mxu0 %v3004
    %v3072 = vpop.f32.mrb[0].mxu0
    %v3073 = vadd.f32 0.0, %v3072
    %v3074 = vpop.f32.mrb[0].mxu0
    %3075 = vdwg.mxu0
    %v3077 = vsel %vm1650, %v3002, 0
    %3079 = vmatprep.subr.mxu0 0.0
    %3080 = vmatpush1.msra.mxu0 %v1483
    %3081 = vmatprep.subr.mxu0 0.0
    %3082 = vmatpush1.msra.mxu0 0.0
    %3083 = vmatprep.subr.mxu0 0.0
    %3084 = vmatpush1.msra.mxu0 0.0
    %3085 = vmatprep.subr.mxu0 0.0
    %3086 = vmatpush1.msra.mxu0 0.0
    %3087 = vmatprep.subr.mxu0 0.0
    %3088 = vmatpush1.msra.mxu0 0.0
    %3089 = vmatprep.subr.mxu0 0.0
    %3090 = vmatpush1.msra.mxu0 0.0
    %3091 = vmatprep.subr.mxu0 0.0
    %3092 = vmatpush1.msra.mxu0 0.0
    %3093 = vmatprep.subr.mxu0 0.0
    %3094 = vmatpush1.msra.mxu0 0.0
    %3095 = vmatprep.subr.mxu0 0.0
    %3096 = vmatpush1.msra.mxu0 0.0
    %3097 = vmatprep.subr.mxu0 0.0
    %3098 = vmatpush1.msra.mxu0 0.0
    %3099 = vmatprep.subr.mxu0 0.0
    %3100 = vmatpush1.msra.mxu0 0.0
    %3101 = vmatprep.subr.mxu0 0.0
    %3102 = vmatpush1.msra.mxu0 0.0
    %3103 = vmatprep.subr.mxu0 0.0
    %3104 = vmatpush1.msra.mxu0 0.0
    %3105 = vmatprep.subr.mxu0 0.0
    %3106 = vmatpush1.msra.mxu0 0.0
    %3107 = vmatprep.subr.mxu0 0.0
    %3108 = vmatpush1.msra.mxu0 0.0
    %3109 = vmatprep.subr.mxu0 0.0
    %3110 = vmatpush1.msra.mxu0 0.0
    %3111 = vmatprep.subr.mxu0 0.0
    %3112 = vmatpush1.msra.mxu0 0.0
    %3113 = vmatprep.subr.mxu0 0.0
    %3114 = vmatpush1.msra.mxu0 0.0
    %3115 = vmatprep.subr.mxu0 0.0
    %3116 = vmatpush1.msra.mxu0 0.0
    %3117 = vmatprep.subr.mxu0 0.0
    %3118 = vmatpush1.msra.mxu0 0.0
    %3119 = vmatprep.subr.mxu0 0.0
    %3120 = vmatpush1.msra.mxu0 0.0
    %3121 = vmatprep.subr.mxu0 0.0
    %3122 = vmatpush1.msra.mxu0 0.0
    %3123 = vmatprep.subr.mxu0 0.0
    %3124 = vmatpush1.msra.mxu0 0.0
    %3125 = vmatprep.subr.mxu0 0.0
    %3126 = vmatpush1.msra.mxu0 0.0
    %3127 = vmatprep.subr.mxu0 0.0
    %3128 = vmatpush1.msra.mxu0 0.0
    %3129 = vmatprep.subr.mxu0 0.0
    %3130 = vmatpush1.msra.mxu0 0.0
    %3131 = vmatprep.subr.mxu0 0.0
    %3132 = vmatpush1.msra.mxu0 0.0
    %3133 = vmatprep.subr.mxu0 0.0
    %3134 = vmatpush1.msra.mxu0 0.0
    %3135 = vmatprep.subr.mxu0 0.0
    %3136 = vmatpush1.msra.mxu0 0.0
    %3137 = vmatprep.subr.mxu0 0.0
    %3138 = vmatpush1.msra.mxu0 0.0
    %3139 = vmatprep.subr.mxu0 0.0
    %3140 = vmatpush1.msra.mxu0 0.0
    %3141 = vmatprep.subr.mxu0 0.0
    %3142 = vmatpush1.msra.mxu0 0.0
    %3143 = vmatprep.mubr.f32.mxu0 0.0
    %3144 = vmatmul.mubr.f32.gmra.mrb[0].mxu0 %v3077
    %v3145 = vpop.f32.mrb[0].mxu0
    %v3146 = vadd.f32 0.0, %v3145
    %v3147 = vpop.f32.mrb[0].mxu0
    %3148 = vdwg.mxu0
    %3149 = vrot.lane.b32.xlu0 %v1018, 64
    %v3150 = vpop.permute.xlu0 %3149
    %3151 = vrot.lane.b32.xlu0 %v1174, 64
    %v3152 = vpop.permute.xlu0 %3151
    %v3153 = vsel %vm1491, %v3150, 0
    %v3155 = vsel %vm1491, %v3152, 0
    %3157 = vmatprep.subr.mxu0 0.0
    %3158 = vmatpush1.xpose.msra.mxu0 %v3155
    %3159 = vmatprep.subr.mxu0 0.0
    %3160 = vmatpush1.xpose.msra.mxu0 0.0
    %3161 = vmatprep.subr.mxu0 0.0
    %3162 = vmatpush1.xpose.msra.mxu0 0.0
    %3163 = vmatprep.subr.mxu0 0.0
    %3164 = vmatpush1.xpose.msra.mxu0 0.0
    %3165 = vmatprep.subr.mxu0 0.0
    %3166 = vmatpush1.xpose.msra.mxu0 0.0
    %3167 = vmatprep.subr.mxu0 0.0
    %3168 = vmatpush1.xpose.msra.mxu0 0.0
    %3169 = vmatprep.subr.mxu0 0.0
    %3170 = vmatpush1.xpose.msra.mxu0 0.0
    %3171 = vmatprep.subr.mxu0 0.0
    %3172 = vmatpush1.xpose.msra.mxu0 0.0
    %3173 = vmatprep.subr.mxu0 0.0
    %3174 = vmatpush1.xpose.msra.mxu0 0.0
    %3175 = vmatprep.subr.mxu0 0.0
    %3176 = vmatpush1.xpose.msra.mxu0 0.0
    %3177 = vmatprep.subr.mxu0 0.0
    %3178 = vmatpush1.xpose.msra.mxu0 0.0
    %3179 = vmatprep.subr.mxu0 0.0
    %3180 = vmatpush1.xpose.msra.mxu0 0.0
    %3181 = vmatprep.subr.mxu0 0.0
    %3182 = vmatpush1.xpose.msra.mxu0 0.0
    %3183 = vmatprep.subr.mxu0 0.0
    %3184 = vmatpush1.xpose.msra.mxu0 0.0
    %3185 = vmatprep.subr.mxu0 0.0
    %3186 = vmatpush1.xpose.msra.mxu0 0.0
    %3187 = vmatprep.subr.mxu0 0.0
    %3188 = vmatpush1.xpose.msra.mxu0 0.0
    %3189 = vmatprep.subr.mxu0 0.0
    %3190 = vmatpush1.xpose.msra.mxu0 0.0
    %3191 = vmatprep.subr.mxu0 0.0
    %3192 = vmatpush1.xpose.msra.mxu0 0.0
    %3193 = vmatprep.subr.mxu0 0.0
    %3194 = vmatpush1.xpose.msra.mxu0 0.0
    %3195 = vmatprep.subr.mxu0 0.0
    %3196 = vmatpush1.xpose.msra.mxu0 0.0
    %3197 = vmatprep.subr.mxu0 0.0
    %3198 = vmatpush1.xpose.msra.mxu0 0.0
    %3199 = vmatprep.subr.mxu0 0.0
    %3200 = vmatpush1.xpose.msra.mxu0 0.0
    %3201 = vmatprep.subr.mxu0 0.0
    %3202 = vmatpush1.xpose.msra.mxu0 0.0
    %3203 = vmatprep.subr.mxu0 0.0
    %3204 = vmatpush1.xpose.msra.mxu0 0.0
    %3205 = vmatprep.subr.mxu0 0.0
    %3206 = vmatpush1.xpose.msra.mxu0 0.0
    %3207 = vmatprep.subr.mxu0 0.0
    %3208 = vmatpush1.xpose.msra.mxu0 0.0
    %3209 = vmatprep.subr.mxu0 0.0
    %3210 = vmatpush1.xpose.msra.mxu0 0.0
    %3211 = vmatprep.subr.mxu0 0.0
    %3212 = vmatpush1.xpose.msra.mxu0 0.0
    %3213 = vmatprep.subr.mxu0 0.0
    %3214 = vmatpush1.xpose.msra.mxu0 0.0
    %3215 = vmatprep.subr.mxu0 0.0
    %3216 = vmatpush1.xpose.msra.mxu0 0.0
    %3217 = vmatprep.subr.mxu0 0.0
    %3218 = vmatpush1.xpose.msra.mxu0 0.0
    %3219 = vmatprep.subr.mxu0 0.0
    %3220 = vmatpush1.xpose.msra.mxu0 0.0
    %3221 = vmatprep.mubr.f32.mxu0 0.0
    %3222 = vmatmul.mubr.f32.gmra.mrb[0].mxu0 %v3153
    %v3223 = vpop.f32.mrb[0].mxu0
    %v3224 = vadd.f32 0.0, %v3223
    %v3225 = vpop.f32.mrb[0].mxu0
    %3226 = vdwg.mxu0
    %3227 = vrot.lane.b32.xlu0 %v1024, 64
    %v3228 = vpop.permute.xlu0 %3227
    %3229 = vrot.lane.b32.xlu0 %v1180, 64
    %v3230 = vpop.permute.xlu0 %3229
    %v3231 = vsel %vm1491, %v3228, 0
    %v3233 = vsel %vm1491, %v3230, 0
    %3235 = vmatprep.subr.mxu0 0.0
    %3236 = vmatpush1.xpose.msra.mxu0 %v3233
    %3237 = vmatprep.subr.mxu0 0.0
    %3238 = vmatpush1.xpose.msra.mxu0 0.0
    %3239 = vmatprep.subr.mxu0 0.0
    %3240 = vmatpush1.xpose.msra.mxu0 0.0
    %3241 = vmatprep.subr.mxu0 0.0
    %3242 = vmatpush1.xpose.msra.mxu0 0.0
    %3243 = vmatprep.subr.mxu0 0.0
    %3244 = vmatpush1.xpose.msra.mxu0 0.0
    %3245 = vmatprep.subr.mxu0 0.0
    %3246 = vmatpush1.xpose.msra.mxu0 0.0
    %3247 = vmatprep.subr.mxu0 0.0
    %3248 = vmatpush1.xpose.msra.mxu0 0.0
    %3249 = vmatprep.subr.mxu0 0.0
    %3250 = vmatpush1.xpose.msra.mxu0 0.0
    %3251 = vmatprep.subr.mxu0 0.0
    %3252 = vmatpush1.xpose.msra.mxu0 0.0
    %3253 = vmatprep.subr.mxu0 0.0
    %3254 = vmatpush1.xpose.msra.mxu0 0.0
    %3255 = vmatprep.subr.mxu0 0.0
    %3256 = vmatpush1.xpose.msra.mxu0 0.0
    %3257 = vmatprep.subr.mxu0 0.0
    %3258 = vmatpush1.xpose.msra.mxu0 0.0
    %3259 = vmatprep.subr.mxu0 0.0
    %3260 = vmatpush1.xpose.msra.mxu0 0.0
    %3261 = vmatprep.subr.mxu0 0.0
    %3262 = vmatpush1.xpose.msra.mxu0 0.0
    %3263 = vmatprep.subr.mxu0 0.0
    %3264 = vmatpush1.xpose.msra.mxu0 0.0
    %3265 = vmatprep.subr.mxu0 0.0
    %3266 = vmatpush1.xpose.msra.mxu0 0.0
    %3267 = vmatprep.subr.mxu0 0.0
    %3268 = vmatpush1.xpose.msra.mxu0 0.0
    %3269 = vmatprep.subr.mxu0 0.0
    %3270 = vmatpush1.xpose.msra.mxu0 0.0
    %3271 = vmatprep.subr.mxu0 0.0
    %3272 = vmatpush1.xpose.msra.mxu0 0.0
    %3273 = vmatprep.subr.mxu0 0.0
    %3274 = vmatpush1.xpose.msra.mxu0 0.0
    %3275 = vmatprep.subr.mxu0 0.0
    %3276 = vmatpush1.xpose.msra.mxu0 0.0
    %3277 = vmatprep.subr.mxu0 0.0
    %3278 = vmatpush1.xpose.msra.mxu0 0.0
    %3279 = vmatprep.subr.mxu0 0.0
    %3280 = vmatpush1.xpose.msra.mxu0 0.0
    %3281 = vmatprep.subr.mxu0 0.0
    %3282 = vmatpush1.xpose.msra.mxu0 0.0
    %3283 = vmatprep.subr.mxu0 0.0
    %3284 = vmatpush1.xpose.msra.mxu0 0.0
    %3285 = vmatprep.subr.mxu0 0.0
    %3286 = vmatpush1.xpose.msra.mxu0 0.0
    %3287 = vmatprep.subr.mxu0 0.0
    %3288 = vmatpush1.xpose.msra.mxu0 0.0
    %3289 = vmatprep.subr.mxu0 0.0
    %3290 = vmatpush1.xpose.msra.mxu0 0.0
    %3291 = vmatprep.subr.mxu0 0.0
    %3292 = vmatpush1.xpose.msra.mxu0 0.0
    %3293 = vmatprep.subr.mxu0 0.0
    %3294 = vmatpush1.xpose.msra.mxu0 0.0
    %3295 = vmatprep.subr.mxu0 0.0
    %3296 = vmatpush1.xpose.msra.mxu0 0.0
    %3297 = vmatprep.subr.mxu0 0.0
    %3298 = vmatpush1.xpose.msra.mxu0 0.0
    %3299 = vmatprep.mubr.f32.mxu0 0.0
    %3300 = vmatmul.mubr.f32.gmra.mrb[0].mxu0 %v3231
    %v3301 = vpop.f32.mrb[0].mxu0
    %v3302 = vadd.f32 0.0, %v3301
    %v3303 = vpop.f32.mrb[0].mxu0
    %3304 = vdwg.mxu0
    %v3305 = vmul.f32 %v3224, 0.05103104
    %v3306 = vmul.f32 %v3302, 0.05103104
    %v3307 = vsel %vm1647, %v3305, -inf
    %v3308 = vsel %vm1647, %v3306, -inf
    %v3309 = vsel %vm1650, %v3307, -inf
    %3310 = vmax.xlane.f32.xlu0 %v3309
    %v3311 = vpop.xlane.xlu0 %3310
    %v3312 = vsel %vm1650, %v3308, -inf
    %3313 = vmax.xlane.f32.xlu0 %v3312
    %v3314 = vpop.xlane.xlu0 %3313
    %v3315 = vsub.f32 %v3307, %v3311
    %v3316 = vsub.f32 %v3308, %v3314
    %v3317 = vmul.f32 %v3315, 1.442695
    %v3318 = vpow.pop %v3317
    %v3319 = vmul.f32 %v3316, 1.442695
    %v3320 = vpow.pop %v3319
    %v3321 = vsel %vm1650, %v3318, 0.0
    %3322 = vadd.xlane.f32.xlu0 %v3321
    %v3323 = vpop.xlane.xlu0 %3322
    %v3324 = vsel %vm1650, %v3320, 0.0
    %3325 = vadd.xlane.f32.xlu0 %v3324
    %v3326 = vpop.xlane.xlu0 %3325
    %v3327 = vrcp.pop %v3323
    %v3328 = vmul.f32 1.0, %v3327
    %v3329 = vrcp.pop %v3326
    %v3330 = vmul.f32 1.0, %v3329
    %v3331 = vmul.f32 %v3318, %v3328
    %v3332 = vmul.f32 %v3320, %v3330
    %3334 = vrot.lane.b32.xlu0 %v1478, 64
    %v3335 = vpop.permute.xlu0 %3334
    %v3338 = vsel %vm1650, %v3331, 0
    %3340 = vmatprep.subr.mxu0 0.0
    %3341 = vmatpush1.msra.mxu0 %v3335
    %3342 = vmatprep.subr.mxu0 0.0
    %3343 = vmatpush1.msra.mxu0 0.0
    %3344 = vmatprep.subr.mxu0 0.0
    %3345 = vmatpush1.msra.mxu0 0.0
    %3346 = vmatprep.subr.mxu0 0.0
    %3347 = vmatpush1.msra.mxu0 0.0
    %3348 = vmatprep.subr.mxu0 0.0
    %3349 = vmatpush1.msra.mxu0 0.0
    %3350 = vmatprep.subr.mxu0 0.0
    %3351 = vmatpush1.msra.mxu0 0.0
    %3352 = vmatprep.subr.mxu0 0.0
    %3353 = vmatpush1.msra.mxu0 0.0
    %3354 = vmatprep.subr.mxu0 0.0
    %3355 = vmatpush1.msra.mxu0 0.0
    %3356 = vmatprep.subr.mxu0 0.0
    %3357 = vmatpush1.msra.mxu0 0.0
    %3358 = vmatprep.subr.mxu0 0.0
    %3359 = vmatpush1.msra.mxu0 0.0
    %3360 = vmatprep.subr.mxu0 0.0
    %3361 = vmatpush1.msra.mxu0 0.0
    %3362 = vmatprep.subr.mxu0 0.0
    %3363 = vmatpush1.msra.mxu0 0.0
    %3364 = vmatprep.subr.mxu0 0.0
    %3365 = vmatpush1.msra.mxu0 0.0
    %3366 = vmatprep.subr.mxu0 0.0
    %3367 = vmatpush1.msra.mxu0 0.0
    %3368 = vmatprep.subr.mxu0 0.0
    %3369 = vmatpush1.msra.mxu0 0.0
    %3370 = vmatprep.subr.mxu0 0.0
    %3371 = vmatpush1.msra.mxu0 0.0
    %3372 = vmatprep.subr.mxu0 0.0
    %3373 = vmatpush1.msra.mxu0 0.0
    %3374 = vmatprep.subr.mxu0 0.0
    %3375 = vmatpush1.msra.mxu0 0.0
    %3376 = vmatprep.subr.mxu0 0.0
    %3377 = vmatpush1.msra.mxu0 0.0
    %3378 = vmatprep.subr.mxu0 0.0
    %3379 = vmatpush1.msra.mxu0 0.0
    %3380 = vmatprep.subr.mxu0 0.0
    %3381 = vmatpush1.msra.mxu0 0.0
    %3382 = vmatprep.subr.mxu0 0.0
    %3383 = vmatpush1.msra.mxu0 0.0
    %3384 = vmatprep.subr.mxu0 0.0
    %3385 = vmatpush1.msra.mxu0 0.0
    %3386 = vmatprep.subr.mxu0 0.0
    %3387 = vmatpush1.msra.mxu0 0.0
    %3388 = vmatprep.subr.mxu0 0.0
    %3389 = vmatpush1.msra.mxu0 0.0
    %3390 = vmatprep.subr.mxu0 0.0
    %3391 = vmatpush1.msra.mxu0 0.0
    %3392 = vmatprep.subr.mxu0 0.0
    %3393 = vmatpush1.msra.mxu0 0.0
    %3394 = vmatprep.subr.mxu0 0.0
    %3395 = vmatpush1.msra.mxu0 0.0
    %3396 = vmatprep.subr.mxu0 0.0
    %3397 = vmatpush1.msra.mxu0 0.0
    %3398 = vmatprep.subr.mxu0 0.0
    %3399 = vmatpush1.msra.mxu0 0.0
    %3400 = vmatprep.subr.mxu0 0.0
    %3401 = vmatpush1.msra.mxu0 0.0
    %3402 = vmatprep.subr.mxu0 0.0
    %3403 = vmatpush1.msra.mxu0 0.0
    %3404 = vmatprep.mubr.f32.mxu0 0.0
    %3405 = vmatmul.mubr.f32.gmra.mrb[0].mxu0 %v3338
    %v3406 = vpop.f32.mrb[0].mxu0
    %v3407 = vadd.f32 0.0, %v3406
    %v3408 = vpop.f32.mrb[0].mxu0
    %3409 = vdwg.mxu0
    %3411 = vrot.lane.b32.xlu0 %v1483, 64
    %v3412 = vpop.permute.xlu0 %3411
    %v3415 = vsel %vm1650, %v3332, 0
    %3417 = vmatprep.subr.mxu0 0.0
    %3418 = vmatpush1.msra.mxu0 %v3412
    %3419 = vmatprep.subr.mxu0 0.0
    %3420 = vmatpush1.msra.mxu0 0.0
    %3421 = vmatprep.subr.mxu0 0.0
    %3422 = vmatpush1.msra.mxu0 0.0
    %3423 = vmatprep.subr.mxu0 0.0
    %3424 = vmatpush1.msra.mxu0 0.0
    %3425 = vmatprep.subr.mxu0 0.0
    %3426 = vmatpush1.msra.mxu0 0.0
    %3427 = vmatprep.subr.mxu0 0.0
    %3428 = vmatpush1.msra.mxu0 0.0
    %3429 = vmatprep.subr.mxu0 0.0
    %3430 = vmatpush1.msra.mxu0 0.0
    %3431 = vmatprep.subr.mxu0 0.0
    %3432 = vmatpush1.msra.mxu0 0.0
    %3433 = vmatprep.subr.mxu0 0.0
    %3434 = vmatpush1.msra.mxu0 0.0
    %3435 = vmatprep.subr.mxu0 0.0
    %3436 = vmatpush1.msra.mxu0 0.0
    %3437 = vmatprep.subr.mxu0 0.0
    %3438 = vmatpush1.msra.mxu0 0.0
    %3439 = vmatprep.subr.mxu0 0.0
    %3440 = vmatpush1.msra.mxu0 0.0
    %3441 = vmatprep.subr.mxu0 0.0
    %3442 = vmatpush1.msra.mxu0 0.0
    %3443 = vmatprep.subr.mxu0 0.0
    %3444 = vmatpush1.msra.mxu0 0.0
    %3445 = vmatprep.subr.mxu0 0.0
    %3446 = vmatpush1.msra.mxu0 0.0
    %3447 = vmatprep.subr.mxu0 0.0
    %3448 = vmatpush1.msra.mxu0 0.0
    %3449 = vmatprep.subr.mxu0 0.0
    %3450 = vmatpush1.msra.mxu0 0.0
    %3451 = vmatprep.subr.mxu0 0.0
    %3452 = vmatpush1.msra.mxu0 0.0
    %3453 = vmatprep.subr.mxu0 0.0
    %3454 = vmatpush1.msra.mxu0 0.0
    %3455 = vmatprep.subr.mxu0 0.0
    %3456 = vmatpush1.msra.mxu0 0.0
    %3457 = vmatprep.subr.mxu0 0.0
    %3458 = vmatpush1.msra.mxu0 0.0
    %3459 = vmatprep.subr.mxu0 0.0
    %3460 = vmatpush1.msra.mxu0 0.0
    %3461 = vmatprep.subr.mxu0 0.0
    %3462 = vmatpush1.msra.mxu0 0.0
    %3463 = vmatprep.subr.mxu0 0.0
    %3464 = vmatpush1.msra.mxu0 0.0
    %3465 = vmatprep.subr.mxu0 0.0
    %3466 = vmatpush1.msra.mxu0 0.0
    %3467 = vmatprep.subr.mxu0 0.0
    %3468 = vmatpush1.msra.mxu0 0.0
    %3469 = vmatprep.subr.mxu0 0.0
    %3470 = vmatpush1.msra.mxu0 0.0
    %3471 = vmatprep.subr.mxu0 0.0
    %3472 = vmatpush1.msra.mxu0 0.0
    %3473 = vmatprep.subr.mxu0 0.0
    %3474 = vmatpush1.msra.mxu0 0.0
    %3475 = vmatprep.subr.mxu0 0.0
    %3476 = vmatpush1.msra.mxu0 0.0
    %3477 = vmatprep.subr.mxu0 0.0
    %3478 = vmatpush1.msra.mxu0 0.0
    %3479 = vmatprep.subr.mxu0 0.0
    %3480 = vmatpush1.msra.mxu0 0.0
    %3481 = vmatprep.mubr.f32.mxu0 0.0
    %3482 = vmatmul.mubr.f32.gmra.mrb[0].mxu0 %v3415
    %v3483 = vpop.f32.mrb[0].mxu0
    %v3484 = vadd.f32 0.0, %v3483
    %v3485 = vpop.f32.mrb[0].mxu0
    %3486 = vdwg.mxu0
    %3489 = vrot.lane.b32.xlu0 %v2079, 64
    %v3490 = vpop.permute.xlu0 %3489
    %3491 = vrot.lane.b32.xlu0 %v2156, 64
    %v3492 = vpop.permute.xlu0 %3491
    %3497 = vrot.lane.b32.xlu0 %v2743, 64
    %v3498 = vpop.permute.xlu0 %3497
    %3499 = vrot.lane.b32.xlu0 %v2820, 64
    %v3500 = vpop.permute.xlu0 %3499
    %3505 = vrot.lane.b32.xlu0 %v3407, 64
    %v3506 = vpop.permute.xlu0 %3505
    %3507 = vrot.lane.b32.xlu0 %v3484, 64
    %v3508 = vpop.permute.xlu0 %3507
    %v3511 = vsel %vm1491, %v1745, %v3490
    %v3512 = vsel %vm1491, %v1818, %v3492
    %v3513 = vsel %vm1491, %v2409, %v3498
    %v3514 = vsel %vm1491, %v2482, %v3500
    %v3515 = vsel %vm1491, %v3073, %v3506
    %v3516 = vsel %vm1491, %v3146, %v3508
    %v3517 = vld [vmem:[#allocation12] sm:$0xff]
    %v3518 = vld [vmem:[#allocation12 + $0x8] sm:$0xff]
    %v3519 = vld [vmem:[#allocation12 + $0x10] sm:$0xff]
    %v3520 = vld [vmem:[#allocation12 + $0x18] sm:$0xff]
    %v3521 = vld [vmem:[#allocation12 + $0x20] sm:$0xff]
    %v3522 = vld [vmem:[#allocation12 + $0x28] sm:$0xff]
    %v3523 = vld [vmem:[#allocation12 + $0x30] sm:$0xff]
    %v3524 = vld [vmem:[#allocation12 + $0x38] sm:$0xff]
    %v3525 = vld [vmem:[#allocation12 + $0x40] sm:$0xff]
    %v3526 = vld [vmem:[#allocation12 + $0x48] sm:$0xff]
    %v3527 = vld [vmem:[#allocation12 + $0x50] sm:$0xff]
    %v3528 = vld [vmem:[#allocation12 + $0x58] sm:$0xff]
    %v3529 = vld [vmem:[#allocation12 + $0x60] sm:$0xff]
    %v3530 = vld [vmem:[#allocation12 + $0x68] sm:$0xff]
    %v3531 = vld [vmem:[#allocation12 + $0x70] sm:$0xff]
    %v3532 = vld [vmem:[#allocation12 + $0x78] sm:$0xff]
    %v3533 = vld [vmem:[#allocation12 + $0x80] sm:$0xff]
    %v3534 = vld [vmem:[#allocation12 + $0x88] sm:$0xff]
    %v3535 = vld [vmem:[#allocation12 + $0x90] sm:$0xff]
    %v3536 = vld [vmem:[#allocation12 + $0x98] sm:$0xff]
    %v3537 = vld [vmem:[#allocation12 + $0xa0] sm:$0xff]
    %v3538 = vld [vmem:[#allocation12 + $0xa8] sm:$0xff]
    %v3539 = vld [vmem:[#allocation12 + $0xb0] sm:$0xff]
    %v3540 = vld [vmem:[#allocation12 + $0xb8] sm:$0xff]
    %v3541 = vld [vmem:[#allocation12 + $0xc0] sm:$0xff]
    %v3542 = vld [vmem:[#allocation12 + $0xc8] sm:$0xff]
    %v3543 = vld [vmem:[#allocation12 + $0xd0] sm:$0xff]
    %v3544 = vld [vmem:[#allocation12 + $0xd8] sm:$0xff]
    %v3545 = vld [vmem:[#allocation12 + $0xe0] sm:$0xff]
    %v3546 = vld [vmem:[#allocation12 + $0xe8] sm:$0xff]
    %v3547 = vld [vmem:[#allocation12 + $0xf0] sm:$0xff]
    %v3548 = vld [vmem:[#allocation12 + $0xf8] sm:$0xff]
    %v3549 = vld [vmem:[#allocation12 + $0x100] sm:$0xff]
    %v3550 = vld [vmem:[#allocation12 + $0x108] sm:$0xff]
    %v3551 = vld [vmem:[#allocation12 + $0x110] sm:$0xff]
    %v3552 = vld [vmem:[#allocation12 + $0x118] sm:$0xff]
    %v3553 = vld [vmem:[#allocation12 + $0x120] sm:$0xff]
    %v3554 = vld [vmem:[#allocation12 + $0x128] sm:$0xff]
    %v3555 = vld [vmem:[#allocation12 + $0x130] sm:$0xff]
    %v3556 = vld [vmem:[#allocation12 + $0x138] sm:$0xff]
    %v3557 = vld [vmem:[#allocation12 + $0x140] sm:$0xff]
    %v3558 = vld [vmem:[#allocation12 + $0x148] sm:$0xff]
    %v3559 = vld [vmem:[#allocation12 + $0x150] sm:$0xff]
    %v3560 = vld [vmem:[#allocation12 + $0x158] sm:$0xff]
    %v3561 = vld [vmem:[#allocation12 + $0x160] sm:$0xff]
    %v3562 = vld [vmem:[#allocation12 + $0x168] sm:$0xff]
    %v3563 = vld [vmem:[#allocation12 + $0x170] sm:$0xff]
    %v3564 = vld [vmem:[#allocation12 + $0x178] sm:$0xff]
    %v3565 = vld [vmem:[#allocation12 + $0x180] sm:$0xff]
    %v3566 = vld [vmem:[#allocation12 + $0x188] sm:$0xff]
    %v3567 = vld [vmem:[#allocation12 + $0x190] sm:$0xff]
    %v3568 = vld [vmem:[#allocation12 + $0x198] sm:$0xff]
    %v3569 = vld [vmem:[#allocation12 + $0x1a0] sm:$0xff]
    %v3570 = vld [vmem:[#allocation12 + $0x1a8] sm:$0xff]
    %v3571 = vld [vmem:[#allocation12 + $0x1b0] sm:$0xff]
    %v3572 = vld [vmem:[#allocation12 + $0x1b8] sm:$0xff]
    %v3573 = vld [vmem:[#allocation12 + $0x1c0] sm:$0xff]
    %v3574 = vld [vmem:[#allocation12 + $0x1c8] sm:$0xff]
    %v3575 = vld [vmem:[#allocation12 + $0x1d0] sm:$0xff]
    %v3576 = vld [vmem:[#allocation12 + $0x1d8] sm:$0xff]
    %v3577 = vld [vmem:[#allocation12 + $0x1e0] sm:$0xff]
    %v3578 = vld [vmem:[#allocation12 + $0x1e8] sm:$0xff]
    %v3579 = vld [vmem:[#allocation12 + $0x1f0] sm:$0xff]
    %v3580 = vld [vmem:[#allocation12 + $0x1f8] sm:$0xff]
    %v3581 = vld [vmem:[#allocation12 + $0x200] sm:$0xff]
    %v3582 = vld [vmem:[#allocation12 + $0x208] sm:$0xff]
    %v3583 = vld [vmem:[#allocation12 + $0x210] sm:$0xff]
    %v3584 = vld [vmem:[#allocation12 + $0x218] sm:$0xff]
    %v3585 = vld [vmem:[#allocation12 + $0x220] sm:$0xff]
    %v3586 = vld [vmem:[#allocation12 + $0x228] sm:$0xff]
    %v3587 = vld [vmem:[#allocation12 + $0x230] sm:$0xff]
    %v3588 = vld [vmem:[#allocation12 + $0x238] sm:$0xff]
    %v3589 = vld [vmem:[#allocation12 + $0x240] sm:$0xff]
    %v3590 = vld [vmem:[#allocation12 + $0x248] sm:$0xff]
    %v3591 = vld [vmem:[#allocation12 + $0x250] sm:$0xff]
    %v3592 = vld [vmem:[#allocation12 + $0x258] sm:$0xff]
    %v3593 = vld [vmem:[#allocation12 + $0x260] sm:$0xff]
    %v3594 = vld [vmem:[#allocation12 + $0x268] sm:$0xff]
    %v3595 = vld [vmem:[#allocation12 + $0x270] sm:$0xff]
    %v3596 = vld [vmem:[#allocation12 + $0x278] sm:$0xff]
    %v3597 = vld [vmem:[#allocation12 + $0x280] sm:$0xff]
    %v3598 = vld [vmem:[#allocation12 + $0x288] sm:$0xff]
    %v3599 = vld [vmem:[#allocation12 + $0x290] sm:$0xff]
    %v3600 = vld [vmem:[#allocation12 + $0x298] sm:$0xff]
    %v3601 = vld [vmem:[#allocation12 + $0x2a0] sm:$0xff]
    %v3602 = vld [vmem:[#allocation12 + $0x2a8] sm:$0xff]
    %v3603 = vld [vmem:[#allocation12 + $0x2b0] sm:$0xff]
    %v3604 = vld [vmem:[#allocation12 + $0x2b8] sm:$0xff]
    %v3605 = vld [vmem:[#allocation12 + $0x2c0] sm:$0xff]
    %v3606 = vld [vmem:[#allocation12 + $0x2c8] sm:$0xff]
    %v3607 = vld [vmem:[#allocation12 + $0x2d0] sm:$0xff]
    %v3608 = vld [vmem:[#allocation12 + $0x2d8] sm:$0xff]
    %v3609 = vld [vmem:[#allocation12 + $0x2e0] sm:$0xff]
    %v3610 = vld [vmem:[#allocation12 + $0x2e8] sm:$0xff]
    %v3611 = vld [vmem:[#allocation12 + $0x2f0] sm:$0xff]
    %v3612 = vld [vmem:[#allocation12 + $0x2f8] sm:$0xff]
    %v3613 = vld [vmem:[#allocation12 + $0x300] sm:$0xff]
    %v3614 = vld [vmem:[#allocation12 + $0x308] sm:$0xff]
    %v3615 = vld [vmem:[#allocation12 + $0x310] sm:$0xff]
    %v3616 = vld [vmem:[#allocation12 + $0x318] sm:$0xff]
    %v3617 = vld [vmem:[#allocation12 + $0x320] sm:$0xff]
    %v3618 = vld [vmem:[#allocation12 + $0x328] sm:$0xff]
    %v3619 = vld [vmem:[#allocation12 + $0x330] sm:$0xff]
    %v3620 = vld [vmem:[#allocation12 + $0x338] sm:$0xff]
    %v3621 = vld [vmem:[#allocation12 + $0x340] sm:$0xff]
    %v3622 = vld [vmem:[#allocation12 + $0x348] sm:$0xff]
    %v3623 = vld [vmem:[#allocation12 + $0x350] sm:$0xff]
    %v3624 = vld [vmem:[#allocation12 + $0x358] sm:$0xff]
    %v3625 = vld [vmem:[#allocation12 + $0x360] sm:$0xff]
    %v3626 = vld [vmem:[#allocation12 + $0x368] sm:$0xff]
    %v3627 = vld [vmem:[#allocation12 + $0x370] sm:$0xff]
    %v3628 = vld [vmem:[#allocation12 + $0x378] sm:$0xff]
    %v3629 = vld [vmem:[#allocation12 + $0x380] sm:$0xff]
    %v3630 = vld [vmem:[#allocation12 + $0x388] sm:$0xff]
    %v3631 = vld [vmem:[#allocation12 + $0x390] sm:$0xff]
    %v3632 = vld [vmem:[#allocation12 + $0x398] sm:$0xff]
    %v3633 = vld [vmem:[#allocation12 + $0x3a0] sm:$0xff]
    %v3634 = vld [vmem:[#allocation12 + $0x3a8] sm:$0xff]
    %v3635 = vld [vmem:[#allocation12 + $0x3b0] sm:$0xff]
    %v3636 = vld [vmem:[#allocation12 + $0x3b8] sm:$0xff]
    %v3637 = vld [vmem:[#allocation12 + $0x3c0] sm:$0xff]
    %v3638 = vld [vmem:[#allocation12 + $0x3c8] sm:$0xff]
    %v3639 = vld [vmem:[#allocation12 + $0x3d0] sm:$0xff]
    %v3640 = vld [vmem:[#allocation12 + $0x3d8] sm:$0xff]
    %v3641 = vld [vmem:[#allocation12 + $0x3e0] sm:$0xff]
    %v3642 = vld [vmem:[#allocation12 + $0x3e8] sm:$0xff]
    %v3643 = vld [vmem:[#allocation12 + $0x3f0] sm:$0xff]
    %v3644 = vld [vmem:[#allocation12 + $0x3f8] sm:$0xff]
    %v3645 = vld [vmem:[#allocation12 + $0x400] sm:$0xff]
    %v3646 = vld [vmem:[#allocation12 + $0x408] sm:$0xff]
    %v3647 = vld [vmem:[#allocation12 + $0x410] sm:$0xff]
    %v3648 = vld [vmem:[#allocation12 + $0x418] sm:$0xff]
    %v3649 = vld [vmem:[#allocation12 + $0x420] sm:$0xff]
    %v3650 = vld [vmem:[#allocation12 + $0x428] sm:$0xff]
    %v3651 = vld [vmem:[#allocation12 + $0x430] sm:$0xff]
    %v3652 = vld [vmem:[#allocation12 + $0x438] sm:$0xff]
    %v3653 = vld [vmem:[#allocation12 + $0x440] sm:$0xff]
    %v3654 = vld [vmem:[#allocation12 + $0x448] sm:$0xff]
    %v3655 = vld [vmem:[#allocation12 + $0x450] sm:$0xff]
    %v3656 = vld [vmem:[#allocation12 + $0x458] sm:$0xff]
    %v3657 = vld [vmem:[#allocation12 + $0x460] sm:$0xff]
    %v3658 = vld [vmem:[#allocation12 + $0x468] sm:$0xff]
    %v3659 = vld [vmem:[#allocation12 + $0x470] sm:$0xff]
    %v3660 = vld [vmem:[#allocation12 + $0x478] sm:$0xff]
    %v3661 = vld [vmem:[#allocation13] sm:$0x7]
    %v3663 = vlaneseq
    %v3664 = vshrl.u32 %v3663, 7
    %v3665 = vsub.s32 0, %v3664
    %v3666 = vrot.slane %v3661, %v3665
    %v3667 = vlaneseq
    %v3668 = vshrl.u32 %v3667, 7
    %v3669 = vsub.s32 1, %v3668
    %v3670 = vrot.slane %v3661, %v3669
    %v3671 = vlaneseq
    %v3672 = vshrl.u32 %v3671, 7
    %v3673 = vsub.s32 2, %v3672
    %v3674 = vrot.slane %v3661, %v3673
    %3678 = vmatprep.subr.mxu0 %v3518
    %3679 = vmatpush1.msra.mxu0 %v3517
    %3680 = vmatprep.subr.mxu0 %v3521
    %3681 = vmatpush1.msra.mxu0 %v3520
    %3682 = vmatprep.subr.mxu0 %v3524
    %3683 = vmatpush1.msra.mxu0 %v3523
    %3684 = vmatprep.subr.mxu0 %v3527
    %3685 = vmatpush1.msra.mxu0 %v3526
    %3686 = vmatprep.subr.mxu0 %v3530
    %3687 = vmatpush1.msra.mxu0 %v3529
    %3688 = vmatprep.subr.mxu0 %v3533
    %3689 = vmatpush1.msra.mxu0 %v3532
    %3690 = vmatprep.subr.mxu0 %v3536
    %3691 = vmatpush1.msra.mxu0 %v3535
    %3692 = vmatprep.subr.mxu0 %v3539
    %3693 = vmatpush1.msra.mxu0 %v3538
    %3694 = vmatprep.subr.mxu0 %v3542
    %3695 = vmatpush1.msra.mxu0 %v3541
    %3696 = vmatprep.subr.mxu0 %v3545
    %3697 = vmatpush1.msra.mxu0 %v3544
    %3698 = vmatprep.subr.mxu0 %v3548
    %3699 = vmatpush1.msra.mxu0 %v3547
    %3700 = vmatprep.subr.mxu0 %v3551
    %3701 = vmatpush1.msra.mxu0 %v3550
    %3702 = vmatprep.subr.mxu0 %v3554
    %3703 = vmatpush1.msra.mxu0 %v3553
    %3704 = vmatprep.subr.mxu0 %v3557
    %3705 = vmatpush1.msra.mxu0 %v3556
    %3706 = vmatprep.subr.mxu0 %v3560
    %3707 = vmatpush1.msra.mxu0 %v3559
    %3708 = vmatprep.subr.mxu0 %v3563
    %3709 = vmatpush1.msra.mxu0 %v3562
    %3710 = vmatprep.subr.mxu0 %v3566
    %3711 = vmatpush1.msra.mxu0 %v3565
    %3712 = vmatprep.subr.mxu0 %v3569
    %3713 = vmatpush1.msra.mxu0 %v3568
    %3714 = vmatprep.subr.mxu0 %v3572
    %3715 = vmatpush1.msra.mxu0 %v3571
    %3716 = vmatprep.subr.mxu0 %v3575
    %3717 = vmatpush1.msra.mxu0 %v3574
    %3718 = vmatprep.subr.mxu0 %v3578
    %3719 = vmatpush1.msra.mxu0 %v3577
    %3720 = vmatprep.subr.mxu0 %v3581
    %3721 = vmatpush1.msra.mxu0 %v3580
    %3722 = vmatprep.subr.mxu0 %v3584
    %3723 = vmatpush1.msra.mxu0 %v3583
    %3724 = vmatprep.subr.mxu0 %v3587
    %3725 = vmatpush1.msra.mxu0 %v3586
    %3726 = vmatprep.subr.mxu0 %v3590
    %3727 = vmatpush1.msra.mxu0 %v3589
    %3728 = vmatprep.subr.mxu0 %v3593
    %3729 = vmatpush1.msra.mxu0 %v3592
    %3730 = vmatprep.subr.mxu0 %v3596
    %3731 = vmatpush1.msra.mxu0 %v3595
    %3732 = vmatprep.subr.mxu0 %v3599
    %3733 = vmatpush1.msra.mxu0 %v3598
    %3734 = vmatprep.subr.mxu0 %v3602
    %3735 = vmatpush1.msra.mxu0 %v3601
    %3736 = vmatprep.subr.mxu0 %v3605
    %3737 = vmatpush1.msra.mxu0 %v3604
    %3738 = vmatprep.subr.mxu0 %v3608
    %3739 = vmatpush1.msra.mxu0 %v3607
    %3740 = vmatprep.subr.mxu0 %v3611
    %3741 = vmatpush1.msra.mxu0 %v3610
    %3742 = vmatprep.mubr.f32.mxu0 %v3513
    %3743 = vmatmul.mubr.f32.gmra.mrb[0].mxu0 %v3511
    %v3744 = vpop.f32.mrb[0].mxu0
    %v3745 = vadd.f32 %v3666, %v3744
    %v3746 = vpop.f32.mrb[0].mxu0
    %v3747 = vadd.f32 %v3670, %v3746
    %3748 = vmatprep.mubr.f32.mxu0 %v3514
    %3749 = vmatmul.mubr.f32.gmra.mrb[0].mxu0 %v3512
    %v3750 = vpop.f32.mrb[0].mxu0
    %v3751 = vadd.f32 %v3666, %v3750
    %v3752 = vpop.f32.mrb[0].mxu0
    %v3753 = vadd.f32 %v3670, %v3752
    %3754 = vdwg.mxu0
    %3755 = vmatprep.subr.mxu0 %v3614
    %3756 = vmatpush1.msra.mxu0 %v3613
    %3757 = vmatprep.subr.mxu0 %v3617
    %3758 = vmatpush1.msra.mxu0 %v3616
    %3759 = vmatprep.subr.mxu0 %v3620
    %3760 = vmatpush1.msra.mxu0 %v3619
    %3761 = vmatprep.subr.mxu0 %v3623
    %3762 = vmatpush1.msra.mxu0 %v3622
    %3763 = vmatprep.subr.mxu0 %v3626
    %3764 = vmatpush1.msra.mxu0 %v3625
    %3765 = vmatprep.subr.mxu0 %v3629
    %3766 = vmatpush1.msra.mxu0 %v3628
    %3767 = vmatprep.subr.mxu0 %v3632
    %3768 = vmatpush1.msra.mxu0 %v3631
    %3769 = vmatprep.subr.mxu0 %v3635
    %3770 = vmatpush1.msra.mxu0 %v3634
    %3771 = vmatprep.subr.mxu0 %v3638
    %3772 = vmatpush1.msra.mxu0 %v3637
    %3773 = vmatprep.subr.mxu0 %v3641
    %3774 = vmatpush1.msra.mxu0 %v3640
    %3775 = vmatprep.subr.mxu0 %v3644
    %3776 = vmatpush1.msra.mxu0 %v3643
    %3777 = vmatprep.subr.mxu0 %v3647
    %3778 = vmatpush1.msra.mxu0 %v3646
    %3779 = vmatprep.subr.mxu0 %v3650
    %3780 = vmatpush1.msra.mxu0 %v3649
    %3781 = vmatprep.subr.mxu0 %v3653
    %3782 = vmatpush1.msra.mxu0 %v3652
    %3783 = vmatprep.subr.mxu0 %v3656
    %3784 = vmatpush1.msra.mxu0 %v3655
    %3785 = vmatprep.subr.mxu0 %v3659
    %3786 = vmatpush1.msra.mxu0 %v3658
    %3787 = vmatprep.subr.mxu0 0.0
    %3788 = vmatpush1.msra.mxu0 0.0
    %3789 = vmatprep.subr.mxu0 0.0
    %3790 = vmatpush1.msra.mxu0 0.0
    %3791 = vmatprep.subr.mxu0 0.0
    %3792 = vmatpush1.msra.mxu0 0.0
    %3793 = vmatprep.subr.mxu0 0.0
    %3794 = vmatpush1.msra.mxu0 0.0
    %3795 = vmatprep.subr.mxu0 0.0
    %3796 = vmatpush1.msra.mxu0 0.0
    %3797 = vmatprep.subr.mxu0 0.0
    %3798 = vmatpush1.msra.mxu0 0.0
    %3799 = vmatprep.subr.mxu0 0.0
    %3800 = vmatpush1.msra.mxu0 0.0
    %3801 = vmatprep.subr.mxu0 0.0
    %3802 = vmatpush1.msra.mxu0 0.0
    %3803 = vmatprep.subr.mxu0 0.0
    %3804 = vmatpush1.msra.mxu0 0.0
    %3805 = vmatprep.subr.mxu0 0.0
    %3806 = vmatpush1.msra.mxu0 0.0
    %3807 = vmatprep.subr.mxu0 0.0
    %3808 = vmatpush1.msra.mxu0 0.0
    %3809 = vmatprep.subr.mxu0 0.0
    %3810 = vmatpush1.msra.mxu0 0.0
    %3811 = vmatprep.subr.mxu0 0.0
    %3812 = vmatpush1.msra.mxu0 0.0
    %3813 = vmatprep.subr.mxu0 0.0
    %3814 = vmatpush1.msra.mxu0 0.0
    %3815 = vmatprep.subr.mxu0 0.0
    %3816 = vmatpush1.msra.mxu0 0.0
    %3817 = vmatprep.subr.mxu0 0.0
    %3818 = vmatpush1.msra.mxu0 0.0
    %3819 = vmatprep.mubr.f32.mxu0 0.0
    %3820 = vmatmul.mubr.f32.gmra.mrb[0].mxu0 %v3515
    %v3821 = vpop.f32.mrb[0].mxu0
    %v3822 = vadd.f32 %v3745, %v3821
    %v3823 = vpop.f32.mrb[0].mxu0
    %v3824 = vadd.f32 %v3747, %v3823
    %3825 = vmatprep.mubr.f32.mxu0 0.0
    %3826 = vmatmul.mubr.f32.gmra.mrb[0].mxu0 %v3516
    %v3827 = vpop.f32.mrb[0].mxu0
    %v3828 = vadd.f32 %v3751, %v3827
    %v3829 = vpop.f32.mrb[0].mxu0
    %v3830 = vadd.f32 %v3753, %v3829
    %3831 = vdwg.mxu0
    %3832 = vmatprep.subr.mxu0 0.0
    %3833 = vmatpush1.msra.mxu0 %v3519
    %3834 = vmatprep.subr.mxu0 0.0
    %3835 = vmatpush1.msra.mxu0 %v3522
    %3836 = vmatprep.subr.mxu0 0.0
    %3837 = vmatpush1.msra.mxu0 %v3525
    %3838 = vmatprep.subr.mxu0 0.0
    %3839 = vmatpush1.msra.mxu0 %v3528
    %3840 = vmatprep.subr.mxu0 0.0
    %3841 = vmatpush1.msra.mxu0 %v3531
    %3842 = vmatprep.subr.mxu0 0.0
    %3843 = vmatpush1.msra.mxu0 %v3534
    %3844 = vmatprep.subr.mxu0 0.0
    %3845 = vmatpush1.msra.mxu0 %v3537
    %3846 = vmatprep.subr.mxu0 0.0
    %3847 = vmatpush1.msra.mxu0 %v3540
    %3848 = vmatprep.subr.mxu0 0.0
    %3849 = vmatpush1.msra.mxu0 %v3543
    %3850 = vmatprep.subr.mxu0 0.0
    %3851 = vmatpush1.msra.mxu0 %v3546
    %3852 = vmatprep.subr.mxu0 0.0
    %3853 = vmatpush1.msra.mxu0 %v3549
    %3854 = vmatprep.subr.mxu0 0.0
    %3855 = vmatpush1.msra.mxu0 %v3552
    %3856 = vmatprep.subr.mxu0 0.0
    %3857 = vmatpush1.msra.mxu0 %v3555
    %3858 = vmatprep.subr.mxu0 0.0
    %3859 = vmatpush1.msra.mxu0 %v3558
    %3860 = vmatprep.subr.mxu0 0.0
    %3861 = vmatpush1.msra.mxu0 %v3561
    %3862 = vmatprep.subr.mxu0 0.0
    %3863 = vmatpush1.msra.mxu0 %v3564
    %3864 = vmatprep.subr.mxu0 0.0
    %3865 = vmatpush1.msra.mxu0 %v3567
    %3866 = vmatprep.subr.mxu0 0.0
    %3867 = vmatpush1.msra.mxu0 %v3570
    %3868 = vmatprep.subr.mxu0 0.0
    %3869 = vmatpush1.msra.mxu0 %v3573
    %3870 = vmatprep.subr.mxu0 0.0
    %3871 = vmatpush1.msra.mxu0 %v3576
    %3872 = vmatprep.subr.mxu0 0.0
    %3873 = vmatpush1.msra.mxu0 %v3579
    %3874 = vmatprep.subr.mxu0 0.0
    %3875 = vmatpush1.msra.mxu0 %v3582
    %3876 = vmatprep.subr.mxu0 0.0
    %3877 = vmatpush1.msra.mxu0 %v3585
    %3878 = vmatprep.subr.mxu0 0.0
    %3879 = vmatpush1.msra.mxu0 %v3588
    %3880 = vmatprep.subr.mxu0 0.0
    %3881 = vmatpush1.msra.mxu0 %v3591
    %3882 = vmatprep.subr.mxu0 0.0
    %3883 = vmatpush1.msra.mxu0 %v3594
    %3884 = vmatprep.subr.mxu0 0.0
    %3885 = vmatpush1.msra.mxu0 %v3597
    %3886 = vmatprep.subr.mxu0 0.0
    %3887 = vmatpush1.msra.mxu0 %v3600
    %3888 = vmatprep.subr.mxu0 0.0
    %3889 = vmatpush1.msra.mxu0 %v3603
    %3890 = vmatprep.subr.mxu0 0.0
    %3891 = vmatpush1.msra.mxu0 %v3606
    %3892 = vmatprep.subr.mxu0 0.0
    %3893 = vmatpush1.msra.mxu0 %v3609
    %3894 = vmatprep.subr.mxu0 0.0
    %3895 = vmatpush1.msra.mxu0 %v3612
    %3896 = vmatprep.mubr.f32.mxu0 %v3513
    %3897 = vmatmul.mubr.f32.gmra.mrb[0].mxu0 %v3511
    %v3898 = vpop.f32.mrb[0].mxu0
    %v3899 = vadd.f32 %v3674, %v3898
    %v3900 = vpop.f32.mrb[0].mxu0
    %3901 = vmatprep.mubr.f32.mxu0 %v3514
    %3902 = vmatmul.mubr.f32.gmra.mrb[0].mxu0 %v3512
    %v3903 = vpop.f32.mrb[0].mxu0
    %v3904 = vadd.f32 %v3674, %v3903
    %v3905 = vpop.f32.mrb[0].mxu0
    %3906 = vdwg.mxu0
    %3907 = vmatprep.subr.mxu0 0.0
    %3908 = vmatpush1.msra.mxu0 %v3615
    %3909 = vmatprep.subr.mxu0 0.0
    %3910 = vmatpush1.msra.mxu0 %v3618
    %3911 = vmatprep.subr.mxu0 0.0
    %3912 = vmatpush1.msra.mxu0 %v3621
    %3913 = vmatprep.subr.mxu0 0.0
    %3914 = vmatpush1.msra.mxu0 %v3624
    %3915 = vmatprep.subr.mxu0 0.0
    %3916 = vmatpush1.msra.mxu0 %v3627
    %3917 = vmatprep.subr.mxu0 0.0
    %3918 = vmatpush1.msra.mxu0 %v3630
    %3919 = vmatprep.subr.mxu0 0.0
    %3920 = vmatpush1.msra.mxu0 %v3633
    %3921 = vmatprep.subr.mxu0 0.0
    %3922 = vmatpush1.msra.mxu0 %v3636
    %3923 = vmatprep.subr.mxu0 0.0
    %3924 = vmatpush1.msra.mxu0 %v3639
    %3925 = vmatprep.subr.mxu0 0.0
    %3926 = vmatpush1.msra.mxu0 %v3642
    %3927 = vmatprep.subr.mxu0 0.0
    %3928 = vmatpush1.msra.mxu0 %v3645
    %3929 = vmatprep.subr.mxu0 0.0
    %3930 = vmatpush1.msra.mxu0 %v3648
    %3931 = vmatprep.subr.mxu0 0.0
    %3932 = vmatpush1.msra.mxu0 %v3651
    %3933 = vmatprep.subr.mxu0 0.0
    %3934 = vmatpush1.msra.mxu0 %v3654
    %3935 = vmatprep.subr.mxu0 0.0
    %3936 = vmatpush1.msra.mxu0 %v3657
    %3937 = vmatprep.subr.mxu0 0.0
    %3938 = vmatpush1.msra.mxu0 %v3660
    %3939 = vmatprep.subr.mxu0 0.0
    %3940 = vmatpush1.msra.mxu0 0.0
    %3941 = vmatprep.subr.mxu0 0.0
    %3942 = vmatpush1.msra.mxu0 0.0
    %3943 = vmatprep.subr.mxu0 0.0
    %3944 = vmatpush1.msra.mxu0 0.0
    %3945 = vmatprep.subr.mxu0 0.0
    %3946 = vmatpush1.msra.mxu0 0.0
    %3947 = vmatprep.subr.mxu0 0.0
    %3948 = vmatpush1.msra.mxu0 0.0
    %3949 = vmatprep.subr.mxu0 0.0
    %3950 = vmatpush1.msra.mxu0 0.0
    %3951 = vmatprep.subr.mxu0 0.0
    %3952 = vmatpush1.msra.mxu0 0.0
    %3953 = vmatprep.subr.mxu0 0.0
    %3954 = vmatpush1.msra.mxu0 0.0
    %3955 = vmatprep.subr.mxu0 0.0
    %3956 = vmatpush1.msra.mxu0 0.0
    %3957 = vmatprep.subr.mxu0 0.0
    %3958 = vmatpush1.msra.mxu0 0.0
    %3959 = vmatprep.subr.mxu0 0.0
    %3960 = vmatpush1.msra.mxu0 0.0
    %3961 = vmatprep.subr.mxu0 0.0
    %3962 = vmatpush1.msra.mxu0 0.0
    %3963 = vmatprep.subr.mxu0 0.0
    %3964 = vmatpush1.msra.mxu0 0.0
    %3965 = vmatprep.subr.mxu0 0.0
    %3966 = vmatpush1.msra.mxu0 0.0
    %3967 = vmatprep.subr.mxu0 0.0
    %3968 = vmatpush1.msra.mxu0 0.0
    %3969 = vmatprep.subr.mxu0 0.0
    %3970 = vmatpush1.msra.mxu0 0.0
    %3971 = vmatprep.mubr.f32.mxu0 0.0
    %3972 = vmatmul.mubr.f32.gmra.mrb[0].mxu0 %v3515
    %v3973 = vpop.f32.mrb[0].mxu0
    %v3974 = vadd.f32 %v3899, %v3973
    %v3975 = vpop.f32.mrb[0].mxu0
    %3976 = vmatprep.mubr.f32.mxu0 0.0
    %3977 = vmatmul.mubr.f32.gmra.mrb[0].mxu0 %v3516
    %v3978 = vpop.f32.mrb[0].mxu0
    %v3979 = vadd.f32 %v3904, %v3978
    %v3980 = vpop.f32.mrb[0].mxu0
    %3981 = vdwg.mxu0
    %v3982 = vadd.f32 %v193, %v3822
    %v3983 = vadd.f32 %v194, %v3824
    %v3984 = vadd.f32 %v195, %v3974
    %v3985 = vadd.f32 %v196, %v3828
    %v3986 = vadd.f32 %v197, %v3830
    %v3987 = vadd.f32 %v198, %v3979
    %v3988 = vld [vmem:[#allocation15] sm:$0x7]
    %v3989 = vld [vmem:[#allocation16] sm:$0x7]
    %v3990 = vadd.f32 %v3982, %v3983
    %v3991 = vadd.f32 %v3990, %v3984
    %3992 = vadd.xlane.f32.xlu0 %v3991
    %v3993 = vpop.xlane.xlu0 %3992
    %v3994 = vadd.f32 %v3985, %v3986
    %v3995 = vadd.f32 %v3994, %v3987
    %3996 = vadd.xlane.f32.xlu0 %v3995
    %v3997 = vpop.xlane.xlu0 %3996
    %v3998 = vmul.f32 %v3993, %v209
    %v3999 = vmul.f32 %v3997, %v209
    %v4000 = vsub.f32 %v3982, %v3998
    %v4001 = vsub.f32 %v3983, %v3998
    %v4002 = vsub.f32 %v3984, %v3998
    %v4003 = vsub.f32 %v3985, %v3999
    %v4004 = vsub.f32 %v3986, %v3999
    %v4005 = vsub.f32 %v3987, %v3999
    %v4006 = vmul.f32 %v4000, %v4000
    %v4007 = vmul.f32 %v4001, %v4001
    %v4008 = vmul.f32 %v4002, %v4002
    %v4009 = vmul.f32 %v4003, %v4003
    %v4010 = vmul.f32 %v4004, %v4004
    %v4011 = vmul.f32 %v4005, %v4005
    %v4012 = vadd.f32 %v4006, %v4007
    %v4013 = vadd.f32 %v4012, %v4008
    %4014 = vadd.xlane.f32.xlu0 %v4013
    %v4015 = vpop.xlane.xlu0 %4014
    %v4016 = vadd.f32 %v4009, %v4010
    %v4017 = vadd.f32 %v4016, %v4011
    %4018 = vadd.xlane.f32.xlu0 %v4017
    %v4019 = vpop.xlane.xlu0 %4018
    %v4020 = vmul.f32 %v4015, %v209
    %v4021 = vmul.f32 %v4019, %v209
    %v4022 = vadd.f32 %v4020, 1e-05
    %v4023 = vadd.f32 %v4021, 1e-05
    %v4024 = vrsqrt.pop %v4022
    %v4025 = vrsqrt.pop %v4023
    %v4026 = vmul.f32 %v4000, %v4024
    %v4027 = vmul.f32 %v4001, %v4024
    %v4028 = vmul.f32 %v4002, %v4024
    %v4029 = vmul.f32 %v4003, %v4025
    %v4030 = vmul.f32 %v4004, %v4025
    %v4031 = vmul.f32 %v4005, %v4025
    %v4033 = vlaneseq
    %v4034 = vshrl.u32 %v4033, 7
    %v4035 = vsub.s32 0, %v4034
    %v4036 = vrot.slane %v3988, %v4035
    %v4037 = vlaneseq
    %v4038 = vshrl.u32 %v4037, 7
    %v4039 = vsub.s32 1, %v4038
    %v4040 = vrot.slane %v3988, %v4039
    %v4041 = vlaneseq
    %v4042 = vshrl.u32 %v4041, 7
    %v4043 = vsub.s32 2, %v4042
    %v4044 = vrot.slane %v3988, %v4043
    %v4048 = vmul.f32 %v4026, %v4036
    %v4049 = vmul.f32 %v4027, %v4040
    %v4050 = vmul.f32 %v4028, %v4044
    %v4051 = vmul.f32 %v4029, %v4036
    %v4052 = vmul.f32 %v4030, %v4040
    %v4053 = vmul.f32 %v4031, %v4044
    %v4055 = vlaneseq
    %v4056 = vshrl.u32 %v4055, 7
    %v4057 = vsub.s32 0, %v4056
    %v4058 = vrot.slane %v3989, %v4057
    %v4059 = vlaneseq
    %v4060 = vshrl.u32 %v4059, 7
    %v4061 = vsub.s32 1, %v4060
    %v4062 = vrot.slane %v3989, %v4061
    %v4063 = vlaneseq
    %v4064 = vshrl.u32 %v4063, 7
    %v4065 = vsub.s32 2, %v4064
    %v4066 = vrot.slane %v3989, %v4065
    %v4070 = vadd.f32 %v4048, %v4058
    %v4071 = vadd.f32 %v4049, %v4062
    %v4072 = vadd.f32 %v4050, %v4066
    %v4073 = vadd.f32 %v4051, %v4058
    %v4074 = vadd.f32 %v4052, %v4062
    %v4075 = vadd.f32 %v4053, %v4066
    %v4076 = vld [vmem:[#allocation18] sm:$0xff]
    %v4077 = vld [vmem:[#allocation18 + $0x8] sm:$0xff]
    %v4078 = vld [vmem:[#allocation18 + $0x10] sm:$0xff]
    %v4079 = vld [vmem:[#allocation18 + $0x18] sm:$0xff]
    %v4080 = vld [vmem:[#allocation18 + $0x20] sm:$0xff]
    %v4081 = vld [vmem:[#allocation18 + $0x28] sm:$0xff]
    %v4082 = vld [vmem:[#allocation18 + $0x30] sm:$0xff]
    %v4083 = vld [vmem:[#allocation18 + $0x38] sm:$0xff]
    %v4084 = vld [vmem:[#allocation18 + $0x40] sm:$0xff]
    %v4085 = vld [vmem:[#allocation18 + $0x48] sm:$0xff]
    %v4086 = vld [vmem:[#allocation18 + $0x50] sm:$0xff]
    %v4087 = vld [vmem:[#allocation18 + $0x58] sm:$0xff]
    %v4088 = vld [vmem:[#allocation18 + $0x60] sm:$0xff]
    %v4089 = vld [vmem:[#allocation18 + $0x68] sm:$0xff]
    %v4090 = vld [vmem:[#allocation18 + $0x70] sm:$0xff]
    %v4091 = vld [vmem:[#allocation18 + $0x78] sm:$0xff]
    %v4092 = vld [vmem:[#allocation18 + $0x80] sm:$0xff]
    %v4093 = vld [vmem:[#allocation18 + $0x88] sm:$0xff]
    %v4094 = vld [vmem:[#allocation18 + $0x90] sm:$0xff]
    %v4095 = vld [vmem:[#allocation18 + $0x98] sm:$0xff]
    %v4096 = vld [vmem:[#allocation18 + $0xa0] sm:$0xff]
    %v4097 = vld [vmem:[#allocation18 + $0xa8] sm:$0xff]
    %v4098 = vld [vmem:[#allocation18 + $0xb0] sm:$0xff]
    %v4099 = vld [vmem:[#allocation18 + $0xb8] sm:$0xff]
    %v4100 = vld [vmem:[#allocation18 + $0xc0] sm:$0xff]
    %v4101 = vld [vmem:[#allocation18 + $0xc8] sm:$0xff]
    %v4102 = vld [vmem:[#allocation18 + $0xd0] sm:$0xff]
    %v4103 = vld [vmem:[#allocation18 + $0xd8] sm:$0xff]
    %v4104 = vld [vmem:[#allocation18 + $0xe0] sm:$0xff]
    %v4105 = vld [vmem:[#allocation18 + $0xe8] sm:$0xff]
    %v4106 = vld [vmem:[#allocation18 + $0xf0] sm:$0xff]
    %v4107 = vld [vmem:[#allocation18 + $0xf8] sm:$0xff]
    %v4108 = vld [vmem:[#allocation18 + $0x100] sm:$0xff]
    %v4109 = vld [vmem:[#allocation18 + $0x108] sm:$0xff]
    %v4110 = vld [vmem:[#allocation18 + $0x110] sm:$0xff]
    %v4111 = vld [vmem:[#allocation18 + $0x118] sm:$0xff]
    %v4112 = vld [vmem:[#allocation18 + $0x120] sm:$0xff]
    %v4113 = vld [vmem:[#allocation18 + $0x128] sm:$0xff]
    %v4114 = vld [vmem:[#allocation18 + $0x130] sm:$0xff]
    %v4115 = vld [vmem:[#allocation18 + $0x138] sm:$0xff]
    %v4116 = vld [vmem:[#allocation18 + $0x140] sm:$0xff]
    %v4117 = vld [vmem:[#allocation18 + $0x148] sm:$0xff]
    %v4118 = vld [vmem:[#allocation18 + $0x150] sm:$0xff]
    %v4119 = vld [vmem:[#allocation18 + $0x158] sm:$0xff]
    %v4120 = vld [vmem:[#allocation18 + $0x160] sm:$0xff]
    %v4121 = vld [vmem:[#allocation18 + $0x168] sm:$0xff]
    %v4122 = vld [vmem:[#allocation18 + $0x170] sm:$0xff]
    %v4123 = vld [vmem:[#allocation18 + $0x178] sm:$0xff]
    %v4124 = vld [vmem:[#allocation18 + $0x180] sm:$0xff]
    %v4125 = vld [vmem:[#allocation18 + $0x188] sm:$0xff]
    %v4126 = vld [vmem:[#allocation18 + $0x190] sm:$0xff]
    %v4127 = vld [vmem:[#allocation18 + $0x198] sm:$0xff]
    %v4128 = vld [vmem:[#allocation18 + $0x1a0] sm:$0xff]
    %v4129 = vld [vmem:[#allocation18 + $0x1a8] sm:$0xff]
    %v4130 = vld [vmem:[#allocation18 + $0x1b0] sm:$0xff]
    %v4131 = vld [vmem:[#allocation18 + $0x1b8] sm:$0xff]
    %v4132 = vld [vmem:[#allocation18 + $0x1c0] sm:$0xff]
    %v4133 = vld [vmem:[#allocation18 + $0x1c8] sm:$0xff]
    %v4134 = vld [vmem:[#allocation18 + $0x1d0] sm:$0xff]
    %v4135 = vld [vmem:[#allocation18 + $0x1d8] sm:$0xff]
    %v4136 = vld [vmem:[#allocation18 + $0x1e0] sm:$0xff]
    %v4137 = vld [vmem:[#allocation18 + $0x1e8] sm:$0xff]
    %v4138 = vld [vmem:[#allocation18 + $0x1f0] sm:$0xff]
    %v4139 = vld [vmem:[#allocation18 + $0x1f8] sm:$0xff]
    %v4140 = vld [vmem:[#allocation18 + $0x200] sm:$0xff]
    %v4141 = vld [vmem:[#allocation18 + $0x208] sm:$0xff]
    %v4142 = vld [vmem:[#allocation18 + $0x210] sm:$0xff]
    %v4143 = vld [vmem:[#allocation18 + $0x218] sm:$0xff]
    %v4144 = vld [vmem:[#allocation18 + $0x220] sm:$0xff]
    %v4145 = vld [vmem:[#allocation18 + $0x228] sm:$0xff]
    %v4146 = vld [vmem:[#allocation18 + $0x230] sm:$0xff]
    %v4147 = vld [vmem:[#allocation18 + $0x238] sm:$0xff]
    %v4148 = vld [vmem:[#allocation18 + $0x240] sm:$0xff]
    %v4149 = vld [vmem:[#allocation18 + $0x248] sm:$0xff]
    %v4150 = vld [vmem:[#allocation18 + $0x250] sm:$0xff]
    %v4151 = vld [vmem:[#allocation18 + $0x258] sm:$0xff]
    %v4152 = vld [vmem:[#allocation18 + $0x260] sm:$0xff]
    %v4153 = vld [vmem:[#allocation18 + $0x268] sm:$0xff]
    %v4154 = vld [vmem:[#allocation18 + $0x270] sm:$0xff]
    %v4155 = vld [vmem:[#allocation18 + $0x278] sm:$0xff]
    %v4156 = vld [vmem:[#allocation18 + $0x280] sm:$0xff]
    %v4157 = vld [vmem:[#allocation18 + $0x288] sm:$0xff]
    %v4158 = vld [vmem:[#allocation18 + $0x290] sm:$0xff]
    %v4159 = vld [vmem:[#allocation18 + $0x298] sm:$0xff]
    %v4160 = vld [vmem:[#allocation18 + $0x2a0] sm:$0xff]
    %v4161 = vld [vmem:[#allocation18 + $0x2a8] sm:$0xff]
    %v4162 = vld [vmem:[#allocation18 + $0x2b0] sm:$0xff]
    %v4163 = vld [vmem:[#allocation18 + $0x2b8] sm:$0xff]
    %v4164 = vld [vmem:[#allocation18 + $0x2c0] sm:$0xff]
    %v4165 = vld [vmem:[#allocation18 + $0x2c8] sm:$0xff]
    %v4166 = vld [vmem:[#allocation18 + $0x2d0] sm:$0xff]
    %v4167 = vld [vmem:[#allocation18 + $0x2d8] sm:$0xff]
    %v4168 = vld [vmem:[#allocation18 + $0x2e0] sm:$0xff]
    %v4169 = vld [vmem:[#allocation18 + $0x2e8] sm:$0xff]
    %v4170 = vld [vmem:[#allocation18 + $0x2f0] sm:$0xff]
    %v4171 = vld [vmem:[#allocation18 + $0x2f8] sm:$0xff]
    %v4172 = vld [vmem:[#allocation18 + $0x300] sm:$0xff]
    %v4173 = vld [vmem:[#allocation18 + $0x308] sm:$0xff]
    %v4174 = vld [vmem:[#allocation18 + $0x310] sm:$0xff]
    %v4175 = vld [vmem:[#allocation18 + $0x318] sm:$0xff]
    %v4176 = vld [vmem:[#allocation18 + $0x320] sm:$0xff]
    %v4177 = vld [vmem:[#allocation18 + $0x328] sm:$0xff]
    %v4178 = vld [vmem:[#allocation18 + $0x330] sm:$0xff]
    %v4179 = vld [vmem:[#allocation18 + $0x338] sm:$0xff]
    %v4180 = vld [vmem:[#allocation18 + $0x340] sm:$0xff]
    %v4181 = vld [vmem:[#allocation18 + $0x348] sm:$0xff]
    %v4182 = vld [vmem:[#allocation18 + $0x350] sm:$0xff]
    %v4183 = vld [vmem:[#allocation18 + $0x358] sm:$0xff]
    %v4184 = vld [vmem:[#allocation18 + $0x360] sm:$0xff]
    %v4185 = vld [vmem:[#allocation18 + $0x368] sm:$0xff]
    %v4186 = vld [vmem:[#allocation18 + $0x370] sm:$0xff]
    %v4187 = vld [vmem:[#allocation18 + $0x378] sm:$0xff]
    %v4188 = vld [vmem:[#allocation18 + $0x380] sm:$0xff]
    %v4189 = vld [vmem:[#allocation18 + $0x388] sm:$0xff]
    %v4190 = vld [vmem:[#allocation18 + $0x390] sm:$0xff]
    %v4191 = vld [vmem:[#allocation18 + $0x398] sm:$0xff]
    %v4192 = vld [vmem:[#allocation18 + $0x3a0] sm:$0xff]
    %v4193 = vld [vmem:[#allocation18 + $0x3a8] sm:$0xff]
    %v4194 = vld [vmem:[#allocation18 + $0x3b0] sm:$0xff]
    %v4195 = vld [vmem:[#allocation18 + $0x3b8] sm:$0xff]
    %v4196 = vld [vmem:[#allocation18 + $0x3c0] sm:$0xff]
    %v4197 = vld [vmem:[#allocation18 + $0x3c8] sm:$0xff]
    %v4198 = vld [vmem:[#allocation18 + $0x3d0] sm:$0xff]
    %v4199 = vld [vmem:[#allocation18 + $0x3d8] sm:$0xff]
    %v4200 = vld [vmem:[#allocation18 + $0x3e0] sm:$0xff]
    %v4201 = vld [vmem:[#allocation18 + $0x3e8] sm:$0xff]
    %v4202 = vld [vmem:[#allocation18 + $0x3f0] sm:$0xff]
    %v4203 = vld [vmem:[#allocation18 + $0x3f8] sm:$0xff]
    %v4204 = vld [vmem:[#allocation18 + $0x400] sm:$0xff]
    %v4205 = vld [vmem:[#allocation18 + $0x408] sm:$0xff]
    %v4206 = vld [vmem:[#allocation18 + $0x410] sm:$0xff]
    %v4207 = vld [vmem:[#allocation18 + $0x418] sm:$0xff]
    %v4208 = vld [vmem:[#allocation18 + $0x420] sm:$0xff]
    %v4209 = vld [vmem:[#allocation18 + $0x428] sm:$0xff]
    %v4210 = vld [vmem:[#allocation18 + $0x430] sm:$0xff]
    %v4211 = vld [vmem:[#allocation18 + $0x438] sm:$0xff]
    %v4212 = vld [vmem:[#allocation18 + $0x440] sm:$0xff]
    %v4213 = vld [vmem:[#allocation18 + $0x448] sm:$0xff]
    %v4214 = vld [vmem:[#allocation18 + $0x450] sm:$0xff]
    %v4215 = vld [vmem:[#allocation18 + $0x458] sm:$0xff]
    %v4216 = vld [vmem:[#allocation18 + $0x460] sm:$0xff]
    %v4217 = vld [vmem:[#allocation18 + $0x468] sm:$0xff]
    %v4218 = vld [vmem:[#allocation18 + $0x470] sm:$0xff]
    %v4219 = vld [vmem:[#allocation18 + $0x478] sm:$0xff]
    %v4220 = vld [vmem:[#allocation18 + $0x480] sm:$0xff]
    %v4221 = vld [vmem:[#allocation18 + $0x488] sm:$0xff]
    %v4222 = vld [vmem:[#allocation18 + $0x490] sm:$0xff]
    %v4223 = vld [vmem:[#allocation18 + $0x498] sm:$0xff]
    %v4224 = vld [vmem:[#allocation18 + $0x4a0] sm:$0xff]
    %v4225 = vld [vmem:[#allocation18 + $0x4a8] sm:$0xff]
    %v4226 = vld [vmem:[#allocation18 + $0x4b0] sm:$0xff]
    %v4227 = vld [vmem:[#allocation18 + $0x4b8] sm:$0xff]
    %v4228 = vld [vmem:[#allocation18 + $0x4c0] sm:$0xff]
    %v4229 = vld [vmem:[#allocation18 + $0x4c8] sm:$0xff]
    %v4230 = vld [vmem:[#allocation18 + $0x4d0] sm:$0xff]
    %v4231 = vld [vmem:[#allocation18 + $0x4d8] sm:$0xff]
    %v4232 = vld [vmem:[#allocation18 + $0x4e0] sm:$0xff]
    %v4233 = vld [vmem:[#allocation18 + $0x4e8] sm:$0xff]
    %v4234 = vld [vmem:[#allocation18 + $0x4f0] sm:$0xff]
    %v4235 = vld [vmem:[#allocation18 + $0x4f8] sm:$0xff]
    %v4236 = vld [vmem:[#allocation18 + $0x500] sm:$0xff]
    %v4237 = vld [vmem:[#allocation18 + $0x508] sm:$0xff]
    %v4238 = vld [vmem:[#allocation18 + $0x510] sm:$0xff]
    %v4239 = vld [vmem:[#allocation18 + $0x518] sm:$0xff]
    %v4240 = vld [vmem:[#allocation18 + $0x520] sm:$0xff]
    %v4241 = vld [vmem:[#allocation18 + $0x528] sm:$0xff]
    %v4242 = vld [vmem:[#allocation18 + $0x530] sm:$0xff]
    %v4243 = vld [vmem:[#allocation18 + $0x538] sm:$0xff]
    %v4244 = vld [vmem:[#allocation18 + $0x540] sm:$0xff]
    %v4245 = vld [vmem:[#allocation18 + $0x548] sm:$0xff]
    %v4246 = vld [vmem:[#allocation18 + $0x550] sm:$0xff]
    %v4247 = vld [vmem:[#allocation18 + $0x558] sm:$0xff]
    %v4248 = vld [vmem:[#allocation18 + $0x560] sm:$0xff]
    %v4249 = vld [vmem:[#allocation18 + $0x568] sm:$0xff]
    %v4250 = vld [vmem:[#allocation18 + $0x570] sm:$0xff]
    %v4251 = vld [vmem:[#allocation18 + $0x578] sm:$0xff]
    %v4252 = vld [vmem:[#allocation18 + $0x580] sm:$0xff]
    %v4253 = vld [vmem:[#allocation18 + $0x588] sm:$0xff]
    %v4254 = vld [vmem:[#allocation18 + $0x590] sm:$0xff]
    %v4255 = vld [vmem:[#allocation18 + $0x598] sm:$0xff]
    %v4256 = vld [vmem:[#allocation18 + $0x5a0] sm:$0xff]
    %v4257 = vld [vmem:[#allocation18 + $0x5a8] sm:$0xff]
    %v4258 = vld [vmem:[#allocation18 + $0x5b0] sm:$0xff]
    %v4259 = vld [vmem:[#allocation18 + $0x5b8] sm:$0xff]
    %v4260 = vld [vmem:[#allocation18 + $0x5c0] sm:$0xff]
    %v4261 = vld [vmem:[#allocation18 + $0x5c8] sm:$0xff]
    %v4262 = vld [vmem:[#allocation18 + $0x5d0] sm:$0xff]
    %v4263 = vld [vmem:[#allocation18 + $0x5d8] sm:$0xff]
    %v4264 = vld [vmem:[#allocation18 + $0x5e0] sm:$0xff]
    %v4265 = vld [vmem:[#allocation18 + $0x5e8] sm:$0xff]
    %v4266 = vld [vmem:[#allocation18 + $0x5f0] sm:$0xff]
    %v4267 = vld [vmem:[#allocation18 + $0x5f8] sm:$0xff]
    %v4268 = vld [vmem:[#allocation18 + $0x600] sm:$0xff]
    %v4269 = vld [vmem:[#allocation18 + $0x608] sm:$0xff]
    %v4270 = vld [vmem:[#allocation18 + $0x610] sm:$0xff]
    %v4271 = vld [vmem:[#allocation18 + $0x618] sm:$0xff]
    %v4272 = vld [vmem:[#allocation18 + $0x620] sm:$0xff]
    %v4273 = vld [vmem:[#allocation18 + $0x628] sm:$0xff]
    %v4274 = vld [vmem:[#allocation18 + $0x630] sm:$0xff]
    %v4275 = vld [vmem:[#allocation18 + $0x638] sm:$0xff]
    %v4276 = vld [vmem:[#allocation18 + $0x640] sm:$0xff]
    %v4277 = vld [vmem:[#allocation18 + $0x648] sm:$0xff]
    %v4278 = vld [vmem:[#allocation18 + $0x650] sm:$0xff]
    %v4279 = vld [vmem:[#allocation18 + $0x658] sm:$0xff]
    %v4280 = vld [vmem:[#allocation18 + $0x660] sm:$0xff]
    %v4281 = vld [vmem:[#allocation18 + $0x668] sm:$0xff]
    %v4282 = vld [vmem:[#allocation18 + $0x670] sm:$0xff]
    %v4283 = vld [vmem:[#allocation18 + $0x678] sm:$0xff]
    %v4284 = vld [vmem:[#allocation18 + $0x680] sm:$0xff]
    %v4285 = vld [vmem:[#allocation18 + $0x688] sm:$0xff]
    %v4286 = vld [vmem:[#allocation18 + $0x690] sm:$0xff]
    %v4287 = vld [vmem:[#allocation18 + $0x698] sm:$0xff]
    %v4288 = vld [vmem:[#allocation18 + $0x6a0] sm:$0xff]
    %v4289 = vld [vmem:[#allocation18 + $0x6a8] sm:$0xff]
    %v4290 = vld [vmem:[#allocation18 + $0x6b0] sm:$0xff]
    %v4291 = vld [vmem:[#allocation18 + $0x6b8] sm:$0xff]
    %v4292 = vld [vmem:[#allocation18 + $0x6c0] sm:$0xff]
    %v4293 = vld [vmem:[#allocation18 + $0x6c8] sm:$0xff]
    %v4294 = vld [vmem:[#allocation18 + $0x6d0] sm:$0xff]
    %v4295 = vld [vmem:[#allocation18 + $0x6d8] sm:$0xff]
    %v4296 = vld [vmem:[#allocation18 + $0x6e0] sm:$0xff]
    %v4297 = vld [vmem:[#allocation18 + $0x6e8] sm:$0xff]
    %v4298 = vld [vmem:[#allocation18 + $0x6f0] sm:$0xff]
    %v4299 = vld [vmem:[#allocation18 + $0x6f8] sm:$0xff]
    %v4300 = vld [vmem:[#allocation18 + $0x700] sm:$0xff]
    %v4301 = vld [vmem:[#allocation18 + $0x708] sm:$0xff]
    %v4302 = vld [vmem:[#allocation18 + $0x710] sm:$0xff]
    %v4303 = vld [vmem:[#allocation18 + $0x718] sm:$0xff]
    %v4304 = vld [vmem:[#allocation18 + $0x720] sm:$0xff]
    %v4305 = vld [vmem:[#allocation18 + $0x728] sm:$0xff]
    %v4306 = vld [vmem:[#allocation18 + $0x730] sm:$0xff]
    %v4307 = vld [vmem:[#allocation18 + $0x738] sm:$0xff]
    %v4308 = vld [vmem:[#allocation18 + $0x740] sm:$0xff]
    %v4309 = vld [vmem:[#allocation18 + $0x748] sm:$0xff]
    %v4310 = vld [vmem:[#allocation18 + $0x750] sm:$0xff]
    %v4311 = vld [vmem:[#allocation18 + $0x758] sm:$0xff]
    %v4312 = vld [vmem:[#allocation18 + $0x760] sm:$0xff]
    %v4313 = vld [vmem:[#allocation18 + $0x768] sm:$0xff]
    %v4314 = vld [vmem:[#allocation18 + $0x770] sm:$0xff]
    %v4315 = vld [vmem:[#allocation18 + $0x778] sm:$0xff]
    %v4316 = vld [vmem:[#allocation18 + $0x780] sm:$0xff]
    %v4317 = vld [vmem:[#allocation18 + $0x788] sm:$0xff]
    %v4318 = vld [vmem:[#allocation18 + $0x790] sm:$0xff]
    %v4319 = vld [vmem:[#allocation18 + $0x798] sm:$0xff]
    %v4320 = vld [vmem:[#allocation18 + $0x7a0] sm:$0xff]
    %v4321 = vld [vmem:[#allocation18 + $0x7a8] sm:$0xff]
    %v4322 = vld [vmem:[#allocation18 + $0x7b0] sm:$0xff]
    %v4323 = vld [vmem:[#allocation18 + $0x7b8] sm:$0xff]
    %v4324 = vld [vmem:[#allocation18 + $0x7c0] sm:$0xff]
    %v4325 = vld [vmem:[#allocation18 + $0x7c8] sm:$0xff]
    %v4326 = vld [vmem:[#allocation18 + $0x7d0] sm:$0xff]
    %v4327 = vld [vmem:[#allocation18 + $0x7d8] sm:$0xff]
    %v4328 = vld [vmem:[#allocation18 + $0x7e0] sm:$0xff]
    %v4329 = vld [vmem:[#allocation18 + $0x7e8] sm:$0xff]
    %v4330 = vld [vmem:[#allocation18 + $0x7f0] sm:$0xff]
    %v4331 = vld [vmem:[#allocation18 + $0x7f8] sm:$0xff]
    %v4332 = vld [vmem:[#allocation18 + $0x800] sm:$0xff]
    %v4333 = vld [vmem:[#allocation18 + $0x808] sm:$0xff]
    %v4334 = vld [vmem:[#allocation18 + $0x810] sm:$0xff]
    %v4335 = vld [vmem:[#allocation18 + $0x818] sm:$0xff]
    %v4336 = vld [vmem:[#allocation18 + $0x820] sm:$0xff]
    %v4337 = vld [vmem:[#allocation18 + $0x828] sm:$0xff]
    %v4338 = vld [vmem:[#allocation18 + $0x830] sm:$0xff]
    %v4339 = vld [vmem:[#allocation18 + $0x838] sm:$0xff]
    %v4340 = vld [vmem:[#allocation18 + $0x840] sm:$0xff]
    %v4341 = vld [vmem:[#allocation18 + $0x848] sm:$0xff]
    %v4342 = vld [vmem:[#allocation18 + $0x850] sm:$0xff]
    %v4343 = vld [vmem:[#allocation18 + $0x858] sm:$0xff]
    %v4344 = vld [vmem:[#allocation18 + $0x860] sm:$0xff]
    %v4345 = vld [vmem:[#allocation18 + $0x868] sm:$0xff]
    %v4346 = vld [vmem:[#allocation18 + $0x870] sm:$0xff]
    %v4347 = vld [vmem:[#allocation18 + $0x878] sm:$0xff]
    %v4348 = vld [vmem:[#allocation18 + $0x880] sm:$0xff]
    %v4349 = vld [vmem:[#allocation18 + $0x888] sm:$0xff]
    %v4350 = vld [vmem:[#allocation18 + $0x890] sm:$0xff]
    %v4351 = vld [vmem:[#allocation18 + $0x898] sm:$0xff]
    %v4352 = vld [vmem:[#allocation18 + $0x8a0] sm:$0xff]
    %v4353 = vld [vmem:[#allocation18 + $0x8a8] sm:$0xff]
    %v4354 = vld [vmem:[#allocation18 + $0x8b0] sm:$0xff]
    %v4355 = vld [vmem:[#allocation18 + $0x8b8] sm:$0xff]
    %v4356 = vld [vmem:[#allocation18 + $0x8c0] sm:$0xff]
    %v4357 = vld [vmem:[#allocation18 + $0x8c8] sm:$0xff]
    %v4358 = vld [vmem:[#allocation18 + $0x8d0] sm:$0xff]
    %v4359 = vld [vmem:[#allocation18 + $0x8d8] sm:$0xff]
    %v4360 = vld [vmem:[#allocation18 + $0x8e0] sm:$0xff]
    %v4361 = vld [vmem:[#allocation18 + $0x8e8] sm:$0xff]
    %v4362 = vld [vmem:[#allocation18 + $0x8f0] sm:$0xff]
    %v4363 = vld [vmem:[#allocation18 + $0x8f8] sm:$0xff]
    %v4364 = vld [vmem:[#allocation18 + $0x900] sm:$0xff]
    %v4365 = vld [vmem:[#allocation18 + $0x908] sm:$0xff]
    %v4366 = vld [vmem:[#allocation18 + $0x910] sm:$0xff]
    %v4367 = vld [vmem:[#allocation18 + $0x918] sm:$0xff]
    %v4368 = vld [vmem:[#allocation18 + $0x920] sm:$0xff]
    %v4369 = vld [vmem:[#allocation18 + $0x928] sm:$0xff]
    %v4370 = vld [vmem:[#allocation18 + $0x930] sm:$0xff]
    %v4371 = vld [vmem:[#allocation18 + $0x938] sm:$0xff]
    %v4372 = vld [vmem:[#allocation18 + $0x940] sm:$0xff]
    %v4373 = vld [vmem:[#allocation18 + $0x948] sm:$0xff]
    %v4374 = vld [vmem:[#allocation18 + $0x950] sm:$0xff]
    %v4375 = vld [vmem:[#allocation18 + $0x958] sm:$0xff]
    %v4376 = vld [vmem:[#allocation18 + $0x960] sm:$0xff]
    %v4377 = vld [vmem:[#allocation18 + $0x968] sm:$0xff]
    %v4378 = vld [vmem:[#allocation18 + $0x970] sm:$0xff]
    %v4379 = vld [vmem:[#allocation18 + $0x978] sm:$0xff]
    %v4380 = vld [vmem:[#allocation18 + $0x980] sm:$0xff]
    %v4381 = vld [vmem:[#allocation18 + $0x988] sm:$0xff]
    %v4382 = vld [vmem:[#allocation18 + $0x990] sm:$0xff]
    %v4383 = vld [vmem:[#allocation18 + $0x998] sm:$0xff]
    %v4384 = vld [vmem:[#allocation18 + $0x9a0] sm:$0xff]
    %v4385 = vld [vmem:[#allocation18 + $0x9a8] sm:$0xff]
    %v4386 = vld [vmem:[#allocation18 + $0x9b0] sm:$0xff]
    %v4387 = vld [vmem:[#allocation18 + $0x9b8] sm:$0xff]
    %v4388 = vld [vmem:[#allocation18 + $0x9c0] sm:$0xff]
    %v4389 = vld [vmem:[#allocation18 + $0x9c8] sm:$0xff]
    %v4390 = vld [vmem:[#allocation18 + $0x9d0] sm:$0xff]
    %v4391 = vld [vmem:[#allocation18 + $0x9d8] sm:$0xff]
    %v4392 = vld [vmem:[#allocation18 + $0x9e0] sm:$0xff]
    %v4393 = vld [vmem:[#allocation18 + $0x9e8] sm:$0xff]
    %v4394 = vld [vmem:[#allocation18 + $0x9f0] sm:$0xff]
    %v4395 = vld [vmem:[#allocation18 + $0x9f8] sm:$0xff]
    %v4396 = vld [vmem:[#allocation18 + $0xa00] sm:$0xff]
    %v4397 = vld [vmem:[#allocation18 + $0xa08] sm:$0xff]
    %v4398 = vld [vmem:[#allocation18 + $0xa10] sm:$0xff]
    %v4399 = vld [vmem:[#allocation18 + $0xa18] sm:$0xff]
    %v4400 = vld [vmem:[#allocation18 + $0xa20] sm:$0xff]
    %v4401 = vld [vmem:[#allocation18 + $0xa28] sm:$0xff]
    %v4402 = vld [vmem:[#allocation18 + $0xa30] sm:$0xff]
    %v4403 = vld [vmem:[#allocation18 + $0xa38] sm:$0xff]
    %v4404 = vld [vmem:[#allocation18 + $0xa40] sm:$0xff]
    %v4405 = vld [vmem:[#allocation18 + $0xa48] sm:$0xff]
    %v4406 = vld [vmem:[#allocation18 + $0xa50] sm:$0xff]
    %v4407 = vld [vmem:[#allocation18 + $0xa58] sm:$0xff]
    %v4408 = vld [vmem:[#allocation18 + $0xa60] sm:$0xff]
    %v4409 = vld [vmem:[#allocation18 + $0xa68] sm:$0xff]
    %v4410 = vld [vmem:[#allocation18 + $0xa70] sm:$0xff]
    %v4411 = vld [vmem:[#allocation18 + $0xa78] sm:$0xff]
    %v4412 = vld [vmem:[#allocation18 + $0xa80] sm:$0xff]
    %v4413 = vld [vmem:[#allocation18 + $0xa88] sm:$0xff]
    %v4414 = vld [vmem:[#allocation18 + $0xa90] sm:$0xff]
    %v4415 = vld [vmem:[#allocation18 + $0xa98] sm:$0xff]
    %v4416 = vld [vmem:[#allocation18 + $0xaa0] sm:$0xff]
    %v4417 = vld [vmem:[#allocation18 + $0xaa8] sm:$0xff]
    %v4418 = vld [vmem:[#allocation18 + $0xab0] sm:$0xff]
    %v4419 = vld [vmem:[#allocation18 + $0xab8] sm:$0xff]
    %v4420 = vld [vmem:[#allocation18 + $0xac0] sm:$0xff]
    %v4421 = vld [vmem:[#allocation18 + $0xac8] sm:$0xff]
    %v4422 = vld [vmem:[#allocation18 + $0xad0] sm:$0xff]
    %v4423 = vld [vmem:[#allocation18 + $0xad8] sm:$0xff]
    %v4424 = vld [vmem:[#allocation18 + $0xae0] sm:$0xff]
    %v4425 = vld [vmem:[#allocation18 + $0xae8] sm:$0xff]
    %v4426 = vld [vmem:[#allocation18 + $0xaf0] sm:$0xff]
    %v4427 = vld [vmem:[#allocation18 + $0xaf8] sm:$0xff]
    %v4428 = vld [vmem:[#allocation18 + $0xb00] sm:$0xff]
    %v4429 = vld [vmem:[#allocation18 + $0xb08] sm:$0xff]
    %v4430 = vld [vmem:[#allocation18 + $0xb10] sm:$0xff]
    %v4431 = vld [vmem:[#allocation18 + $0xb18] sm:$0xff]
    %v4432 = vld [vmem:[#allocation18 + $0xb20] sm:$0xff]
    %v4433 = vld [vmem:[#allocation18 + $0xb28] sm:$0xff]
    %v4434 = vld [vmem:[#allocation18 + $0xb30] sm:$0xff]
    %v4435 = vld [vmem:[#allocation18 + $0xb38] sm:$0xff]
    %v4436 = vld [vmem:[#allocation18 + $0xb40] sm:$0xff]
    %v4437 = vld [vmem:[#allocation18 + $0xb48] sm:$0xff]
    %v4438 = vld [vmem:[#allocation18 + $0xb50] sm:$0xff]
    %v4439 = vld [vmem:[#allocation18 + $0xb58] sm:$0xff]
    %v4440 = vld [vmem:[#allocation18 + $0xb60] sm:$0xff]
    %v4441 = vld [vmem:[#allocation18 + $0xb68] sm:$0xff]
    %v4442 = vld [vmem:[#allocation18 + $0xb70] sm:$0xff]
    %v4443 = vld [vmem:[#allocation18 + $0xb78] sm:$0xff]
    %v4444 = vld [vmem:[#allocation18 + $0xb80] sm:$0xff]
    %v4445 = vld [vmem:[#allocation18 + $0xb88] sm:$0xff]
    %v4446 = vld [vmem:[#allocation18 + $0xb90] sm:$0xff]
    %v4447 = vld [vmem:[#allocation18 + $0xb98] sm:$0xff]
    %v4448 = vld [vmem:[#allocation18 + $0xba0] sm:$0xff]
    %v4449 = vld [vmem:[#allocation18 + $0xba8] sm:$0xff]
    %v4450 = vld [vmem:[#allocation18 + $0xbb0] sm:$0xff]
    %v4451 = vld [vmem:[#allocation18 + $0xbb8] sm:$0xff]
    %v4452 = vld [vmem:[#allocation18 + $0xbc0] sm:$0xff]
    %v4453 = vld [vmem:[#allocation18 + $0xbc8] sm:$0xff]
    %v4454 = vld [vmem:[#allocation18 + $0xbd0] sm:$0xff]
    %v4455 = vld [vmem:[#allocation18 + $0xbd8] sm:$0xff]
    %v4456 = vld [vmem:[#allocation18 + $0xbe0] sm:$0xff]
    %v4457 = vld [vmem:[#allocation18 + $0xbe8] sm:$0xff]
    %v4458 = vld [vmem:[#allocation18 + $0xbf0] sm:$0xff]
    %v4459 = vld [vmem:[#allocation18 + $0xbf8] sm:$0xff]
    %v4460 = vld [vmem:[#allocation18 + $0xc00] sm:$0xff]
    %v4461 = vld [vmem:[#allocation18 + $0xc08] sm:$0xff]
    %v4462 = vld [vmem:[#allocation18 + $0xc10] sm:$0xff]
    %v4463 = vld [vmem:[#allocation18 + $0xc18] sm:$0xff]
    %v4464 = vld [vmem:[#allocation18 + $0xc20] sm:$0xff]
    %v4465 = vld [vmem:[#allocation18 + $0xc28] sm:$0xff]
    %v4466 = vld [vmem:[#allocation18 + $0xc30] sm:$0xff]
    %v4467 = vld [vmem:[#allocation18 + $0xc38] sm:$0xff]
    %v4468 = vld [vmem:[#allocation18 + $0xc40] sm:$0xff]
    %v4469 = vld [vmem:[#allocation18 + $0xc48] sm:$0xff]
    %v4470 = vld [vmem:[#allocation18 + $0xc50] sm:$0xff]
    %v4471 = vld [vmem:[#allocation18 + $0xc58] sm:$0xff]
    %v4472 = vld [vmem:[#allocation18 + $0xc60] sm:$0xff]
    %v4473 = vld [vmem:[#allocation18 + $0xc68] sm:$0xff]
    %v4474 = vld [vmem:[#allocation18 + $0xc70] sm:$0xff]
    %v4475 = vld [vmem:[#allocation18 + $0xc78] sm:$0xff]
    %v4476 = vld [vmem:[#allocation18 + $0xc80] sm:$0xff]
    %v4477 = vld [vmem:[#allocation18 + $0xc88] sm:$0xff]
    %v4478 = vld [vmem:[#allocation18 + $0xc90] sm:$0xff]
    %v4479 = vld [vmem:[#allocation18 + $0xc98] sm:$0xff]
    %v4480 = vld [vmem:[#allocation18 + $0xca0] sm:$0xff]
    %v4481 = vld [vmem:[#allocation18 + $0xca8] sm:$0xff]
    %v4482 = vld [vmem:[#allocation18 + $0xcb0] sm:$0xff]
    %v4483 = vld [vmem:[#allocation18 + $0xcb8] sm:$0xff]
    %v4484 = vld [vmem:[#allocation18 + $0xcc0] sm:$0xff]
    %v4485 = vld [vmem:[#allocation18 + $0xcc8] sm:$0xff]
    %v4486 = vld [vmem:[#allocation18 + $0xcd0] sm:$0xff]
    %v4487 = vld [vmem:[#allocation18 + $0xcd8] sm:$0xff]
    %v4488 = vld [vmem:[#allocation18 + $0xce0] sm:$0xff]
    %v4489 = vld [vmem:[#allocation18 + $0xce8] sm:$0xff]
    %v4490 = vld [vmem:[#allocation18 + $0xcf0] sm:$0xff]
    %v4491 = vld [vmem:[#allocation18 + $0xcf8] sm:$0xff]
    %v4492 = vld [vmem:[#allocation18 + $0xd00] sm:$0xff]
    %v4493 = vld [vmem:[#allocation18 + $0xd08] sm:$0xff]
    %v4494 = vld [vmem:[#allocation18 + $0xd10] sm:$0xff]
    %v4495 = vld [vmem:[#allocation18 + $0xd18] sm:$0xff]
    %v4496 = vld [vmem:[#allocation18 + $0xd20] sm:$0xff]
    %v4497 = vld [vmem:[#allocation18 + $0xd28] sm:$0xff]
    %v4498 = vld [vmem:[#allocation18 + $0xd30] sm:$0xff]
    %v4499 = vld [vmem:[#allocation18 + $0xd38] sm:$0xff]
    %v4500 = vld [vmem:[#allocation18 + $0xd40] sm:$0xff]
    %v4501 = vld [vmem:[#allocation18 + $0xd48] sm:$0xff]
    %v4502 = vld [vmem:[#allocation18 + $0xd50] sm:$0xff]
    %v4503 = vld [vmem:[#allocation18 + $0xd58] sm:$0xff]
    %v4504 = vld [vmem:[#allocation18 + $0xd60] sm:$0xff]
    %v4505 = vld [vmem:[#allocation18 + $0xd68] sm:$0xff]
    %v4506 = vld [vmem:[#allocation18 + $0xd70] sm:$0xff]
    %v4507 = vld [vmem:[#allocation18 + $0xd78] sm:$0xff]
    %v4508 = vld [vmem:[#allocation18 + $0xd80] sm:$0xff]
    %v4509 = vld [vmem:[#allocation18 + $0xd88] sm:$0xff]
    %v4510 = vld [vmem:[#allocation18 + $0xd90] sm:$0xff]
    %v4511 = vld [vmem:[#allocation18 + $0xd98] sm:$0xff]
    %v4512 = vld [vmem:[#allocation18 + $0xda0] sm:$0xff]
    %v4513 = vld [vmem:[#allocation18 + $0xda8] sm:$0xff]
    %v4514 = vld [vmem:[#allocation18 + $0xdb0] sm:$0xff]
    %v4515 = vld [vmem:[#allocation18 + $0xdb8] sm:$0xff]
    %v4516 = vld [vmem:[#allocation18 + $0xdc0] sm:$0xff]
    %v4517 = vld [vmem:[#allocation18 + $0xdc8] sm:$0xff]
    %v4518 = vld [vmem:[#allocation18 + $0xdd0] sm:$0xff]
    %v4519 = vld [vmem:[#allocation18 + $0xdd8] sm:$0xff]
    %v4520 = vld [vmem:[#allocation18 + $0xde0] sm:$0xff]
    %v4521 = vld [vmem:[#allocation18 + $0xde8] sm:$0xff]
    %v4522 = vld [vmem:[#allocation18 + $0xdf0] sm:$0xff]
    %v4523 = vld [vmem:[#allocation18 + $0xdf8] sm:$0xff]
    %v4524 = vld [vmem:[#allocation18 + $0xe00] sm:$0xff]
    %v4525 = vld [vmem:[#allocation18 + $0xe08] sm:$0xff]
    %v4526 = vld [vmem:[#allocation18 + $0xe10] sm:$0xff]
    %v4527 = vld [vmem:[#allocation18 + $0xe18] sm:$0xff]
    %v4528 = vld [vmem:[#allocation18 + $0xe20] sm:$0xff]
    %v4529 = vld [vmem:[#allocation18 + $0xe28] sm:$0xff]
    %v4530 = vld [vmem:[#allocation18 + $0xe30] sm:$0xff]
    %v4531 = vld [vmem:[#allocation18 + $0xe38] sm:$0xff]
    %v4532 = vld [vmem:[#allocation18 + $0xe40] sm:$0xff]
    %v4533 = vld [vmem:[#allocation18 + $0xe48] sm:$0xff]
    %v4534 = vld [vmem:[#allocation18 + $0xe50] sm:$0xff]
    %v4535 = vld [vmem:[#allocation18 + $0xe58] sm:$0xff]
    %v4536 = vld [vmem:[#allocation18 + $0xe60] sm:$0xff]
    %v4537 = vld [vmem:[#allocation18 + $0xe68] sm:$0xff]
    %v4538 = vld [vmem:[#allocation18 + $0xe70] sm:$0xff]
    %v4539 = vld [vmem:[#allocation18 + $0xe78] sm:$0xff]
    %v4540 = vld [vmem:[#allocation18 + $0xe80] sm:$0xff]
    %v4541 = vld [vmem:[#allocation18 + $0xe88] sm:$0xff]
    %v4542 = vld [vmem:[#allocation18 + $0xe90] sm:$0xff]
    %v4543 = vld [vmem:[#allocation18 + $0xe98] sm:$0xff]
    %v4544 = vld [vmem:[#allocation18 + $0xea0] sm:$0xff]
    %v4545 = vld [vmem:[#allocation18 + $0xea8] sm:$0xff]
    %v4546 = vld [vmem:[#allocation18 + $0xeb0] sm:$0xff]
    %v4547 = vld [vmem:[#allocation18 + $0xeb8] sm:$0xff]
    %v4548 = vld [vmem:[#allocation18 + $0xec0] sm:$0xff]
    %v4549 = vld [vmem:[#allocation18 + $0xec8] sm:$0xff]
    %v4550 = vld [vmem:[#allocation18 + $0xed0] sm:$0xff]
    %v4551 = vld [vmem:[#allocation18 + $0xed8] sm:$0xff]
    %v4552 = vld [vmem:[#allocation18 + $0xee0] sm:$0xff]
    %v4553 = vld [vmem:[#allocation18 + $0xee8] sm:$0xff]
    %v4554 = vld [vmem:[#allocation18 + $0xef0] sm:$0xff]
    %v4555 = vld [vmem:[#allocation18 + $0xef8] sm:$0xff]
    %v4556 = vld [vmem:[#allocation18 + $0xf00] sm:$0xff]
    %v4557 = vld [vmem:[#allocation18 + $0xf08] sm:$0xff]
    %v4558 = vld [vmem:[#allocation18 + $0xf10] sm:$0xff]
    %v4559 = vld [vmem:[#allocation18 + $0xf18] sm:$0xff]
    %v4560 = vld [vmem:[#allocation18 + $0xf20] sm:$0xff]
    %v4561 = vld [vmem:[#allocation18 + $0xf28] sm:$0xff]
    %v4562 = vld [vmem:[#allocation18 + $0xf30] sm:$0xff]
    %v4563 = vld [vmem:[#allocation18 + $0xf38] sm:$0xff]
    %v4564 = vld [vmem:[#allocation18 + $0xf40] sm:$0xff]
    %v4565 = vld [vmem:[#allocation18 + $0xf48] sm:$0xff]
    %v4566 = vld [vmem:[#allocation18 + $0xf50] sm:$0xff]
    %v4567 = vld [vmem:[#allocation18 + $0xf58] sm:$0xff]
    %v4568 = vld [vmem:[#allocation18 + $0xf60] sm:$0xff]
    %v4569 = vld [vmem:[#allocation18 + $0xf68] sm:$0xff]
    %v4570 = vld [vmem:[#allocation18 + $0xf70] sm:$0xff]
    %v4571 = vld [vmem:[#allocation18 + $0xf78] sm:$0xff]
    %v4572 = vld [vmem:[#allocation18 + $0xf80] sm:$0xff]
    %v4573 = vld [vmem:[#allocation18 + $0xf88] sm:$0xff]
    %v4574 = vld [vmem:[#allocation18 + $0xf90] sm:$0xff]
    %v4575 = vld [vmem:[#allocation18 + $0xf98] sm:$0xff]
    %v4576 = vld [vmem:[#allocation18 + $0xfa0] sm:$0xff]
    %v4577 = vld [vmem:[#allocation18 + $0xfa8] sm:$0xff]
    %v4578 = vld [vmem:[#allocation18 + $0xfb0] sm:$0xff]
    %v4579 = vld [vmem:[#allocation18 + $0xfb8] sm:$0xff]
    %v4580 = vld [vmem:[#allocation18 + $0xfc0] sm:$0xff]
    %v4581 = vld [vmem:[#allocation18 + $0xfc8] sm:$0xff]
    %v4582 = vld [vmem:[#allocation18 + $0xfd0] sm:$0xff]
    %v4583 = vld [vmem:[#allocation18 + $0xfd8] sm:$0xff]
    %v4584 = vld [vmem:[#allocation18 + $0xfe0] sm:$0xff]
    %v4585 = vld [vmem:[#allocation18 + $0xfe8] sm:$0xff]
    %v4586 = vld [vmem:[#allocation18 + $0xff0] sm:$0xff]
    %v4587 = vld [vmem:[#allocation18 + $0xff8] sm:$0xff]
    %v4588 = vld [vmem:[#allocation18 + $0x1000] sm:$0xff]
    %v4589 = vld [vmem:[#allocation18 + $0x1008] sm:$0xff]
    %v4590 = vld [vmem:[#allocation18 + $0x1010] sm:$0xff]
    %v4591 = vld [vmem:[#allocation18 + $0x1018] sm:$0xff]
    %v4592 = vld [vmem:[#allocation18 + $0x1020] sm:$0xff]
    %v4593 = vld [vmem:[#allocation18 + $0x1028] sm:$0xff]
    %v4594 = vld [vmem:[#allocation18 + $0x1030] sm:$0xff]
    %v4595 = vld [vmem:[#allocation18 + $0x1038] sm:$0xff]
    %v4596 = vld [vmem:[#allocation18 + $0x1040] sm:$0xff]
    %v4597 = vld [vmem:[#allocation18 + $0x1048] sm:$0xff]
    %v4598 = vld [vmem:[#allocation18 + $0x1050] sm:$0xff]
    %v4599 = vld [vmem:[#allocation18 + $0x1058] sm:$0xff]
    %v4600 = vld [vmem:[#allocation18 + $0x1060] sm:$0xff]
    %v4601 = vld [vmem:[#allocation18 + $0x1068] sm:$0xff]
    %v4602 = vld [vmem:[#allocation18 + $0x1070] sm:$0xff]
    %v4603 = vld [vmem:[#allocation18 + $0x1078] sm:$0xff]
    %v4604 = vld [vmem:[#allocation18 + $0x1080] sm:$0xff]
    %v4605 = vld [vmem:[#allocation18 + $0x1088] sm:$0xff]
    %v4606 = vld [vmem:[#allocation18 + $0x1090] sm:$0xff]
    %v4607 = vld [vmem:[#allocation18 + $0x1098] sm:$0xff]
    %v4608 = vld [vmem:[#allocation18 + $0x10a0] sm:$0xff]
    %v4609 = vld [vmem:[#allocation18 + $0x10a8] sm:$0xff]
    %v4610 = vld [vmem:[#allocation18 + $0x10b0] sm:$0xff]
    %v4611 = vld [vmem:[#allocation18 + $0x10b8] sm:$0xff]
    %v4612 = vld [vmem:[#allocation18 + $0x10c0] sm:$0xff]
    %v4613 = vld [vmem:[#allocation18 + $0x10c8] sm:$0xff]
    %v4614 = vld [vmem:[#allocation18 + $0x10d0] sm:$0xff]
    %v4615 = vld [vmem:[#allocation18 + $0x10d8] sm:$0xff]
    %v4616 = vld [vmem:[#allocation18 + $0x10e0] sm:$0xff]
    %v4617 = vld [vmem:[#allocation18 + $0x10e8] sm:$0xff]
    %v4618 = vld [vmem:[#allocation18 + $0x10f0] sm:$0xff]
    %v4619 = vld [vmem:[#allocation18 + $0x10f8] sm:$0xff]
    %v4620 = vld [vmem:[#allocation18 + $0x1100] sm:$0xff]
    %v4621 = vld [vmem:[#allocation18 + $0x1108] sm:$0xff]
    %v4622 = vld [vmem:[#allocation18 + $0x1110] sm:$0xff]
    %v4623 = vld [vmem:[#allocation18 + $0x1118] sm:$0xff]
    %v4624 = vld [vmem:[#allocation18 + $0x1120] sm:$0xff]
    %v4625 = vld [vmem:[#allocation18 + $0x1128] sm:$0xff]
    %v4626 = vld [vmem:[#allocation18 + $0x1130] sm:$0xff]
    %v4627 = vld [vmem:[#allocation18 + $0x1138] sm:$0xff]
    %v4628 = vld [vmem:[#allocation18 + $0x1140] sm:$0xff]
    %v4629 = vld [vmem:[#allocation18 + $0x1148] sm:$0xff]
    %v4630 = vld [vmem:[#allocation18 + $0x1150] sm:$0xff]
    %v4631 = vld [vmem:[#allocation18 + $0x1158] sm:$0xff]
    %v4632 = vld [vmem:[#allocation18 + $0x1160] sm:$0xff]
    %v4633 = vld [vmem:[#allocation18 + $0x1168] sm:$0xff]
    %v4634 = vld [vmem:[#allocation18 + $0x1170] sm:$0xff]
    %v4635 = vld [vmem:[#allocation18 + $0x1178] sm:$0xff]
    %v4636 = vld [vmem:[#allocation18 + $0x1180] sm:$0xff]
    %v4637 = vld [vmem:[#allocation18 + $0x1188] sm:$0xff]
    %v4638 = vld [vmem:[#allocation18 + $0x1190] sm:$0xff]
    %v4639 = vld [vmem:[#allocation18 + $0x1198] sm:$0xff]
    %v4640 = vld [vmem:[#allocation18 + $0x11a0] sm:$0xff]
    %v4641 = vld [vmem:[#allocation18 + $0x11a8] sm:$0xff]
    %v4642 = vld [vmem:[#allocation18 + $0x11b0] sm:$0xff]
    %v4643 = vld [vmem:[#allocation18 + $0x11b8] sm:$0xff]
    %v4644 = vld [vmem:[#allocation18 + $0x11c0] sm:$0xff]
    %v4645 = vld [vmem:[#allocation18 + $0x11c8] sm:$0xff]
    %v4646 = vld [vmem:[#allocation18 + $0x11d0] sm:$0xff]
    %v4647 = vld [vmem:[#allocation18 + $0x11d8] sm:$0xff]
    %v4648 = vld [vmem:[#allocation18 + $0x11e0] sm:$0xff]
    %v4649 = vld [vmem:[#allocation18 + $0x11e8] sm:$0xff]
    %v4650 = vld [vmem:[#allocation18 + $0x11f0] sm:$0xff]
    %v4651 = vld [vmem:[#allocation18 + $0x11f8] sm:$0xff]
    %v4652 = vld [vmem:[#allocation19] sm:$0xff]
    %v4653 = vld [vmem:[#allocation19 + $0x8] sm:$0xf]
    %v4656 = vlaneseq
    %v4657 = vshrl.u32 %v4656, 7
    %v4658 = vsub.s32 0, %v4657
    %v4659 = vrot.slane %v4652, %v4658
    %v4660 = vlaneseq
    %v4661 = vshrl.u32 %v4660, 7
    %v4662 = vsub.s32 1, %v4661
    %v4663 = vrot.slane %v4652, %v4662
    %v4664 = vlaneseq
    %v4665 = vshrl.u32 %v4664, 7
    %v4666 = vsub.s32 2, %v4665
    %v4667 = vrot.slane %v4652, %v4666
    %v4668 = vlaneseq
    %v4669 = vshrl.u32 %v4668, 7
    %v4670 = vsub.s32 3, %v4669
    %v4671 = vrot.slane %v4652, %v4670
    %v4672 = vlaneseq
    %v4673 = vshrl.u32 %v4672, 7
    %v4674 = vsub.s32 4, %v4673
    %v4675 = vrot.slane %v4652, %v4674
    %v4676 = vlaneseq
    %v4677 = vshrl.u32 %v4676, 7
    %v4678 = vsub.s32 5, %v4677
    %v4679 = vrot.slane %v4652, %v4678
    %v4680 = vlaneseq
    %v4681 = vshrl.u32 %v4680, 7
    %v4682 = vsub.s32 6, %v4681
    %v4683 = vrot.slane %v4652, %v4682
    %v4684 = vlaneseq
    %v4685 = vshrl.u32 %v4684, 7
    %v4686 = vsub.s32 7, %v4685
    %v4687 = vrot.slane %v4652, %v4686
    %v4688 = vlaneseq
    %v4689 = vshrl.u32 %v4688, 7
    %v4690 = vsub.s32 0, %v4689
    %v4691 = vrot.slane %v4653, %v4690
    %v4692 = vlaneseq
    %v4693 = vshrl.u32 %v4692, 7
    %v4694 = vsub.s32 1, %v4693
    %v4695 = vrot.slane %v4653, %v4694
    %v4696 = vlaneseq
    %v4697 = vshrl.u32 %v4696, 7
    %v4698 = vsub.s32 2, %v4697
    %v4699 = vrot.slane %v4653, %v4698
    %v4700 = vlaneseq
    %v4701 = vshrl.u32 %v4700, 7
    %v4702 = vsub.s32 3, %v4701
    %v4703 = vrot.slane %v4653, %v4702
    %4716 = vmatprep.subr.mxu0 %v4077
    %4717 = vmatpush1.msra.mxu0 %v4076
    %4718 = vmatprep.subr.mxu0 %v4089
    %4719 = vmatpush1.msra.mxu0 %v4088
    %4720 = vmatprep.subr.mxu0 %v4101
    %4721 = vmatpush1.msra.mxu0 %v4100
    %4722 = vmatprep.subr.mxu0 %v4113
    %4723 = vmatpush1.msra.mxu0 %v4112
    %4724 = vmatprep.subr.mxu0 %v4125
    %4725 = vmatpush1.msra.mxu0 %v4124
    %4726 = vmatprep.subr.mxu0 %v4137
    %4727 = vmatpush1.msra.mxu0 %v4136
    %4728 = vmatprep.subr.mxu0 %v4149
    %4729 = vmatpush1.msra.mxu0 %v4148
    %4730 = vmatprep.subr.mxu0 %v4161
    %4731 = vmatpush1.msra.mxu0 %v4160
    %4732 = vmatprep.subr.mxu0 %v4173
    %4733 = vmatpush1.msra.mxu0 %v4172
    %4734 = vmatprep.subr.mxu0 %v4185
    %4735 = vmatpush1.msra.mxu0 %v4184
    %4736 = vmatprep.subr.mxu0 %v4197
    %4737 = vmatpush1.msra.mxu0 %v4196
    %4738 = vmatprep.subr.mxu0 %v4209
    %4739 = vmatpush1.msra.mxu0 %v4208
    %4740 = vmatprep.subr.mxu0 %v4221
    %4741 = vmatpush1.msra.mxu0 %v4220
    %4742 = vmatprep.subr.mxu0 %v4233
    %4743 = vmatpush1.msra.mxu0 %v4232
    %4744 = vmatprep.subr.mxu0 %v4245
    %4745 = vmatpush1.msra.mxu0 %v4244
    %4746 = vmatprep.subr.mxu0 %v4257
    %4747 = vmatpush1.msra.mxu0 %v4256
    %4748 = vmatprep.subr.mxu0 %v4269
    %4749 = vmatpush1.msra.mxu0 %v4268
    %4750 = vmatprep.subr.mxu0 %v4281
    %4751 = vmatpush1.msra.mxu0 %v4280
    %4752 = vmatprep.subr.mxu0 %v4293
    %4753 = vmatpush1.msra.mxu0 %v4292
    %4754 = vmatprep.subr.mxu0 %v4305
    %4755 = vmatpush1.msra.mxu0 %v4304
    %4756 = vmatprep.subr.mxu0 %v4317
    %4757 = vmatpush1.msra.mxu0 %v4316
    %4758 = vmatprep.subr.mxu0 %v4329
    %4759 = vmatpush1.msra.mxu0 %v4328
    %4760 = vmatprep.subr.mxu0 %v4341
    %4761 = vmatpush1.msra.mxu0 %v4340
    %4762 = vmatprep.subr.mxu0 %v4353
    %4763 = vmatpush1.msra.mxu0 %v4352
    %4764 = vmatprep.subr.mxu0 %v4365
    %4765 = vmatpush1.msra.mxu0 %v4364
    %4766 = vmatprep.subr.mxu0 %v4377
    %4767 = vmatpush1.msra.mxu0 %v4376
    %4768 = vmatprep.subr.mxu0 %v4389
    %4769 = vmatpush1.msra.mxu0 %v4388
    %4770 = vmatprep.subr.mxu0 %v4401
    %4771 = vmatpush1.msra.mxu0 %v4400
    %4772 = vmatprep.subr.mxu0 %v4413
    %4773 = vmatpush1.msra.mxu0 %v4412
    %4774 = vmatprep.subr.mxu0 %v4425
    %4775 = vmatpush1.msra.mxu0 %v4424
    %4776 = vmatprep.subr.mxu0 %v4437
    %4777 = vmatpush1.msra.mxu0 %v4436
    %4778 = vmatprep.subr.mxu0 %v4449
    %4779 = vmatpush1.msra.mxu0 %v4448
    %4780 = vmatprep.mubr.f32.mxu0 %v4071
    %4781 = vmatmul.mubr.f32.gmra.mrb[0].mxu0 %v4070
    %v4782 = vpop.f32.mrb[0].mxu0
    %v4783 = vadd.f32 %v4659, %v4782
    %v4784 = vpop.f32.mrb[0].mxu0
    %v4785 = vadd.f32 %v4663, %v4784
    %4786 = vmatprep.mubr.f32.mxu0 %v4074
    %4787 = vmatmul.mubr.f32.gmra.mrb[0].mxu0 %v4073
    %v4788 = vpop.f32.mrb[0].mxu0
    %v4789 = vadd.f32 %v4659, %v4788
    %v4790 = vpop.f32.mrb[0].mxu0
    %v4791 = vadd.f32 %v4663, %v4790
    %4792 = vdwg.mxu0
    %4793 = vmatprep.subr.mxu0 %v4461
    %4794 = vmatpush1.msra.mxu0 %v4460
    %4795 = vmatprep.subr.mxu0 %v4473
    %4796 = vmatpush1.msra.mxu0 %v4472
    %4797 = vmatprep.subr.mxu0 %v4485
    %4798 = vmatpush1.msra.mxu0 %v4484
    %4799 = vmatprep.subr.mxu0 %v4497
    %4800 = vmatpush1.msra.mxu0 %v4496
    %4801 = vmatprep.subr.mxu0 %v4509
    %4802 = vmatpush1.msra.mxu0 %v4508
    %4803 = vmatprep.subr.mxu0 %v4521
    %4804 = vmatpush1.msra.mxu0 %v4520
    %4805 = vmatprep.subr.mxu0 %v4533
    %4806 = vmatpush1.msra.mxu0 %v4532
    %4807 = vmatprep.subr.mxu0 %v4545
    %4808 = vmatpush1.msra.mxu0 %v4544
    %4809 = vmatprep.subr.mxu0 %v4557
    %4810 = vmatpush1.msra.mxu0 %v4556
    %4811 = vmatprep.subr.mxu0 %v4569
    %4812 = vmatpush1.msra.mxu0 %v4568
    %4813 = vmatprep.subr.mxu0 %v4581
    %4814 = vmatpush1.msra.mxu0 %v4580
    %4815 = vmatprep.subr.mxu0 %v4593
    %4816 = vmatpush1.msra.mxu0 %v4592
    %4817 = vmatprep.subr.mxu0 %v4605
    %4818 = vmatpush1.msra.mxu0 %v4604
    %4819 = vmatprep.subr.mxu0 %v4617
    %4820 = vmatpush1.msra.mxu0 %v4616
    %4821 = vmatprep.subr.mxu0 %v4629
    %4822 = vmatpush1.msra.mxu0 %v4628
    %4823 = vmatprep.subr.mxu0 %v4641
    %4824 = vmatpush1.msra.mxu0 %v4640
    %4825 = vmatprep.subr.mxu0 0.0
    %4826 = vmatpush1.msra.mxu0 0.0
    %4827 = vmatprep.subr.mxu0 0.0
    %4828 = vmatpush1.msra.mxu0 0.0
    %4829 = vmatprep.subr.mxu0 0.0
    %4830 = vmatpush1.msra.mxu0 0.0
    %4831 = vmatprep.subr.mxu0 0.0
    %4832 = vmatpush1.msra.mxu0 0.0
    %4833 = vmatprep.subr.mxu0 0.0
    %4834 = vmatpush1.msra.mxu0 0.0
    %4835 = vmatprep.subr.mxu0 0.0
    %4836 = vmatpush1.msra.mxu0 0.0
    %4837 = vmatprep.subr.mxu0 0.0
    %4838 = vmatpush1.msra.mxu0 0.0
    %4839 = vmatprep.subr.mxu0 0.0
    %4840 = vmatpush1.msra.mxu0 0.0
    %4841 = vmatprep.subr.mxu0 0.0
    %4842 = vmatpush1.msra.mxu0 0.0
    %4843 = vmatprep.subr.mxu0 0.0
    %4844 = vmatpush1.msra.mxu0 0.0
    %4845 = vmatprep.subr.mxu0 0.0
    %4846 = vmatpush1.msra.mxu0 0.0
    %4847 = vmatprep.subr.mxu0 0.0
    %4848 = vmatpush1.msra.mxu0 0.0
    %4849 = vmatprep.subr.mxu0 0.0
    %4850 = vmatpush1.msra.mxu0 0.0
    %4851 = vmatprep.subr.mxu0 0.0
    %4852 = vmatpush1.msra.mxu0 0.0
    %4853 = vmatprep.subr.mxu0 0.0
    %4854 = vmatpush1.msra.mxu0 0.0
    %4855 = vmatprep.subr.mxu0 0.0
    %4856 = vmatpush1.msra.mxu0 0.0
    %4857 = vmatprep.mubr.f32.mxu0 0.0
    %4858 = vmatmul.mubr.f32.gmra.mrb[0].mxu0 %v4072
    %v4859 = vpop.f32.mrb[0].mxu0
    %v4860 = vadd.f32 %v4783, %v4859
    %v4861 = vpop.f32.mrb[0].mxu0
    %v4862 = vadd.f32 %v4785, %v4861
    %4863 = vmatprep.mubr.f32.mxu0 0.0
    %4864 = vmatmul.mubr.f32.gmra.mrb[0].mxu0 %v4075
    %v4865 = vpop.f32.mrb[0].mxu0
    %v4866 = vadd.f32 %v4789, %v4865
    %v4867 = vpop.f32.mrb[0].mxu0
    %v4868 = vadd.f32 %v4791, %v4867
    %4869 = vdwg.mxu0
    %4870 = vmatprep.subr.mxu0 %v4079
    %4871 = vmatpush1.msra.mxu0 %v4078
    %4872 = vmatprep.subr.mxu0 %v4091
    %4873 = vmatpush1.msra.mxu0 %v4090
    %4874 = vmatprep.subr.mxu0 %v4103
    %4875 = vmatpush1.msra.mxu0 %v4102
    %4876 = vmatprep.subr.mxu0 %v4115
    %4877 = vmatpush1.msra.mxu0 %v4114
    %4878 = vmatprep.subr.mxu0 %v4127
    %4879 = vmatpush1.msra.mxu0 %v4126
    %4880 = vmatprep.subr.mxu0 %v4139
    %4881 = vmatpush1.msra.mxu0 %v4138
    %4882 = vmatprep.subr.mxu0 %v4151
    %4883 = vmatpush1.msra.mxu0 %v4150
    %4884 = vmatprep.subr.mxu0 %v4163
    %4885 = vmatpush1.msra.mxu0 %v4162
    %4886 = vmatprep.subr.mxu0 %v4175
    %4887 = vmatpush1.msra.mxu0 %v4174
    %4888 = vmatprep.subr.mxu0 %v4187
    %4889 = vmatpush1.msra.mxu0 %v4186
    %4890 = vmatprep.subr.mxu0 %v4199
    %4891 = vmatpush1.msra.mxu0 %v4198
    %4892 = vmatprep.subr.mxu0 %v4211
    %4893 = vmatpush1.msra.mxu0 %v4210
    %4894 = vmatprep.subr.mxu0 %v4223
    %4895 = vmatpush1.msra.mxu0 %v4222
    %4896 = vmatprep.subr.mxu0 %v4235
    %4897 = vmatpush1.msra.mxu0 %v4234
    %4898 = vmatprep.subr.mxu0 %v4247
    %4899 = vmatpush1.msra.mxu0 %v4246
    %4900 = vmatprep.subr.mxu0 %v4259
    %4901 = vmatpush1.msra.mxu0 %v4258
    %4902 = vmatprep.subr.mxu0 %v4271
    %4903 = vmatpush1.msra.mxu0 %v4270
    %4904 = vmatprep.subr.mxu0 %v4283
    %4905 = vmatpush1.msra.mxu0 %v4282
    %4906 = vmatprep.subr.mxu0 %v4295
    %4907 = vmatpush1.msra.mxu0 %v4294
    %4908 = vmatprep.subr.mxu0 %v4307
    %4909 = vmatpush1.msra.mxu0 %v4306
    %4910 = vmatprep.subr.mxu0 %v4319
    %4911 = vmatpush1.msra.mxu0 %v4318
    %4912 = vmatprep.subr.mxu0 %v4331
    %4913 = vmatpush1.msra.mxu0 %v4330
    %4914 = vmatprep.subr.mxu0 %v4343
    %4915 = vmatpush1.msra.mxu0 %v4342
    %4916 = vmatprep.subr.mxu0 %v4355
    %4917 = vmatpush1.msra.mxu0 %v4354
    %4918 = vmatprep.subr.mxu0 %v4367
    %4919 = vmatpush1.msra.mxu0 %v4366
    %4920 = vmatprep.subr.mxu0 %v4379
    %4921 = vmatpush1.msra.mxu0 %v4378
    %4922 = vmatprep.subr.mxu0 %v4391
    %4923 = vmatpush1.msra.mxu0 %v4390
    %4924 = vmatprep.subr.mxu0 %v4403
    %4925 = vmatpush1.msra.mxu0 %v4402
    %4926 = vmatprep.subr.mxu0 %v4415
    %4927 = vmatpush1.msra.mxu0 %v4414
    %4928 = vmatprep.subr.mxu0 %v4427
    %4929 = vmatpush1.msra.mxu0 %v4426
    %4930 = vmatprep.subr.mxu0 %v4439
    %4931 = vmatpush1.msra.mxu0 %v4438
    %4932 = vmatprep.subr.mxu0 %v4451
    %4933 = vmatpush1.msra.mxu0 %v4450
    %4934 = vmatprep.mubr.f32.mxu0 %v4071
    %4935 = vmatmul.mubr.f32.gmra.mrb[0].mxu0 %v4070
    %v4936 = vpop.f32.mrb[0].mxu0
    %v4937 = vadd.f32 %v4667, %v4936
    %v4938 = vpop.f32.mrb[0].mxu0
    %v4939 = vadd.f32 %v4671, %v4938
    %4940 = vmatprep.mubr.f32.mxu0 %v4074
    %4941 = vmatmul.mubr.f32.gmra.mrb[0].mxu0 %v4073
    %v4942 = vpop.f32.mrb[0].mxu0
    %v4943 = vadd.f32 %v4667, %v4942
    %v4944 = vpop.f32.mrb[0].mxu0
    %v4945 = vadd.f32 %v4671, %v4944
    %4946 = vdwg.mxu0
    %4947 = vmatprep.subr.mxu0 %v4463
    %4948 = vmatpush1.msra.mxu0 %v4462
    %4949 = vmatprep.subr.mxu0 %v4475
    %4950 = vmatpush1.msra.mxu0 %v4474
    %4951 = vmatprep.subr.mxu0 %v4487
    %4952 = vmatpush1.msra.mxu0 %v4486
    %4953 = vmatprep.subr.mxu0 %v4499
    %4954 = vmatpush1.msra.mxu0 %v4498
    %4955 = vmatprep.subr.mxu0 %v4511
    %4956 = vmatpush1.msra.mxu0 %v4510
    %4957 = vmatprep.subr.mxu0 %v4523
    %4958 = vmatpush1.msra.mxu0 %v4522
    %4959 = vmatprep.subr.mxu0 %v4535
    %4960 = vmatpush1.msra.mxu0 %v4534
    %4961 = vmatprep.subr.mxu0 %v4547
    %4962 = vmatpush1.msra.mxu0 %v4546
    %4963 = vmatprep.subr.mxu0 %v4559
    %4964 = vmatpush1.msra.mxu0 %v4558
    %4965 = vmatprep.subr.mxu0 %v4571
    %4966 = vmatpush1.msra.mxu0 %v4570
    %4967 = vmatprep.subr.mxu0 %v4583
    %4968 = vmatpush1.msra.mxu0 %v4582
    %4969 = vmatprep.subr.mxu0 %v4595
    %4970 = vmatpush1.msra.mxu0 %v4594
    %4971 = vmatprep.subr.mxu0 %v4607
    %4972 = vmatpush1.msra.mxu0 %v4606
    %4973 = vmatprep.subr.mxu0 %v4619
    %4974 = vmatpush1.msra.mxu0 %v4618
    %4975 = vmatprep.subr.mxu0 %v4631
    %4976 = vmatpush1.msra.mxu0 %v4630
    %4977 = vmatprep.subr.mxu0 %v4643
    %4978 = vmatpush1.msra.mxu0 %v4642
    %4979 = vmatprep.subr.mxu0 0.0
    %4980 = vmatpush1.msra.mxu0 0.0
    %4981 = vmatprep.subr.mxu0 0.0
    %4982 = vmatpush1.msra.mxu0 0.0
    %4983 = vmatprep.subr.mxu0 0.0
    %4984 = vmatpush1.msra.mxu0 0.0
    %4985 = vmatprep.subr.mxu0 0.0
    %4986 = vmatpush1.msra.mxu0 0.0
    %4987 = vmatprep.subr.mxu0 0.0
    %4988 = vmatpush1.msra.mxu0 0.0
    %4989 = vmatprep.subr.mxu0 0.0
    %4990 = vmatpush1.msra.mxu0 0.0
    %4991 = vmatprep.subr.mxu0 0.0
    %4992 = vmatpush1.msra.mxu0 0.0
    %4993 = vmatprep.subr.mxu0 0.0
    %4994 = vmatpush1.msra.mxu0 0.0
    %4995 = vmatprep.subr.mxu0 0.0
    %4996 = vmatpush1.msra.mxu0 0.0
    %4997 = vmatprep.subr.mxu0 0.0
    %4998 = vmatpush1.msra.mxu0 0.0
    %4999 = vmatprep.subr.mxu0 0.0
    %5000 = vmatpush1.msra.mxu0 0.0
    %5001 = vmatprep.subr.mxu0 0.0
    %5002 = vmatpush1.msra.mxu0 0.0
    %5003 = vmatprep.subr.mxu0 0.0
    %5004 = vmatpush1.msra.mxu0 0.0
    %5005 = vmatprep.subr.mxu0 0.0
    %5006 = vmatpush1.msra.mxu0 0.0
    %5007 = vmatprep.subr.mxu0 0.0
    %5008 = vmatpush1.msra.mxu0 0.0
    %5009 = vmatprep.subr.mxu0 0.0
    %5010 = vmatpush1.msra.mxu0 0.0
    %5011 = vmatprep.mubr.f32.mxu0 0.0
    %5012 = vmatmul.mubr.f32.gmra.mrb[0].mxu0 %v4072
    %v5013 = vpop.f32.mrb[0].mxu0
    %v5014 = vadd.f32 %v4937, %v5013
    %v5015 = vpop.f32.mrb[0].mxu0
    %v5016 = vadd.f32 %v4939, %v5015
    %5017 = vmatprep.mubr.f32.mxu0 0.0
    %5018 = vmatmul.mubr.f32.gmra.mrb[0].mxu0 %v4075
    %v5019 = vpop.f32.mrb[0].mxu0
    %v5020 = vadd.f32 %v4943, %v5019
    %v5021 = vpop.f32.mrb[0].mxu0
    %v5022 = vadd.f32 %v4945, %v5021
    %5023 = vdwg.mxu0
    %5024 = vmatprep.subr.mxu0 %v4081
    %5025 = vmatpush1.msra.mxu0 %v4080
    %5026 = vmatprep.subr.mxu0 %v4093
    %5027 = vmatpush1.msra.mxu0 %v4092
    %5028 = vmatprep.subr.mxu0 %v4105
    %5029 = vmatpush1.msra.mxu0 %v4104
    %5030 = vmatprep.subr.mxu0 %v4117
    %5031 = vmatpush1.msra.mxu0 %v4116
    %5032 = vmatprep.subr.mxu0 %v4129
    %5033 = vmatpush1.msra.mxu0 %v4128
    %5034 = vmatprep.subr.mxu0 %v4141
    %5035 = vmatpush1.msra.mxu0 %v4140
    %5036 = vmatprep.subr.mxu0 %v4153
    %5037 = vmatpush1.msra.mxu0 %v4152
    %5038 = vmatprep.subr.mxu0 %v4165
    %5039 = vmatpush1.msra.mxu0 %v4164
    %5040 = vmatprep.subr.mxu0 %v4177
    %5041 = vmatpush1.msra.mxu0 %v4176
    %5042 = vmatprep.subr.mxu0 %v4189
    %5043 = vmatpush1.msra.mxu0 %v4188
    %5044 = vmatprep.subr.mxu0 %v4201
    %5045 = vmatpush1.msra.mxu0 %v4200
    %5046 = vmatprep.subr.mxu0 %v4213
    %5047 = vmatpush1.msra.mxu0 %v4212
    %5048 = vmatprep.subr.mxu0 %v4225
    %5049 = vmatpush1.msra.mxu0 %v4224
    %5050 = vmatprep.subr.mxu0 %v4237
    %5051 = vmatpush1.msra.mxu0 %v4236
    %5052 = vmatprep.subr.mxu0 %v4249
    %5053 = vmatpush1.msra.mxu0 %v4248
    %5054 = vmatprep.subr.mxu0 %v4261
    %5055 = vmatpush1.msra.mxu0 %v4260
    %5056 = vmatprep.subr.mxu0 %v4273
    %5057 = vmatpush1.msra.mxu0 %v4272
    %5058 = vmatprep.subr.mxu0 %v4285
    %5059 = vmatpush1.msra.mxu0 %v4284
    %5060 = vmatprep.subr.mxu0 %v4297
    %5061 = vmatpush1.msra.mxu0 %v4296
    %5062 = vmatprep.subr.mxu0 %v4309
    %5063 = vmatpush1.msra.mxu0 %v4308
    %5064 = vmatprep.subr.mxu0 %v4321
    %5065 = vmatpush1.msra.mxu0 %v4320
    %5066 = vmatprep.subr.mxu0 %v4333
    %5067 = vmatpush1.msra.mxu0 %v4332
    %5068 = vmatprep.subr.mxu0 %v4345
    %5069 = vmatpush1.msra.mxu0 %v4344
    %5070 = vmatprep.subr.mxu0 %v4357
    %5071 = vmatpush1.msra.mxu0 %v4356
    %5072 = vmatprep.subr.mxu0 %v4369
    %5073 = vmatpush1.msra.mxu0 %v4368
    %5074 = vmatprep.subr.mxu0 %v4381
    %5075 = vmatpush1.msra.mxu0 %v4380
    %5076 = vmatprep.subr.mxu0 %v4393
    %5077 = vmatpush1.msra.mxu0 %v4392
    %5078 = vmatprep.subr.mxu0 %v4405
    %5079 = vmatpush1.msra.mxu0 %v4404
    %5080 = vmatprep.subr.mxu0 %v4417
    %5081 = vmatpush1.msra.mxu0 %v4416
    %5082 = vmatprep.subr.mxu0 %v4429
    %5083 = vmatpush1.msra.mxu0 %v4428
    %5084 = vmatprep.subr.mxu0 %v4441
    %5085 = vmatpush1.msra.mxu0 %v4440
    %5086 = vmatprep.subr.mxu0 %v4453
    %5087 = vmatpush1.msra.mxu0 %v4452
    %5088 = vmatprep.mubr.f32.mxu0 %v4071
    %5089 = vmatmul.mubr.f32.gmra.mrb[0].mxu0 %v4070
    %v5090 = vpop.f32.mrb[0].mxu0
    %v5091 = vadd.f32 %v4675, %v5090
    %v5092 = vpop.f32.mrb[0].mxu0
    %v5093 = vadd.f32 %v4679, %v5092
    %5094 = vmatprep.mubr.f32.mxu0 %v4074
    %5095 = vmatmul.mubr.f32.gmra.mrb[0].mxu0 %v4073
    %v5096 = vpop.f32.mrb[0].mxu0
    %v5097 = vadd.f32 %v4675, %v5096
    %v5098 = vpop.f32.mrb[0].mxu0
    %v5099 = vadd.f32 %v4679, %v5098
    %5100 = vdwg.mxu0
    %5101 = vmatprep.subr.mxu0 %v4465
    %5102 = vmatpush1.msra.mxu0 %v4464
    %5103 = vmatprep.subr.mxu0 %v4477
    %5104 = vmatpush1.msra.mxu0 %v4476
    %5105 = vmatprep.subr.mxu0 %v4489
    %5106 = vmatpush1.msra.mxu0 %v4488
    %5107 = vmatprep.subr.mxu0 %v4501
    %5108 = vmatpush1.msra.mxu0 %v4500
    %5109 = vmatprep.subr.mxu0 %v4513
    %5110 = vmatpush1.msra.mxu0 %v4512
    %5111 = vmatprep.subr.mxu0 %v4525
    %5112 = vmatpush1.msra.mxu0 %v4524
    %5113 = vmatprep.subr.mxu0 %v4537
    %5114 = vmatpush1.msra.mxu0 %v4536
    %5115 = vmatprep.subr.mxu0 %v4549
    %5116 = vmatpush1.msra.mxu0 %v4548
    %5117 = vmatprep.subr.mxu0 %v4561
    %5118 = vmatpush1.msra.mxu0 %v4560
    %5119 = vmatprep.subr.mxu0 %v4573
    %5120 = vmatpush1.msra.mxu0 %v4572
    %5121 = vmatprep.subr.mxu0 %v4585
    %5122 = vmatpush1.msra.mxu0 %v4584
    %5123 = vmatprep.subr.mxu0 %v4597
    %5124 = vmatpush1.msra.mxu0 %v4596
    %5125 = vmatprep.subr.mxu0 %v4609
    %5126 = vmatpush1.msra.mxu0 %v4608
    %5127 = vmatprep.subr.mxu0 %v4621
    %5128 = vmatpush1.msra.mxu0 %v4620
    %5129 = vmatprep.subr.mxu0 %v4633
    %5130 = vmatpush1.msra.mxu0 %v4632
    %5131 = vmatprep.subr.mxu0 %v4645
    %5132 = vmatpush1.msra.mxu0 %v4644
    %5133 = vmatprep.subr.mxu0 0.0
    %5134 = vmatpush1.msra.mxu0 0.0
    %5135 = vmatprep.subr.mxu0 0.0
    %5136 = vmatpush1.msra.mxu0 0.0
    %5137 = vmatprep.subr.mxu0 0.0
    %5138 = vmatpush1.msra.mxu0 0.0
    %5139 = vmatprep.subr.mxu0 0.0
    %5140 = vmatpush1.msra.mxu0 0.0
    %5141 = vmatprep.subr.mxu0 0.0
    %5142 = vmatpush1.msra.mxu0 0.0
    %5143 = vmatprep.subr.mxu0 0.0
    %5144 = vmatpush1.msra.mxu0 0.0
    %5145 = vmatprep.subr.mxu0 0.0
    %5146 = vmatpush1.msra.mxu0 0.0
    %5147 = vmatprep.subr.mxu0 0.0
    %5148 = vmatpush1.msra.mxu0 0.0
    %5149 = vmatprep.subr.mxu0 0.0
    %5150 = vmatpush1.msra.mxu0 0.0
    %5151 = vmatprep.subr.mxu0 0.0
    %5152 = vmatpush1.msra.mxu0 0.0
    %5153 = vmatprep.subr.mxu0 0.0
    %5154 = vmatpush1.msra.mxu0 0.0
    %5155 = vmatprep.subr.mxu0 0.0
    %5156 = vmatpush1.msra.mxu0 0.0
    %5157 = vmatprep.subr.mxu0 0.0
    %5158 = vmatpush1.msra.mxu0 0.0
    %5159 = vmatprep.subr.mxu0 0.0
    %5160 = vmatpush1.msra.mxu0 0.0
    %5161 = vmatprep.subr.mxu0 0.0
    %5162 = vmatpush1.msra.mxu0 0.0
    %5163 = vmatprep.subr.mxu0 0.0
    %5164 = vmatpush1.msra.mxu0 0.0
    %5165 = vmatprep.mubr.f32.mxu0 0.0
    %5166 = vmatmul.mubr.f32.gmra.mrb[0].mxu0 %v4072
    %v5167 = vpop.f32.mrb[0].mxu0
    %v5168 = vadd.f32 %v5091, %v5167
    %v5169 = vpop.f32.mrb[0].mxu0
    %v5170 = vadd.f32 %v5093, %v5169
    %5171 = vmatprep.mubr.f32.mxu0 0.0
    %5172 = vmatmul.mubr.f32.gmra.mrb[0].mxu0 %v4075
    %v5173 = vpop.f32.mrb[0].mxu0
    %v5174 = vadd.f32 %v5097, %v5173
    %v5175 = vpop.f32.mrb[0].mxu0
    %v5176 = vadd.f32 %v5099, %v5175
    %5177 = vdwg.mxu0
    %5178 = vmatprep.subr.mxu0 %v4083
    %5179 = vmatpush1.msra.mxu0 %v4082
    %5180 = vmatprep.subr.mxu0 %v4095
    %5181 = vmatpush1.msra.mxu0 %v4094
    %5182 = vmatprep.subr.mxu0 %v4107
    %5183 = vmatpush1.msra.mxu0 %v4106
    %5184 = vmatprep.subr.mxu0 %v4119
    %5185 = vmatpush1.msra.mxu0 %v4118
    %5186 = vmatprep.subr.mxu0 %v4131
    %5187 = vmatpush1.msra.mxu0 %v4130
    %5188 = vmatprep.subr.mxu0 %v4143
    %5189 = vmatpush1.msra.mxu0 %v4142
    %5190 = vmatprep.subr.mxu0 %v4155
    %5191 = vmatpush1.msra.mxu0 %v4154
    %5192 = vmatprep.subr.mxu0 %v4167
    %5193 = vmatpush1.msra.mxu0 %v4166
    %5194 = vmatprep.subr.mxu0 %v4179
    %5195 = vmatpush1.msra.mxu0 %v4178
    %5196 = vmatprep.subr.mxu0 %v4191
    %5197 = vmatpush1.msra.mxu0 %v4190
    %5198 = vmatprep.subr.mxu0 %v4203
    %5199 = vmatpush1.msra.mxu0 %v4202
    %5200 = vmatprep.subr.mxu0 %v4215
    %5201 = vmatpush1.msra.mxu0 %v4214
    %5202 = vmatprep.subr.mxu0 %v4227
    %5203 = vmatpush1.msra.mxu0 %v4226
    %5204 = vmatprep.subr.mxu0 %v4239
    %5205 = vmatpush1.msra.mxu0 %v4238
    %5206 = vmatprep.subr.mxu0 %v4251
    %5207 = vmatpush1.msra.mxu0 %v4250
    %5208 = vmatprep.subr.mxu0 %v4263
    %5209 = vmatpush1.msra.mxu0 %v4262
    %5210 = vmatprep.subr.mxu0 %v4275
    %5211 = vmatpush1.msra.mxu0 %v4274
    %5212 = vmatprep.subr.mxu0 %v4287
    %5213 = vmatpush1.msra.mxu0 %v4286
    %5214 = vmatprep.subr.mxu0 %v4299
    %5215 = vmatpush1.msra.mxu0 %v4298
    %5216 = vmatprep.subr.mxu0 %v4311
    %5217 = vmatpush1.msra.mxu0 %v4310
    %5218 = vmatprep.subr.mxu0 %v4323
    %5219 = vmatpush1.msra.mxu0 %v4322
    %5220 = vmatprep.subr.mxu0 %v4335
    %5221 = vmatpush1.msra.mxu0 %v4334
    %5222 = vmatprep.subr.mxu0 %v4347
    %5223 = vmatpush1.msra.mxu0 %v4346
    %5224 = vmatprep.subr.mxu0 %v4359
    %5225 = vmatpush1.msra.mxu0 %v4358
    %5226 = vmatprep.subr.mxu0 %v4371
    %5227 = vmatpush1.msra.mxu0 %v4370
    %5228 = vmatprep.subr.mxu0 %v4383
    %5229 = vmatpush1.msra.mxu0 %v4382
    %5230 = vmatprep.subr.mxu0 %v4395
    %5231 = vmatpush1.msra.mxu0 %v4394
    %5232 = vmatprep.subr.mxu0 %v4407
    %5233 = vmatpush1.msra.mxu0 %v4406
    %5234 = vmatprep.subr.mxu0 %v4419
    %5235 = vmatpush1.msra.mxu0 %v4418
    %5236 = vmatprep.subr.mxu0 %v4431
    %5237 = vmatpush1.msra.mxu0 %v4430
    %5238 = vmatprep.subr.mxu0 %v4443
    %5239 = vmatpush1.msra.mxu0 %v4442
    %5240 = vmatprep.subr.mxu0 %v4455
    %5241 = vmatpush1.msra.mxu0 %v4454
    %5242 = vmatprep.mubr.f32.mxu0 %v4071
    %5243 = vmatmul.mubr.f32.gmra.mrb[0].mxu0 %v4070
    %v5244 = vpop.f32.mrb[0].mxu0
    %v5245 = vadd.f32 %v4683, %v5244
    %v5246 = vpop.f32.mrb[0].mxu0
    %v5247 = vadd.f32 %v4687, %v5246
    %5248 = vmatprep.mubr.f32.mxu0 %v4074
    %5249 = vmatmul.mubr.f32.gmra.mrb[0].mxu0 %v4073
    %v5250 = vpop.f32.mrb[0].mxu0
    %v5251 = vadd.f32 %v4683, %v5250
    %v5252 = vpop.f32.mrb[0].mxu0
    %v5253 = vadd.f32 %v4687, %v5252
    %5254 = vdwg.mxu0
    %5255 = vmatprep.subr.mxu0 %v4467
    %5256 = vmatpush1.msra.mxu0 %v4466
    %5257 = vmatprep.subr.mxu0 %v4479
    %5258 = vmatpush1.msra.mxu0 %v4478
    %5259 = vmatprep.subr.mxu0 %v4491
    %5260 = vmatpush1.msra.mxu0 %v4490
    %5261 = vmatprep.subr.mxu0 %v4503
    %5262 = vmatpush1.msra.mxu0 %v4502
    %5263 = vmatprep.subr.mxu0 %v4515
    %5264 = vmatpush1.msra.mxu0 %v4514
    %5265 = vmatprep.subr.mxu0 %v4527
    %5266 = vmatpush1.msra.mxu0 %v4526
    %5267 = vmatprep.subr.mxu0 %v4539
    %5268 = vmatpush1.msra.mxu0 %v4538
    %5269 = vmatprep.subr.mxu0 %v4551
    %5270 = vmatpush1.msra.mxu0 %v4550
    %5271 = vmatprep.subr.mxu0 %v4563
    %5272 = vmatpush1.msra.mxu0 %v4562
    %5273 = vmatprep.subr.mxu0 %v4575
    %5274 = vmatpush1.msra.mxu0 %v4574
    %5275 = vmatprep.subr.mxu0 %v4587
    %5276 = vmatpush1.msra.mxu0 %v4586
    %5277 = vmatprep.subr.mxu0 %v4599
    %5278 = vmatpush1.msra.mxu0 %v4598
    %5279 = vmatprep.subr.mxu0 %v4611
    %5280 = vmatpush1.msra.mxu0 %v4610
    %5281 = vmatprep.subr.mxu0 %v4623
    %5282 = vmatpush1.msra.mxu0 %v4622
    %5283 = vmatprep.subr.mxu0 %v4635
    %5284 = vmatpush1.msra.mxu0 %v4634
    %5285 = vmatprep.subr.mxu0 %v4647
    %5286 = vmatpush1.msra.mxu0 %v4646
    %5287 = vmatprep.subr.mxu0 0.0
    %5288 = vmatpush1.msra.mxu0 0.0
    %5289 = vmatprep.subr.mxu0 0.0
    %5290 = vmatpush1.msra.mxu0 0.0
    %5291 = vmatprep.subr.mxu0 0.0
    %5292 = vmatpush1.msra.mxu0 0.0
    %5293 = vmatprep.subr.mxu0 0.0
    %5294 = vmatpush1.msra.mxu0 0.0
    %5295 = vmatprep.subr.mxu0 0.0
    %5296 = vmatpush1.msra.mxu0 0.0
    %5297 = vmatprep.subr.mxu0 0.0
    %5298 = vmatpush1.msra.mxu0 0.0
    %5299 = vmatprep.subr.mxu0 0.0
    %5300 = vmatpush1.msra.mxu0 0.0
    %5301 = vmatprep.subr.mxu0 0.0
    %5302 = vmatpush1.msra.mxu0 0.0
    %5303 = vmatprep.subr.mxu0 0.0
    %5304 = vmatpush1.msra.mxu0 0.0
    %5305 = vmatprep.subr.mxu0 0.0
    %5306 = vmatpush1.msra.mxu0 0.0
    %5307 = vmatprep.subr.mxu0 0.0
    %5308 = vmatpush1.msra.mxu0 0.0
    %5309 = vmatprep.subr.mxu0 0.0
    %5310 = vmatpush1.msra.mxu0 0.0
    %5311 = vmatprep.subr.mxu0 0.0
    %5312 = vmatpush1.msra.mxu0 0.0
    %5313 = vmatprep.subr.mxu0 0.0
    %5314 = vmatpush1.msra.mxu0 0.0
    %5315 = vmatprep.subr.mxu0 0.0
    %5316 = vmatpush1.msra.mxu0 0.0
    %5317 = vmatprep.subr.mxu0 0.0
    %5318 = vmatpush1.msra.mxu0 0.0
    %5319 = vmatprep.mubr.f32.mxu0 0.0
    %5320 = vmatmul.mubr.f32.gmra.mrb[0].mxu0 %v4072
    %v5321 = vpop.f32.mrb[0].mxu0
    %v5322 = vadd.f32 %v5245, %v5321
    %v5323 = vpop.f32.mrb[0].mxu0
    %v5324 = vadd.f32 %v5247, %v5323
    %5325 = vmatprep.mubr.f32.mxu0 0.0
    %5326 = vmatmul.mubr.f32.gmra.mrb[0].mxu0 %v4075
    %v5327 = vpop.f32.mrb[0].mxu0
    %v5328 = vadd.f32 %v5251, %v5327
    %v5329 = vpop.f32.mrb[0].mxu0
    %v5330 = vadd.f32 %v5253, %v5329
    %5331 = vdwg.mxu0
    %5332 = vmatprep.subr.mxu0 %v4085
    %5333 = vmatpush1.msra.mxu0 %v4084
    %5334 = vmatprep.subr.mxu0 %v4097
    %5335 = vmatpush1.msra.mxu0 %v4096
    %5336 = vmatprep.subr.mxu0 %v4109
    %5337 = vmatpush1.msra.mxu0 %v4108
    %5338 = vmatprep.subr.mxu0 %v4121
    %5339 = vmatpush1.msra.mxu0 %v4120
    %5340 = vmatprep.subr.mxu0 %v4133
    %5341 = vmatpush1.msra.mxu0 %v4132
    %5342 = vmatprep.subr.mxu0 %v4145
    %5343 = vmatpush1.msra.mxu0 %v4144
    %5344 = vmatprep.subr.mxu0 %v4157
    %5345 = vmatpush1.msra.mxu0 %v4156
    %5346 = vmatprep.subr.mxu0 %v4169
    %5347 = vmatpush1.msra.mxu0 %v4168
    %5348 = vmatprep.subr.mxu0 %v4181
    %5349 = vmatpush1.msra.mxu0 %v4180
    %5350 = vmatprep.subr.mxu0 %v4193
    %5351 = vmatpush1.msra.mxu0 %v4192
    %5352 = vmatprep.subr.mxu0 %v4205
    %5353 = vmatpush1.msra.mxu0 %v4204
    %5354 = vmatprep.subr.mxu0 %v4217
    %5355 = vmatpush1.msra.mxu0 %v4216
    %5356 = vmatprep.subr.mxu0 %v4229
    %5357 = vmatpush1.msra.mxu0 %v4228
    %5358 = vmatprep.subr.mxu0 %v4241
    %5359 = vmatpush1.msra.mxu0 %v4240
    %5360 = vmatprep.subr.mxu0 %v4253
    %5361 = vmatpush1.msra.mxu0 %v4252
    %5362 = vmatprep.subr.mxu0 %v4265
    %5363 = vmatpush1.msra.mxu0 %v4264
    %5364 = vmatprep.subr.mxu0 %v4277
    %5365 = vmatpush1.msra.mxu0 %v4276
    %5366 = vmatprep.subr.mxu0 %v4289
    %5367 = vmatpush1.msra.mxu0 %v4288
    %5368 = vmatprep.subr.mxu0 %v4301
    %5369 = vmatpush1.msra.mxu0 %v4300
    %5370 = vmatprep.subr.mxu0 %v4313
    %5371 = vmatpush1.msra.mxu0 %v4312
    %5372 = vmatprep.subr.mxu0 %v4325
    %5373 = vmatpush1.msra.mxu0 %v4324
    %5374 = vmatprep.subr.mxu0 %v4337
    %5375 = vmatpush1.msra.mxu0 %v4336
    %5376 = vmatprep.subr.mxu0 %v4349
    %5377 = vmatpush1.msra.mxu0 %v4348
    %5378 = vmatprep.subr.mxu0 %v4361
    %5379 = vmatpush1.msra.mxu0 %v4360
    %5380 = vmatprep.subr.mxu0 %v4373
    %5381 = vmatpush1.msra.mxu0 %v4372
    %5382 = vmatprep.subr.mxu0 %v4385
    %5383 = vmatpush1.msra.mxu0 %v4384
    %5384 = vmatprep.subr.mxu0 %v4397
    %5385 = vmatpush1.msra.mxu0 %v4396
    %5386 = vmatprep.subr.mxu0 %v4409
    %5387 = vmatpush1.msra.mxu0 %v4408
    %5388 = vmatprep.subr.mxu0 %v4421
    %5389 = vmatpush1.msra.mxu0 %v4420
    %5390 = vmatprep.subr.mxu0 %v4433
    %5391 = vmatpush1.msra.mxu0 %v4432
    %5392 = vmatprep.subr.mxu0 %v4445
    %5393 = vmatpush1.msra.mxu0 %v4444
    %5394 = vmatprep.subr.mxu0 %v4457
    %5395 = vmatpush1.msra.mxu0 %v4456
    %5396 = vmatprep.mubr.f32.mxu0 %v4071
    %5397 = vmatmul.mubr.f32.gmra.mrb[0].mxu0 %v4070
    %v5398 = vpop.f32.mrb[0].mxu0
    %v5399 = vadd.f32 %v4691, %v5398
    %v5400 = vpop.f32.mrb[0].mxu0
    %v5401 = vadd.f32 %v4695, %v5400
    %5402 = vmatprep.mubr.f32.mxu0 %v4074
    %5403 = vmatmul.mubr.f32.gmra.mrb[0].mxu0 %v4073
    %v5404 = vpop.f32.mrb[0].mxu0
    %v5405 = vadd.f32 %v4691, %v5404
    %v5406 = vpop.f32.mrb[0].mxu0
    %v5407 = vadd.f32 %v4695, %v5406
    %5408 = vdwg.mxu0
    %5409 = vmatprep.subr.mxu0 %v4469
    %5410 = vmatpush1.msra.mxu0 %v4468
    %5411 = vmatprep.subr.mxu0 %v4481
    %5412 = vmatpush1.msra.mxu0 %v4480
    %5413 = vmatprep.subr.mxu0 %v4493
    %5414 = vmatpush1.msra.mxu0 %v4492
    %5415 = vmatprep.subr.mxu0 %v4505
    %5416 = vmatpush1.msra.mxu0 %v4504
    %5417 = vmatprep.subr.mxu0 %v4517
    %5418 = vmatpush1.msra.mxu0 %v4516
    %5419 = vmatprep.subr.mxu0 %v4529
    %5420 = vmatpush1.msra.mxu0 %v4528
    %5421 = vmatprep.subr.mxu0 %v4541
    %5422 = vmatpush1.msra.mxu0 %v4540
    %5423 = vmatprep.subr.mxu0 %v4553
    %5424 = vmatpush1.msra.mxu0 %v4552
    %5425 = vmatprep.subr.mxu0 %v4565
    %5426 = vmatpush1.msra.mxu0 %v4564
    %5427 = vmatprep.subr.mxu0 %v4577
    %5428 = vmatpush1.msra.mxu0 %v4576
    %5429 = vmatprep.subr.mxu0 %v4589
    %5430 = vmatpush1.msra.mxu0 %v4588
    %5431 = vmatprep.subr.mxu0 %v4601
    %5432 = vmatpush1.msra.mxu0 %v4600
    %5433 = vmatprep.subr.mxu0 %v4613
    %5434 = vmatpush1.msra.mxu0 %v4612
    %5435 = vmatprep.subr.mxu0 %v4625
    %5436 = vmatpush1.msra.mxu0 %v4624
    %5437 = vmatprep.subr.mxu0 %v4637
    %5438 = vmatpush1.msra.mxu0 %v4636
    %5439 = vmatprep.subr.mxu0 %v4649
    %5440 = vmatpush1.msra.mxu0 %v4648
    %5441 = vmatprep.subr.mxu0 0.0
    %5442 = vmatpush1.msra.mxu0 0.0
    %5443 = vmatprep.subr.mxu0 0.0
    %5444 = vmatpush1.msra.mxu0 0.0
    %5445 = vmatprep.subr.mxu0 0.0
    %5446 = vmatpush1.msra.mxu0 0.0
    %5447 = vmatprep.subr.mxu0 0.0
    %5448 = vmatpush1.msra.mxu0 0.0
    %5449 = vmatprep.subr.mxu0 0.0
    %5450 = vmatpush1.msra.mxu0 0.0
    %5451 = vmatprep.subr.mxu0 0.0
    %5452 = vmatpush1.msra.mxu0 0.0
    %5453 = vmatprep.subr.mxu0 0.0
    %5454 = vmatpush1.msra.mxu0 0.0
    %5455 = vmatprep.subr.mxu0 0.0
    %5456 = vmatpush1.msra.mxu0 0.0
    %5457 = vmatprep.subr.mxu0 0.0
    %5458 = vmatpush1.msra.mxu0 0.0
    %5459 = vmatprep.subr.mxu0 0.0
    %5460 = vmatpush1.msra.mxu0 0.0
    %5461 = vmatprep.subr.mxu0 0.0
    %5462 = vmatpush1.msra.mxu0 0.0
    %5463 = vmatprep.subr.mxu0 0.0
    %5464 = vmatpush1.msra.mxu0 0.0
    %5465 = vmatprep.subr.mxu0 0.0
    %5466 = vmatpush1.msra.mxu0 0.0
    %5467 = vmatprep.subr.mxu0 0.0
    %5468 = vmatpush1.msra.mxu0 0.0
    %5469 = vmatprep.subr.mxu0 0.0
    %5470 = vmatpush1.msra.mxu0 0.0
    %5471 = vmatprep.subr.mxu0 0.0
    %5472 = vmatpush1.msra.mxu0 0.0
    %5473 = vmatprep.mubr.f32.mxu0 0.0
    %5474 = vmatmul.mubr.f32.gmra.mrb[0].mxu0 %v4072
    %v5475 = vpop.f32.mrb[0].mxu0
    %v5476 = vadd.f32 %v5399, %v5475
    %v5477 = vpop.f32.mrb[0].mxu0
    %v5478 = vadd.f32 %v5401, %v5477
    %5479 = vmatprep.mubr.f32.mxu0 0.0
    %5480 = vmatmul.mubr.f32.gmra.mrb[0].mxu0 %v4075
    %v5481 = vpop.f32.mrb[0].mxu0
    %v5482 = vadd.f32 %v5405, %v5481
    %v5483 = vpop.f32.mrb[0].mxu0
    %v5484 = vadd.f32 %v5407, %v5483
    %5485 = vdwg.mxu0
    %5486 = vmatprep.subr.mxu0 %v4087
    %5487 = vmatpush1.msra.mxu0 %v4086
    %5488 = vmatprep.subr.mxu0 %v4099
    %5489 = vmatpush1.msra.mxu0 %v4098
    %5490 = vmatprep.subr.mxu0 %v4111
    %5491 = vmatpush1.msra.mxu0 %v4110
    %5492 = vmatprep.subr.mxu0 %v4123
    %5493 = vmatpush1.msra.mxu0 %v4122
    %5494 = vmatprep.subr.mxu0 %v4135
    %5495 = vmatpush1.msra.mxu0 %v4134
    %5496 = vmatprep.subr.mxu0 %v4147
    %5497 = vmatpush1.msra.mxu0 %v4146
    %5498 = vmatprep.subr.mxu0 %v4159
    %5499 = vmatpush1.msra.mxu0 %v4158
    %5500 = vmatprep.subr.mxu0 %v4171
    %5501 = vmatpush1.msra.mxu0 %v4170
    %5502 = vmatprep.subr.mxu0 %v4183
    %5503 = vmatpush1.msra.mxu0 %v4182
    %5504 = vmatprep.subr.mxu0 %v4195
    %5505 = vmatpush1.msra.mxu0 %v4194
    %5506 = vmatprep.subr.mxu0 %v4207
    %5507 = vmatpush1.msra.mxu0 %v4206
    %5508 = vmatprep.subr.mxu0 %v4219
    %5509 = vmatpush1.msra.mxu0 %v4218
    %5510 = vmatprep.subr.mxu0 %v4231
    %5511 = vmatpush1.msra.mxu0 %v4230
    %5512 = vmatprep.subr.mxu0 %v4243
    %5513 = vmatpush1.msra.mxu0 %v4242
    %5514 = vmatprep.subr.mxu0 %v4255
    %5515 = vmatpush1.msra.mxu0 %v4254
    %5516 = vmatprep.subr.mxu0 %v4267
    %5517 = vmatpush1.msra.mxu0 %v4266
    %5518 = vmatprep.subr.mxu0 %v4279
    %5519 = vmatpush1.msra.mxu0 %v4278
    %5520 = vmatprep.subr.mxu0 %v4291
    %5521 = vmatpush1.msra.mxu0 %v4290
    %5522 = vmatprep.subr.mxu0 %v4303
    %5523 = vmatpush1.msra.mxu0 %v4302
    %5524 = vmatprep.subr.mxu0 %v4315
    %5525 = vmatpush1.msra.mxu0 %v4314
    %5526 = vmatprep.subr.mxu0 %v4327
    %5527 = vmatpush1.msra.mxu0 %v4326
    %5528 = vmatprep.subr.mxu0 %v4339
    %5529 = vmatpush1.msra.mxu0 %v4338
    %5530 = vmatprep.subr.mxu0 %v4351
    %5531 = vmatpush1.msra.mxu0 %v4350
    %5532 = vmatprep.subr.mxu0 %v4363
    %5533 = vmatpush1.msra.mxu0 %v4362
    %5534 = vmatprep.subr.mxu0 %v4375
    %5535 = vmatpush1.msra.mxu0 %v4374
    %5536 = vmatprep.subr.mxu0 %v4387
    %5537 = vmatpush1.msra.mxu0 %v4386
    %5538 = vmatprep.subr.mxu0 %v4399
    %5539 = vmatpush1.msra.mxu0 %v4398
    %5540 = vmatprep.subr.mxu0 %v4411
    %5541 = vmatpush1.msra.mxu0 %v4410
    %5542 = vmatprep.subr.mxu0 %v4423
    %5543 = vmatpush1.msra.mxu0 %v4422
    %5544 = vmatprep.subr.mxu0 %v4435
    %5545 = vmatpush1.msra.mxu0 %v4434
    %5546 = vmatprep.subr.mxu0 %v4447
    %5547 = vmatpush1.msra.mxu0 %v4446
    %5548 = vmatprep.subr.mxu0 %v4459
    %5549 = vmatpush1.msra.mxu0 %v4458
    %5550 = vmatprep.mubr.f32.mxu0 %v4071
    %5551 = vmatmul.mubr.f32.gmra.mrb[0].mxu0 %v4070
    %v5552 = vpop.f32.mrb[0].mxu0
    %v5553 = vadd.f32 %v4699, %v5552
    %v5554 = vpop.f32.mrb[0].mxu0
    %v5555 = vadd.f32 %v4703, %v5554
    %5556 = vmatprep.mubr.f32.mxu0 %v4074
    %5557 = vmatmul.mubr.f32.gmra.mrb[0].mxu0 %v4073
    %v5558 = vpop.f32.mrb[0].mxu0
    %v5559 = vadd.f32 %v4699, %v5558
    %v5560 = vpop.f32.mrb[0].mxu0
    %v5561 = vadd.f32 %v4703, %v5560
    %5562 = vdwg.mxu0
    %5563 = vmatprep.subr.mxu0 %v4471
    %5564 = vmatpush1.msra.mxu0 %v4470
    %5565 = vmatprep.subr.mxu0 %v4483
    %5566 = vmatpush1.msra.mxu0 %v4482
    %5567 = vmatprep.subr.mxu0 %v4495
    %5568 = vmatpush1.msra.mxu0 %v4494
    %5569 = vmatprep.subr.mxu0 %v4507
    %5570 = vmatpush1.msra.mxu0 %v4506
    %5571 = vmatprep.subr.mxu0 %v4519
    %5572 = vmatpush1.msra.mxu0 %v4518
    %5573 = vmatprep.subr.mxu0 %v4531
    %5574 = vmatpush1.msra.mxu0 %v4530
    %5575 = vmatprep.subr.mxu0 %v4543
    %5576 = vmatpush1.msra.mxu0 %v4542
    %5577 = vmatprep.subr.mxu0 %v4555
    %5578 = vmatpush1.msra.mxu0 %v4554
    %5579 = vmatprep.subr.mxu0 %v4567
    %5580 = vmatpush1.msra.mxu0 %v4566
    %5581 = vmatprep.subr.mxu0 %v4579
    %5582 = vmatpush1.msra.mxu0 %v4578
    %5583 = vmatprep.subr.mxu0 %v4591
    %5584 = vmatpush1.msra.mxu0 %v4590
    %5585 = vmatprep.subr.mxu0 %v4603
    %5586 = vmatpush1.msra.mxu0 %v4602
    %5587 = vmatprep.subr.mxu0 %v4615
    %5588 = vmatpush1.msra.mxu0 %v4614
    %5589 = vmatprep.subr.mxu0 %v4627
    %5590 = vmatpush1.msra.mxu0 %v4626
    %5591 = vmatprep.subr.mxu0 %v4639
    %5592 = vmatpush1.msra.mxu0 %v4638
    %5593 = vmatprep.subr.mxu0 %v4651
    %5594 = vmatpush1.msra.mxu0 %v4650
    %5595 = vmatprep.subr.mxu0 0.0
    %5596 = vmatpush1.msra.mxu0 0.0
    %5597 = vmatprep.subr.mxu0 0.0
    %5598 = vmatpush1.msra.mxu0 0.0
    %5599 = vmatprep.subr.mxu0 0.0
    %5600 = vmatpush1.msra.mxu0 0.0
    %5601 = vmatprep.subr.mxu0 0.0
    %5602 = vmatpush1.msra.mxu0 0.0
    %5603 = vmatprep.subr.mxu0 0.0
    %5604 = vmatpush1.msra.mxu0 0.0
    %5605 = vmatprep.subr.mxu0 0.0
    %5606 = vmatpush1.msra.mxu0 0.0
    %5607 = vmatprep.subr.mxu0 0.0
    %5608 = vmatpush1.msra.mxu0 0.0
    %5609 = vmatprep.subr.mxu0 0.0
    %5610 = vmatpush1.msra.mxu0 0.0
    %5611 = vmatprep.subr.mxu0 0.0
    %5612 = vmatpush1.msra.mxu0 0.0
    %5613 = vmatprep.subr.mxu0 0.0
    %5614 = vmatpush1.msra.mxu0 0.0
    %5615 = vmatprep.subr.mxu0 0.0
    %5616 = vmatpush1.msra.mxu0 0.0
    %5617 = vmatprep.subr.mxu0 0.0
    %5618 = vmatpush1.msra.mxu0 0.0
    %5619 = vmatprep.subr.mxu0 0.0
    %5620 = vmatpush1.msra.mxu0 0.0
    %5621 = vmatprep.subr.mxu0 0.0
    %5622 = vmatpush1.msra.mxu0 0.0
    %5623 = vmatprep.subr.mxu0 0.0
    %5624 = vmatpush1.msra.mxu0 0.0
    %5625 = vmatprep.subr.mxu0 0.0
    %5626 = vmatpush1.msra.mxu0 0.0
    %5627 = vmatprep.mubr.f32.mxu0 0.0
    %5628 = vmatmul.mubr.f32.gmra.mrb[0].mxu0 %v4072
    %v5629 = vpop.f32.mrb[0].mxu0
    %v5630 = vadd.f32 %v5553, %v5629
    %v5631 = vpop.f32.mrb[0].mxu0
    %v5632 = vadd.f32 %v5555, %v5631
    %5633 = vmatprep.mubr.f32.mxu0 0.0
    %5634 = vmatmul.mubr.f32.gmra.mrb[0].mxu0 %v4075
    %v5635 = vpop.f32.mrb[0].mxu0
    %v5636 = vadd.f32 %v5559, %v5635
    %v5637 = vpop.f32.mrb[0].mxu0
    %v5638 = vadd.f32 %v5561, %v5637
    %5639 = vdwg.mxu0
    %v5640 = vmax.f32 %v4860, 0.0
    %v5641 = vmax.f32 %v4862, 0.0
    %v5642 = vmax.f32 %v5014, 0.0
    %v5643 = vmax.f32 %v5016, 0.0
    %v5644 = vmax.f32 %v5168, 0.0
    %v5645 = vmax.f32 %v5170, 0.0
    %v5646 = vmax.f32 %v5322, 0.0
    %v5647 = vmax.f32 %v5324, 0.0
    %v5648 = vmax.f32 %v5476, 0.0
    %v5649 = vmax.f32 %v5478, 0.0
    %v5650 = vmax.f32 %v5630, 0.0
    %v5651 = vmax.f32 %v5632, 0.0
    %v5652 = vmax.f32 %v4866, 0.0
    %v5653 = vmax.f32 %v4868, 0.0
    %v5654 = vmax.f32 %v5020, 0.0
    %v5655 = vmax.f32 %v5022, 0.0
    %v5656 = vmax.f32 %v5174, 0.0
    %v5657 = vmax.f32 %v5176, 0.0
    %v5658 = vmax.f32 %v5328, 0.0
    %v5659 = vmax.f32 %v5330, 0.0
    %v5660 = vmax.f32 %v5482, 0.0
    %v5661 = vmax.f32 %v5484, 0.0
    %v5662 = vmax.f32 %v5636, 0.0
    %v5663 = vmax.f32 %v5638, 0.0
    %v5664 = vld [vmem:[#allocation21] sm:$0xff]
    %v5665 = vld [vmem:[#allocation21 + $0x8] sm:$0xff]
    %v5666 = vld [vmem:[#allocation21 + $0x10] sm:$0xff]
    %v5667 = vld [vmem:[#allocation21 + $0x18] sm:$0xff]
    %v5668 = vld [vmem:[#allocation21 + $0x20] sm:$0xff]
    %v5669 = vld [vmem:[#allocation21 + $0x28] sm:$0xff]
    %v5670 = vld [vmem:[#allocation21 + $0x30] sm:$0xff]
    %v5671 = vld [vmem:[#allocation21 + $0x38] sm:$0xff]
    %v5672 = vld [vmem:[#allocation21 + $0x40] sm:$0xff]
    %v5673 = vld [vmem:[#allocation21 + $0x48] sm:$0xff]
    %v5674 = vld [vmem:[#allocation21 + $0x50] sm:$0xff]
    %v5675 = vld [vmem:[#allocation21 + $0x58] sm:$0xff]
    %v5676 = vld [vmem:[#allocation21 + $0x60] sm:$0xff]
    %v5677 = vld [vmem:[#allocation21 + $0x68] sm:$0xff]
    %v5678 = vld [vmem:[#allocation21 + $0x70] sm:$0xff]
    %v5679 = vld [vmem:[#allocation21 + $0x78] sm:$0xff]
    %v5680 = vld [vmem:[#allocation21 + $0x80] sm:$0xff]
    %v5681 = vld [vmem:[#allocation21 + $0x88] sm:$0xff]
    %v5682 = vld [vmem:[#allocation21 + $0x90] sm:$0xff]
    %v5683 = vld [vmem:[#allocation21 + $0x98] sm:$0xff]
    %v5684 = vld [vmem:[#allocation21 + $0xa0] sm:$0xff]
    %v5685 = vld [vmem:[#allocation21 + $0xa8] sm:$0xff]
    %v5686 = vld [vmem:[#allocation21 + $0xb0] sm:$0xff]
    %v5687 = vld [vmem:[#allocation21 + $0xb8] sm:$0xff]
    %v5688 = vld [vmem:[#allocation21 + $0xc0] sm:$0xff]
    %v5689 = vld [vmem:[#allocation21 + $0xc8] sm:$0xff]
    %v5690 = vld [vmem:[#allocation21 + $0xd0] sm:$0xff]
    %v5691 = vld [vmem:[#allocation21 + $0xd8] sm:$0xff]
    %v5692 = vld [vmem:[#allocation21 + $0xe0] sm:$0xff]
    %v5693 = vld [vmem:[#allocation21 + $0xe8] sm:$0xff]
    %v5694 = vld [vmem:[#allocation21 + $0xf0] sm:$0xff]
    %v5695 = vld [vmem:[#allocation21 + $0xf8] sm:$0xff]
    %v5696 = vld [vmem:[#allocation21 + $0x100] sm:$0xff]
    %v5697 = vld [vmem:[#allocation21 + $0x108] sm:$0xff]
    %v5698 = vld [vmem:[#allocation21 + $0x110] sm:$0xff]
    %v5699 = vld [vmem:[#allocation21 + $0x118] sm:$0xff]
    %v5700 = vld [vmem:[#allocation21 + $0x120] sm:$0xff]
    %v5701 = vld [vmem:[#allocation21 + $0x128] sm:$0xff]
    %v5702 = vld [vmem:[#allocation21 + $0x130] sm:$0xff]
    %v5703 = vld [vmem:[#allocation21 + $0x138] sm:$0xff]
    %v5704 = vld [vmem:[#allocation21 + $0x140] sm:$0xff]
    %v5705 = vld [vmem:[#allocation21 + $0x148] sm:$0xff]
    %v5706 = vld [vmem:[#allocation21 + $0x150] sm:$0xff]
    %v5707 = vld [vmem:[#allocation21 + $0x158] sm:$0xff]
    %v5708 = vld [vmem:[#allocation21 + $0x160] sm:$0xff]
    %v5709 = vld [vmem:[#allocation21 + $0x168] sm:$0xff]
    %v5710 = vld [vmem:[#allocation21 + $0x170] sm:$0xff]
    %v5711 = vld [vmem:[#allocation21 + $0x178] sm:$0xff]
    %v5712 = vld [vmem:[#allocation21 + $0x180] sm:$0xff]
    %v5713 = vld [vmem:[#allocation21 + $0x188] sm:$0xff]
    %v5714 = vld [vmem:[#allocation21 + $0x190] sm:$0xff]
    %v5715 = vld [vmem:[#allocation21 + $0x198] sm:$0xff]
    %v5716 = vld [vmem:[#allocation21 + $0x1a0] sm:$0xff]
    %v5717 = vld [vmem:[#allocation21 + $0x1a8] sm:$0xff]
    %v5718 = vld [vmem:[#allocation21 + $0x1b0] sm:$0xff]
    %v5719 = vld [vmem:[#allocation21 + $0x1b8] sm:$0xff]
    %v5720 = vld [vmem:[#allocation21 + $0x1c0] sm:$0xff]
    %v5721 = vld [vmem:[#allocation21 + $0x1c8] sm:$0xff]
    %v5722 = vld [vmem:[#allocation21 + $0x1d0] sm:$0xff]
    %v5723 = vld [vmem:[#allocation21 + $0x1d8] sm:$0xff]
    %v5724 = vld [vmem:[#allocation21 + $0x1e0] sm:$0xff]
    %v5725 = vld [vmem:[#allocation21 + $0x1e8] sm:$0xff]
    %v5726 = vld [vmem:[#allocation21 + $0x1f0] sm:$0xff]
    %v5727 = vld [vmem:[#allocation21 + $0x1f8] sm:$0xff]
    %v5728 = vld [vmem:[#allocation21 + $0x200] sm:$0xff]
    %v5729 = vld [vmem:[#allocation21 + $0x208] sm:$0xff]
    %v5730 = vld [vmem:[#allocation21 + $0x210] sm:$0xff]
    %v5731 = vld [vmem:[#allocation21 + $0x218] sm:$0xff]
    %v5732 = vld [vmem:[#allocation21 + $0x220] sm:$0xff]
    %v5733 = vld [vmem:[#allocation21 + $0x228] sm:$0xff]
    %v5734 = vld [vmem:[#allocation21 + $0x230] sm:$0xff]
    %v5735 = vld [vmem:[#allocation21 + $0x238] sm:$0xff]
    %v5736 = vld [vmem:[#allocation21 + $0x240] sm:$0xff]
    %v5737 = vld [vmem:[#allocation21 + $0x248] sm:$0xff]
    %v5738 = vld [vmem:[#allocation21 + $0x250] sm:$0xff]
    %v5739 = vld [vmem:[#allocation21 + $0x258] sm:$0xff]
    %v5740 = vld [vmem:[#allocation21 + $0x260] sm:$0xff]
    %v5741 = vld [vmem:[#allocation21 + $0x268] sm:$0xff]
    %v5742 = vld [vmem:[#allocation21 + $0x270] sm:$0xff]
    %v5743 = vld [vmem:[#allocation21 + $0x278] sm:$0xff]
    %v5744 = vld [vmem:[#allocation21 + $0x280] sm:$0xff]
    %v5745 = vld [vmem:[#allocation21 + $0x288] sm:$0xff]
    %v5746 = vld [vmem:[#allocation21 + $0x290] sm:$0xff]
    %v5747 = vld [vmem:[#allocation21 + $0x298] sm:$0xff]
    %v5748 = vld [vmem:[#allocation21 + $0x2a0] sm:$0xff]
    %v5749 = vld [vmem:[#allocation21 + $0x2a8] sm:$0xff]
    %v5750 = vld [vmem:[#allocation21 + $0x2b0] sm:$0xff]
    %v5751 = vld [vmem:[#allocation21 + $0x2b8] sm:$0xff]
    %v5752 = vld [vmem:[#allocation21 + $0x2c0] sm:$0xff]
    %v5753 = vld [vmem:[#allocation21 + $0x2c8] sm:$0xff]
    %v5754 = vld [vmem:[#allocation21 + $0x2d0] sm:$0xff]
    %v5755 = vld [vmem:[#allocation21 + $0x2d8] sm:$0xff]
    %v5756 = vld [vmem:[#allocation21 + $0x2e0] sm:$0xff]
    %v5757 = vld [vmem:[#allocation21 + $0x2e8] sm:$0xff]
    %v5758 = vld [vmem:[#allocation21 + $0x2f0] sm:$0xff]
    %v5759 = vld [vmem:[#allocation21 + $0x2f8] sm:$0xff]
    %v5760 = vld [vmem:[#allocation21 + $0x300] sm:$0xff]
    %v5761 = vld [vmem:[#allocation21 + $0x308] sm:$0xff]
    %v5762 = vld [vmem:[#allocation21 + $0x310] sm:$0xff]
    %v5763 = vld [vmem:[#allocation21 + $0x318] sm:$0xff]
    %v5764 = vld [vmem:[#allocation21 + $0x320] sm:$0xff]
    %v5765 = vld [vmem:[#allocation21 + $0x328] sm:$0xff]
    %v5766 = vld [vmem:[#allocation21 + $0x330] sm:$0xff]
    %v5767 = vld [vmem:[#allocation21 + $0x338] sm:$0xff]
    %v5768 = vld [vmem:[#allocation21 + $0x340] sm:$0xff]
    %v5769 = vld [vmem:[#allocation21 + $0x348] sm:$0xff]
    %v5770 = vld [vmem:[#allocation21 + $0x350] sm:$0xff]
    %v5771 = vld [vmem:[#allocation21 + $0x358] sm:$0xff]
    %v5772 = vld [vmem:[#allocation21 + $0x360] sm:$0xff]
    %v5773 = vld [vmem:[#allocation21 + $0x368] sm:$0xff]
    %v5774 = vld [vmem:[#allocation21 + $0x370] sm:$0xff]
    %v5775 = vld [vmem:[#allocation21 + $0x378] sm:$0xff]
    %v5776 = vld [vmem:[#allocation21 + $0x380] sm:$0xff]
    %v5777 = vld [vmem:[#allocation21 + $0x388] sm:$0xff]
    %v5778 = vld [vmem:[#allocation21 + $0x390] sm:$0xff]
    %v5779 = vld [vmem:[#allocation21 + $0x398] sm:$0xff]
    %v5780 = vld [vmem:[#allocation21 + $0x3a0] sm:$0xff]
    %v5781 = vld [vmem:[#allocation21 + $0x3a8] sm:$0xff]
    %v5782 = vld [vmem:[#allocation21 + $0x3b0] sm:$0xff]
    %v5783 = vld [vmem:[#allocation21 + $0x3b8] sm:$0xff]
    %v5784 = vld [vmem:[#allocation21 + $0x3c0] sm:$0xff]
    %v5785 = vld [vmem:[#allocation21 + $0x3c8] sm:$0xff]
    %v5786 = vld [vmem:[#allocation21 + $0x3d0] sm:$0xff]
    %v5787 = vld [vmem:[#allocation21 + $0x3d8] sm:$0xff]
    %v5788 = vld [vmem:[#allocation21 + $0x3e0] sm:$0xff]
    %v5789 = vld [vmem:[#allocation21 + $0x3e8] sm:$0xff]
    %v5790 = vld [vmem:[#allocation21 + $0x3f0] sm:$0xff]
    %v5791 = vld [vmem:[#allocation21 + $0x3f8] sm:$0xff]
    %v5792 = vld [vmem:[#allocation21 + $0x400] sm:$0xff]
    %v5793 = vld [vmem:[#allocation21 + $0x408] sm:$0xff]
    %v5794 = vld [vmem:[#allocation21 + $0x410] sm:$0xff]
    %v5795 = vld [vmem:[#allocation21 + $0x418] sm:$0xff]
    %v5796 = vld [vmem:[#allocation21 + $0x420] sm:$0xff]
    %v5797 = vld [vmem:[#allocation21 + $0x428] sm:$0xff]
    %v5798 = vld [vmem:[#allocation21 + $0x430] sm:$0xff]
    %v5799 = vld [vmem:[#allocation21 + $0x438] sm:$0xff]
    %v5800 = vld [vmem:[#allocation21 + $0x440] sm:$0xff]
    %v5801 = vld [vmem:[#allocation21 + $0x448] sm:$0xff]
    %v5802 = vld [vmem:[#allocation21 + $0x450] sm:$0xff]
    %v5803 = vld [vmem:[#allocation21 + $0x458] sm:$0xff]
    %v5804 = vld [vmem:[#allocation21 + $0x460] sm:$0xff]
    %v5805 = vld [vmem:[#allocation21 + $0x468] sm:$0xff]
    %v5806 = vld [vmem:[#allocation21 + $0x470] sm:$0xff]
    %v5807 = vld [vmem:[#allocation21 + $0x478] sm:$0xff]
    %v5808 = vld [vmem:[#allocation21 + $0x480] sm:$0xff]
    %v5809 = vld [vmem:[#allocation21 + $0x488] sm:$0xff]
    %v5810 = vld [vmem:[#allocation21 + $0x490] sm:$0xff]
    %v5811 = vld [vmem:[#allocation21 + $0x498] sm:$0xff]
    %v5812 = vld [vmem:[#allocation21 + $0x4a0] sm:$0xff]
    %v5813 = vld [vmem:[#allocation21 + $0x4a8] sm:$0xff]
    %v5814 = vld [vmem:[#allocation21 + $0x4b0] sm:$0xff]
    %v5815 = vld [vmem:[#allocation21 + $0x4b8] sm:$0xff]
    %v5816 = vld [vmem:[#allocation21 + $0x4c0] sm:$0xff]
    %v5817 = vld [vmem:[#allocation21 + $0x4c8] sm:$0xff]
    %v5818 = vld [vmem:[#allocation21 + $0x4d0] sm:$0xff]
    %v5819 = vld [vmem:[#allocation21 + $0x4d8] sm:$0xff]
    %v5820 = vld [vmem:[#allocation21 + $0x4e0] sm:$0xff]
    %v5821 = vld [vmem:[#allocation21 + $0x4e8] sm:$0xff]
    %v5822 = vld [vmem:[#allocation21 + $0x4f0] sm:$0xff]
    %v5823 = vld [vmem:[#allocation21 + $0x4f8] sm:$0xff]
    %v5824 = vld [vmem:[#allocation21 + $0x500] sm:$0xff]
    %v5825 = vld [vmem:[#allocation21 + $0x508] sm:$0xff]
    %v5826 = vld [vmem:[#allocation21 + $0x510] sm:$0xff]
    %v5827 = vld [vmem:[#allocation21 + $0x518] sm:$0xff]
    %v5828 = vld [vmem:[#allocation21 + $0x520] sm:$0xff]
    %v5829 = vld [vmem:[#allocation21 + $0x528] sm:$0xff]
    %v5830 = vld [vmem:[#allocation21 + $0x530] sm:$0xff]
    %v5831 = vld [vmem:[#allocation21 + $0x538] sm:$0xff]
    %v5832 = vld [vmem:[#allocation21 + $0x540] sm:$0xff]
    %v5833 = vld [vmem:[#allocation21 + $0x548] sm:$0xff]
    %v5834 = vld [vmem:[#allocation21 + $0x550] sm:$0xff]
    %v5835 = vld [vmem:[#allocation21 + $0x558] sm:$0xff]
    %v5836 = vld [vmem:[#allocation21 + $0x560] sm:$0xff]
    %v5837 = vld [vmem:[#allocation21 + $0x568] sm:$0xff]
    %v5838 = vld [vmem:[#allocation21 + $0x570] sm:$0xff]
    %v5839 = vld [vmem:[#allocation21 + $0x578] sm:$0xff]
    %v5840 = vld [vmem:[#allocation21 + $0x580] sm:$0xff]
    %v5841 = vld [vmem:[#allocation21 + $0x588] sm:$0xff]
    %v5842 = vld [vmem:[#allocation21 + $0x590] sm:$0xff]
    %v5843 = vld [vmem:[#allocation21 + $0x598] sm:$0xff]
    %v5844 = vld [vmem:[#allocation21 + $0x5a0] sm:$0xff]
    %v5845 = vld [vmem:[#allocation21 + $0x5a8] sm:$0xff]
    %v5846 = vld [vmem:[#allocation21 + $0x5b0] sm:$0xff]
    %v5847 = vld [vmem:[#allocation21 + $0x5b8] sm:$0xff]
    %v5848 = vld [vmem:[#allocation21 + $0x5c0] sm:$0xff]
    %v5849 = vld [vmem:[#allocation21 + $0x5c8] sm:$0xff]
    %v5850 = vld [vmem:[#allocation21 + $0x5d0] sm:$0xff]
    %v5851 = vld [vmem:[#allocation21 + $0x5d8] sm:$0xff]
    %v5852 = vld [vmem:[#allocation21 + $0x5e0] sm:$0xff]
    %v5853 = vld [vmem:[#allocation21 + $0x5e8] sm:$0xff]
    %v5854 = vld [vmem:[#allocation21 + $0x5f0] sm:$0xff]
    %v5855 = vld [vmem:[#allocation21 + $0x5f8] sm:$0xff]
    %v5856 = vld [vmem:[#allocation21 + $0x600] sm:$0xff]
    %v5857 = vld [vmem:[#allocation21 + $0x608] sm:$0xff]
    %v5858 = vld [vmem:[#allocation21 + $0x610] sm:$0xff]
    %v5859 = vld [vmem:[#allocation21 + $0x618] sm:$0xff]
    %v5860 = vld [vmem:[#allocation21 + $0x620] sm:$0xff]
    %v5861 = vld [vmem:[#allocation21 + $0x628] sm:$0xff]
    %v5862 = vld [vmem:[#allocation21 + $0x630] sm:$0xff]
    %v5863 = vld [vmem:[#allocation21 + $0x638] sm:$0xff]
    %v5864 = vld [vmem:[#allocation21 + $0x640] sm:$0xff]
    %v5865 = vld [vmem:[#allocation21 + $0x648] sm:$0xff]
    %v5866 = vld [vmem:[#allocation21 + $0x650] sm:$0xff]
    %v5867 = vld [vmem:[#allocation21 + $0x658] sm:$0xff]
    %v5868 = vld [vmem:[#allocation21 + $0x660] sm:$0xff]
    %v5869 = vld [vmem:[#allocation21 + $0x668] sm:$0xff]
    %v5870 = vld [vmem:[#allocation21 + $0x670] sm:$0xff]
    %v5871 = vld [vmem:[#allocation21 + $0x678] sm:$0xff]
    %v5872 = vld [vmem:[#allocation21 + $0x680] sm:$0xff]
    %v5873 = vld [vmem:[#allocation21 + $0x688] sm:$0xff]
    %v5874 = vld [vmem:[#allocation21 + $0x690] sm:$0xff]
    %v5875 = vld [vmem:[#allocation21 + $0x698] sm:$0xff]
    %v5876 = vld [vmem:[#allocation21 + $0x6a0] sm:$0xff]
    %v5877 = vld [vmem:[#allocation21 + $0x6a8] sm:$0xff]
    %v5878 = vld [vmem:[#allocation21 + $0x6b0] sm:$0xff]
    %v5879 = vld [vmem:[#allocation21 + $0x6b8] sm:$0xff]
    %v5880 = vld [vmem:[#allocation21 + $0x6c0] sm:$0xff]
    %v5881 = vld [vmem:[#allocation21 + $0x6c8] sm:$0xff]
    %v5882 = vld [vmem:[#allocation21 + $0x6d0] sm:$0xff]
    %v5883 = vld [vmem:[#allocation21 + $0x6d8] sm:$0xff]
    %v5884 = vld [vmem:[#allocation21 + $0x6e0] sm:$0xff]
    %v5885 = vld [vmem:[#allocation21 + $0x6e8] sm:$0xff]
    %v5886 = vld [vmem:[#allocation21 + $0x6f0] sm:$0xff]
    %v5887 = vld [vmem:[#allocation21 + $0x6f8] sm:$0xff]
    %v5888 = vld [vmem:[#allocation21 + $0x700] sm:$0xff]
    %v5889 = vld [vmem:[#allocation21 + $0x708] sm:$0xff]
    %v5890 = vld [vmem:[#allocation21 + $0x710] sm:$0xff]
    %v5891 = vld [vmem:[#allocation21 + $0x718] sm:$0xff]
    %v5892 = vld [vmem:[#allocation21 + $0x720] sm:$0xff]
    %v5893 = vld [vmem:[#allocation21 + $0x728] sm:$0xff]
    %v5894 = vld [vmem:[#allocation21 + $0x730] sm:$0xff]
    %v5895 = vld [vmem:[#allocation21 + $0x738] sm:$0xff]
    %v5896 = vld [vmem:[#allocation21 + $0x740] sm:$0xff]
    %v5897 = vld [vmem:[#allocation21 + $0x748] sm:$0xff]
    %v5898 = vld [vmem:[#allocation21 + $0x750] sm:$0xff]
    %v5899 = vld [vmem:[#allocation21 + $0x758] sm:$0xff]
    %v5900 = vld [vmem:[#allocation21 + $0x760] sm:$0xff]
    %v5901 = vld [vmem:[#allocation21 + $0x768] sm:$0xff]
    %v5902 = vld [vmem:[#allocation21 + $0x770] sm:$0xff]
    %v5903 = vld [vmem:[#allocation21 + $0x778] sm:$0xff]
    %v5904 = vld [vmem:[#allocation21 + $0x780] sm:$0xff]
    %v5905 = vld [vmem:[#allocation21 + $0x788] sm:$0xff]
    %v5906 = vld [vmem:[#allocation21 + $0x790] sm:$0xff]
    %v5907 = vld [vmem:[#allocation21 + $0x798] sm:$0xff]
    %v5908 = vld [vmem:[#allocation21 + $0x7a0] sm:$0xff]
    %v5909 = vld [vmem:[#allocation21 + $0x7a8] sm:$0xff]
    %v5910 = vld [vmem:[#allocation21 + $0x7b0] sm:$0xff]
    %v5911 = vld [vmem:[#allocation21 + $0x7b8] sm:$0xff]
    %v5912 = vld [vmem:[#allocation21 + $0x7c0] sm:$0xff]
    %v5913 = vld [vmem:[#allocation21 + $0x7c8] sm:$0xff]
    %v5914 = vld [vmem:[#allocation21 + $0x7d0] sm:$0xff]
    %v5915 = vld [vmem:[#allocation21 + $0x7d8] sm:$0xff]
    %v5916 = vld [vmem:[#allocation21 + $0x7e0] sm:$0xff]
    %v5917 = vld [vmem:[#allocation21 + $0x7e8] sm:$0xff]
    %v5918 = vld [vmem:[#allocation21 + $0x7f0] sm:$0xff]
    %v5919 = vld [vmem:[#allocation21 + $0x7f8] sm:$0xff]
    %v5920 = vld [vmem:[#allocation21 + $0x800] sm:$0xff]
    %v5921 = vld [vmem:[#allocation21 + $0x808] sm:$0xff]
    %v5922 = vld [vmem:[#allocation21 + $0x810] sm:$0xff]
    %v5923 = vld [vmem:[#allocation21 + $0x818] sm:$0xff]
    %v5924 = vld [vmem:[#allocation21 + $0x820] sm:$0xff]
    %v5925 = vld [vmem:[#allocation21 + $0x828] sm:$0xff]
    %v5926 = vld [vmem:[#allocation21 + $0x830] sm:$0xff]
    %v5927 = vld [vmem:[#allocation21 + $0x838] sm:$0xff]
    %v5928 = vld [vmem:[#allocation21 + $0x840] sm:$0xff]
    %v5929 = vld [vmem:[#allocation21 + $0x848] sm:$0xff]
    %v5930 = vld [vmem:[#allocation21 + $0x850] sm:$0xff]
    %v5931 = vld [vmem:[#allocation21 + $0x858] sm:$0xff]
    %v5932 = vld [vmem:[#allocation21 + $0x860] sm:$0xff]
    %v5933 = vld [vmem:[#allocation21 + $0x868] sm:$0xff]
    %v5934 = vld [vmem:[#allocation21 + $0x870] sm:$0xff]
    %v5935 = vld [vmem:[#allocation21 + $0x878] sm:$0xff]
    %v5936 = vld [vmem:[#allocation21 + $0x880] sm:$0xff]
    %v5937 = vld [vmem:[#allocation21 + $0x888] sm:$0xff]
    %v5938 = vld [vmem:[#allocation21 + $0x890] sm:$0xff]
    %v5939 = vld [vmem:[#allocation21 + $0x898] sm:$0xff]
    %v5940 = vld [vmem:[#allocation21 + $0x8a0] sm:$0xff]
    %v5941 = vld [vmem:[#allocation21 + $0x8a8] sm:$0xff]
    %v5942 = vld [vmem:[#allocation21 + $0x8b0] sm:$0xff]
    %v5943 = vld [vmem:[#allocation21 + $0x8b8] sm:$0xff]
    %v5944 = vld [vmem:[#allocation21 + $0x8c0] sm:$0xff]
    %v5945 = vld [vmem:[#allocation21 + $0x8c8] sm:$0xff]
    %v5946 = vld [vmem:[#allocation21 + $0x8d0] sm:$0xff]
    %v5947 = vld [vmem:[#allocation21 + $0x8d8] sm:$0xff]
    %v5948 = vld [vmem:[#allocation21 + $0x8e0] sm:$0xff]
    %v5949 = vld [vmem:[#allocation21 + $0x8e8] sm:$0xff]
    %v5950 = vld [vmem:[#allocation21 + $0x8f0] sm:$0xff]
    %v5951 = vld [vmem:[#allocation21 + $0x8f8] sm:$0xff]
    %v5952 = vld [vmem:[#allocation21 + $0x900] sm:$0xff]
    %v5953 = vld [vmem:[#allocation21 + $0x908] sm:$0xff]
    %v5954 = vld [vmem:[#allocation21 + $0x910] sm:$0xff]
    %v5955 = vld [vmem:[#allocation21 + $0x918] sm:$0xff]
    %v5956 = vld [vmem:[#allocation21 + $0x920] sm:$0xff]
    %v5957 = vld [vmem:[#allocation21 + $0x928] sm:$0xff]
    %v5958 = vld [vmem:[#allocation21 + $0x930] sm:$0xff]
    %v5959 = vld [vmem:[#allocation21 + $0x938] sm:$0xff]
    %v5960 = vld [vmem:[#allocation21 + $0x940] sm:$0xff]
    %v5961 = vld [vmem:[#allocation21 + $0x948] sm:$0xff]
    %v5962 = vld [vmem:[#allocation21 + $0x950] sm:$0xff]
    %v5963 = vld [vmem:[#allocation21 + $0x958] sm:$0xff]
    %v5964 = vld [vmem:[#allocation21 + $0x960] sm:$0xff]
    %v5965 = vld [vmem:[#allocation21 + $0x968] sm:$0xff]
    %v5966 = vld [vmem:[#allocation21 + $0x970] sm:$0xff]
    %v5967 = vld [vmem:[#allocation21 + $0x978] sm:$0xff]
    %v5968 = vld [vmem:[#allocation21 + $0x980] sm:$0xff]
    %v5969 = vld [vmem:[#allocation21 + $0x988] sm:$0xff]
    %v5970 = vld [vmem:[#allocation21 + $0x990] sm:$0xff]
    %v5971 = vld [vmem:[#allocation21 + $0x998] sm:$0xff]
    %v5972 = vld [vmem:[#allocation21 + $0x9a0] sm:$0xff]
    %v5973 = vld [vmem:[#allocation21 + $0x9a8] sm:$0xff]
    %v5974 = vld [vmem:[#allocation21 + $0x9b0] sm:$0xff]
    %v5975 = vld [vmem:[#allocation21 + $0x9b8] sm:$0xff]
    %v5976 = vld [vmem:[#allocation21 + $0x9c0] sm:$0xff]
    %v5977 = vld [vmem:[#allocation21 + $0x9c8] sm:$0xff]
    %v5978 = vld [vmem:[#allocation21 + $0x9d0] sm:$0xff]
    %v5979 = vld [vmem:[#allocation21 + $0x9d8] sm:$0xff]
    %v5980 = vld [vmem:[#allocation21 + $0x9e0] sm:$0xff]
    %v5981 = vld [vmem:[#allocation21 + $0x9e8] sm:$0xff]
    %v5982 = vld [vmem:[#allocation21 + $0x9f0] sm:$0xff]
    %v5983 = vld [vmem:[#allocation21 + $0x9f8] sm:$0xff]
    %v5984 = vld [vmem:[#allocation21 + $0xa00] sm:$0xff]
    %v5985 = vld [vmem:[#allocation21 + $0xa08] sm:$0xff]
    %v5986 = vld [vmem:[#allocation21 + $0xa10] sm:$0xff]
    %v5987 = vld [vmem:[#allocation21 + $0xa18] sm:$0xff]
    %v5988 = vld [vmem:[#allocation21 + $0xa20] sm:$0xff]
    %v5989 = vld [vmem:[#allocation21 + $0xa28] sm:$0xff]
    %v5990 = vld [vmem:[#allocation21 + $0xa30] sm:$0xff]
    %v5991 = vld [vmem:[#allocation21 + $0xa38] sm:$0xff]
    %v5992 = vld [vmem:[#allocation21 + $0xa40] sm:$0xff]
    %v5993 = vld [vmem:[#allocation21 + $0xa48] sm:$0xff]
    %v5994 = vld [vmem:[#allocation21 + $0xa50] sm:$0xff]
    %v5995 = vld [vmem:[#allocation21 + $0xa58] sm:$0xff]
    %v5996 = vld [vmem:[#allocation21 + $0xa60] sm:$0xff]
    %v5997 = vld [vmem:[#allocation21 + $0xa68] sm:$0xff]
    %v5998 = vld [vmem:[#allocation21 + $0xa70] sm:$0xff]
    %v5999 = vld [vmem:[#allocation21 + $0xa78] sm:$0xff]
    %v6000 = vld [vmem:[#allocation21 + $0xa80] sm:$0xff]
    %v6001 = vld [vmem:[#allocation21 + $0xa88] sm:$0xff]
    %v6002 = vld [vmem:[#allocation21 + $0xa90] sm:$0xff]
    %v6003 = vld [vmem:[#allocation21 + $0xa98] sm:$0xff]
    %v6004 = vld [vmem:[#allocation21 + $0xaa0] sm:$0xff]
    %v6005 = vld [vmem:[#allocation21 + $0xaa8] sm:$0xff]
    %v6006 = vld [vmem:[#allocation21 + $0xab0] sm:$0xff]
    %v6007 = vld [vmem:[#allocation21 + $0xab8] sm:$0xff]
    %v6008 = vld [vmem:[#allocation21 + $0xac0] sm:$0xff]
    %v6009 = vld [vmem:[#allocation21 + $0xac8] sm:$0xff]
    %v6010 = vld [vmem:[#allocation21 + $0xad0] sm:$0xff]
    %v6011 = vld [vmem:[#allocation21 + $0xad8] sm:$0xff]
    %v6012 = vld [vmem:[#allocation21 + $0xae0] sm:$0xff]
    %v6013 = vld [vmem:[#allocation21 + $0xae8] sm:$0xff]
    %v6014 = vld [vmem:[#allocation21 + $0xaf0] sm:$0xff]
    %v6015 = vld [vmem:[#allocation21 + $0xaf8] sm:$0xff]
    %v6016 = vld [vmem:[#allocation21 + $0xb00] sm:$0xff]
    %v6017 = vld [vmem:[#allocation21 + $0xb08] sm:$0xff]
    %v6018 = vld [vmem:[#allocation21 + $0xb10] sm:$0xff]
    %v6019 = vld [vmem:[#allocation21 + $0xb18] sm:$0xff]
    %v6020 = vld [vmem:[#allocation21 + $0xb20] sm:$0xff]
    %v6021 = vld [vmem:[#allocation21 + $0xb28] sm:$0xff]
    %v6022 = vld [vmem:[#allocation21 + $0xb30] sm:$0xff]
    %v6023 = vld [vmem:[#allocation21 + $0xb38] sm:$0xff]
    %v6024 = vld [vmem:[#allocation21 + $0xb40] sm:$0xff]
    %v6025 = vld [vmem:[#allocation21 + $0xb48] sm:$0xff]
    %v6026 = vld [vmem:[#allocation21 + $0xb50] sm:$0xff]
    %v6027 = vld [vmem:[#allocation21 + $0xb58] sm:$0xff]
    %v6028 = vld [vmem:[#allocation21 + $0xb60] sm:$0xff]
    %v6029 = vld [vmem:[#allocation21 + $0xb68] sm:$0xff]
    %v6030 = vld [vmem:[#allocation21 + $0xb70] sm:$0xff]
    %v6031 = vld [vmem:[#allocation21 + $0xb78] sm:$0xff]
    %v6032 = vld [vmem:[#allocation21 + $0xb80] sm:$0xff]
    %v6033 = vld [vmem:[#allocation21 + $0xb88] sm:$0xff]
    %v6034 = vld [vmem:[#allocation21 + $0xb90] sm:$0xff]
    %v6035 = vld [vmem:[#allocation21 + $0xb98] sm:$0xff]
    %v6036 = vld [vmem:[#allocation21 + $0xba0] sm:$0xff]
    %v6037 = vld [vmem:[#allocation21 + $0xba8] sm:$0xff]
    %v6038 = vld [vmem:[#allocation21 + $0xbb0] sm:$0xff]
    %v6039 = vld [vmem:[#allocation21 + $0xbb8] sm:$0xff]
    %v6040 = vld [vmem:[#allocation21 + $0xbc0] sm:$0xff]
    %v6041 = vld [vmem:[#allocation21 + $0xbc8] sm:$0xff]
    %v6042 = vld [vmem:[#allocation21 + $0xbd0] sm:$0xff]
    %v6043 = vld [vmem:[#allocation21 + $0xbd8] sm:$0xff]
    %v6044 = vld [vmem:[#allocation21 + $0xbe0] sm:$0xff]
    %v6045 = vld [vmem:[#allocation21 + $0xbe8] sm:$0xff]
    %v6046 = vld [vmem:[#allocation21 + $0xbf0] sm:$0xff]
    %v6047 = vld [vmem:[#allocation21 + $0xbf8] sm:$0xff]
    %v6048 = vld [vmem:[#allocation21 + $0xc00] sm:$0xff]
    %v6049 = vld [vmem:[#allocation21 + $0xc08] sm:$0xff]
    %v6050 = vld [vmem:[#allocation21 + $0xc10] sm:$0xff]
    %v6051 = vld [vmem:[#allocation21 + $0xc18] sm:$0xff]
    %v6052 = vld [vmem:[#allocation21 + $0xc20] sm:$0xff]
    %v6053 = vld [vmem:[#allocation21 + $0xc28] sm:$0xff]
    %v6054 = vld [vmem:[#allocation21 + $0xc30] sm:$0xff]
    %v6055 = vld [vmem:[#allocation21 + $0xc38] sm:$0xff]
    %v6056 = vld [vmem:[#allocation21 + $0xc40] sm:$0xff]
    %v6057 = vld [vmem:[#allocation21 + $0xc48] sm:$0xff]
    %v6058 = vld [vmem:[#allocation21 + $0xc50] sm:$0xff]
    %v6059 = vld [vmem:[#allocation21 + $0xc58] sm:$0xff]
    %v6060 = vld [vmem:[#allocation21 + $0xc60] sm:$0xff]
    %v6061 = vld [vmem:[#allocation21 + $0xc68] sm:$0xff]
    %v6062 = vld [vmem:[#allocation21 + $0xc70] sm:$0xff]
    %v6063 = vld [vmem:[#allocation21 + $0xc78] sm:$0xff]
    %v6064 = vld [vmem:[#allocation21 + $0xc80] sm:$0xff]
    %v6065 = vld [vmem:[#allocation21 + $0xc88] sm:$0xff]
    %v6066 = vld [vmem:[#allocation21 + $0xc90] sm:$0xff]
    %v6067 = vld [vmem:[#allocation21 + $0xc98] sm:$0xff]
    %v6068 = vld [vmem:[#allocation21 + $0xca0] sm:$0xff]
    %v6069 = vld [vmem:[#allocation21 + $0xca8] sm:$0xff]
    %v6070 = vld [vmem:[#allocation21 + $0xcb0] sm:$0xff]
    %v6071 = vld [vmem:[#allocation21 + $0xcb8] sm:$0xff]
    %v6072 = vld [vmem:[#allocation21 + $0xcc0] sm:$0xff]
    %v6073 = vld [vmem:[#allocation21 + $0xcc8] sm:$0xff]
    %v6074 = vld [vmem:[#allocation21 + $0xcd0] sm:$0xff]
    %v6075 = vld [vmem:[#allocation21 + $0xcd8] sm:$0xff]
    %v6076 = vld [vmem:[#allocation21 + $0xce0] sm:$0xff]
    %v6077 = vld [vmem:[#allocation21 + $0xce8] sm:$0xff]
    %v6078 = vld [vmem:[#allocation21 + $0xcf0] sm:$0xff]
    %v6079 = vld [vmem:[#allocation21 + $0xcf8] sm:$0xff]
    %v6080 = vld [vmem:[#allocation21 + $0xd00] sm:$0xff]
    %v6081 = vld [vmem:[#allocation21 + $0xd08] sm:$0xff]
    %v6082 = vld [vmem:[#allocation21 + $0xd10] sm:$0xff]
    %v6083 = vld [vmem:[#allocation21 + $0xd18] sm:$0xff]
    %v6084 = vld [vmem:[#allocation21 + $0xd20] sm:$0xff]
    %v6085 = vld [vmem:[#allocation21 + $0xd28] sm:$0xff]
    %v6086 = vld [vmem:[#allocation21 + $0xd30] sm:$0xff]
    %v6087 = vld [vmem:[#allocation21 + $0xd38] sm:$0xff]
    %v6088 = vld [vmem:[#allocation21 + $0xd40] sm:$0xff]
    %v6089 = vld [vmem:[#allocation21 + $0xd48] sm:$0xff]
    %v6090 = vld [vmem:[#allocation21 + $0xd50] sm:$0xff]
    %v6091 = vld [vmem:[#allocation21 + $0xd58] sm:$0xff]
    %v6092 = vld [vmem:[#allocation21 + $0xd60] sm:$0xff]
    %v6093 = vld [vmem:[#allocation21 + $0xd68] sm:$0xff]
    %v6094 = vld [vmem:[#allocation21 + $0xd70] sm:$0xff]
    %v6095 = vld [vmem:[#allocation21 + $0xd78] sm:$0xff]
    %v6096 = vld [vmem:[#allocation21 + $0xd80] sm:$0xff]
    %v6097 = vld [vmem:[#allocation21 + $0xd88] sm:$0xff]
    %v6098 = vld [vmem:[#allocation21 + $0xd90] sm:$0xff]
    %v6099 = vld [vmem:[#allocation21 + $0xd98] sm:$0xff]
    %v6100 = vld [vmem:[#allocation21 + $0xda0] sm:$0xff]
    %v6101 = vld [vmem:[#allocation21 + $0xda8] sm:$0xff]
    %v6102 = vld [vmem:[#allocation21 + $0xdb0] sm:$0xff]
    %v6103 = vld [vmem:[#allocation21 + $0xdb8] sm:$0xff]
    %v6104 = vld [vmem:[#allocation21 + $0xdc0] sm:$0xff]
    %v6105 = vld [vmem:[#allocation21 + $0xdc8] sm:$0xff]
    %v6106 = vld [vmem:[#allocation21 + $0xdd0] sm:$0xff]
    %v6107 = vld [vmem:[#allocation21 + $0xdd8] sm:$0xff]
    %v6108 = vld [vmem:[#allocation21 + $0xde0] sm:$0xff]
    %v6109 = vld [vmem:[#allocation21 + $0xde8] sm:$0xff]
    %v6110 = vld [vmem:[#allocation21 + $0xdf0] sm:$0xff]
    %v6111 = vld [vmem:[#allocation21 + $0xdf8] sm:$0xff]
    %v6112 = vld [vmem:[#allocation21 + $0xe00] sm:$0xff]
    %v6113 = vld [vmem:[#allocation21 + $0xe08] sm:$0xff]
    %v6114 = vld [vmem:[#allocation21 + $0xe10] sm:$0xff]
    %v6115 = vld [vmem:[#allocation21 + $0xe18] sm:$0xff]
    %v6116 = vld [vmem:[#allocation21 + $0xe20] sm:$0xff]
    %v6117 = vld [vmem:[#allocation21 + $0xe28] sm:$0xff]
    %v6118 = vld [vmem:[#allocation21 + $0xe30] sm:$0xff]
    %v6119 = vld [vmem:[#allocation21 + $0xe38] sm:$0xff]
    %v6120 = vld [vmem:[#allocation21 + $0xe40] sm:$0xff]
    %v6121 = vld [vmem:[#allocation21 + $0xe48] sm:$0xff]
    %v6122 = vld [vmem:[#allocation21 + $0xe50] sm:$0xff]
    %v6123 = vld [vmem:[#allocation21 + $0xe58] sm:$0xff]
    %v6124 = vld [vmem:[#allocation21 + $0xe60] sm:$0xff]
    %v6125 = vld [vmem:[#allocation21 + $0xe68] sm:$0xff]
    %v6126 = vld [vmem:[#allocation21 + $0xe70] sm:$0xff]
    %v6127 = vld [vmem:[#allocation21 + $0xe78] sm:$0xff]
    %v6128 = vld [vmem:[#allocation21 + $0xe80] sm:$0xff]
    %v6129 = vld [vmem:[#allocation21 + $0xe88] sm:$0xff]
    %v6130 = vld [vmem:[#allocation21 + $0xe90] sm:$0xff]
    %v6131 = vld [vmem:[#allocation21 + $0xe98] sm:$0xff]
    %v6132 = vld [vmem:[#allocation21 + $0xea0] sm:$0xff]
    %v6133 = vld [vmem:[#allocation21 + $0xea8] sm:$0xff]
    %v6134 = vld [vmem:[#allocation21 + $0xeb0] sm:$0xff]
    %v6135 = vld [vmem:[#allocation21 + $0xeb8] sm:$0xff]
    %v6136 = vld [vmem:[#allocation21 + $0xec0] sm:$0xff]
    %v6137 = vld [vmem:[#allocation21 + $0xec8] sm:$0xff]
    %v6138 = vld [vmem:[#allocation21 + $0xed0] sm:$0xff]
    %v6139 = vld [vmem:[#allocation21 + $0xed8] sm:$0xff]
    %v6140 = vld [vmem:[#allocation21 + $0xee0] sm:$0xff]
    %v6141 = vld [vmem:[#allocation21 + $0xee8] sm:$0xff]
    %v6142 = vld [vmem:[#allocation21 + $0xef0] sm:$0xff]
    %v6143 = vld [vmem:[#allocation21 + $0xef8] sm:$0xff]
    %v6144 = vld [vmem:[#allocation21 + $0xf00] sm:$0xff]
    %v6145 = vld [vmem:[#allocation21 + $0xf08] sm:$0xff]
    %v6146 = vld [vmem:[#allocation21 + $0xf10] sm:$0xff]
    %v6147 = vld [vmem:[#allocation21 + $0xf18] sm:$0xff]
    %v6148 = vld [vmem:[#allocation21 + $0xf20] sm:$0xff]
    %v6149 = vld [vmem:[#allocation21 + $0xf28] sm:$0xff]
    %v6150 = vld [vmem:[#allocation21 + $0xf30] sm:$0xff]
    %v6151 = vld [vmem:[#allocation21 + $0xf38] sm:$0xff]
    %v6152 = vld [vmem:[#allocation21 + $0xf40] sm:$0xff]
    %v6153 = vld [vmem:[#allocation21 + $0xf48] sm:$0xff]
    %v6154 = vld [vmem:[#allocation21 + $0xf50] sm:$0xff]
    %v6155 = vld [vmem:[#allocation21 + $0xf58] sm:$0xff]
    %v6156 = vld [vmem:[#allocation21 + $0xf60] sm:$0xff]
    %v6157 = vld [vmem:[#allocation21 + $0xf68] sm:$0xff]
    %v6158 = vld [vmem:[#allocation21 + $0xf70] sm:$0xff]
    %v6159 = vld [vmem:[#allocation21 + $0xf78] sm:$0xff]
    %v6160 = vld [vmem:[#allocation21 + $0xf80] sm:$0xff]
    %v6161 = vld [vmem:[#allocation21 + $0xf88] sm:$0xff]
    %v6162 = vld [vmem:[#allocation21 + $0xf90] sm:$0xff]
    %v6163 = vld [vmem:[#allocation21 + $0xf98] sm:$0xff]
    %v6164 = vld [vmem:[#allocation21 + $0xfa0] sm:$0xff]
    %v6165 = vld [vmem:[#allocation21 + $0xfa8] sm:$0xff]
    %v6166 = vld [vmem:[#allocation21 + $0xfb0] sm:$0xff]
    %v6167 = vld [vmem:[#allocation21 + $0xfb8] sm:$0xff]
    %v6168 = vld [vmem:[#allocation21 + $0xfc0] sm:$0xff]
    %v6169 = vld [vmem:[#allocation21 + $0xfc8] sm:$0xff]
    %v6170 = vld [vmem:[#allocation21 + $0xfd0] sm:$0xff]
    %v6171 = vld [vmem:[#allocation21 + $0xfd8] sm:$0xff]
    %v6172 = vld [vmem:[#allocation21 + $0xfe0] sm:$0xff]
    %v6173 = vld [vmem:[#allocation21 + $0xfe8] sm:$0xff]
    %v6174 = vld [vmem:[#allocation21 + $0xff0] sm:$0xff]
    %v6175 = vld [vmem:[#allocation21 + $0xff8] sm:$0xff]
    %v6176 = vld [vmem:[#allocation21 + $0x1000] sm:$0xff]
    %v6177 = vld [vmem:[#allocation21 + $0x1008] sm:$0xff]
    %v6178 = vld [vmem:[#allocation21 + $0x1010] sm:$0xff]
    %v6179 = vld [vmem:[#allocation21 + $0x1018] sm:$0xff]
    %v6180 = vld [vmem:[#allocation21 + $0x1020] sm:$0xff]
    %v6181 = vld [vmem:[#allocation21 + $0x1028] sm:$0xff]
    %v6182 = vld [vmem:[#allocation21 + $0x1030] sm:$0xff]
    %v6183 = vld [vmem:[#allocation21 + $0x1038] sm:$0xff]
    %v6184 = vld [vmem:[#allocation21 + $0x1040] sm:$0xff]
    %v6185 = vld [vmem:[#allocation21 + $0x1048] sm:$0xff]
    %v6186 = vld [vmem:[#allocation21 + $0x1050] sm:$0xff]
    %v6187 = vld [vmem:[#allocation21 + $0x1058] sm:$0xff]
    %v6188 = vld [vmem:[#allocation21 + $0x1060] sm:$0xff]
    %v6189 = vld [vmem:[#allocation21 + $0x1068] sm:$0xff]
    %v6190 = vld [vmem:[#allocation21 + $0x1070] sm:$0xff]
    %v6191 = vld [vmem:[#allocation21 + $0x1078] sm:$0xff]
    %v6192 = vld [vmem:[#allocation21 + $0x1080] sm:$0xff]
    %v6193 = vld [vmem:[#allocation21 + $0x1088] sm:$0xff]
    %v6194 = vld [vmem:[#allocation21 + $0x1090] sm:$0xff]
    %v6195 = vld [vmem:[#allocation21 + $0x1098] sm:$0xff]
    %v6196 = vld [vmem:[#allocation21 + $0x10a0] sm:$0xff]
    %v6197 = vld [vmem:[#allocation21 + $0x10a8] sm:$0xff]
    %v6198 = vld [vmem:[#allocation21 + $0x10b0] sm:$0xff]
    %v6199 = vld [vmem:[#allocation21 + $0x10b8] sm:$0xff]
    %v6200 = vld [vmem:[#allocation21 + $0x10c0] sm:$0xff]
    %v6201 = vld [vmem:[#allocation21 + $0x10c8] sm:$0xff]
    %v6202 = vld [vmem:[#allocation21 + $0x10d0] sm:$0xff]
    %v6203 = vld [vmem:[#allocation21 + $0x10d8] sm:$0xff]
    %v6204 = vld [vmem:[#allocation21 + $0x10e0] sm:$0xff]
    %v6205 = vld [vmem:[#allocation21 + $0x10e8] sm:$0xff]
    %v6206 = vld [vmem:[#allocation21 + $0x10f0] sm:$0xff]
    %v6207 = vld [vmem:[#allocation21 + $0x10f8] sm:$0xff]
    %v6208 = vld [vmem:[#allocation21 + $0x1100] sm:$0xff]
    %v6209 = vld [vmem:[#allocation21 + $0x1108] sm:$0xff]
    %v6210 = vld [vmem:[#allocation21 + $0x1110] sm:$0xff]
    %v6211 = vld [vmem:[#allocation21 + $0x1118] sm:$0xff]
    %v6212 = vld [vmem:[#allocation21 + $0x1120] sm:$0xff]
    %v6213 = vld [vmem:[#allocation21 + $0x1128] sm:$0xff]
    %v6214 = vld [vmem:[#allocation21 + $0x1130] sm:$0xff]
    %v6215 = vld [vmem:[#allocation21 + $0x1138] sm:$0xff]
    %v6216 = vld [vmem:[#allocation21 + $0x1140] sm:$0xff]
    %v6217 = vld [vmem:[#allocation21 + $0x1148] sm:$0xff]
    %v6218 = vld [vmem:[#allocation21 + $0x1150] sm:$0xff]
    %v6219 = vld [vmem:[#allocation21 + $0x1158] sm:$0xff]
    %v6220 = vld [vmem:[#allocation21 + $0x1160] sm:$0xff]
    %v6221 = vld [vmem:[#allocation21 + $0x1168] sm:$0xff]
    %v6222 = vld [vmem:[#allocation21 + $0x1170] sm:$0xff]
    %v6223 = vld [vmem:[#allocation21 + $0x1178] sm:$0xff]
    %v6224 = vld [vmem:[#allocation21 + $0x1180] sm:$0xff]
    %v6225 = vld [vmem:[#allocation21 + $0x1188] sm:$0xff]
    %v6226 = vld [vmem:[#allocation21 + $0x1190] sm:$0xff]
    %v6227 = vld [vmem:[#allocation21 + $0x1198] sm:$0xff]
    %v6228 = vld [vmem:[#allocation21 + $0x11a0] sm:$0xff]
    %v6229 = vld [vmem:[#allocation21 + $0x11a8] sm:$0xff]
    %v6230 = vld [vmem:[#allocation21 + $0x11b0] sm:$0xff]
    %v6231 = vld [vmem:[#allocation21 + $0x11b8] sm:$0xff]
    %v6232 = vld [vmem:[#allocation21 + $0x11c0] sm:$0xff]
    %v6233 = vld [vmem:[#allocation21 + $0x11c8] sm:$0xff]
    %v6234 = vld [vmem:[#allocation21 + $0x11d0] sm:$0xff]
    %v6235 = vld [vmem:[#allocation21 + $0x11d8] sm:$0xff]
    %v6236 = vld [vmem:[#allocation21 + $0x11e0] sm:$0xff]
    %v6237 = vld [vmem:[#allocation21 + $0x11e8] sm:$0xff]
    %v6238 = vld [vmem:[#allocation21 + $0x11f0] sm:$0xff]
    %v6239 = vld [vmem:[#allocation21 + $0x11f8] sm:$0xff]
    %v6240 = vld [vmem:[#allocation22] sm:$0x7]
    %v6242 = vlaneseq
    %v6243 = vshrl.u32 %v6242, 7
    %v6244 = vsub.s32 0, %v6243
    %v6245 = vrot.slane %v6240, %v6244
    %v6246 = vlaneseq
    %v6247 = vshrl.u32 %v6246, 7
    %v6248 = vsub.s32 1, %v6247
    %v6249 = vrot.slane %v6240, %v6248
    %v6250 = vlaneseq
    %v6251 = vshrl.u32 %v6250, 7
    %v6252 = vsub.s32 2, %v6251
    %v6253 = vrot.slane %v6240, %v6252
    %6257 = vmatprep.subr.mxu0 %v5665
    %6258 = vmatpush1.msra.mxu0 %v5664
    %6259 = vmatprep.subr.mxu0 %v5668
    %6260 = vmatpush1.msra.mxu0 %v5667
    %6261 = vmatprep.subr.mxu0 %v5671
    %6262 = vmatpush1.msra.mxu0 %v5670
    %6263 = vmatprep.subr.mxu0 %v5674
    %6264 = vmatpush1.msra.mxu0 %v5673
    %6265 = vmatprep.subr.mxu0 %v5677
    %6266 = vmatpush1.msra.mxu0 %v5676
    %6267 = vmatprep.subr.mxu0 %v5680
    %6268 = vmatpush1.msra.mxu0 %v5679
    %6269 = vmatprep.subr.mxu0 %v5683
    %6270 = vmatpush1.msra.mxu0 %v5682
    %6271 = vmatprep.subr.mxu0 %v5686
    %6272 = vmatpush1.msra.mxu0 %v5685
    %6273 = vmatprep.subr.mxu0 %v5689
    %6274 = vmatpush1.msra.mxu0 %v5688
    %6275 = vmatprep.subr.mxu0 %v5692
    %6276 = vmatpush1.msra.mxu0 %v5691
    %6277 = vmatprep.subr.mxu0 %v5695
    %6278 = vmatpush1.msra.mxu0 %v5694
    %6279 = vmatprep.subr.mxu0 %v5698
    %6280 = vmatpush1.msra.mxu0 %v5697
    %6281 = vmatprep.subr.mxu0 %v5701
    %6282 = vmatpush1.msra.mxu0 %v5700
    %6283 = vmatprep.subr.mxu0 %v5704
    %6284 = vmatpush1.msra.mxu0 %v5703
    %6285 = vmatprep.subr.mxu0 %v5707
    %6286 = vmatpush1.msra.mxu0 %v5706
    %6287 = vmatprep.subr.mxu0 %v5710
    %6288 = vmatpush1.msra.mxu0 %v5709
    %6289 = vmatprep.subr.mxu0 %v5713
    %6290 = vmatpush1.msra.mxu0 %v5712
    %6291 = vmatprep.subr.mxu0 %v5716
    %6292 = vmatpush1.msra.mxu0 %v5715
    %6293 = vmatprep.subr.mxu0 %v5719
    %6294 = vmatpush1.msra.mxu0 %v5718
    %6295 = vmatprep.subr.mxu0 %v5722
    %6296 = vmatpush1.msra.mxu0 %v5721
    %6297 = vmatprep.subr.mxu0 %v5725
    %6298 = vmatpush1.msra.mxu0 %v5724
    %6299 = vmatprep.subr.mxu0 %v5728
    %6300 = vmatpush1.msra.mxu0 %v5727
    %6301 = vmatprep.subr.mxu0 %v5731
    %6302 = vmatpush1.msra.mxu0 %v5730
    %6303 = vmatprep.subr.mxu0 %v5734
    %6304 = vmatpush1.msra.mxu0 %v5733
    %6305 = vmatprep.subr.mxu0 %v5737
    %6306 = vmatpush1.msra.mxu0 %v5736
    %6307 = vmatprep.subr.mxu0 %v5740
    %6308 = vmatpush1.msra.mxu0 %v5739
    %6309 = vmatprep.subr.mxu0 %v5743
    %6310 = vmatpush1.msra.mxu0 %v5742
    %6311 = vmatprep.subr.mxu0 %v5746
    %6312 = vmatpush1.msra.mxu0 %v5745
    %6313 = vmatprep.subr.mxu0 %v5749
    %6314 = vmatpush1.msra.mxu0 %v5748
    %6315 = vmatprep.subr.mxu0 %v5752
    %6316 = vmatpush1.msra.mxu0 %v5751
    %6317 = vmatprep.subr.mxu0 %v5755
    %6318 = vmatpush1.msra.mxu0 %v5754
    %6319 = vmatprep.subr.mxu0 %v5758
    %6320 = vmatpush1.msra.mxu0 %v5757
    %6321 = vmatprep.mubr.f32.mxu0 %v5641
    %6322 = vmatmul.mubr.f32.gmra.mrb[0].mxu0 %v5640
    %v6323 = vpop.f32.mrb[0].mxu0
    %v6324 = vadd.f32 %v6245, %v6323
    %v6325 = vpop.f32.mrb[0].mxu0
    %v6326 = vadd.f32 %v6249, %v6325
    %6327 = vmatprep.mubr.f32.mxu0 %v5653
    %6328 = vmatmul.mubr.f32.gmra.mrb[0].mxu0 %v5652
    %v6329 = vpop.f32.mrb[0].mxu0
    %v6330 = vadd.f32 %v6245, %v6329
    %v6331 = vpop.f32.mrb[0].mxu0
    %v6332 = vadd.f32 %v6249, %v6331
    %6333 = vdwg.mxu0
    %6334 = vmatprep.subr.mxu0 %v5761
    %6335 = vmatpush1.msra.mxu0 %v5760
    %6336 = vmatprep.subr.mxu0 %v5764
    %6337 = vmatpush1.msra.mxu0 %v5763
    %6338 = vmatprep.subr.mxu0 %v5767
    %6339 = vmatpush1.msra.mxu0 %v5766
    %6340 = vmatprep.subr.mxu0 %v5770
    %6341 = vmatpush1.msra.mxu0 %v5769
    %6342 = vmatprep.subr.mxu0 %v5773
    %6343 = vmatpush1.msra.mxu0 %v5772
    %6344 = vmatprep.subr.mxu0 %v5776
    %6345 = vmatpush1.msra.mxu0 %v5775
    %6346 = vmatprep.subr.mxu0 %v5779
    %6347 = vmatpush1.msra.mxu0 %v5778
    %6348 = vmatprep.subr.mxu0 %v5782
    %6349 = vmatpush1.msra.mxu0 %v5781
    %6350 = vmatprep.subr.mxu0 %v5785
    %6351 = vmatpush1.msra.mxu0 %v5784
    %6352 = vmatprep.subr.mxu0 %v5788
    %6353 = vmatpush1.msra.mxu0 %v5787
    %6354 = vmatprep.subr.mxu0 %v5791
    %6355 = vmatpush1.msra.mxu0 %v5790
    %6356 = vmatprep.subr.mxu0 %v5794
    %6357 = vmatpush1.msra.mxu0 %v5793
    %6358 = vmatprep.subr.mxu0 %v5797
    %6359 = vmatpush1.msra.mxu0 %v5796
    %6360 = vmatprep.subr.mxu0 %v5800
    %6361 = vmatpush1.msra.mxu0 %v5799
    %6362 = vmatprep.subr.mxu0 %v5803
    %6363 = vmatpush1.msra.mxu0 %v5802
    %6364 = vmatprep.subr.mxu0 %v5806
    %6365 = vmatpush1.msra.mxu0 %v5805
    %6366 = vmatprep.subr.mxu0 %v5809
    %6367 = vmatpush1.msra.mxu0 %v5808
    %6368 = vmatprep.subr.mxu0 %v5812
    %6369 = vmatpush1.msra.mxu0 %v5811
    %6370 = vmatprep.subr.mxu0 %v5815
    %6371 = vmatpush1.msra.mxu0 %v5814
    %6372 = vmatprep.subr.mxu0 %v5818
    %6373 = vmatpush1.msra.mxu0 %v5817
    %6374 = vmatprep.subr.mxu0 %v5821
    %6375 = vmatpush1.msra.mxu0 %v5820
    %6376 = vmatprep.subr.mxu0 %v5824
    %6377 = vmatpush1.msra.mxu0 %v5823
    %6378 = vmatprep.subr.mxu0 %v5827
    %6379 = vmatpush1.msra.mxu0 %v5826
    %6380 = vmatprep.subr.mxu0 %v5830
    %6381 = vmatpush1.msra.mxu0 %v5829
    %6382 = vmatprep.subr.mxu0 %v5833
    %6383 = vmatpush1.msra.mxu0 %v5832
    %6384 = vmatprep.subr.mxu0 %v5836
    %6385 = vmatpush1.msra.mxu0 %v5835
    %6386 = vmatprep.subr.mxu0 %v5839
    %6387 = vmatpush1.msra.mxu0 %v5838
    %6388 = vmatprep.subr.mxu0 %v5842
    %6389 = vmatpush1.msra.mxu0 %v5841
    %6390 = vmatprep.subr.mxu0 %v5845
    %6391 = vmatpush1.msra.mxu0 %v5844
    %6392 = vmatprep.subr.mxu0 %v5848
    %6393 = vmatpush1.msra.mxu0 %v5847
    %6394 = vmatprep.subr.mxu0 %v5851
    %6395 = vmatpush1.msra.mxu0 %v5850
    %6396 = vmatprep.subr.mxu0 %v5854
    %6397 = vmatpush1.msra.mxu0 %v5853
    %6398 = vmatprep.mubr.f32.mxu0 %v5643
    %6399 = vmatmul.mubr.f32.gmra.mrb[0].mxu0 %v5642
    %v6400 = vpop.f32.mrb[0].mxu0
    %v6401 = vadd.f32 %v6324, %v6400
    %v6402 = vpop.f32.mrb[0].mxu0
    %v6403 = vadd.f32 %v6326, %v6402
    %6404 = vmatprep.mubr.f32.mxu0 %v5655
    %6405 = vmatmul.mubr.f32.gmra.mrb[0].mxu0 %v5654
    %v6406 = vpop.f32.mrb[0].mxu0
    %v6407 = vadd.f32 %v6330, %v6406
    %v6408 = vpop.f32.mrb[0].mxu0
    %v6409 = vadd.f32 %v6332, %v6408
    %6410 = vdwg.mxu0
    %6411 = vmatprep.subr.mxu0 %v5857
    %6412 = vmatpush1.msra.mxu0 %v5856
    %6413 = vmatprep.subr.mxu0 %v5860
    %6414 = vmatpush1.msra.mxu0 %v5859
    %6415 = vmatprep.subr.mxu0 %v5863
    %6416 = vmatpush1.msra.mxu0 %v5862
    %6417 = vmatprep.subr.mxu0 %v5866
    %6418 = vmatpush1.msra.mxu0 %v5865
    %6419 = vmatprep.subr.mxu0 %v5869
    %6420 = vmatpush1.msra.mxu0 %v5868
    %6421 = vmatprep.subr.mxu0 %v5872
    %6422 = vmatpush1.msra.mxu0 %v5871
    %6423 = vmatprep.subr.mxu0 %v5875
    %6424 = vmatpush1.msra.mxu0 %v5874
    %6425 = vmatprep.subr.mxu0 %v5878
    %6426 = vmatpush1.msra.mxu0 %v5877
    %6427 = vmatprep.subr.mxu0 %v5881
    %6428 = vmatpush1.msra.mxu0 %v5880
    %6429 = vmatprep.subr.mxu0 %v5884
    %6430 = vmatpush1.msra.mxu0 %v5883
    %6431 = vmatprep.subr.mxu0 %v5887
    %6432 = vmatpush1.msra.mxu0 %v5886
    %6433 = vmatprep.subr.mxu0 %v5890
    %6434 = vmatpush1.msra.mxu0 %v5889
    %6435 = vmatprep.subr.mxu0 %v5893
    %6436 = vmatpush1.msra.mxu0 %v5892
    %6437 = vmatprep.subr.mxu0 %v5896
    %6438 = vmatpush1.msra.mxu0 %v5895
    %6439 = vmatprep.subr.mxu0 %v5899
    %6440 = vmatpush1.msra.mxu0 %v5898
    %6441 = vmatprep.subr.mxu0 %v5902
    %6442 = vmatpush1.msra.mxu0 %v5901
    %6443 = vmatprep.subr.mxu0 %v5905
    %6444 = vmatpush1.msra.mxu0 %v5904
    %6445 = vmatprep.subr.mxu0 %v5908
    %6446 = vmatpush1.msra.mxu0 %v5907
    %6447 = vmatprep.subr.mxu0 %v5911
    %6448 = vmatpush1.msra.mxu0 %v5910
    %6449 = vmatprep.subr.mxu0 %v5914
    %6450 = vmatpush1.msra.mxu0 %v5913
    %6451 = vmatprep.subr.mxu0 %v5917
    %6452 = vmatpush1.msra.mxu0 %v5916
    %6453 = vmatprep.subr.mxu0 %v5920
    %6454 = vmatpush1.msra.mxu0 %v5919
    %6455 = vmatprep.subr.mxu0 %v5923
    %6456 = vmatpush1.msra.mxu0 %v5922
    %6457 = vmatprep.subr.mxu0 %v5926
    %6458 = vmatpush1.msra.mxu0 %v5925
    %6459 = vmatprep.subr.mxu0 %v5929
    %6460 = vmatpush1.msra.mxu0 %v5928
    %6461 = vmatprep.subr.mxu0 %v5932
    %6462 = vmatpush1.msra.mxu0 %v5931
    %6463 = vmatprep.subr.mxu0 %v5935
    %6464 = vmatpush1.msra.mxu0 %v5934
    %6465 = vmatprep.subr.mxu0 %v5938
    %6466 = vmatpush1.msra.mxu0 %v5937
    %6467 = vmatprep.subr.mxu0 %v5941
    %6468 = vmatpush1.msra.mxu0 %v5940
    %6469 = vmatprep.subr.mxu0 %v5944
    %6470 = vmatpush1.msra.mxu0 %v5943
    %6471 = vmatprep.subr.mxu0 %v5947
    %6472 = vmatpush1.msra.mxu0 %v5946
    %6473 = vmatprep.subr.mxu0 %v5950
    %6474 = vmatpush1.msra.mxu0 %v5949
    %6475 = vmatprep.mubr.f32.mxu0 %v5645
    %6476 = vmatmul.mubr.f32.gmra.mrb[0].mxu0 %v5644
    %v6477 = vpop.f32.mrb[0].mxu0
    %v6478 = vadd.f32 %v6401, %v6477
    %v6479 = vpop.f32.mrb[0].mxu0
    %v6480 = vadd.f32 %v6403, %v6479
    %6481 = vmatprep.mubr.f32.mxu0 %v5657
    %6482 = vmatmul.mubr.f32.gmra.mrb[0].mxu0 %v5656
    %v6483 = vpop.f32.mrb[0].mxu0
    %v6484 = vadd.f32 %v6407, %v6483
    %v6485 = vpop.f32.mrb[0].mxu0
    %v6486 = vadd.f32 %v6409, %v6485
    %6487 = vdwg.mxu0
    %6488 = vmatprep.subr.mxu0 %v5953
    %6489 = vmatpush1.msra.mxu0 %v5952
    %6490 = vmatprep.subr.mxu0 %v5956
    %6491 = vmatpush1.msra.mxu0 %v5955
    %6492 = vmatprep.subr.mxu0 %v5959
    %6493 = vmatpush1.msra.mxu0 %v5958
    %6494 = vmatprep.subr.mxu0 %v5962
    %6495 = vmatpush1.msra.mxu0 %v5961
    %6496 = vmatprep.subr.mxu0 %v5965
    %6497 = vmatpush1.msra.mxu0 %v5964
    %6498 = vmatprep.subr.mxu0 %v5968
    %6499 = vmatpush1.msra.mxu0 %v5967
    %6500 = vmatprep.subr.mxu0 %v5971
    %6501 = vmatpush1.msra.mxu0 %v5970
    %6502 = vmatprep.subr.mxu0 %v5974
    %6503 = vmatpush1.msra.mxu0 %v5973
    %6504 = vmatprep.subr.mxu0 %v5977
    %6505 = vmatpush1.msra.mxu0 %v5976
    %6506 = vmatprep.subr.mxu0 %v5980
    %6507 = vmatpush1.msra.mxu0 %v5979
    %6508 = vmatprep.subr.mxu0 %v5983
    %6509 = vmatpush1.msra.mxu0 %v5982
    %6510 = vmatprep.subr.mxu0 %v5986
    %6511 = vmatpush1.msra.mxu0 %v5985
    %6512 = vmatprep.subr.mxu0 %v5989
    %6513 = vmatpush1.msra.mxu0 %v5988
    %6514 = vmatprep.subr.mxu0 %v5992
    %6515 = vmatpush1.msra.mxu0 %v5991
    %6516 = vmatprep.subr.mxu0 %v5995
    %6517 = vmatpush1.msra.mxu0 %v5994
    %6518 = vmatprep.subr.mxu0 %v5998
    %6519 = vmatpush1.msra.mxu0 %v5997
    %6520 = vmatprep.subr.mxu0 %v6001
    %6521 = vmatpush1.msra.mxu0 %v6000
    %6522 = vmatprep.subr.mxu0 %v6004
    %6523 = vmatpush1.msra.mxu0 %v6003
    %6524 = vmatprep.subr.mxu0 %v6007
    %6525 = vmatpush1.msra.mxu0 %v6006
    %6526 = vmatprep.subr.mxu0 %v6010
    %6527 = vmatpush1.msra.mxu0 %v6009
    %6528 = vmatprep.subr.mxu0 %v6013
    %6529 = vmatpush1.msra.mxu0 %v6012
    %6530 = vmatprep.subr.mxu0 %v6016
    %6531 = vmatpush1.msra.mxu0 %v6015
    %6532 = vmatprep.subr.mxu0 %v6019
    %6533 = vmatpush1.msra.mxu0 %v6018
    %6534 = vmatprep.subr.mxu0 %v6022
    %6535 = vmatpush1.msra.mxu0 %v6021
    %6536 = vmatprep.subr.mxu0 %v6025
    %6537 = vmatpush1.msra.mxu0 %v6024
    %6538 = vmatprep.subr.mxu0 %v6028
    %6539 = vmatpush1.msra.mxu0 %v6027
    %6540 = vmatprep.subr.mxu0 %v6031
    %6541 = vmatpush1.msra.mxu0 %v6030
    %6542 = vmatprep.subr.mxu0 %v6034
    %6543 = vmatpush1.msra.mxu0 %v6033
    %6544 = vmatprep.subr.mxu0 %v6037
    %6545 = vmatpush1.msra.mxu0 %v6036
    %6546 = vmatprep.subr.mxu0 %v6040
    %6547 = vmatpush1.msra.mxu0 %v6039
    %6548 = vmatprep.subr.mxu0 %v6043
    %6549 = vmatpush1.msra.mxu0 %v6042
    %6550 = vmatprep.subr.mxu0 %v6046
    %6551 = vmatpush1.msra.mxu0 %v6045
    %6552 = vmatprep.mubr.f32.mxu0 %v5647
    %6553 = vmatmul.mubr.f32.gmra.mrb[0].mxu0 %v5646
    %v6554 = vpop.f32.mrb[0].mxu0
    %v6555 = vadd.f32 %v6478, %v6554
    %v6556 = vpop.f32.mrb[0].mxu0
    %v6557 = vadd.f32 %v6480, %v6556
    %6558 = vmatprep.mubr.f32.mxu0 %v5659
    %6559 = vmatmul.mubr.f32.gmra.mrb[0].mxu0 %v5658
    %v6560 = vpop.f32.mrb[0].mxu0
    %v6561 = vadd.f32 %v6484, %v6560
    %v6562 = vpop.f32.mrb[0].mxu0
    %v6563 = vadd.f32 %v6486, %v6562
    %6564 = vdwg.mxu0
    %6565 = vmatprep.subr.mxu0 %v6049
    %6566 = vmatpush1.msra.mxu0 %v6048
    %6567 = vmatprep.subr.mxu0 %v6052
    %6568 = vmatpush1.msra.mxu0 %v6051
    %6569 = vmatprep.subr.mxu0 %v6055
    %6570 = vmatpush1.msra.mxu0 %v6054
    %6571 = vmatprep.subr.mxu0 %v6058
    %6572 = vmatpush1.msra.mxu0 %v6057
    %6573 = vmatprep.subr.mxu0 %v6061
    %6574 = vmatpush1.msra.mxu0 %v6060
    %6575 = vmatprep.subr.mxu0 %v6064
    %6576 = vmatpush1.msra.mxu0 %v6063
    %6577 = vmatprep.subr.mxu0 %v6067
    %6578 = vmatpush1.msra.mxu0 %v6066
    %6579 = vmatprep.subr.mxu0 %v6070
    %6580 = vmatpush1.msra.mxu0 %v6069
    %6581 = vmatprep.subr.mxu0 %v6073
    %6582 = vmatpush1.msra.mxu0 %v6072
    %6583 = vmatprep.subr.mxu0 %v6076
    %6584 = vmatpush1.msra.mxu0 %v6075
    %6585 = vmatprep.subr.mxu0 %v6079
    %6586 = vmatpush1.msra.mxu0 %v6078
    %6587 = vmatprep.subr.mxu0 %v6082
    %6588 = vmatpush1.msra.mxu0 %v6081
    %6589 = vmatprep.subr.mxu0 %v6085
    %6590 = vmatpush1.msra.mxu0 %v6084
    %6591 = vmatprep.subr.mxu0 %v6088
    %6592 = vmatpush1.msra.mxu0 %v6087
    %6593 = vmatprep.subr.mxu0 %v6091
    %6594 = vmatpush1.msra.mxu0 %v6090
    %6595 = vmatprep.subr.mxu0 %v6094
    %6596 = vmatpush1.msra.mxu0 %v6093
    %6597 = vmatprep.subr.mxu0 %v6097
    %6598 = vmatpush1.msra.mxu0 %v6096
    %6599 = vmatprep.subr.mxu0 %v6100
    %6600 = vmatpush1.msra.mxu0 %v6099
    %6601 = vmatprep.subr.mxu0 %v6103
    %6602 = vmatpush1.msra.mxu0 %v6102
    %6603 = vmatprep.subr.mxu0 %v6106
    %6604 = vmatpush1.msra.mxu0 %v6105
    %6605 = vmatprep.subr.mxu0 %v6109
    %6606 = vmatpush1.msra.mxu0 %v6108
    %6607 = vmatprep.subr.mxu0 %v6112
    %6608 = vmatpush1.msra.mxu0 %v6111
    %6609 = vmatprep.subr.mxu0 %v6115
    %6610 = vmatpush1.msra.mxu0 %v6114
    %6611 = vmatprep.subr.mxu0 %v6118
    %6612 = vmatpush1.msra.mxu0 %v6117
    %6613 = vmatprep.subr.mxu0 %v6121
    %6614 = vmatpush1.msra.mxu0 %v6120
    %6615 = vmatprep.subr.mxu0 %v6124
    %6616 = vmatpush1.msra.mxu0 %v6123
    %6617 = vmatprep.subr.mxu0 %v6127
    %6618 = vmatpush1.msra.mxu0 %v6126
    %6619 = vmatprep.subr.mxu0 %v6130
    %6620 = vmatpush1.msra.mxu0 %v6129
    %6621 = vmatprep.subr.mxu0 %v6133
    %6622 = vmatpush1.msra.mxu0 %v6132
    %6623 = vmatprep.subr.mxu0 %v6136
    %6624 = vmatpush1.msra.mxu0 %v6135
    %6625 = vmatprep.subr.mxu0 %v6139
    %6626 = vmatpush1.msra.mxu0 %v6138
    %6627 = vmatprep.subr.mxu0 %v6142
    %6628 = vmatpush1.msra.mxu0 %v6141
    %6629 = vmatprep.mubr.f32.mxu0 %v5649
    %6630 = vmatmul.mubr.f32.gmra.mrb[0].mxu0 %v5648
    %v6631 = vpop.f32.mrb[0].mxu0
    %v6632 = vadd.f32 %v6555, %v6631
    %v6633 = vpop.f32.mrb[0].mxu0
    %v6634 = vadd.f32 %v6557, %v6633
    %6635 = vmatprep.mubr.f32.mxu0 %v5661
    %6636 = vmatmul.mubr.f32.gmra.mrb[0].mxu0 %v5660
    %v6637 = vpop.f32.mrb[0].mxu0
    %v6638 = vadd.f32 %v6561, %v6637
    %v6639 = vpop.f32.mrb[0].mxu0
    %v6640 = vadd.f32 %v6563, %v6639
    %6641 = vdwg.mxu0
    %6642 = vmatprep.subr.mxu0 %v6145
    %6643 = vmatpush1.msra.mxu0 %v6144
    %6644 = vmatprep.subr.mxu0 %v6148
    %6645 = vmatpush1.msra.mxu0 %v6147
    %6646 = vmatprep.subr.mxu0 %v6151
    %6647 = vmatpush1.msra.mxu0 %v6150
    %6648 = vmatprep.subr.mxu0 %v6154
    %6649 = vmatpush1.msra.mxu0 %v6153
    %6650 = vmatprep.subr.mxu0 %v6157
    %6651 = vmatpush1.msra.mxu0 %v6156
    %6652 = vmatprep.subr.mxu0 %v6160
    %6653 = vmatpush1.msra.mxu0 %v6159
    %6654 = vmatprep.subr.mxu0 %v6163
    %6655 = vmatpush1.msra.mxu0 %v6162
    %6656 = vmatprep.subr.mxu0 %v6166
    %6657 = vmatpush1.msra.mxu0 %v6165
    %6658 = vmatprep.subr.mxu0 %v6169
    %6659 = vmatpush1.msra.mxu0 %v6168
    %6660 = vmatprep.subr.mxu0 %v6172
    %6661 = vmatpush1.msra.mxu0 %v6171
    %6662 = vmatprep.subr.mxu0 %v6175
    %6663 = vmatpush1.msra.mxu0 %v6174
    %6664 = vmatprep.subr.mxu0 %v6178
    %6665 = vmatpush1.msra.mxu0 %v6177
    %6666 = vmatprep.subr.mxu0 %v6181
    %6667 = vmatpush1.msra.mxu0 %v6180
    %6668 = vmatprep.subr.mxu0 %v6184
    %6669 = vmatpush1.msra.mxu0 %v6183
    %6670 = vmatprep.subr.mxu0 %v6187
    %6671 = vmatpush1.msra.mxu0 %v6186
    %6672 = vmatprep.subr.mxu0 %v6190
    %6673 = vmatpush1.msra.mxu0 %v6189
    %6674 = vmatprep.subr.mxu0 %v6193
    %6675 = vmatpush1.msra.mxu0 %v6192
    %6676 = vmatprep.subr.mxu0 %v6196
    %6677 = vmatpush1.msra.mxu0 %v6195
    %6678 = vmatprep.subr.mxu0 %v6199
    %6679 = vmatpush1.msra.mxu0 %v6198
    %6680 = vmatprep.subr.mxu0 %v6202
    %6681 = vmatpush1.msra.mxu0 %v6201
    %6682 = vmatprep.subr.mxu0 %v6205
    %6683 = vmatpush1.msra.mxu0 %v6204
    %6684 = vmatprep.subr.mxu0 %v6208
    %6685 = vmatpush1.msra.mxu0 %v6207
    %6686 = vmatprep.subr.mxu0 %v6211
    %6687 = vmatpush1.msra.mxu0 %v6210
    %6688 = vmatprep.subr.mxu0 %v6214
    %6689 = vmatpush1.msra.mxu0 %v6213
    %6690 = vmatprep.subr.mxu0 %v6217
    %6691 = vmatpush1.msra.mxu0 %v6216
    %6692 = vmatprep.subr.mxu0 %v6220
    %6693 = vmatpush1.msra.mxu0 %v6219
    %6694 = vmatprep.subr.mxu0 %v6223
    %6695 = vmatpush1.msra.mxu0 %v6222
    %6696 = vmatprep.subr.mxu0 %v6226
    %6697 = vmatpush1.msra.mxu0 %v6225
    %6698 = vmatprep.subr.mxu0 %v6229
    %6699 = vmatpush1.msra.mxu0 %v6228
    %6700 = vmatprep.subr.mxu0 %v6232
    %6701 = vmatpush1.msra.mxu0 %v6231
    %6702 = vmatprep.subr.mxu0 %v6235
    %6703 = vmatpush1.msra.mxu0 %v6234
    %6704 = vmatprep.subr.mxu0 %v6238
    %6705 = vmatpush1.msra.mxu0 %v6237
    %6706 = vmatprep.mubr.f32.mxu0 %v5651
    %6707 = vmatmul.mubr.f32.gmra.mrb[0].mxu0 %v5650
    %v6708 = vpop.f32.mrb[0].mxu0
    %v6709 = vadd.f32 %v6632, %v6708
    %v6710 = vpop.f32.mrb[0].mxu0
    %v6711 = vadd.f32 %v6634, %v6710
    %6712 = vmatprep.mubr.f32.mxu0 %v5663
    %6713 = vmatmul.mubr.f32.gmra.mrb[0].mxu0 %v5662
    %v6714 = vpop.f32.mrb[0].mxu0
    %v6715 = vadd.f32 %v6638, %v6714
    %v6716 = vpop.f32.mrb[0].mxu0
    %v6717 = vadd.f32 %v6640, %v6716
    %6718 = vdwg.mxu0
    %6719 = vmatprep.subr.mxu0 0.0
    %6720 = vmatpush1.msra.mxu0 %v5666
    %6721 = vmatprep.subr.mxu0 0.0
    %6722 = vmatpush1.msra.mxu0 %v5669
    %6723 = vmatprep.subr.mxu0 0.0
    %6724 = vmatpush1.msra.mxu0 %v5672
    %6725 = vmatprep.subr.mxu0 0.0
    %6726 = vmatpush1.msra.mxu0 %v5675
    %6727 = vmatprep.subr.mxu0 0.0
    %6728 = vmatpush1.msra.mxu0 %v5678
    %6729 = vmatprep.subr.mxu0 0.0
    %6730 = vmatpush1.msra.mxu0 %v5681
    %6731 = vmatprep.subr.mxu0 0.0
    %6732 = vmatpush1.msra.mxu0 %v5684
    %6733 = vmatprep.subr.mxu0 0.0
    %6734 = vmatpush1.msra.mxu0 %v5687
    %6735 = vmatprep.subr.mxu0 0.0
    %6736 = vmatpush1.msra.mxu0 %v5690
    %6737 = vmatprep.subr.mxu0 0.0
    %6738 = vmatpush1.msra.mxu0 %v5693
    %6739 = vmatprep.subr.mxu0 0.0
    %6740 = vmatpush1.msra.mxu0 %v5696
    %6741 = vmatprep.subr.mxu0 0.0
    %6742 = vmatpush1.msra.mxu0 %v5699
    %6743 = vmatprep.subr.mxu0 0.0
    %6744 = vmatpush1.msra.mxu0 %v5702
    %6745 = vmatprep.subr.mxu0 0.0
    %6746 = vmatpush1.msra.mxu0 %v5705
    %6747 = vmatprep.subr.mxu0 0.0
    %6748 = vmatpush1.msra.mxu0 %v5708
    %6749 = vmatprep.subr.mxu0 0.0
    %6750 = vmatpush1.msra.mxu0 %v5711
    %6751 = vmatprep.subr.mxu0 0.0
    %6752 = vmatpush1.msra.mxu0 %v5714
    %6753 = vmatprep.subr.mxu0 0.0
    %6754 = vmatpush1.msra.mxu0 %v5717
    %6755 = vmatprep.subr.mxu0 0.0
    %6756 = vmatpush1.msra.mxu0 %v5720
    %6757 = vmatprep.subr.mxu0 0.0
    %6758 = vmatpush1.msra.mxu0 %v5723
    %6759 = vmatprep.subr.mxu0 0.0
    %6760 = vmatpush1.msra.mxu0 %v5726
    %6761 = vmatprep.subr.mxu0 0.0
    %6762 = vmatpush1.msra.mxu0 %v5729
    %6763 = vmatprep.subr.mxu0 0.0
    %6764 = vmatpush1.msra.mxu0 %v5732
    %6765 = vmatprep.subr.mxu0 0.0
    %6766 = vmatpush1.msra.mxu0 %v5735
    %6767 = vmatprep.subr.mxu0 0.0
    %6768 = vmatpush1.msra.mxu0 %v5738
    %6769 = vmatprep.subr.mxu0 0.0
    %6770 = vmatpush1.msra.mxu0 %v5741
    %6771 = vmatprep.subr.mxu0 0.0
    %6772 = vmatpush1.msra.mxu0 %v5744
    %6773 = vmatprep.subr.mxu0 0.0
    %6774 = vmatpush1.msra.mxu0 %v5747
    %6775 = vmatprep.subr.mxu0 0.0
    %6776 = vmatpush1.msra.mxu0 %v5750
    %6777 = vmatprep.subr.mxu0 0.0
    %6778 = vmatpush1.msra.mxu0 %v5753
    %6779 = vmatprep.subr.mxu0 0.0
    %6780 = vmatpush1.msra.mxu0 %v5756
    %6781 = vmatprep.subr.mxu0 0.0
    %6782 = vmatpush1.msra.mxu0 %v5759
    %6783 = vmatprep.mubr.f32.mxu0 %v5641
    %6784 = vmatmul.mubr.f32.gmra.mrb[0].mxu0 %v5640
    %v6785 = vpop.f32.mrb[0].mxu0
    %v6786 = vadd.f32 %v6253, %v6785
    %v6787 = vpop.f32.mrb[0].mxu0
    %6788 = vmatprep.mubr.f32.mxu0 %v5653
    %6789 = vmatmul.mubr.f32.gmra.mrb[0].mxu0 %v5652
    %v6790 = vpop.f32.mrb[0].mxu0
    %v6791 = vadd.f32 %v6253, %v6790
    %v6792 = vpop.f32.mrb[0].mxu0
    %6793 = vdwg.mxu0
    %6794 = vmatprep.subr.mxu0 0.0
    %6795 = vmatpush1.msra.mxu0 %v5762
    %6796 = vmatprep.subr.mxu0 0.0
    %6797 = vmatpush1.msra.mxu0 %v5765
    %6798 = vmatprep.subr.mxu0 0.0
    %6799 = vmatpush1.msra.mxu0 %v5768
    %6800 = vmatprep.subr.mxu0 0.0
    %6801 = vmatpush1.msra.mxu0 %v5771
    %6802 = vmatprep.subr.mxu0 0.0
    %6803 = vmatpush1.msra.mxu0 %v5774
    %6804 = vmatprep.subr.mxu0 0.0
    %6805 = vmatpush1.msra.mxu0 %v5777
    %6806 = vmatprep.subr.mxu0 0.0
    %6807 = vmatpush1.msra.mxu0 %v5780
    %6808 = vmatprep.subr.mxu0 0.0
    %6809 = vmatpush1.msra.mxu0 %v5783
    %6810 = vmatprep.subr.mxu0 0.0
    %6811 = vmatpush1.msra.mxu0 %v5786
    %6812 = vmatprep.subr.mxu0 0.0
    %6813 = vmatpush1.msra.mxu0 %v5789
    %6814 = vmatprep.subr.mxu0 0.0
    %6815 = vmatpush1.msra.mxu0 %v5792
    %6816 = vmatprep.subr.mxu0 0.0
    %6817 = vmatpush1.msra.mxu0 %v5795
    %6818 = vmatprep.subr.mxu0 0.0
    %6819 = vmatpush1.msra.mxu0 %v5798
    %6820 = vmatprep.subr.mxu0 0.0
    %6821 = vmatpush1.msra.mxu0 %v5801
    %6822 = vmatprep.subr.mxu0 0.0
    %6823 = vmatpush1.msra.mxu0 %v5804
    %6824 = vmatprep.subr.mxu0 0.0
    %6825 = vmatpush1.msra.mxu0 %v5807
    %6826 = vmatprep.subr.mxu0 0.0
    %6827 = vmatpush1.msra.mxu0 %v5810
    %6828 = vmatprep.subr.mxu0 0.0
    %6829 = vmatpush1.msra.mxu0 %v5813
    %6830 = vmatprep.subr.mxu0 0.0
    %6831 = vmatpush1.msra.mxu0 %v5816
    %6832 = vmatprep.subr.mxu0 0.0
    %6833 = vmatpush1.msra.mxu0 %v5819
    %6834 = vmatprep.subr.mxu0 0.0
    %6835 = vmatpush1.msra.mxu0 %v5822
    %6836 = vmatprep.subr.mxu0 0.0
    %6837 = vmatpush1.msra.mxu0 %v5825
    %6838 = vmatprep.subr.mxu0 0.0
    %6839 = vmatpush1.msra.mxu0 %v5828
    %6840 = vmatprep.subr.mxu0 0.0
    %6841 = vmatpush1.msra.mxu0 %v5831
    %6842 = vmatprep.subr.mxu0 0.0
    %6843 = vmatpush1.msra.mxu0 %v5834
    %6844 = vmatprep.subr.mxu0 0.0
    %6845 = vmatpush1.msra.mxu0 %v5837
    %6846 = vmatprep.subr.mxu0 0.0
    %6847 = vmatpush1.msra.mxu0 %v5840
    %6848 = vmatprep.subr.mxu0 0.0
    %6849 = vmatpush1.msra.mxu0 %v5843
    %6850 = vmatprep.subr.mxu0 0.0
    %6851 = vmatpush1.msra.mxu0 %v5846
    %6852 = vmatprep.subr.mxu0 0.0
    %6853 = vmatpush1.msra.mxu0 %v5849
    %6854 = vmatprep.subr.mxu0 0.0
    %6855 = vmatpush1.msra.mxu0 %v5852
    %6856 = vmatprep.subr.mxu0 0.0
    %6857 = vmatpush1.msra.mxu0 %v5855
    %6858 = vmatprep.mubr.f32.mxu0 %v5643
    %6859 = vmatmul.mubr.f32.gmra.mrb[0].mxu0 %v5642
    %v6860 = vpop.f32.mrb[0].mxu0
    %v6861 = vadd.f32 %v6786, %v6860
    %v6862 = vpop.f32.mrb[0].mxu0
    %6863 = vmatprep.mubr.f32.mxu0 %v5655
    %6864 = vmatmul.mubr.f32.gmra.mrb[0].mxu0 %v5654
    %v6865 = vpop.f32.mrb[0].mxu0
    %v6866 = vadd.f32 %v6791, %v6865
    %v6867 = vpop.f32.mrb[0].mxu0
    %6868 = vdwg.mxu0
    %6869 = vmatprep.subr.mxu0 0.0
    %6870 = vmatpush1.msra.mxu0 %v5858
    %6871 = vmatprep.subr.mxu0 0.0
    %6872 = vmatpush1.msra.mxu0 %v5861
    %6873 = vmatprep.subr.mxu0 0.0
    %6874 = vmatpush1.msra.mxu0 %v5864
    %6875 = vmatprep.subr.mxu0 0.0
    %6876 = vmatpush1.msra.mxu0 %v5867
    %6877 = vmatprep.subr.mxu0 0.0
    %6878 = vmatpush1.msra.mxu0 %v5870
    %6879 = vmatprep.subr.mxu0 0.0
    %6880 = vmatpush1.msra.mxu0 %v5873
    %6881 = vmatprep.subr.mxu0 0.0
    %6882 = vmatpush1.msra.mxu0 %v5876
    %6883 = vmatprep.subr.mxu0 0.0
    %6884 = vmatpush1.msra.mxu0 %v5879
    %6885 = vmatprep.subr.mxu0 0.0
    %6886 = vmatpush1.msra.mxu0 %v5882
    %6887 = vmatprep.subr.mxu0 0.0
    %6888 = vmatpush1.msra.mxu0 %v5885
    %6889 = vmatprep.subr.mxu0 0.0
    %6890 = vmatpush1.msra.mxu0 %v5888
    %6891 = vmatprep.subr.mxu0 0.0
    %6892 = vmatpush1.msra.mxu0 %v5891
    %6893 = vmatprep.subr.mxu0 0.0
    %6894 = vmatpush1.msra.mxu0 %v5894
    %6895 = vmatprep.subr.mxu0 0.0
    %6896 = vmatpush1.msra.mxu0 %v5897
    %6897 = vmatprep.subr.mxu0 0.0
    %6898 = vmatpush1.msra.mxu0 %v5900
    %6899 = vmatprep.subr.mxu0 0.0
    %6900 = vmatpush1.msra.mxu0 %v5903
    %6901 = vmatprep.subr.mxu0 0.0
    %6902 = vmatpush1.msra.mxu0 %v5906
    %6903 = vmatprep.subr.mxu0 0.0
    %6904 = vmatpush1.msra.mxu0 %v5909
    %6905 = vmatprep.subr.mxu0 0.0
    %6906 = vmatpush1.msra.mxu0 %v5912
    %6907 = vmatprep.subr.mxu0 0.0
    %6908 = vmatpush1.msra.mxu0 %v5915
    %6909 = vmatprep.subr.mxu0 0.0
    %6910 = vmatpush1.msra.mxu0 %v5918
    %6911 = vmatprep.subr.mxu0 0.0
    %6912 = vmatpush1.msra.mxu0 %v5921
    %6913 = vmatprep.subr.mxu0 0.0
    %6914 = vmatpush1.msra.mxu0 %v5924
    %6915 = vmatprep.subr.mxu0 0.0
    %6916 = vmatpush1.msra.mxu0 %v5927
    %6917 = vmatprep.subr.mxu0 0.0
    %6918 = vmatpush1.msra.mxu0 %v5930
    %6919 = vmatprep.subr.mxu0 0.0
    %6920 = vmatpush1.msra.mxu0 %v5933
    %6921 = vmatprep.subr.mxu0 0.0
    %6922 = vmatpush1.msra.mxu0 %v5936
    %6923 = vmatprep.subr.mxu0 0.0
    %6924 = vmatpush1.msra.mxu0 %v5939
    %6925 = vmatprep.subr.mxu0 0.0
    %6926 = vmatpush1.msra.mxu0 %v5942
    %6927 = vmatprep.subr.mxu0 0.0
    %6928 = vmatpush1.msra.mxu0 %v5945
    %6929 = vmatprep.subr.mxu0 0.0
    %6930 = vmatpush1.msra.mxu0 %v5948
    %6931 = vmatprep.subr.mxu0 0.0
    %6932 = vmatpush1.msra.mxu0 %v5951
    %6933 = vmatprep.mubr.f32.mxu0 %v5645
    %6934 = vmatmul.mubr.f32.gmra.mrb[0].mxu0 %v5644
    %v6935 = vpop.f32.mrb[0].mxu0
    %v6936 = vadd.f32 %v6861, %v6935
    %v6937 = vpop.f32.mrb[0].mxu0
    %6938 = vmatprep.mubr.f32.mxu0 %v5657
    %6939 = vmatmul.mubr.f32.gmra.mrb[0].mxu0 %v5656
    %v6940 = vpop.f32.mrb[0].mxu0
    %v6941 = vadd.f32 %v6866, %v6940
    %v6942 = vpop.f32.mrb[0].mxu0
    %6943 = vdwg.mxu0
    %6944 = vmatprep.subr.mxu0 0.0
    %6945 = vmatpush1.msra.mxu0 %v5954
    %6946 = vmatprep.subr.mxu0 0.0
    %6947 = vmatpush1.msra.mxu0 %v5957
    %6948 = vmatprep.subr.mxu0 0.0
    %6949 = vmatpush1.msra.mxu0 %v5960
    %6950 = vmatprep.subr.mxu0 0.0
    %6951 = vmatpush1.msra.mxu0 %v5963
    %6952 = vmatprep.subr.mxu0 0.0
    %6953 = vmatpush1.msra.mxu0 %v5966
    %6954 = vmatprep.subr.mxu0 0.0
    %6955 = vmatpush1.msra.mxu0 %v5969
    %6956 = vmatprep.subr.mxu0 0.0
    %6957 = vmatpush1.msra.mxu0 %v5972
    %6958 = vmatprep.subr.mxu0 0.0
    %6959 = vmatpush1.msra.mxu0 %v5975
    %6960 = vmatprep.subr.mxu0 0.0
    %6961 = vmatpush1.msra.mxu0 %v5978
    %6962 = vmatprep.subr.mxu0 0.0
    %6963 = vmatpush1.msra.mxu0 %v5981
    %6964 = vmatprep.subr.mxu0 0.0
    %6965 = vmatpush1.msra.mxu0 %v5984
    %6966 = vmatprep.subr.mxu0 0.0
    %6967 = vmatpush1.msra.mxu0 %v5987
    %6968 = vmatprep.subr.mxu0 0.0
    %6969 = vmatpush1.msra.mxu0 %v5990
    %6970 = vmatprep.subr.mxu0 0.0
    %6971 = vmatpush1.msra.mxu0 %v5993
    %6972 = vmatprep.subr.mxu0 0.0
    %6973 = vmatpush1.msra.mxu0 %v5996
    %6974 = vmatprep.subr.mxu0 0.0
    %6975 = vmatpush1.msra.mxu0 %v5999
    %6976 = vmatprep.subr.mxu0 0.0
    %6977 = vmatpush1.msra.mxu0 %v6002
    %6978 = vmatprep.subr.mxu0 0.0
    %6979 = vmatpush1.msra.mxu0 %v6005
    %6980 = vmatprep.subr.mxu0 0.0
    %6981 = vmatpush1.msra.mxu0 %v6008
    %6982 = vmatprep.subr.mxu0 0.0
    %6983 = vmatpush1.msra.mxu0 %v6011
    %6984 = vmatprep.subr.mxu0 0.0
    %6985 = vmatpush1.msra.mxu0 %v6014
    %6986 = vmatprep.subr.mxu0 0.0
    %6987 = vmatpush1.msra.mxu0 %v6017
    %6988 = vmatprep.subr.mxu0 0.0
    %6989 = vmatpush1.msra.mxu0 %v6020
    %6990 = vmatprep.subr.mxu0 0.0
    %6991 = vmatpush1.msra.mxu0 %v6023
    %6992 = vmatprep.subr.mxu0 0.0
    %6993 = vmatpush1.msra.mxu0 %v6026
    %6994 = vmatprep.subr.mxu0 0.0
    %6995 = vmatpush1.msra.mxu0 %v6029
    %6996 = vmatprep.subr.mxu0 0.0
    %6997 = vmatpush1.msra.mxu0 %v6032
    %6998 = vmatprep.subr.mxu0 0.0
    %6999 = vmatpush1.msra.mxu0 %v6035
    %7000 = vmatprep.subr.mxu0 0.0
    %7001 = vmatpush1.msra.mxu0 %v6038
    %7002 = vmatprep.subr.mxu0 0.0
    %7003 = vmatpush1.msra.mxu0 %v6041
    %7004 = vmatprep.subr.mxu0 0.0
    %7005 = vmatpush1.msra.mxu0 %v6044
    %7006 = vmatprep.subr.mxu0 0.0
    %7007 = vmatpush1.msra.mxu0 %v6047
    %7008 = vmatprep.mubr.f32.mxu0 %v5647
    %7009 = vmatmul.mubr.f32.gmra.mrb[0].mxu0 %v5646
    %v7010 = vpop.f32.mrb[0].mxu0
    %v7011 = vadd.f32 %v6936, %v7010
    %v7012 = vpop.f32.mrb[0].mxu0
    %7013 = vmatprep.mubr.f32.mxu0 %v5659
    %7014 = vmatmul.mubr.f32.gmra.mrb[0].mxu0 %v5658
    %v7015 = vpop.f32.mrb[0].mxu0
    %v7016 = vadd.f32 %v6941, %v7015
    %v7017 = vpop.f32.mrb[0].mxu0
    %7018 = vdwg.mxu0
    %7019 = vmatprep.subr.mxu0 0.0
    %7020 = vmatpush1.msra.mxu0 %v6050
    %7021 = vmatprep.subr.mxu0 0.0
    %7022 = vmatpush1.msra.mxu0 %v6053
    %7023 = vmatprep.subr.mxu0 0.0
    %7024 = vmatpush1.msra.mxu0 %v6056
    %7025 = vmatprep.subr.mxu0 0.0
    %7026 = vmatpush1.msra.mxu0 %v6059
    %7027 = vmatprep.subr.mxu0 0.0
    %7028 = vmatpush1.msra.mxu0 %v6062
    %7029 = vmatprep.subr.mxu0 0.0
    %7030 = vmatpush1.msra.mxu0 %v6065
    %7031 = vmatprep.subr.mxu0 0.0
    %7032 = vmatpush1.msra.mxu0 %v6068
    %7033 = vmatprep.subr.mxu0 0.0
    %7034 = vmatpush1.msra.mxu0 %v6071
    %7035 = vmatprep.subr.mxu0 0.0
    %7036 = vmatpush1.msra.mxu0 %v6074
    %7037 = vmatprep.subr.mxu0 0.0
    %7038 = vmatpush1.msra.mxu0 %v6077
    %7039 = vmatprep.subr.mxu0 0.0
    %7040 = vmatpush1.msra.mxu0 %v6080
    %7041 = vmatprep.subr.mxu0 0.0
    %7042 = vmatpush1.msra.mxu0 %v6083
    %7043 = vmatprep.subr.mxu0 0.0
    %7044 = vmatpush1.msra.mxu0 %v6086
    %7045 = vmatprep.subr.mxu0 0.0
    %7046 = vmatpush1.msra.mxu0 %v6089
    %7047 = vmatprep.subr.mxu0 0.0
    %7048 = vmatpush1.msra.mxu0 %v6092
    %7049 = vmatprep.subr.mxu0 0.0
    %7050 = vmatpush1.msra.mxu0 %v6095
    %7051 = vmatprep.subr.mxu0 0.0
    %7052 = vmatpush1.msra.mxu0 %v6098
    %7053 = vmatprep.subr.mxu0 0.0
    %7054 = vmatpush1.msra.mxu0 %v6101
    %7055 = vmatprep.subr.mxu0 0.0
    %7056 = vmatpush1.msra.mxu0 %v6104
    %7057 = vmatprep.subr.mxu0 0.0
    %7058 = vmatpush1.msra.mxu0 %v6107
    %7059 = vmatprep.subr.mxu0 0.0
    %7060 = vmatpush1.msra.mxu0 %v6110
    %7061 = vmatprep.subr.mxu0 0.0
    %7062 = vmatpush1.msra.mxu0 %v6113
    %7063 = vmatprep.subr.mxu0 0.0
    %7064 = vmatpush1.msra.mxu0 %v6116
    %7065 = vmatprep.subr.mxu0 0.0
    %7066 = vmatpush1.msra.mxu0 %v6119
    %7067 = vmatprep.subr.mxu0 0.0
    %7068 = vmatpush1.msra.mxu0 %v6122
    %7069 = vmatprep.subr.mxu0 0.0
    %7070 = vmatpush1.msra.mxu0 %v6125
    %7071 = vmatprep.subr.mxu0 0.0
    %7072 = vmatpush1.msra.mxu0 %v6128
    %7073 = vmatprep.subr.mxu0 0.0
    %7074 = vmatpush1.msra.mxu0 %v6131
    %7075 = vmatprep.subr.mxu0 0.0
    %7076 = vmatpush1.msra.mxu0 %v6134
    %7077 = vmatprep.subr.mxu0 0.0
    %7078 = vmatpush1.msra.mxu0 %v6137
    %7079 = vmatprep.subr.mxu0 0.0
    %7080 = vmatpush1.msra.mxu0 %v6140
    %7081 = vmatprep.subr.mxu0 0.0
    %7082 = vmatpush1.msra.mxu0 %v6143
    %7083 = vmatprep.mubr.f32.mxu0 %v5649
    %7084 = vmatmul.mubr.f32.gmra.mrb[0].mxu0 %v5648
    %v7085 = vpop.f32.mrb[0].mxu0
    %v7086 = vadd.f32 %v7011, %v7085
    %v7087 = vpop.f32.mrb[0].mxu0
    %7088 = vmatprep.mubr.f32.mxu0 %v5661
    %7089 = vmatmul.mubr.f32.gmra.mrb[0].mxu0 %v5660
    %v7090 = vpop.f32.mrb[0].mxu0
    %v7091 = vadd.f32 %v7016, %v7090
    %v7092 = vpop.f32.mrb[0].mxu0
    %7093 = vdwg.mxu0
    %7094 = vmatprep.subr.mxu0 0.0
    %7095 = vmatpush1.msra.mxu0 %v6146
    %7096 = vmatprep.subr.mxu0 0.0
    %7097 = vmatpush1.msra.mxu0 %v6149
    %7098 = vmatprep.subr.mxu0 0.0
    %7099 = vmatpush1.msra.mxu0 %v6152
    %7100 = vmatprep.subr.mxu0 0.0
    %7101 = vmatpush1.msra.mxu0 %v6155
    %7102 = vmatprep.subr.mxu0 0.0
    %7103 = vmatpush1.msra.mxu0 %v6158
    %7104 = vmatprep.subr.mxu0 0.0
    %7105 = vmatpush1.msra.mxu0 %v6161
    %7106 = vmatprep.subr.mxu0 0.0
    %7107 = vmatpush1.msra.mxu0 %v6164
    %7108 = vmatprep.subr.mxu0 0.0
    %7109 = vmatpush1.msra.mxu0 %v6167
    %7110 = vmatprep.subr.mxu0 0.0
    %7111 = vmatpush1.msra.mxu0 %v6170
    %7112 = vmatprep.subr.mxu0 0.0
    %7113 = vmatpush1.msra.mxu0 %v6173
    %7114 = vmatprep.subr.mxu0 0.0
    %7115 = vmatpush1.msra.mxu0 %v6176
    %7116 = vmatprep.subr.mxu0 0.0
    %7117 = vmatpush1.msra.mxu0 %v6179
    %7118 = vmatprep.subr.mxu0 0.0
    %7119 = vmatpush1.msra.mxu0 %v6182
    %7120 = vmatprep.subr.mxu0 0.0
    %7121 = vmatpush1.msra.mxu0 %v6185
    %7122 = vmatprep.subr.mxu0 0.0
    %7123 = vmatpush1.msra.mxu0 %v6188
    %7124 = vmatprep.subr.mxu0 0.0
    %7125 = vmatpush1.msra.mxu0 %v6191
    %7126 = vmatprep.subr.mxu0 0.0
    %7127 = vmatpush1.msra.mxu0 %v6194
    %7128 = vmatprep.subr.mxu0 0.0
    %7129 = vmatpush1.msra.mxu0 %v6197
    %7130 = vmatprep.subr.mxu0 0.0
    %7131 = vmatpush1.msra.mxu0 %v6200
    %7132 = vmatprep.subr.mxu0 0.0
    %7133 = vmatpush1.msra.mxu0 %v6203
    %7134 = vmatprep.subr.mxu0 0.0
    %7135 = vmatpush1.msra.mxu0 %v6206
    %7136 = vmatprep.subr.mxu0 0.0
    %7137 = vmatpush1.msra.mxu0 %v6209
    %7138 = vmatprep.subr.mxu0 0.0
    %7139 = vmatpush1.msra.mxu0 %v6212
    %7140 = vmatprep.subr.mxu0 0.0
    %7141 = vmatpush1.msra.mxu0 %v6215
    %7142 = vmatprep.subr.mxu0 0.0
    %7143 = vmatpush1.msra.mxu0 %v6218
    %7144 = vmatprep.subr.mxu0 0.0
    %7145 = vmatpush1.msra.mxu0 %v6221
    %7146 = vmatprep.subr.mxu0 0.0
    %7147 = vmatpush1.msra.mxu0 %v6224
    %7148 = vmatprep.subr.mxu0 0.0
    %7149 = vmatpush1.msra.mxu0 %v6227
    %7150 = vmatprep.subr.mxu0 0.0
    %7151 = vmatpush1.msra.mxu0 %v6230
    %7152 = vmatprep.subr.mxu0 0.0
    %7153 = vmatpush1.msra.mxu0 %v6233
    %7154 = vmatprep.subr.mxu0 0.0
    %7155 = vmatpush1.msra.mxu0 %v6236
    %7156 = vmatprep.subr.mxu0 0.0
    %7157 = vmatpush1.msra.mxu0 %v6239
    %7158 = vmatprep.mubr.f32.mxu0 %v5651
    %7159 = vmatmul.mubr.f32.gmra.mrb[0].mxu0 %v5650
    %v7160 = vpop.f32.mrb[0].mxu0
    %v7161 = vadd.f32 %v7086, %v7160
    %v7162 = vpop.f32.mrb[0].mxu0
    %7163 = vmatprep.mubr.f32.mxu0 %v5663
    %7164 = vmatmul.mubr.f32.gmra.mrb[0].mxu0 %v5662
    %v7165 = vpop.f32.mrb[0].mxu0
    %v7166 = vadd.f32 %v7091, %v7165
    %v7167 = vpop.f32.mrb[0].mxu0
    %7168 = vdwg.mxu0
    %v7169 = vadd.f32 %v3982, %v6709
    %v7170 = vadd.f32 %v3983, %v6711
    %v7171 = vadd.f32 %v3984, %v7161
    %v7172 = vadd.f32 %v3985, %v6715
    %v7173 = vadd.f32 %v3986, %v6717
    %v7174 = vadd.f32 %v3987, %v7166
    %7175 = vst [vmem:[#allocation24] sm:$0xff] %v7169
    %7176 = vst [vmem:[#allocation24 + $0x8] sm:$0xff] %v7170
    %7177 = vst [vmem:[#allocation24 + $0x10] sm:$0xff] %v7171
    %7178 = vst [vmem:[#allocation24 + $0x18] sm:$0xff] %v7172
    %7179 = vst [vmem:[#allocation24 + $0x20] sm:$0xff] %v7173
    %7180 = vst [vmem:[#allocation24 + $0x28] sm:$0xff] %v7174
    // Predicated region
    $region98: #{tpu_custom_call.1} parent=1 // pred_check
      _
    $region99: #{tpu_custom_call.1} parent=1 // pred_check_branch
      %7182 = sbr.rel (0) target = $region101
    $region100: #{tpu_custom_call.1} parent=1 // pred_region
      %s7184 = ssub.s32 768, 768
      %7185 = vsyncadd [#allocation6], %s7184
      %s7186 = sshll.u32 [#allocation24], 4
      %s7187 = int_to_ptr.vmem [resolvable:$true] %s7186
      %7192 = dma.vmem_to_hbm [thread:$0]  %s7187, 768, %s13, [#allocation6], 384, 384, 24
    $region101: #{tpu_custom_call.1} parent=1 // pred_fallthru
      _
    // Predicated region
    $region102: #{tpu_custom_call.1} parent=1 // pred_check
      _
    $region103: #{tpu_custom_call.1} parent=1 // pred_check_branch
      %7194 = sbr.rel (0) target = $region105
    $region104: #{tpu_custom_call.1} parent=1 // pred_region
      %7195 = dma.done [#allocation6], 768
    $region105: #{tpu_custom_call.1} parent=1 // pred_fallthru
      _
    %7196 = vsyncpa [#allocation5], 1
    %7197 = vsyncpa [#allocation8], 1
    %7198 = vsyncpa [#allocation11], 1
    %7199 = vsyncpa [#allocation14], 1
    %7200 = vsyncpa [#allocation17], 1
    %7201 = vsyncpa [#allocation20], 1
    %7202 = vsyncpa [#allocation23], 1
    %7203 = vsyncpa [#allocation6], 1

</llo_original>
